<compile_context>
chip_gen: v5e
topology: v5e:2x2
jax: 0.10.0
libtpu: 0.0.40
codegen_flags: <defaults>
</compile_context>

<pallas_src>
import functools
import math

import jax
import jax.numpy as jnp
from jax.experimental import pallas as pl
from jax.experimental.pallas import tpu as pltpu


def _ru(a, b):
    return (a + b - 1) // b * b


# ------------------------- kernel bodies -------------------------

def _act_fn(y, act):
    if act == "relu":
        return jnp.maximum(y, 0.0)
    if act == "tanh":
        return jnp.tanh(y)
    if act == "elu":
        # exp() only sees the clamped-negative side -> no overflow.
        return jnp.where(y > 0, y, jnp.exp(jnp.minimum(y, 0.0)) - 1.0)
    return y


def _cmajor_gemm_kernel(w_ref, x_ref, b_ref, o_ref, *, act):
    # out = act(W^T @ cols + b), bias broadcast per output row (channel).
    y = jnp.dot(w_ref[...], x_ref[...],
                preferred_element_type=jnp.float32) + b_ref[...]
    o_ref[...] = _act_fn(y, act).astype(o_ref.dtype)


def _gemm_kernel(x_ref, w_ref, o_ref, *, act):
    y = jnp.dot(x_ref[...], w_ref[...], preferred_element_type=jnp.float32)
    o_ref[...] = _act_fn(y, act).astype(o_ref.dtype)


def _gemm_bias_kernel(x_ref, w_ref, b_ref, o_ref, *, act):
    y = jnp.dot(x_ref[...], w_ref[...],
                preferred_element_type=jnp.float32) + b_ref[...]
    o_ref[...] = _act_fn(y, act).astype(o_ref.dtype)


def _fused_mlp_kernel(*refs, n_layers, acts, compute_dtype):
    x_ref, o_ref = refs[0], refs[-1]
    h = x_ref[...].astype(compute_dtype)
    for l in range(n_layers):
        w_ref, b_ref = refs[1 + 2 * l], refs[2 + 2 * l]
        y = jnp.dot(h, w_ref[...], preferred_element_type=jnp.float32)
        y = _act_fn(y + b_ref[...], acts[l])
        h = y.astype(compute_dtype) if l + 1 < n_layers else y
    o_ref[...] = h.astype(o_ref.dtype)


def _sumsq_kernel(a_ref, b_ref, o_ref):
    @pl.when(pl.program_id(0) == 0)
    def _():
        o_ref[...] = jnp.zeros_like(o_ref)

    d = a_ref[...] - b_ref[...]
    o_ref[...] += jnp.sum(d * d, axis=0, keepdims=True)


# ------------------------- Pallas wrappers -------------------------

def cmajor_conv_pallas(cols, wT, b, act):
    """out[n] = act(wT @ cols[n] + b).  cols: (B, K, M), wT: (Cout, K) bf16,
    b: (Cout, 1).  Returns (B, Cout, M) f32; batch is a parallel grid axis."""
    B, K, M = cols.shape
    Cout = wT.shape[0]
    cols = cols.astype(wT.dtype)
    return pl.pallas_call(
        functools.partial(_cmajor_gemm_kernel, act=act),
        out_shape=jax.ShapeDtypeStruct((B, Cout, M), jnp.float32),
        grid=(B,),
        in_specs=[
            pl.BlockSpec((Cout, K), lambda i: (0, 0)),
            pl.BlockSpec((None, K, M), lambda i: (i, 0, 0)),
            pl.BlockSpec((Cout, 1), lambda i: (0, 0)),
        ],
        out_specs=pl.BlockSpec((None, Cout, M), lambda i: (i, 0, 0)),
        compiler_params=pltpu.CompilerParams(dimension_semantics=("parallel",)),
    )(wT, cols, b)


def grouped_cmajor_conv_pallas(cols, wT, b, act):
    """Grouped variant: cols (B, G*K, M); group split is a contiguous block
    offset along K / the output channel axis (no physical transposes).
    wT: (G, Cout, K) bf16, b: (G, Cout, 1).  Returns (B, G*Cout, M) f32."""
    B, GK, M = cols.shape
    G, Cout, K = wT.shape
    assert GK == G * K
    cols = cols.astype(wT.dtype)
    return pl.pallas_call(
        functools.partial(_cmajor_gemm_kernel, act=act),
        out_shape=jax.ShapeDtypeStruct((B, G * Cout, M), jnp.float32),
        grid=(G, B),
        in_specs=[
            pl.BlockSpec((None, Cout, K), lambda g, i: (g, 0, 0)),
            pl.BlockSpec((None, K, M), lambda g, i: (i, g, 0)),
            pl.BlockSpec((None, Cout, 1), lambda g, i: (g, 0, 0)),
        ],
        out_specs=pl.BlockSpec((None, Cout, M), lambda g, i: (i, g, 0)),
        compiler_params=pltpu.CompilerParams(
            dimension_semantics=("parallel", "parallel")),
    )(wT, cols, b)


def linear_pallas(x, w, b=None, act="none"):
    """y = act(x @ w + b).  x: (M, K), w: (K, N) bf16, b: (N,) or None.
    M is split into two parallel tiles when cleanly possible (v7x)."""
    M, K = x.shape
    N = w.shape[1]
    x = x.astype(w.dtype)
    tm = M // 2 if (M >= 512 and M % 2 == 0 and (M // 2) % 8 == 0) else M
    in_specs = [pl.BlockSpec((tm, K), lambda i: (i, 0)),
                pl.BlockSpec((K, N), lambda i: (0, 0))]
    args = [x, w]
    if b is not None:
        in_specs.append(pl.BlockSpec((1, N), lambda i: (0, 0)))
        args.append(b.reshape(1, N).astype(jnp.float32))
        kern = functools.partial(_gemm_bias_kernel, act=act)
    else:
        kern = functools.partial(_gemm_kernel, act=act)
    return pl.pallas_call(
        kern,
        out_shape=jax.ShapeDtypeStruct((M, N), jnp.float32),
        grid=(M // tm,),
        in_specs=in_specs,
        out_specs=pl.BlockSpec((tm, N), lambda i: (i, 0)),
        compiler_params=pltpu.CompilerParams(dimension_semantics=("parallel",)),
    )(*args)


def fused_mlp_pallas(x, layers, acts, x_shared=False,
                     compute_dtype=jnp.bfloat16):
    """Fused N-layer MLP: all weights + intermediates stay in VMEM, one launch.

    layers: list of (w: (G, Kin, Kout) bf16, b: (G, Kout)).
    x: (G, M, K0) per-group, or (M, K0) shared across groups (x_shared=True).
    Returns (G, M, N) float32; the group axis is a parallel grid dim.
    """
    G = layers[0][0].shape[0]
    N = layers[-1][0].shape[-1]
    x = x.astype(compute_dtype)
    if x_shared:
        M = x.shape[0]
        in_specs = [pl.BlockSpec(x.shape, lambda g: (0, 0))]
    else:
        M = x.shape[1]
        in_specs = [pl.BlockSpec((None,) + x.shape[1:], lambda g: (g, 0, 0))]
    args = [x]
    for (w, b) in layers:
        args += [w.astype(compute_dtype),
                 b.reshape(G, 1, -1).astype(jnp.float32)]
        in_specs += [pl.BlockSpec((None,) + w.shape[1:], lambda g: (g, 0, 0)),
                     pl.BlockSpec((None, 1, b.shape[-1]), lambda g: (g, 0, 0))]
    return pl.pallas_call(
        functools.partial(_fused_mlp_kernel, n_layers=len(layers), acts=acts,
                          compute_dtype=compute_dtype),
        out_shape=jax.ShapeDtypeStruct((G, M, N), jnp.float32),
        grid=(G,),
        in_specs=in_specs,
        out_specs=pl.BlockSpec((None, M, N), lambda g: (g, 0, 0)),
        compiler_params=pltpu.CompilerParams(dimension_semantics=("parallel",)),
    )(*args)


def mse_pallas(a, b):
    """mean((a - b)^2) via a big-tile Pallas sum-of-squares reduction."""
    a = a.reshape(-1).astype(jnp.float32)
    b = b.reshape(-1).astype(jnp.float32)
    n = a.shape[0]
    lanes = 128
    rows = _ru(max(pl.cdiv(n, lanes), 8), 8)
    tm = rows if rows <= 2048 else 2048
    rows = _ru(rows, tm)
    tot = rows * lanes
    ap = jnp.pad(a, (0, tot - n)).reshape(rows, lanes)
    bp = jnp.pad(b, (0, tot - n)).reshape(rows, lanes)
    partial = pl.pallas_call(
        _sumsq_kernel,
        out_shape=jax.ShapeDtypeStruct((1, lanes), jnp.float32),
        grid=(rows // tm,),
        in_specs=[pl.BlockSpec((tm, lanes), lambda i: (i, 0)),
                  pl.BlockSpec((tm, lanes), lambda i: (i, 0))],
        out_specs=pl.BlockSpec((1, lanes), lambda i: (0, 0)),
        compiler_params=pltpu.CompilerParams(dimension_semantics=("arbitrary",)),
    )(ap, bp)
    return jnp.sum(partial) / n


# ------------------------- conv glue (slice-based, no gathers) -------------------------

def _im2col_km(x, k, stride, c_major):
    """Strided-slice im2col in (B, K, M) layout (K = patch features, M = pixels).

    K ordering is (channel, tap) if c_major else (tap, channel); the matching
    weights are initialised in the same order, so either is valid.
    """
    B, C, H, W = x.shape
    oh = (H - k) // stride + 1
    ow = (W - k) // stride + 1
    slices = []
    for kh in range(k):
        for kw in range(k):
            slices.append(jax.lax.slice(
                x, (0, 0, kh, kw),
                (B, C, kh + (oh - 1) * stride + 1, kw + (ow - 1) * stride + 1),
                (1, 1, stride, stride)))
    cols = jnp.stack(slices, axis=2 if c_major else 1)
    return cols.reshape(B, C * k * k, oh * ow), oh, ow


def _col2im_2x(cols, s):
    """col2im for padding=0 ConvTranspose with kernel k = 2*stride.

    cols: (B, H, W, C, 2s, 2s) -> (B, C, (H+1)*s, (W+1)*s).
    One up-front transpose + 4 pad/adds; no scatter-add."""
    B, H, W, C, k, _ = cols.shape
    cr = cols.reshape(B, H, W, C, 2, s, 2, s)
    cr = cr.transpose(0, 3, 4, 6, 1, 5, 2, 7)       # (B, C, qh, qw, H, s, W, s)
    out = None
    for qh in range(2):
        for qw in range(2):
            blk = cr[:, :, qh, qw]                  # (B, C, H, s, W, s)
            blk = jnp.pad(blk, ((0, 0), (0, 0), (qh, 1 - qh), (0, 0),
                                (qw, 1 - qw), (0, 0)))
            blk = blk.reshape(B, C, (H + 1) * s, (W + 1) * s)
            out = blk if out is None else out + blk
    return out


def conv_transpose2d(x, w, b, k, stride, act="none"):
    """PyTorch ConvTranspose2d(NCHW), padding=0, kernel = 2*stride.
    w: (Cin, Cout*k*k) bf16 with column order (Cout, kh, kw); b: (Cout,)."""
    B, Cin, H, W = x.shape
    Cout = b.shape[0]
    xf = x.transpose(0, 2, 3, 1).reshape(B * H * W, Cin)
    cols = linear_pallas(xf, w, None)                     # bias=None fast path
    cols = cols.reshape(B, H, W, Cout, k, k)
    out = _col2im_2x(cols, stride) + b[None, :, None, None]
    if act == "relu":
        out = jnp.maximum(out, 0.0)
    return out


# ------------------------- sub-networks -------------------------

def dual_encoder_forward(p, s):
    """Causal + noise encoders fused (causal = group/channels 0, noise = 1)."""
    B = s.shape[0]
    # Conv(nc,16,8,4)+ReLU for both encoders (output channels stacked).
    cols1, oh1, ow1 = _im2col_km(s, 8, 4, c_major=False)            # (B,192,400)
    h1 = cmajor_conv_pallas(cols1, p["c1_wT"], p["c1_b"], "relu")   # (B,32,400)
    h1 = h1.reshape(B, 32, oh1, ow1)
    # Conv(16,32,4,2)+ReLU, grouped: the causal/noise split is a contiguous
    # block offset along K / output channels in the BlockSpec index_map.
    cols2, oh2, ow2 = _im2col_km(h1, 4, 2, c_major=True)            # (B,512,81)
    h2 = grouped_cmajor_conv_pallas(cols2, p["c2_wT"], p["c2_b"], "relu")  # (B,64,81)
    # Conv(32,256,11,1,p=1)+Tanh + View + Linear(256,rep): only the interior
    # 9x9 taps are kept (border taps always see padded zeros), and the two
    # layers are fused into one grouped 2-layer MLP call.
    x3 = h2.reshape(B, 2, 32, oh2 * ow2).transpose(1, 0, 2, 3)
    x3 = x3.reshape(2, B, 32 * oh2 * ow2)                           # (2,B,2592)
    reps = fused_mlp_pallas(
        x3, [(p["c3_w"], p["c3_b"]), (p["fc_w"], p["fc_b"])],
        acts=("tanh", "none"))                                      # (2,B,rep)
    return reps[0], reps[1]


def obs_decoder_forward(p, xy):
    """ObservationsDecoder on pre-concatenated rows xy: (Mrows, 2*rep)."""
    M = xy.shape[0]
    # Linear(2*rep,256)+Tanh, then ConvT(256,32,11,1,p=1)+ReLU on a 1x1 input:
    # a plain matmul whose output columns were pre-cropped at init to the
    # interior 9x9 (padding=1 discards the border); bias/ReLU folded in.
    h = fused_mlp_pallas(
        xy, [(p["fc_w"][None], p["fc_b"][None]),
             (p["d1_w"][None], p["d1_bexp"][None])],
        acts=("tanh", "relu"), x_shared=True)[0]                    # (M,2592)
    h = h.reshape(M, 32, 9, 9)
    h = conv_transpose2d(h, p["d2_w"], p["d2_b"], 4, 2, act="relu")  # (M,16,20,20)
    return conv_transpose2d(h, p["d3_w"], p["d3_b"], 8, 4)           # (M,nc,84,84)


def energy_forward(p, x):
    # TODO(synk): MnistEnergyNN arch + checkpoint unavailable; deterministic stand-in.
    cols, _, _ = _im2col_km(x, 8, 4, c_major=False)                 # (B,192,400)
    h = cmajor_conv_pallas(cols, p["c_wT"], p["c_b"], "relu")       # (B,16,400)
    h = jnp.mean(h, axis=-1)                                        # (B,16)
    return (h @ p["fc_w"] + p["fc_b"])[:, 0]                        # tiny: plain jnp


def reparameterize(mu, logstd, key):
    # Matches the PyTorch reference exactly: std = exp(2 * logstd).
    std = jnp.exp(2.0 * logstd)
    eps = jax.random.normal(key, std.shape, std.dtype)
    return mu + eps * std


# ------------------------- ICIL forward -------------------------

def icil_forward(params, s, a, label, key, deterministic=False):
    B = s.shape[0]
    causal_rep, noise_rep = dual_encoder_forward(params["enc"], s)

    # Policy head + MINE statistics network share one grouped fused-MLP call
    # (group 0 = policy with zero-padded weights, group 1 = MINE T).
    sg_c = jax.lax.stop_gradient(causal_rep)
    sg_n = jax.lax.stop_gradient(noise_rep)
    mine_in = jnp.concatenate([
        jnp.concatenate([causal_rep, noise_rep], axis=-1),
        jnp.concatenate([causal_rep, jnp.roll(noise_rep, 1, axis=0)], axis=-1),
        jnp.concatenate([sg_c, sg_n], axis=-1),
        jnp.concatenate([sg_c, jnp.roll(sg_n, 1, axis=0)], axis=-1)],
        axis=0)                                                     # (4B, 2*rep)
    pmp = params["pol_mine"]
    pm = fused_mlp_pallas(
        mine_in,
        [(pmp["w1"], pmp["b1"]), (pmp["w2"], pmp["b2"]), (pmp["w3"], pmp["b3"])],
        acts=("elu", "elu", "none"), x_shared=True)                 # (2, 4B, 2*act)
    act_logits = jnp.tanh(pm[0, :B, :])          # StudentNetwork final Tanh (tiny)
    t_all = pm[1, :, 0]                          # MINE T values (4B,)

    half = act_logits.shape[-1] // 2
    if not deterministic:
        act_pred = reparameterize(act_logits[:, :half], act_logits[:, half:], key)
    else:
        act_pred = act_logits[:, :half]
    policy_loss = jnp.mean((act_pred - a) ** 2)   # B*action_dim elems: plain jnp

    # All four feature-decoder evaluations in one fused G=4 MLP call:
    # [causal(.,a), noise(.,a), causal(.,act_pred), noise(.,act_pred)].
    fd_in = jnp.stack([
        jnp.concatenate([causal_rep, a], axis=-1),
        jnp.concatenate([noise_rep, a], axis=-1),
        jnp.concatenate([causal_rep, act_pred], axis=-1),
        jnp.concatenate([noise_rep, act_pred], axis=-1)], axis=0)
    fd = params["feat_dec"]
    feat = fused_mlp_pallas(
        fd_in, [(fd["w1"], fd["b1"]), (fd["w2"], fd["b2"]), (fd["w3"], fd["b3"])],
        acts=("elu", "elu", "none"))                                # (4,B,rep)
    next_state_causal_rep, next_state_noise_rep = feat[0], feat[1]
    ns_causal_e, ns_noise_e = feat[2], feat[3]

    # Both observation-decoder passes batched along M (2B rows).
    dec_in = jnp.concatenate([
        jnp.concatenate([next_state_causal_rep, next_state_noise_rep], axis=-1),
        jnp.concatenate([ns_causal_e, ns_noise_e], axis=-1)], axis=0)
    dec_out = obs_decoder_forward(params["obs_dec"], dec_in)        # (2B,nc,84,84)
    predicted_next_state, pred_ns_energy = dec_out[:B], dec_out[B:]

    next_state_pred_loss = mse_pallas(predicted_next_state, label)

    # MINE (stand-in): Donsker-Varadhan bound, logsumexp for stability.
    logB = math.log(B)
    mi_loss = jnp.mean(t_all[:B]) - (jax.nn.logsumexp(t_all[B:2 * B]) - logB)
    mine_loss = -(jnp.mean(t_all[2 * B:3 * B])
                  - (jax.nn.logsumexp(t_all[3 * B:]) - logB))

    next_state_energy_loss = 0.05 * jnp.mean(
        energy_forward(params["energy"], pred_ns_energy))

    return (policy_loss, next_state_pred_loss, next_state_energy_loss,
            mi_loss, mine_loss)


# ------------------------- deterministic param init -------------------------

def init_params(key, state_dim, action_dim, hidden_dim_input, hidden_dim):
    # The reference architecture requires causal_rep dim == policy in_dim.
    assert hidden_dim_input == hidden_dim
    keys = iter(jax.random.split(key, 64))
    bf = jnp.bfloat16

    def uni(shape, fan_in, dtype=jnp.float32):
        lim = 1.0 / math.sqrt(fan_in)
        return jax.random.uniform(next(keys), shape, jnp.float32,
                                  -lim, lim).astype(dtype)

    nc, rep, hid, adim = state_dim, hidden_dim_input, hidden_dim, action_dim

    # ---- dual encoder (group 0 = causal, group 1 = noise) ----
    enc = dict(
        # conv1 stored transposed (Cout, K), K-order (tap, channel); both
        # encoders' 16 output channels stacked along Cout.
        c1_wT=uni((32, nc * 64), nc * 64, bf), c1_b=uni((32, 1), nc * 64),
        # conv2: (G, Cout, K), K-order (c_in, tap).
        c2_wT=uni((2, 32, 16 * 16), 16 * 16, bf),
        c2_b=uni((2, 32, 1), 16 * 16),
        # conv3: only the interior 9x9 taps of the 11x11 kernel (padding=1 on
        # a 9x9 input -> border taps always see zeros).  K-order (c, 9, 9).
        c3_w=uni((2, 32 * 81, 256), 32 * 121, bf),
        c3_b=uni((2, 256), 32 * 121),
        fc_w=uni((2, 256, rep), 256, bf), fc_b=uni((2, rep), 256),
    )

    # ---- policy (StudentNetwork) + MINE T merged into one G=2 stack ----
    n_out = 2 * adim
    pol_w1 = uni((hid, hid), hid, bf);      pol_b1 = uni((hid,), hid)
    pol_w2 = uni((hid, hid), hid, bf);      pol_b2 = uni((hid,), hid)
    pol_w3 = uni((hid, n_out), hid, bf);    pol_b3 = uni((n_out,), hid)
    mine_w1 = uni((2 * rep, hid), 2 * rep, bf); mine_b1 = uni((hid,), 2 * rep)
    mine_w2 = uni((hid, hid), hid, bf);     mine_b2 = uni((hid,), hid)
    mine_w3 = uni((hid, 1), hid, bf);       mine_b3 = uni((1,), hid)
    pol_mine = dict(
        w1=jnp.stack([jnp.concatenate(
            [pol_w1, jnp.zeros((2 * rep - hid, hid), bf)], axis=0), mine_w1]),
        b1=jnp.stack([pol_b1, mine_b1]),
        w2=jnp.stack([pol_w2, mine_w2]),
        b2=jnp.stack([pol_b2, mine_b2]),
        w3=jnp.stack([pol_w3, jnp.concatenate(
            [mine_w3, jnp.zeros((hid, n_out - 1), bf)], axis=1)]),
        b3=jnp.stack([pol_b3, jnp.concatenate(
            [mine_b3, jnp.zeros((n_out - 1,), jnp.float32)], axis=0)]),
    )

    # ---- feature decoders, tiled to the G=4 evaluation order ----
    def mlp3(g, k0, width, nout):
        return dict(w1=uni((g, k0, width), k0, bf), b1=uni((g, width), k0),
                    w2=uni((g, width, width), width, bf), b2=uni((g, width), width),
                    w3=uni((g, width, nout), width, bf), b3=uni((g, nout), width))

    fd2 = mlp3(2, rep + adim, hid, rep)            # [causal_dec, noise_dec]
    feat_dec = {k: jnp.concatenate([v, v], axis=0) for k, v in fd2.items()}

    # ---- observation decoder ----
    obs = dict(
        fc_w=uni((2 * rep, 256), 2 * rep, bf), fc_b=uni((256,), 2 * rep),
        # deconv1: ConvT(256,32,11,1,p=1) on a 1x1 input == Linear whose output
        # columns are pre-cropped to the interior 9x9 (N: 3872 -> 2592).
        d1_w=uni((256, 32 * 81), 256, bf),
        d2_w=uni((32, 16 * 16), 32, bf), d2_b=uni((16,), 32),
        d3_w=uni((16, nc * 64), 16, bf), d3_b=uni((nc,), 16),
    )
    d1_b = uni((32,), 256)
    # One contribution per output pixel (1x1 input) -> bias folds per column.
    obs["d1_bexp"] = jnp.repeat(d1_b, 81)

    energy = dict(c_wT=uni((16, nc * 64), nc * 64, bf),
                  c_b=uni((16, 1), nc * 64),
                  fc_w=uni((16, 1), 16), fc_b=uni((1,), 16))

    return dict(enc=enc, pol_mine=pol_mine, feat_dec=feat_dec,
                obs_dec=obs, energy=energy)


# ------------------------- main -------------------------

if __name__ == "__main__":
    # The encoder (conv 8/4 -> 4/2 -> 11/1 p1 -> View(-1,256)) requires 84x84
    # spatial inputs; state_dim is the channel count.
    state_dim, action_dim = 3, 2
    hidden_dim_input, hidden_dim = 32, 32
    B, HW = 2, 84

    root = jax.random.PRNGKey(0)
    k_s, k_a, k_label, k_eps, k_params = jax.random.split(root, 5)
    s = jax.random.normal(k_s, (B, state_dim, HW, HW), jnp.float32)
    a = jax.random.normal(k_a, (B, action_dim), jnp.float32)
    label = jax.random.normal(k_label, (B, state_dim, HW, HW), jnp.float32)
    params = init_params(k_params, state_dim, action_dim,
                         hidden_dim_input, hidden_dim)

    fwd = jax.jit(functools.partial(icil_forward, deterministic=False))
    losses = jax.block_until_ready(fwd(params, s, a, label, k_eps))
    print("KERNEL_OK")
</pallas_src>

<mosaic_0001>
module attributes {stable_mosaic.version = 11 : i64} {
  func.func @_cmajor_gemm_kernel(%arg0: i32, %arg1: memref<32x192xbf16, #tpu.memory_space<vmem>>, %arg2: memref<1x192x400xbf16, #tpu.memory_space<vmem>>, %arg3: memref<32x1xf32, #tpu.memory_space<vmem>>, %arg4: memref<1x32x400xf32, #tpu.memory_space<vmem>>) attributes {dimension_semantics = [#tpu.dimension_semantics<parallel>], iteration_bounds = array<i64: 2>, scalar_prefetch = 0 : i64, scratch_operands = 0 : i64, tpu.core_type = #tpu.core_type<tc>, window_params = [{pipeline_mode = #tpu.pipeline_mode<synchronous>, transform_indices = @transform_0, window_bounds = array<i64: 32, 192>}, {transform_indices = @transform_1, window_bounds = array<i64: 1, 192, 400>}, {pipeline_mode = #tpu.pipeline_mode<synchronous>, transform_indices = @transform_2, window_bounds = array<i64: 32, 1>}, {transform_indices = @transform_3, window_bounds = array<i64: 1, 32, 400>}]} {
    %c0 = arith.constant 0 : index
    %c0_0 = arith.constant 0 : index
    %0 = vector.load %arg1[%c0, %c0_0] : memref<32x192xbf16, #tpu.memory_space<vmem>>, vector<32x192xbf16>
    %c0_1 = arith.constant 0 : index
    %c0_2 = arith.constant 0 : index
    %c0_3 = arith.constant 0 : index
    %1 = vector.load %arg2[%c0_1, %c0_2, %c0_3] : memref<1x192x400xbf16, #tpu.memory_space<vmem>>, vector<1x192x400xbf16>
    %2 = vector.shape_cast %1 : vector<1x192x400xbf16> to vector<192x400xbf16>
    %cst = arith.constant dense<0.000000e+00> : vector<32x400xf32>
    %3 = tpu.matmul %0, %2, %cst {dimension_numbers = #tpu.dot_dimension_numbers<[1], [0], [0], [1], [0, 0, 1, 1], [], []>} : vector<32x192xbf16>, vector<192x400xbf16>, vector<32x400xf32> -> vector<32x400xf32>
    %c0_4 = arith.constant 0 : index
    %c0_5 = arith.constant 0 : index
    %4 = vector.load %arg3[%c0_4, %c0_5] : memref<32x1xf32, #tpu.memory_space<vmem>>, vector<32x1xf32>
    %5 = vector.broadcast %4 : vector<32x1xf32> to vector<32x400xf32>
    %6 = arith.addf %3, %5 : vector<32x400xf32>
    %cst_6 = arith.constant 0.000000e+00 : f32
    %7 = vector.broadcast %cst_6 : f32 to vector<32x400xf32>
    %8 = arith.maximumf %6, %7 : vector<32x400xf32>
    %c0_7 = arith.constant 0 : index
    %c0_8 = arith.constant 0 : index
    %c0_9 = arith.constant 0 : index
    %9 = vector.load %arg4[%c0_7, %c0_8, %c0_9] : memref<1x32x400xf32, #tpu.memory_space<vmem>>, vector<1x32x400xf32>
    %10 = vector.shape_cast %9 : vector<1x32x400xf32> to vector<32x400xf32>
    %11 = vector.shape_cast %8 : vector<32x400xf32> to vector<1x32x400xf32>
    tpu.vector_store %arg4[%c0_7, %c0_8, %c0_9], %11 {strides = array<i32>} : memref<1x32x400xf32, #tpu.memory_space<vmem>>, vector<1x32x400xf32>,
    return
  }
  func.func @transform_0(%arg0: i32) -> (i32, i32) {
    %c0_i32 = arith.constant 0 : i32
    %c0_i32_0 = arith.constant 0 : i32
    %c0_i32_1 = arith.constant 0 : i32
    return %c0_i32, %c0_i32_0 : i32, i32
  }
  func.func @transform_1(%arg0: i32) -> (i32, i32, i32) {
    %c0_i32 = arith.constant 0 : i32
    %c0_i32_0 = arith.constant 0 : i32
    %c0_i32_1 = arith.constant 0 : i32
    return %arg0, %c0_i32, %c0_i32_0 : i32, i32, i32
  }
  func.func @transform_2(%arg0: i32) -> (i32, i32) {
    %c0_i32 = arith.constant 0 : i32
    %c0_i32_0 = arith.constant 0 : i32
    %c0_i32_1 = arith.constant 0 : i32
    return %c0_i32, %c0_i32_0 : i32, i32
  }
  func.func @transform_3(%arg0: i32) -> (i32, i32, i32) {
    %c0_i32 = arith.constant 0 : i32
    %c0_i32_0 = arith.constant 0 : i32
    %c0_i32_1 = arith.constant 0 : i32
    return %arg0, %c0_i32, %c0_i32_0 : i32, i32, i32
  }
}

module attributes {stable_mosaic.version = 11 : i64} {
  func.func @_cmajor_gemm_kernel(%arg0: i32, %arg1: i32, %arg2: memref<1x32x256xbf16, #tpu.memory_space<vmem>>, %arg3: memref<1x256x81xbf16, #tpu.memory_space<vmem>>, %arg4: memref<1x32x1xf32, #tpu.memory_space<vmem>>, %arg5: memref<1x32x81xf32, #tpu.memory_space<vmem>>) attributes {dimension_semantics = [#tpu.dimension_semantics<parallel>, #tpu.dimension_semantics<parallel>], iteration_bounds = array<i64: 2, 2>, scalar_prefetch = 0 : i64, scratch_operands = 0 : i64, tpu.core_type = #tpu.core_type<tc>, window_params = [{transform_indices = @transform_0, window_bounds = array<i64: 1, 32, 256>}, {transform_indices = @transform_1, window_bounds = array<i64: 1, 256, 81>}, {transform_indices = @transform_2, window_bounds = array<i64: 1, 32, 1>}, {transform_indices = @transform_3, window_bounds = array<i64: 1, 32, 81>}]} {
    %c0 = arith.constant 0 : index
    %c0_0 = arith.constant 0 : index
    %c0_1 = arith.constant 0 : index
    %0 = vector.load %arg2[%c0, %c0_0, %c0_1] : memref<1x32x256xbf16, #tpu.memory_space<vmem>>, vector<1x32x256xbf16>
    %1 = vector.shape_cast %0 : vector<1x32x256xbf16> to vector<32x256xbf16>
    %c0_2 = arith.constant 0 : index
    %c0_3 = arith.constant 0 : index
    %c0_4 = arith.constant 0 : index
    %2 = vector.load %arg3[%c0_2, %c0_3, %c0_4] : memref<1x256x81xbf16, #tpu.memory_space<vmem>>, vector<1x256x81xbf16>
    %3 = vector.shape_cast %2 : vector<1x256x81xbf16> to vector<256x81xbf16>
    %cst = arith.constant dense<0.000000e+00> : vector<32x81xf32>
    %4 = tpu.matmul %1, %3, %cst {dimension_numbers = #tpu.dot_dimension_numbers<[1], [0], [0], [1], [0, 0, 1, 1], [], []>} : vector<32x256xbf16>, vector<256x81xbf16>, vector<32x81xf32> -> vector<32x81xf32>
    %c0_5 = arith.constant 0 : index
    %c0_6 = arith.constant 0 : index
    %c0_7 = arith.constant 0 : index
    %5 = vector.load %arg4[%c0_5, %c0_6, %c0_7] : memref<1x32x1xf32, #tpu.memory_space<vmem>>, vector<1x32x1xf32>
    %6 = vector.shape_cast %5 : vector<1x32x1xf32> to vector<32x1xf32>
    %7 = vector.broadcast %6 : vector<32x1xf32> to vector<32x81xf32>
    %8 = arith.addf %4, %7 : vector<32x81xf32>
    %cst_8 = arith.constant 0.000000e+00 : f32
    %9 = vector.broadcast %cst_8 : f32 to vector<32x81xf32>
    %10 = arith.maximumf %8, %9 : vector<32x81xf32>
    %c0_9 = arith.constant 0 : index
    %c0_10 = arith.constant 0 : index
    %c0_11 = arith.constant 0 : index
    %11 = vector.load %arg5[%c0_9, %c0_10, %c0_11] : memref<1x32x81xf32, #tpu.memory_space<vmem>>, vector<1x32x81xf32>
    %12 = vector.shape_cast %11 : vector<1x32x81xf32> to vector<32x81xf32>
    %13 = vector.shape_cast %10 : vector<32x81xf32> to vector<1x32x81xf32>
    tpu.vector_store %arg5[%c0_9, %c0_10, %c0_11], %13 {strides = array<i32>} : memref<1x32x81xf32, #tpu.memory_space<vmem>>, vector<1x32x81xf32>,
    return
  }
  func.func @transform_0(%arg0: i32, %arg1: i32) -> (i32, i32, i32) {
    %c0_i32 = arith.constant 0 : i32
    %c0_i32_0 = arith.constant 0 : i32
    %c0_i32_1 = arith.constant 0 : i32
    return %arg0, %c0_i32, %c0_i32_0 : i32, i32, i32
  }
  func.func @transform_1(%arg0: i32, %arg1: i32) -> (i32, i32, i32) {
    %c0_i32 = arith.constant 0 : i32
    %c0_i32_0 = arith.constant 0 : i32
    return %arg1, %arg0, %c0_i32 : i32, i32, i32
  }
  func.func @transform_2(%arg0: i32, %arg1: i32) -> (i32, i32, i32) {
    %c0_i32 = arith.constant 0 : i32
    %c0_i32_0 = arith.constant 0 : i32
    %c0_i32_1 = arith.constant 0 : i32
    return %arg0, %c0_i32, %c0_i32_0 : i32, i32, i32
  }
  func.func @transform_3(%arg0: i32, %arg1: i32) -> (i32, i32, i32) {
    %c0_i32 = arith.constant 0 : i32
    %c0_i32_0 = arith.constant 0 : i32
    return %arg1, %arg0, %c0_i32 : i32, i32, i32
  }
}

module attributes {stable_mosaic.version = 11 : i64} {
  func.func @_fused_mlp_kernel(%arg0: i32, %arg1: memref<1x2x2592xbf16, #tpu.memory_space<vmem>>, %arg2: memref<1x2592x256xbf16, #tpu.memory_space<vmem>>, %arg3: memref<1x1x256xf32, #tpu.memory_space<vmem>>, %arg4: memref<1x256x32xbf16, #tpu.memory_space<vmem>>, %arg5: memref<1x1x32xf32, #tpu.memory_space<vmem>>, %arg6: memref<1x2x32xf32, #tpu.memory_space<vmem>>) attributes {dimension_semantics = [#tpu.dimension_semantics<parallel>], iteration_bounds = array<i64: 2>, scalar_prefetch = 0 : i64, scratch_operands = 0 : i64, tpu.core_type = #tpu.core_type<tc>, window_params = [{transform_indices = @transform_0, window_bounds = array<i64: 1, 2, 2592>}, {transform_indices = @transform_1, window_bounds = array<i64: 1, 2592, 256>}, {transform_indices = @transform_2, window_bounds = array<i64: 1, 1, 256>}, {transform_indices = @transform_3, window_bounds = array<i64: 1, 256, 32>}, {transform_indices = @transform_4, window_bounds = array<i64: 1, 1, 32>}, {transform_indices = @transform_5, window_bounds = array<i64: 1, 2, 32>}]} {
    %c0 = arith.constant 0 : index
    %c0_0 = arith.constant 0 : index
    %c0_1 = arith.constant 0 : index
    %0 = vector.load %arg1[%c0, %c0_0, %c0_1] : memref<1x2x2592xbf16, #tpu.memory_space<vmem>>, vector<1x2x2592xbf16>
    %1 = vector.shape_cast %0 : vector<1x2x2592xbf16> to vector<2x2592xbf16>
    %c0_2 = arith.constant 0 : index
    %c0_3 = arith.constant 0 : index
    %c0_4 = arith.constant 0 : index
    %2 = vector.load %arg2[%c0_2, %c0_3, %c0_4] : memref<1x2592x256xbf16, #tpu.memory_space<vmem>>, vector<1x2592x256xbf16>
    %3 = vector.shape_cast %2 : vector<1x2592x256xbf16> to vector<2592x256xbf16>
    %cst = arith.constant dense<0.000000e+00> : vector<2x256xf32>
    %4 = tpu.matmul %1, %3, %cst {dimension_numbers = #tpu.dot_dimension_numbers<[1], [0], [0], [1], [0, 0, 1, 1], [], []>} : vector<2x2592xbf16>, vector<2592x256xbf16>, vector<2x256xf32> -> vector<2x256xf32>
    %c0_5 = arith.constant 0 : index
    %c0_6 = arith.constant 0 : index
    %c0_7 = arith.constant 0 : index
    %5 = vector.load %arg3[%c0_5, %c0_6, %c0_7] : memref<1x1x256xf32, #tpu.memory_space<vmem>>, vector<1x1x256xf32>
    %6 = vector.shape_cast %5 : vector<1x1x256xf32> to vector<1x256xf32>
    %7 = vector.broadcast %6 : vector<1x256xf32> to vector<2x256xf32>
    %8 = arith.addf %4, %7 : vector<2x256xf32>
    %9 = math.tanh %8 : vector<2x256xf32>
    %10 = arith.truncf %9 : vector<2x256xf32> to vector<2x256xbf16>
    %c0_8 = arith.constant 0 : index
    %c0_9 = arith.constant 0 : index
    %c0_10 = arith.constant 0 : index
    %11 = vector.load %arg4[%c0_8, %c0_9, %c0_10] : memref<1x256x32xbf16, #tpu.memory_space<vmem>>, vector<1x256x32xbf16>
    %12 = vector.shape_cast %11 : vector<1x256x32xbf16> to vector<256x32xbf16>
    %cst_11 = arith.constant dense<0.000000e+00> : vector<2x32xf32>
    %13 = tpu.matmul %10, %12, %cst_11 {dimension_numbers = #tpu.dot_dimension_numbers<[1], [0], [0], [1], [0, 0, 1, 1], [], []>} : vector<2x256xbf16>, vector<256x32xbf16>, vector<2x32xf32> -> vector<2x32xf32>
    %c0_12 = arith.constant 0 : index
    %c0_13 = arith.constant 0 : index
    %c0_14 = arith.constant 0 : index
    %14 = vector.load %arg5[%c0_12, %c0_13, %c0_14] : memref<1x1x32xf32, #tpu.memory_space<vmem>>, vector<1x1x32xf32>
    %15 = vector.shape_cast %14 : vector<1x1x32xf32> to vector<1x32xf32>
    %16 = vector.broadcast %15 : vector<1x32xf32> to vector<2x32xf32>
    %17 = arith.addf %13, %16 : vector<2x32xf32>
    %c0_15 = arith.constant 0 : index
    %c0_16 = arith.constant 0 : index
    %c0_17 = arith.constant 0 : index
    %18 = vector.load %arg6[%c0_15, %c0_16, %c0_17] : memref<1x2x32xf32, #tpu.memory_space<vmem>>, vector<1x2x32xf32>
    %19 = vector.shape_cast %18 : vector<1x2x32xf32> to vector<2x32xf32>
    %20 = vector.shape_cast %17 : vector<2x32xf32> to vector<1x2x32xf32>
    tpu.vector_store %arg6[%c0_15, %c0_16, %c0_17], %20 {strides = array<i32>} : memref<1x2x32xf32, #tpu.memory_space<vmem>>, vector<1x2x32xf32>,
    return
  }
  func.func @transform_0(%arg0: i32) -> (i32, i32, i32) {
    %c0_i32 = arith.constant 0 : i32
    %c0_i32_0 = arith.constant 0 : i32
    %c0_i32_1 = arith.constant 0 : i32
    return %arg0, %c0_i32, %c0_i32_0 : i32, i32, i32
  }
  func.func @transform_1(%arg0: i32) -> (i32, i32, i32) {
    %c0_i32 = arith.constant 0 : i32
    %c0_i32_0 = arith.constant 0 : i32
    %c0_i32_1 = arith.constant 0 : i32
    return %arg0, %c0_i32, %c0_i32_0 : i32, i32, i32
  }
  func.func @transform_2(%arg0: i32) -> (i32, i32, i32) {
    %c0_i32 = arith.constant 0 : i32
    %c0_i32_0 = arith.constant 0 : i32
    %c0_i32_1 = arith.constant 0 : i32
    return %arg0, %c0_i32, %c0_i32_0 : i32, i32, i32
  }
  func.func @transform_3(%arg0: i32) -> (i32, i32, i32) {
    %c0_i32 = arith.constant 0 : i32
    %c0_i32_0 = arith.constant 0 : i32
    %c0_i32_1 = arith.constant 0 : i32
    return %arg0, %c0_i32, %c0_i32_0 : i32, i32, i32
  }
  func.func @transform_4(%arg0: i32) -> (i32, i32, i32) {
    %c0_i32 = arith.constant 0 : i32
    %c0_i32_0 = arith.constant 0 : i32
    %c0_i32_1 = arith.constant 0 : i32
    return %arg0, %c0_i32, %c0_i32_0 : i32, i32, i32
  }
  func.func @transform_5(%arg0: i32) -> (i32, i32, i32) {
    %c0_i32 = arith.constant 0 : i32
    %c0_i32_0 = arith.constant 0 : i32
    %c0_i32_1 = arith.constant 0 : i32
    return %arg0, %c0_i32, %c0_i32_0 : i32, i32, i32
  }
}

module attributes {stable_mosaic.version = 11 : i64} {
  func.func @_fused_mlp_kernel(%arg0: i32, %arg1: memref<8x64xbf16, #tpu.memory_space<vmem>>, %arg2: memref<1x64x32xbf16, #tpu.memory_space<vmem>>, %arg3: memref<1x1x32xf32, #tpu.memory_space<vmem>>, %arg4: memref<1x32x32xbf16, #tpu.memory_space<vmem>>, %arg5: memref<1x1x32xf32, #tpu.memory_space<vmem>>, %arg6: memref<1x32x4xbf16, #tpu.memory_space<vmem>>, %arg7: memref<1x1x4xf32, #tpu.memory_space<vmem>>, %arg8: memref<1x8x4xf32, #tpu.memory_space<vmem>>) attributes {dimension_semantics = [#tpu.dimension_semantics<parallel>], iteration_bounds = array<i64: 2>, scalar_prefetch = 0 : i64, scratch_operands = 0 : i64, tpu.core_type = #tpu.core_type<tc>, window_params = [{pipeline_mode = #tpu.pipeline_mode<synchronous>, transform_indices = @transform_0, window_bounds = array<i64: 8, 64>}, {transform_indices = @transform_1, window_bounds = array<i64: 1, 64, 32>}, {transform_indices = @transform_2, window_bounds = array<i64: 1, 1, 32>}, {transform_indices = @transform_3, window_bounds = array<i64: 1, 32, 32>}, {transform_indices = @transform_4, window_bounds = array<i64: 1, 1, 32>}, {transform_indices = @transform_5, window_bounds = array<i64: 1, 32, 4>}, {transform_indices = @transform_6, window_bounds = array<i64: 1, 1, 4>}, {transform_indices = @transform_7, window_bounds = array<i64: 1, 8, 4>}]} {
    %c0 = arith.constant 0 : index
    %c0_0 = arith.constant 0 : index
    %0 = vector.load %arg1[%c0, %c0_0] : memref<8x64xbf16, #tpu.memory_space<vmem>>, vector<8x64xbf16>
    %c0_1 = arith.constant 0 : index
    %c0_2 = arith.constant 0 : index
    %c0_3 = arith.constant 0 : index
    %1 = vector.load %arg2[%c0_1, %c0_2, %c0_3] : memref<1x64x32xbf16, #tpu.memory_space<vmem>>, vector<1x64x32xbf16>
    %2 = vector.shape_cast %1 : vector<1x64x32xbf16> to vector<64x32xbf16>
    %cst = arith.constant dense<0.000000e+00> : vector<8x32xf32>
    %3 = tpu.matmul %0, %2, %cst {dimension_numbers = #tpu.dot_dimension_numbers<[1], [0], [0], [1], [0, 0, 1, 1], [], []>} : vector<8x64xbf16>, vector<64x32xbf16>, vector<8x32xf32> -> vector<8x32xf32>
    %c0_4 = arith.constant 0 : index
    %c0_5 = arith.constant 0 : index
    %c0_6 = arith.constant 0 : index
    %4 = vector.load %arg3[%c0_4, %c0_5, %c0_6] : memref<1x1x32xf32, #tpu.memory_space<vmem>>, vector<1x1x32xf32>
    %5 = vector.shape_cast %4 : vector<1x1x32xf32> to vector<1x32xf32>
    %6 = vector.broadcast %5 : vector<1x32xf32> to vector<8x32xf32>
    %7 = arith.addf %3, %6 : vector<8x32xf32>
    %cst_7 = arith.constant 0.000000e+00 : f32
    %8 = vector.broadcast %cst_7 : f32 to vector<8x32xf32>
    %9 = arith.cmpf ogt, %7, %8 : vector<8x32xf32>
    %cst_8 = arith.constant 0.000000e+00 : f32
    %10 = vector.broadcast %cst_8 : f32 to vector<8x32xf32>
    %11 = arith.minimumf %7, %10 : vector<8x32xf32>
    %12 = math.exp %11 : vector<8x32xf32>
    %cst_9 = arith.constant 1.000000e+00 : f32
    %13 = vector.broadcast %cst_9 : f32 to vector<8x32xf32>
    %14 = arith.subf %12, %13 : vector<8x32xf32>
    %15 = arith.select %9, %7, %14 : vector<8x32xi1>, vector<8x32xf32>
    %16 = arith.truncf %15 : vector<8x32xf32> to vector<8x32xbf16>
    %c0_10 = arith.constant 0 : index
    %c0_11 = arith.constant 0 : index
    %c0_12 = arith.constant 0 : index
    %17 = vector.load %arg4[%c0_10, %c0_11, %c0_12] : memref<1x32x32xbf16, #tpu.memory_space<vmem>>, vector<1x32x32xbf16>
    %18 = vector.shape_cast %17 : vector<1x32x32xbf16> to vector<32x32xbf16>
    %cst_13 = arith.constant dense<0.000000e+00> : vector<8x32xf32>
    %19 = tpu.matmul %16, %18, %cst_13 {dimension_numbers = #tpu.dot_dimension_numbers<[1], [0], [0], [1], [0, 0, 1, 1], [], []>} : vector<8x32xbf16>, vector<32x32xbf16>, vector<8x32xf32> -> vector<8x32xf32>
    %c0_14 = arith.constant 0 : index
    %c0_15 = arith.constant 0 : index
    %c0_16 = arith.constant 0 : index
    %20 = vector.load %arg5[%c0_14, %c0_15, %c0_16] : memref<1x1x32xf32, #tpu.memory_space<vmem>>, vector<1x1x32xf32>
    %21 = vector.shape_cast %20 : vector<1x1x32xf32> to vector<1x32xf32>
    %22 = vector.broadcast %21 : vector<1x32xf32> to vector<8x32xf32>
    %23 = arith.addf %19, %22 : vector<8x32xf32>
    %cst_17 = arith.constant 0.000000e+00 : f32
    %24 = vector.broadcast %cst_17 : f32 to vector<8x32xf32>
    %25 = arith.cmpf ogt, %23, %24 : vector<8x32xf32>
    %cst_18 = arith.constant 0.000000e+00 : f32
    %26 = vector.broadcast %cst_18 : f32 to vector<8x32xf32>
    %27 = arith.minimumf %23, %26 : vector<8x32xf32>
    %28 = math.exp %27 : vector<8x32xf32>
    %cst_19 = arith.constant 1.000000e+00 : f32
    %29 = vector.broadcast %cst_19 : f32 to vector<8x32xf32>
    %30 = arith.subf %28, %29 : vector<8x32xf32>
    %31 = arith.select %25, %23, %30 : vector<8x32xi1>, vector<8x32xf32>
    %32 = arith.truncf %31 : vector<8x32xf32> to vector<8x32xbf16>
    %c0_20 = arith.constant 0 : index
    %c0_21 = arith.constant 0 : index
    %c0_22 = arith.constant 0 : index
    %33 = vector.load %arg6[%c0_20, %c0_21, %c0_22] : memref<1x32x4xbf16, #tpu.memory_space<vmem>>, vector<1x32x4xbf16>
    %34 = vector.shape_cast %33 : vector<1x32x4xbf16> to vector<32x4xbf16>
    %cst_23 = arith.constant dense<0.000000e+00> : vector<8x4xf32>
    %35 = tpu.matmul %32, %34, %cst_23 {dimension_numbers = #tpu.dot_dimension_numbers<[1], [0], [0], [1], [0, 0, 1, 1], [], []>} : vector<8x32xbf16>, vector<32x4xbf16>, vector<8x4xf32> -> vector<8x4xf32>
    %c0_24 = arith.constant 0 : index
    %c0_25 = arith.constant 0 : index
    %c0_26 = arith.constant 0 : index
    %36 = vector.load %arg7[%c0_24, %c0_25, %c0_26] : memref<1x1x4xf32, #tpu.memory_space<vmem>>, vector<1x1x4xf32>
    %37 = vector.shape_cast %36 : vector<1x1x4xf32> to vector<1x4xf32>
    %38 = vector.broadcast %37 : vector<1x4xf32> to vector<8x4xf32>
    %39 = arith.addf %35, %38 : vector<8x4xf32>
    %c0_27 = arith.constant 0 : index
    %c0_28 = arith.constant 0 : index
    %c0_29 = arith.constant 0 : index
    %40 = vector.load %arg8[%c0_27, %c0_28, %c0_29] : memref<1x8x4xf32, #tpu.memory_space<vmem>>, vector<1x8x4xf32>
    %41 = vector.shape_cast %40 : vector<1x8x4xf32> to vector<8x4xf32>
    %42 = vector.shape_cast %39 : vector<8x4xf32> to vector<1x8x4xf32>
    tpu.vector_store %arg8[%c0_27, %c0_28, %c0_29], %42 {strides = array<i32>} : memref<1x8x4xf32, #tpu.memory_space<vmem>>, vector<1x8x4xf32>,
    return
  }
  func.func @transform_0(%arg0: i32) -> (i32, i32) {
    %c0_i32 = arith.constant 0 : i32
    %c0_i32_0 = arith.constant 0 : i32
    %c0_i32_1 = arith.constant 0 : i32
    return %c0_i32, %c0_i32_0 : i32, i32
  }
  func.func @transform_1(%arg0: i32) -> (i32, i32, i32) {
    %c0_i32 = arith.constant 0 : i32
    %c0_i32_0 = arith.constant 0 : i32
    %c0_i32_1 = arith.constant 0 : i32
    return %arg0, %c0_i32, %c0_i32_0 : i32, i32, i32
  }
  func.func @transform_2(%arg0: i32) -> (i32, i32, i32) {
    %c0_i32 = arith.constant 0 : i32
    %c0_i32_0 = arith.constant 0 : i32
    %c0_i32_1 = arith.constant 0 : i32
    return %arg0, %c0_i32, %c0_i32_0 : i32, i32, i32
  }
  func.func @transform_3(%arg0: i32) -> (i32, i32, i32) {
    %c0_i32 = arith.constant 0 : i32
    %c0_i32_0 = arith.constant 0 : i32
    %c0_i32_1 = arith.constant 0 : i32
    return %arg0, %c0_i32, %c0_i32_0 : i32, i32, i32
  }
  func.func @transform_4(%arg0: i32) -> (i32, i32, i32) {
    %c0_i32 = arith.constant 0 : i32
    %c0_i32_0 = arith.constant 0 : i32
    %c0_i32_1 = arith.constant 0 : i32
    return %arg0, %c0_i32, %c0_i32_0 : i32, i32, i32
  }
  func.func @transform_5(%arg0: i32) -> (i32, i32, i32) {
    %c0_i32 = arith.constant 0 : i32
    %c0_i32_0 = arith.constant 0 : i32
    %c0_i32_1 = arith.constant 0 : i32
    return %arg0, %c0_i32, %c0_i32_0 : i32, i32, i32
  }
  func.func @transform_6(%arg0: i32) -> (i32, i32, i32) {
    %c0_i32 = arith.constant 0 : i32
    %c0_i32_0 = arith.constant 0 : i32
    %c0_i32_1 = arith.constant 0 : i32
    return %arg0, %c0_i32, %c0_i32_0 : i32, i32, i32
  }
  func.func @transform_7(%arg0: i32) -> (i32, i32, i32) {
    %c0_i32 = arith.constant 0 : i32
    %c0_i32_0 = arith.constant 0 : i32
    %c0_i32_1 = arith.constant 0 : i32
    return %arg0, %c0_i32, %c0_i32_0 : i32, i32, i32
  }
}

module attributes {stable_mosaic.version = 11 : i64} {
  func.func @_fused_mlp_kernel(%arg0: i32, %arg1: memref<1x2x34xbf16, #tpu.memory_space<vmem>>, %arg2: memref<1x34x32xbf16, #tpu.memory_space<vmem>>, %arg3: memref<1x1x32xf32, #tpu.memory_space<vmem>>, %arg4: memref<1x32x32xbf16, #tpu.memory_space<vmem>>, %arg5: memref<1x1x32xf32, #tpu.memory_space<vmem>>, %arg6: memref<1x32x32xbf16, #tpu.memory_space<vmem>>, %arg7: memref<1x1x32xf32, #tpu.memory_space<vmem>>, %arg8: memref<1x2x32xf32, #tpu.memory_space<vmem>>) attributes {dimension_semantics = [#tpu.dimension_semantics<parallel>], iteration_bounds = array<i64: 4>, scalar_prefetch = 0 : i64, scratch_operands = 0 : i64, tpu.core_type = #tpu.core_type<tc>, window_params = [{transform_indices = @transform_0, window_bounds = array<i64: 1, 2, 34>}, {transform_indices = @transform_1, window_bounds = array<i64: 1, 34, 32>}, {transform_indices = @transform_2, window_bounds = array<i64: 1, 1, 32>}, {transform_indices = @transform_3, window_bounds = array<i64: 1, 32, 32>}, {transform_indices = @transform_4, window_bounds = array<i64: 1, 1, 32>}, {transform_indices = @transform_5, window_bounds = array<i64: 1, 32, 32>}, {transform_indices = @transform_6, window_bounds = array<i64: 1, 1, 32>}, {transform_indices = @transform_7, window_bounds = array<i64: 1, 2, 32>}]} {
    %c0 = arith.constant 0 : index
    %c0_0 = arith.constant 0 : index
    %c0_1 = arith.constant 0 : index
    %0 = vector.load %arg1[%c0, %c0_0, %c0_1] : memref<1x2x34xbf16, #tpu.memory_space<vmem>>, vector<1x2x34xbf16>
    %1 = vector.shape_cast %0 : vector<1x2x34xbf16> to vector<2x34xbf16>
    %c0_2 = arith.constant 0 : index
    %c0_3 = arith.constant 0 : index
    %c0_4 = arith.constant 0 : index
    %2 = vector.load %arg2[%c0_2, %c0_3, %c0_4] : memref<1x34x32xbf16, #tpu.memory_space<vmem>>, vector<1x34x32xbf16>
    %3 = vector.shape_cast %2 : vector<1x34x32xbf16> to vector<34x32xbf16>
    %cst = arith.constant dense<0.000000e+00> : vector<2x32xf32>
    %4 = tpu.matmul %1, %3, %cst {dimension_numbers = #tpu.dot_dimension_numbers<[1], [0], [0], [1], [0, 0, 1, 1], [], []>} : vector<2x34xbf16>, vector<34x32xbf16>, vector<2x32xf32> -> vector<2x32xf32>
    %c0_5 = arith.constant 0 : index
    %c0_6 = arith.constant 0 : index
    %c0_7 = arith.constant 0 : index
    %5 = vector.load %arg3[%c0_5, %c0_6, %c0_7] : memref<1x1x32xf32, #tpu.memory_space<vmem>>, vector<1x1x32xf32>
    %6 = vector.shape_cast %5 : vector<1x1x32xf32> to vector<1x32xf32>
    %7 = vector.broadcast %6 : vector<1x32xf32> to vector<2x32xf32>
    %8 = arith.addf %4, %7 : vector<2x32xf32>
    %cst_8 = arith.constant 0.000000e+00 : f32
    %9 = vector.broadcast %cst_8 : f32 to vector<2x32xf32>
    %10 = arith.cmpf ogt, %8, %9 : vector<2x32xf32>
    %cst_9 = arith.constant 0.000000e+00 : f32
    %11 = vector.broadcast %cst_9 : f32 to vector<2x32xf32>
    %12 = arith.minimumf %8, %11 : vector<2x32xf32>
    %13 = math.exp %12 : vector<2x32xf32>
    %cst_10 = arith.constant 1.000000e+00 : f32
    %14 = vector.broadcast %cst_10 : f32 to vector<2x32xf32>
    %15 = arith.subf %13, %14 : vector<2x32xf32>
    %16 = arith.select %10, %8, %15 : vector<2x32xi1>, vector<2x32xf32>
    %17 = arith.truncf %16 : vector<2x32xf32> to vector<2x32xbf16>
    %c0_11 = arith.constant 0 : index
    %c0_12 = arith.constant 0 : index
    %c0_13 = arith.constant 0 : index
    %18 = vector.load %arg4[%c0_11, %c0_12, %c0_13] : memref<1x32x32xbf16, #tpu.memory_space<vmem>>, vector<1x32x32xbf16>
    %19 = vector.shape_cast %18 : vector<1x32x32xbf16> to vector<32x32xbf16>
    %cst_14 = arith.constant dense<0.000000e+00> : vector<2x32xf32>
    %20 = tpu.matmul %17, %19, %cst_14 {dimension_numbers = #tpu.dot_dimension_numbers<[1], [0], [0], [1], [0, 0, 1, 1], [], []>} : vector<2x32xbf16>, vector<32x32xbf16>, vector<2x32xf32> -> vector<2x32xf32>
    %c0_15 = arith.constant 0 : index
    %c0_16 = arith.constant 0 : index
    %c0_17 = arith.constant 0 : index
    %21 = vector.load %arg5[%c0_15, %c0_16, %c0_17] : memref<1x1x32xf32, #tpu.memory_space<vmem>>, vector<1x1x32xf32>
    %22 = vector.shape_cast %21 : vector<1x1x32xf32> to vector<1x32xf32>
    %23 = vector.broadcast %22 : vector<1x32xf32> to vector<2x32xf32>
    %24 = arith.addf %20, %23 : vector<2x32xf32>
    %cst_18 = arith.constant 0.000000e+00 : f32
    %25 = vector.broadcast %cst_18 : f32 to vector<2x32xf32>
    %26 = arith.cmpf ogt, %24, %25 : vector<2x32xf32>
    %cst_19 = arith.constant 0.000000e+00 : f32
    %27 = vector.broadcast %cst_19 : f32 to vector<2x32xf32>
    %28 = arith.minimumf %24, %27 : vector<2x32xf32>
    %29 = math.exp %28 : vector<2x32xf32>
    %cst_20 = arith.constant 1.000000e+00 : f32
    %30 = vector.broadcast %cst_20 : f32 to vector<2x32xf32>
    %31 = arith.subf %29, %30 : vector<2x32xf32>
    %32 = arith.select %26, %24, %31 : vector<2x32xi1>, vector<2x32xf32>
    %33 = arith.truncf %32 : vector<2x32xf32> to vector<2x32xbf16>
    %c0_21 = arith.constant 0 : index
    %c0_22 = arith.constant 0 : index
    %c0_23 = arith.constant 0 : index
    %34 = vector.load %arg6[%c0_21, %c0_22, %c0_23] : memref<1x32x32xbf16, #tpu.memory_space<vmem>>, vector<1x32x32xbf16>
    %35 = vector.shape_cast %34 : vector<1x32x32xbf16> to vector<32x32xbf16>
    %cst_24 = arith.constant dense<0.000000e+00> : vector<2x32xf32>
    %36 = tpu.matmul %33, %35, %cst_24 {dimension_numbers = #tpu.dot_dimension_numbers<[1], [0], [0], [1], [0, 0, 1, 1], [], []>} : vector<2x32xbf16>, vector<32x32xbf16>, vector<2x32xf32> -> vector<2x32xf32>
    %c0_25 = arith.constant 0 : index
    %c0_26 = arith.constant 0 : index
    %c0_27 = arith.constant 0 : index
    %37 = vector.load %arg7[%c0_25, %c0_26, %c0_27] : memref<1x1x32xf32, #tpu.memory_space<vmem>>, vector<1x1x32xf32>
    %38 = vector.shape_cast %37 : vector<1x1x32xf32> to vector<1x32xf32>
    %39 = vector.broadcast %38 : vector<1x32xf32> to vector<2x32xf32>
    %40 = arith.addf %36, %39 : vector<2x32xf32>
    %c0_28 = arith.constant 0 : index
    %c0_29 = arith.constant 0 : index
    %c0_30 = arith.constant 0 : index
    %41 = vector.load %arg8[%c0_28, %c0_29, %c0_30] : memref<1x2x32xf32, #tpu.memory_space<vmem>>, vector<1x2x32xf32>
    %42 = vector.shape_cast %41 : vector<1x2x32xf32> to vector<2x32xf32>
    %43 = vector.shape_cast %40 : vector<2x32xf32> to vector<1x2x32xf32>
    tpu.vector_store %arg8[%c0_28, %c0_29, %c0_30], %43 {strides = array<i32>} : memref<1x2x32xf32, #tpu.memory_space<vmem>>, vector<1x2x32xf32>,
    return
  }
  func.func @transform_0(%arg0: i32) -> (i32, i32, i32) {
    %c0_i32 = arith.constant 0 : i32
    %c0_i32_0 = arith.constant 0 : i32
    %c0_i32_1 = arith.constant 0 : i32
    return %arg0, %c0_i32, %c0_i32_0 : i32, i32, i32
  }
  func.func @transform_1(%arg0: i32) -> (i32, i32, i32) {
    %c0_i32 = arith.constant 0 : i32
    %c0_i32_0 = arith.constant 0 : i32
    %c0_i32_1 = arith.constant 0 : i32
    return %arg0, %c0_i32, %c0_i32_0 : i32, i32, i32
  }
  func.func @transform_2(%arg0: i32) -> (i32, i32, i32) {
    %c0_i32 = arith.constant 0 : i32
    %c0_i32_0 = arith.constant 0 : i32
    %c0_i32_1 = arith.constant 0 : i32
    return %arg0, %c0_i32, %c0_i32_0 : i32, i32, i32
  }
  func.func @transform_3(%arg0: i32) -> (i32, i32, i32) {
    %c0_i32 = arith.constant 0 : i32
    %c0_i32_0 = arith.constant 0 : i32
    %c0_i32_1 = arith.constant 0 : i32
    return %arg0, %c0_i32, %c0_i32_0 : i32, i32, i32
  }
  func.func @transform_4(%arg0: i32) -> (i32, i32, i32) {
    %c0_i32 = arith.constant 0 : i32
    %c0_i32_0 = arith.constant 0 : i32
    %c0_i32_1 = arith.constant 0 : i32
    return %arg0, %c0_i32, %c0_i32_0 : i32, i32, i32
  }
  func.func @transform_5(%arg0: i32) -> (i32, i32, i32) {
    %c0_i32 = arith.constant 0 : i32
    %c0_i32_0 = arith.constant 0 : i32
    %c0_i32_1 = arith.constant 0 : i32
    return %arg0, %c0_i32, %c0_i32_0 : i32, i32, i32
  }
  func.func @transform_6(%arg0: i32) -> (i32, i32, i32) {
    %c0_i32 = arith.constant 0 : i32
    %c0_i32_0 = arith.constant 0 : i32
    %c0_i32_1 = arith.constant 0 : i32
    return %arg0, %c0_i32, %c0_i32_0 : i32, i32, i32
  }
  func.func @transform_7(%arg0: i32) -> (i32, i32, i32) {
    %c0_i32 = arith.constant 0 : i32
    %c0_i32_0 = arith.constant 0 : i32
    %c0_i32_1 = arith.constant 0 : i32
    return %arg0, %c0_i32, %c0_i32_0 : i32, i32, i32
  }
}

module attributes {stable_mosaic.version = 11 : i64} {
  func.func @_fused_mlp_kernel(%arg0: i32, %arg1: memref<4x64xbf16, #tpu.memory_space<vmem>>, %arg2: memref<1x64x256xbf16, #tpu.memory_space<vmem>>, %arg3: memref<1x1x256xf32, #tpu.memory_space<vmem>>, %arg4: memref<1x256x2592xbf16, #tpu.memory_space<vmem>>, %arg5: memref<1x1x2592xf32, #tpu.memory_space<vmem>>, %arg6: memref<1x4x2592xf32, #tpu.memory_space<vmem>>) attributes {dimension_semantics = [#tpu.dimension_semantics<parallel>], iteration_bounds = array<i64: 1>, scalar_prefetch = 0 : i64, scratch_operands = 0 : i64, tpu.core_type = #tpu.core_type<tc>, window_params = [{pipeline_mode = #tpu.pipeline_mode<synchronous>, transform_indices = @transform_0, window_bounds = array<i64: 4, 64>}, {transform_indices = @transform_1, window_bounds = array<i64: 1, 64, 256>}, {transform_indices = @transform_2, window_bounds = array<i64: 1, 1, 256>}, {transform_indices = @transform_3, window_bounds = array<i64: 1, 256, 2592>}, {transform_indices = @transform_4, window_bounds = array<i64: 1, 1, 2592>}, {transform_indices = @transform_5, window_bounds = array<i64: 1, 4, 2592>}]} {
    %c0 = arith.constant 0 : index
    %c0_0 = arith.constant 0 : index
    %0 = vector.load %arg1[%c0, %c0_0] : memref<4x64xbf16, #tpu.memory_space<vmem>>, vector<4x64xbf16>
    %c0_1 = arith.constant 0 : index
    %c0_2 = arith.constant 0 : index
    %c0_3 = arith.constant 0 : index
    %1 = vector.load %arg2[%c0_1, %c0_2, %c0_3] : memref<1x64x256xbf16, #tpu.memory_space<vmem>>, vector<1x64x256xbf16>
    %2 = vector.shape_cast %1 : vector<1x64x256xbf16> to vector<64x256xbf16>
    %cst = arith.constant dense<0.000000e+00> : vector<4x256xf32>
    %3 = tpu.matmul %0, %2, %cst {dimension_numbers = #tpu.dot_dimension_numbers<[1], [0], [0], [1], [0, 0, 1, 1], [], []>} : vector<4x64xbf16>, vector<64x256xbf16>, vector<4x256xf32> -> vector<4x256xf32>
    %c0_4 = arith.constant 0 : index
    %c0_5 = arith.constant 0 : index
    %c0_6 = arith.constant 0 : index
    %4 = vector.load %arg3[%c0_4, %c0_5, %c0_6] : memref<1x1x256xf32, #tpu.memory_space<vmem>>, vector<1x1x256xf32>
    %5 = vector.shape_cast %4 : vector<1x1x256xf32> to vector<1x256xf32>
    %6 = vector.broadcast %5 : vector<1x256xf32> to vector<4x256xf32>
    %7 = arith.addf %3, %6 : vector<4x256xf32>
    %8 = math.tanh %7 : vector<4x256xf32>
    %9 = arith.truncf %8 : vector<4x256xf32> to vector<4x256xbf16>
    %c0_7 = arith.constant 0 : index
    %c0_8 = arith.constant 0 : index
    %c0_9 = arith.constant 0 : index
    %10 = vector.load %arg4[%c0_7, %c0_8, %c0_9] : memref<1x256x2592xbf16, #tpu.memory_space<vmem>>, vector<1x256x2592xbf16>
    %11 = vector.shape_cast %10 : vector<1x256x2592xbf16> to vector<256x2592xbf16>
    %cst_10 = arith.constant dense<0.000000e+00> : vector<4x2592xf32>
    %12 = tpu.matmul %9, %11, %cst_10 {dimension_numbers = #tpu.dot_dimension_numbers<[1], [0], [0], [1], [0, 0, 1, 1], [], []>} : vector<4x256xbf16>, vector<256x2592xbf16>, vector<4x2592xf32> -> vector<4x2592xf32>
    %c0_11 = arith.constant 0 : index
    %c0_12 = arith.constant 0 : index
    %c0_13 = arith.constant 0 : index
    %13 = vector.load %arg5[%c0_11, %c0_12, %c0_13] : memref<1x1x2592xf32, #tpu.memory_space<vmem>>, vector<1x1x2592xf32>
    %14 = vector.shape_cast %13 : vector<1x1x2592xf32> to vector<1x2592xf32>
    %15 = vector.broadcast %14 : vector<1x2592xf32> to vector<4x2592xf32>
    %16 = arith.addf %12, %15 : vector<4x2592xf32>
    %cst_14 = arith.constant 0.000000e+00 : f32
    %17 = vector.broadcast %cst_14 : f32 to vector<4x2592xf32>
    %18 = arith.maximumf %16, %17 : vector<4x2592xf32>
    %c0_15 = arith.constant 0 : index
    %c0_16 = arith.constant 0 : index
    %c0_17 = arith.constant 0 : index
    %19 = vector.load %arg6[%c0_15, %c0_16, %c0_17] : memref<1x4x2592xf32, #tpu.memory_space<vmem>>, vector<1x4x2592xf32>
    %20 = vector.shape_cast %19 : vector<1x4x2592xf32> to vector<4x2592xf32>
    %21 = vector.shape_cast %18 : vector<4x2592xf32> to vector<1x4x2592xf32>
    tpu.vector_store %arg6[%c0_15, %c0_16, %c0_17], %21 {strides = array<i32>} : memref<1x4x2592xf32, #tpu.memory_space<vmem>>, vector<1x4x2592xf32>,
    return
  }
  func.func @transform_0(%arg0: i32) -> (i32, i32) {
    %c0_i32 = arith.constant 0 : i32
    %c0_i32_0 = arith.constant 0 : i32
    %c0_i32_1 = arith.constant 0 : i32
    return %c0_i32, %c0_i32_0 : i32, i32
  }
  func.func @transform_1(%arg0: i32) -> (i32, i32, i32) {
    %c0_i32 = arith.constant 0 : i32
    %c0_i32_0 = arith.constant 0 : i32
    %c0_i32_1 = arith.constant 0 : i32
    return %arg0, %c0_i32, %c0_i32_0 : i32, i32, i32
  }
  func.func @transform_2(%arg0: i32) -> (i32, i32, i32) {
    %c0_i32 = arith.constant 0 : i32
    %c0_i32_0 = arith.constant 0 : i32
    %c0_i32_1 = arith.constant 0 : i32
    return %arg0, %c0_i32, %c0_i32_0 : i32, i32, i32
  }
  func.func @transform_3(%arg0: i32) -> (i32, i32, i32) {
    %c0_i32 = arith.constant 0 : i32
    %c0_i32_0 = arith.constant 0 : i32
    %c0_i32_1 = arith.constant 0 : i32
    return %arg0, %c0_i32, %c0_i32_0 : i32, i32, i32
  }
  func.func @transform_4(%arg0: i32) -> (i32, i32, i32) {
    %c0_i32 = arith.constant 0 : i32
    %c0_i32_0 = arith.constant 0 : i32
    %c0_i32_1 = arith.constant 0 : i32
    return %arg0, %c0_i32, %c0_i32_0 : i32, i32, i32
  }
  func.func @transform_5(%arg0: i32) -> (i32, i32, i32) {
    %c0_i32 = arith.constant 0 : i32
    %c0_i32_0 = arith.constant 0 : i32
    %c0_i32_1 = arith.constant 0 : i32
    return %arg0, %c0_i32, %c0_i32_0 : i32, i32, i32
  }
}

module attributes {stable_mosaic.version = 11 : i64} {
  func.func @_gemm_kernel(%arg0: i32, %arg1: memref<324x32xbf16, #tpu.memory_space<vmem>>, %arg2: memref<32x256xbf16, #tpu.memory_space<vmem>>, %arg3: memref<324x256xf32, #tpu.memory_space<vmem>>) attributes {dimension_semantics = [#tpu.dimension_semantics<parallel>], iteration_bounds = array<i64: 1>, scalar_prefetch = 0 : i64, scratch_operands = 0 : i64, tpu.core_type = #tpu.core_type<tc>, window_params = [{transform_indices = @transform_0, window_bounds = array<i64: 324, 32>}, {pipeline_mode = #tpu.pipeline_mode<synchronous>, transform_indices = @transform_1, window_bounds = array<i64: 32, 256>}, {transform_indices = @transform_2, window_bounds = array<i64: 324, 256>}]} {
    %c0 = arith.constant 0 : index
    %c0_0 = arith.constant 0 : index
    %0 = vector.load %arg1[%c0, %c0_0] : memref<324x32xbf16, #tpu.memory_space<vmem>>, vector<324x32xbf16>
    %c0_1 = arith.constant 0 : index
    %c0_2 = arith.constant 0 : index
    %1 = vector.load %arg2[%c0_1, %c0_2] : memref<32x256xbf16, #tpu.memory_space<vmem>>, vector<32x256xbf16>
    %cst = arith.constant dense<0.000000e+00> : vector<324x256xf32>
    %2 = tpu.matmul %0, %1, %cst {dimension_numbers = #tpu.dot_dimension_numbers<[1], [0], [0], [1], [0, 0, 1, 1], [], []>} : vector<324x32xbf16>, vector<32x256xbf16>, vector<324x256xf32> -> vector<324x256xf32>
    %c0_3 = arith.constant 0 : index
    %c0_4 = arith.constant 0 : index
    %3 = vector.load %arg3[%c0_3, %c0_4] : memref<324x256xf32, #tpu.memory_space<vmem>>, vector<324x256xf32>
    tpu.vector_store %arg3[%c0_3, %c0_4], %2 {strides = array<i32>} : memref<324x256xf32, #tpu.memory_space<vmem>>, vector<324x256xf32>,
    return
  }
  func.func @transform_0(%arg0: i32) -> (i32, i32) {
    %c0_i32 = arith.constant 0 : i32
    %c0_i32_0 = arith.constant 0 : i32
    return %arg0, %c0_i32 : i32, i32
  }
  func.func @transform_1(%arg0: i32) -> (i32, i32) {
    %c0_i32 = arith.constant 0 : i32
    %c0_i32_0 = arith.constant 0 : i32
    %c0_i32_1 = arith.constant 0 : i32
    return %c0_i32, %c0_i32_0 : i32, i32
  }
  func.func @transform_2(%arg0: i32) -> (i32, i32) {
    %c0_i32 = arith.constant 0 : i32
    %c0_i32_0 = arith.constant 0 : i32
    return %arg0, %c0_i32 : i32, i32
  }
}

module attributes {stable_mosaic.version = 11 : i64} {
  func.func @_gemm_kernel(%arg0: i32, %arg1: memref<800x16xbf16, #tpu.memory_space<vmem>>, %arg2: memref<16x192xbf16, #tpu.memory_space<vmem>>, %arg3: memref<800x192xf32, #tpu.memory_space<vmem>>) attributes {dimension_semantics = [#tpu.dimension_semantics<parallel>], iteration_bounds = array<i64: 2>, scalar_prefetch = 0 : i64, scratch_operands = 0 : i64, tpu.core_type = #tpu.core_type<tc>, window_params = [{transform_indices = @transform_0, window_bounds = array<i64: 800, 16>}, {pipeline_mode = #tpu.pipeline_mode<synchronous>, transform_indices = @transform_1, window_bounds = array<i64: 16, 192>}, {transform_indices = @transform_2, window_bounds = array<i64: 800, 192>}]} {
    %c0 = arith.constant 0 : index
    %c0_0 = arith.constant 0 : index
    %0 = vector.load %arg1[%c0, %c0_0] : memref<800x16xbf16, #tpu.memory_space<vmem>>, vector<800x16xbf16>
    %c0_1 = arith.constant 0 : index
    %c0_2 = arith.constant 0 : index
    %1 = vector.load %arg2[%c0_1, %c0_2] : memref<16x192xbf16, #tpu.memory_space<vmem>>, vector<16x192xbf16>
    %cst = arith.constant dense<0.000000e+00> : vector<800x192xf32>
    %2 = tpu.matmul %0, %1, %cst {dimension_numbers = #tpu.dot_dimension_numbers<[1], [0], [0], [1], [0, 0, 1, 1], [], []>} : vector<800x16xbf16>, vector<16x192xbf16>, vector<800x192xf32> -> vector<800x192xf32>
    %c0_3 = arith.constant 0 : index
    %c0_4 = arith.constant 0 : index
    %3 = vector.load %arg3[%c0_3, %c0_4] : memref<800x192xf32, #tpu.memory_space<vmem>>, vector<800x192xf32>
    tpu.vector_store %arg3[%c0_3, %c0_4], %2 {strides = array<i32>} : memref<800x192xf32, #tpu.memory_space<vmem>>, vector<800x192xf32>,
    return
  }
  func.func @transform_0(%arg0: i32) -> (i32, i32) {
    %c0_i32 = arith.constant 0 : i32
    %c0_i32_0 = arith.constant 0 : i32
    return %arg0, %c0_i32 : i32, i32
  }
  func.func @transform_1(%arg0: i32) -> (i32, i32) {
    %c0_i32 = arith.constant 0 : i32
    %c0_i32_0 = arith.constant 0 : i32
    %c0_i32_1 = arith.constant 0 : i32
    return %c0_i32, %c0_i32_0 : i32, i32
  }
  func.func @transform_2(%arg0: i32) -> (i32, i32) {
    %c0_i32 = arith.constant 0 : i32
    %c0_i32_0 = arith.constant 0 : i32
    return %arg0, %c0_i32 : i32, i32
  }
}

module attributes {stable_mosaic.version = 11 : i64} {
  func.func @_cmajor_gemm_kernel(%arg0: i32, %arg1: memref<16x192xbf16, #tpu.memory_space<vmem>>, %arg2: memref<1x192x400xbf16, #tpu.memory_space<vmem>>, %arg3: memref<16x1xf32, #tpu.memory_space<vmem>>, %arg4: memref<1x16x400xf32, #tpu.memory_space<vmem>>) attributes {dimension_semantics = [#tpu.dimension_semantics<parallel>], iteration_bounds = array<i64: 2>, scalar_prefetch = 0 : i64, scratch_operands = 0 : i64, tpu.core_type = #tpu.core_type<tc>, window_params = [{pipeline_mode = #tpu.pipeline_mode<synchronous>, transform_indices = @transform_0, window_bounds = array<i64: 16, 192>}, {transform_indices = @transform_1, window_bounds = array<i64: 1, 192, 400>}, {pipeline_mode = #tpu.pipeline_mode<synchronous>, transform_indices = @transform_2, window_bounds = array<i64: 16, 1>}, {transform_indices = @transform_3, window_bounds = array<i64: 1, 16, 400>}]} {
    %c0 = arith.constant 0 : index
    %c0_0 = arith.constant 0 : index
    %0 = vector.load %arg1[%c0, %c0_0] : memref<16x192xbf16, #tpu.memory_space<vmem>>, vector<16x192xbf16>
    %c0_1 = arith.constant 0 : index
    %c0_2 = arith.constant 0 : index
    %c0_3 = arith.constant 0 : index
    %1 = vector.load %arg2[%c0_1, %c0_2, %c0_3] : memref<1x192x400xbf16, #tpu.memory_space<vmem>>, vector<1x192x400xbf16>
    %2 = vector.shape_cast %1 : vector<1x192x400xbf16> to vector<192x400xbf16>
    %cst = arith.constant dense<0.000000e+00> : vector<16x400xf32>
    %3 = tpu.matmul %0, %2, %cst {dimension_numbers = #tpu.dot_dimension_numbers<[1], [0], [0], [1], [0, 0, 1, 1], [], []>} : vector<16x192xbf16>, vector<192x400xbf16>, vector<16x400xf32> -> vector<16x400xf32>
    %c0_4 = arith.constant 0 : index
    %c0_5 = arith.constant 0 : index
    %4 = vector.load %arg3[%c0_4, %c0_5] : memref<16x1xf32, #tpu.memory_space<vmem>>, vector<16x1xf32>
    %5 = vector.broadcast %4 : vector<16x1xf32> to vector<16x400xf32>
    %6 = arith.addf %3, %5 : vector<16x400xf32>
    %cst_6 = arith.constant 0.000000e+00 : f32
    %7 = vector.broadcast %cst_6 : f32 to vector<16x400xf32>
    %8 = arith.maximumf %6, %7 : vector<16x400xf32>
    %c0_7 = arith.constant 0 : index
    %c0_8 = arith.constant 0 : index
    %c0_9 = arith.constant 0 : index
    %9 = vector.load %arg4[%c0_7, %c0_8, %c0_9] : memref<1x16x400xf32, #tpu.memory_space<vmem>>, vector<1x16x400xf32>
    %10 = vector.shape_cast %9 : vector<1x16x400xf32> to vector<16x400xf32>
    %11 = vector.shape_cast %8 : vector<16x400xf32> to vector<1x16x400xf32>
    tpu.vector_store %arg4[%c0_7, %c0_8, %c0_9], %11 {strides = array<i32>} : memref<1x16x400xf32, #tpu.memory_space<vmem>>, vector<1x16x400xf32>,
    return
  }
  func.func @transform_0(%arg0: i32) -> (i32, i32) {
    %c0_i32 = arith.constant 0 : i32
    %c0_i32_0 = arith.constant 0 : i32
    %c0_i32_1 = arith.constant 0 : i32
    return %c0_i32, %c0_i32_0 : i32, i32
  }
  func.func @transform_1(%arg0: i32) -> (i32, i32, i32) {
    %c0_i32 = arith.constant 0 : i32
    %c0_i32_0 = arith.constant 0 : i32
    %c0_i32_1 = arith.constant 0 : i32
    return %arg0, %c0_i32, %c0_i32_0 : i32, i32, i32
  }
  func.func @transform_2(%arg0: i32) -> (i32, i32) {
    %c0_i32 = arith.constant 0 : i32
    %c0_i32_0 = arith.constant 0 : i32
    %c0_i32_1 = arith.constant 0 : i32
    return %c0_i32, %c0_i32_0 : i32, i32
  }
  func.func @transform_3(%arg0: i32) -> (i32, i32, i32) {
    %c0_i32 = arith.constant 0 : i32
    %c0_i32_0 = arith.constant 0 : i32
    %c0_i32_1 = arith.constant 0 : i32
    return %arg0, %c0_i32, %c0_i32_0 : i32, i32, i32
  }
}

module attributes {stable_mosaic.version = 11 : i64} {
  func.func @_sumsq_kernel(%arg0: i32, %arg1: memref<336x128xf32, #tpu.memory_space<vmem>>, %arg2: memref<336x128xf32, #tpu.memory_space<vmem>>, %arg3: memref<1x128xf32, #tpu.memory_space<vmem>>) attributes {dimension_semantics = [#tpu.dimension_semantics<arbitrary>], iteration_bounds = array<i64: 1>, scalar_prefetch = 0 : i64, scratch_operands = 0 : i64, tpu.core_type = #tpu.core_type<tc>, window_params = [{transform_indices = @transform_0, window_bounds = array<i64: 336, 128>}, {transform_indices = @transform_1, window_bounds = array<i64: 336, 128>}, {pipeline_mode = #tpu.pipeline_mode<synchronous>, transform_indices = @transform_2, window_bounds = array<i64: 1, 128>}]} {
    %c0_i32 = arith.constant 0 : i32
    %0 = arith.cmpi eq, %arg0, %c0_i32 : i32
    %1 = arith.extui %0 : i1 to i32
    %c0_i32_0 = arith.constant 0 : i32
    %2 = arith.cmpi ne, %1, %c0_i32_0 : i32
    scf.if %2 {
      %cst_8 = arith.constant 0.000000e+00 : f32
      %12 = vector.broadcast %cst_8 : f32 to vector<1x128xf32>
      %c0_9 = arith.constant 0 : index
      %c0_10 = arith.constant 0 : index
      %13 = vector.load %arg3[%c0_9, %c0_10] : memref<1x128xf32, #tpu.memory_space<vmem>>, vector<1x128xf32>
      tpu.vector_store %arg3[%c0_9, %c0_10], %12 {strides = array<i32>} : memref<1x128xf32, #tpu.memory_space<vmem>>, vector<1x128xf32>,
    } else {
    }
    %c0 = arith.constant 0 : index
    %c0_1 = arith.constant 0 : index
    %3 = vector.load %arg1[%c0, %c0_1] : memref<336x128xf32, #tpu.memory_space<vmem>>, vector<336x128xf32>
    %c0_2 = arith.constant 0 : index
    %c0_3 = arith.constant 0 : index
    %4 = vector.load %arg2[%c0_2, %c0_3] : memref<336x128xf32, #tpu.memory_space<vmem>>, vector<336x128xf32>
    %5 = arith.subf %3, %4 : vector<336x128xf32>
    %c0_4 = arith.constant 0 : index
    %c0_5 = arith.constant 0 : index
    %6 = vector.load %arg3[%c0_4, %c0_5] : memref<1x128xf32, #tpu.memory_space<vmem>>, vector<1x128xf32>
    %7 = arith.mulf %5, %5 : vector<336x128xf32>
    %cst = arith.constant dense<0.000000e+00> : vector<128xf32>
    %8 = vector.multi_reduction <add>, %7, %cst [0] : vector<336x128xf32> to vector<128xf32>
    %9 = vector.shape_cast %8 : vector<128xf32> to vector<1x128xf32>
    %10 = arith.addf %6, %9 : vector<1x128xf32>
    %c0_6 = arith.constant 0 : index
    %c0_7 = arith.constant 0 : index
    %11 = vector.load %arg3[%c0_6, %c0_7] : memref<1x128xf32, #tpu.memory_space<vmem>>, vector<1x128xf32>
    tpu.vector_store %arg3[%c0_6, %c0_7], %10 {strides = array<i32>} : memref<1x128xf32, #tpu.memory_space<vmem>>, vector<1x128xf32>,
    return
  }
  func.func @transform_0(%arg0: i32) -> (i32, i32) {
    %c0_i32 = arith.constant 0 : i32
    %c0_i32_0 = arith.constant 0 : i32
    return %arg0, %c0_i32 : i32, i32
  }
  func.func @transform_1(%arg0: i32) -> (i32, i32) {
    %c0_i32 = arith.constant 0 : i32
    %c0_i32_0 = arith.constant 0 : i32
    return %arg0, %c0_i32 : i32, i32
  }
  func.func @transform_2(%arg0: i32) -> (i32, i32) {
    %c0_i32 = arith.constant 0 : i32
    %c0_i32_0 = arith.constant 0 : i32
    %c0_i32_1 = arith.constant 0 : i32
    return %c0_i32, %c0_i32_0 : i32, i32
  }
}

</mosaic_0001>

<llo_original>
// kernel: icil_forward.10
$region0: #{icil_forward.10}
  #allocation0 [shape = 'u32[]', space=smem, size = 0x4, offset = 0x4, fixed_abs, tag = 'smem constant byte address 0x4 - core index']
  #allocation1 [shape = 'u32[72,128]{1,0:T(1,128)}', space=vmem, size = 0x9000, scoped, tag = 'internal scratch']
  %s0 = inlined_call_operand.vmem [shape: bf16[32,192], index: 0, kind: input, shape index: {}]
  %s1 = inlined_call_operand.vmem [shape: bf16[2,192,400], index: 1, kind: input, shape index: {}]
  %s2 = inlined_call_operand.vmem [shape: f32[32,1], index: 2, kind: input, shape index: {}]
  %s3 = inlined_call_operand.vmem [shape: f32[2,32,400], index: 3, kind: output, shape index: {}]
  %s4 = sld [smem:[#allocation0]]
  $region45: #{icil_forward.10} parent=0
    _
  %s6 = ssub.s32 1, %s4
  %s7 = scalar_select 0, %s6, %s4
  loop: start=0, step=1, limit=4
  $region2: #{icil_forward.10} parent=0 // loop_pre_header
    _
  $region3: #{icil_forward.10} parent=0 // loop_header
    %s9 = sphi 0, %s13
    %p10 = scmp.ge.s32.totalorder %s9, 4
    %s17 = sphi 0, %s17
    %s19 = sphi 0, %s17
    %s20 = sphi 0, %s19
    %s34 = sphi 0, %s20
    %s40 = sphi 0, %s42
    %s43 = sphi 0, %s40
    %s44 = sphi 0, %s43
    %s60 = sphi 0, %s44
    %s64 = sphi 0, %s64
    %s66 = sphi 0, %s64
    %s67 = sphi 0, %s66
    %s81 = sphi 0, %s67
    %s87 = sphi 0, %s89
    %s90 = sphi 0, %s87
    %s91 = sphi 0, %s90
    %s107 = sphi 0, %s91
  $region4: #{icil_forward.10} parent=0 // loop_header_branch
    %12 = sbr.rel (%p10) target = $region8
  $region5: #{icil_forward.10} parent=0 // loop_body
    %s14 = ssub.s32 %s9, 1
    %s15 = ssub.s32 %s9, 2
    %s16 = sadd.s32 %s9, 1
    %s18 = sadd.s32 %s17, 1
    %p21 = scmp.eq.s32.totalorder %s9, 1
    %p22 = scmp.ne.s32.totalorder %s17, %s19
    %p23 = scmp.eq.s32.totalorder %s9, 0
    %p24 = por %p22, %p23
    %p25 = scmp.ne.s32.totalorder %s17, %s19
    %p26 = scmp.eq.s32.totalorder %s14, 1
    %p27 = por %p25, %p26
    %p28 = scmp.ne.s32.totalorder %s19, %s20
    %p29 = scmp.eq.s32.totalorder %s14, 0
    %p30 = por %p28, %p29
    %p31 = scmp.ne.s32.totalorder %s19, %s20
    %p32 = scmp.eq.s32.totalorder %s15, 1
    %p33 = por %p31, %p32
    %p35 = scmp.ne.s32.totalorder %s20, %s34
    %p36 = scmp.eq.s32.totalorder %s15, 0
    %p37 = por %p35, %p36
    %s38 = ssub.s32 %s9, %s16
    %p39 = scmp.eq.s32.totalorder %s38, 0
    %s41 = sadd.s32 %s40, 1
    %s42 = scalar_select %p39, %s40, %s41
    %p45 = pneg %p39
    %p46 = scmp.eq.s32.totalorder %s9, 1
    %p47 = por %p45, %p46
    %p48 = scmp.ne.s32.totalorder %s40, %s43
    %p49 = scmp.eq.s32.totalorder %s9, 0
    %p50 = por %p48, %p49
    %p51 = scmp.ne.s32.totalorder %s40, %s43
    %p52 = scmp.eq.s32.totalorder %s14, 1
    %p53 = por %p51, %p52
    %p54 = scmp.ne.s32.totalorder %s43, %s44
    %p55 = scmp.eq.s32.totalorder %s14, 0
    %p56 = por %p54, %p55
    %p57 = scmp.ne.s32.totalorder %s43, %s44
    %p58 = scmp.eq.s32.totalorder %s15, 1
    %p59 = por %p57, %p58
    %p61 = scmp.ne.s32.totalorder %s44, %s60
    %p62 = scmp.eq.s32.totalorder %s15, 0
    %p63 = por %p61, %p62
    %s65 = sadd.s32 %s64, 1
    %p68 = scmp.eq.s32.totalorder %s9, 1
    %p69 = scmp.ne.s32.totalorder %s64, %s66
    %p70 = scmp.eq.s32.totalorder %s9, 0
    %p71 = por %p69, %p70
    %p72 = scmp.ne.s32.totalorder %s64, %s66
    %p73 = scmp.eq.s32.totalorder %s14, 1
    %p74 = por %p72, %p73
    %p75 = scmp.ne.s32.totalorder %s66, %s67
    %p76 = scmp.eq.s32.totalorder %s14, 0
    %p77 = por %p75, %p76
    %p78 = scmp.ne.s32.totalorder %s66, %s67
    %p79 = scmp.eq.s32.totalorder %s15, 1
    %p80 = por %p78, %p79
    %p82 = scmp.ne.s32.totalorder %s67, %s81
    %p83 = scmp.eq.s32.totalorder %s15, 0
    %p84 = por %p82, %p83
    %s85 = ssub.s32 %s9, %s16
    %p86 = scmp.eq.s32.totalorder %s85, 0
    %s88 = sadd.s32 %s87, 1
    %s89 = scalar_select %p86, %s87, %s88
    %p92 = pneg %p86
    %p93 = scmp.eq.s32.totalorder %s9, 1
    %p94 = por %p92, %p93
    %p95 = scmp.ne.s32.totalorder %s87, %s90
    %p96 = scmp.eq.s32.totalorder %s9, 0
    %p97 = por %p95, %p96
    %p98 = scmp.ne.s32.totalorder %s87, %s90
    %p99 = scmp.eq.s32.totalorder %s14, 1
    %p100 = por %p98, %p99
    %p101 = scmp.ne.s32.totalorder %s90, %s91
    %p102 = scmp.eq.s32.totalorder %s14, 0
    %p103 = por %p101, %p102
    %p104 = scmp.ne.s32.totalorder %s90, %s91
    %p105 = scmp.eq.s32.totalorder %s15, 1
    %p106 = por %p104, %p105
    %p108 = scmp.ne.s32.totalorder %s91, %s107
    %p109 = scmp.eq.s32.totalorder %s15, 0
    %p110 = por %p108, %p109
    %p111 = scmp.le.s32.totalorder 1, %s9
    %p112 = scmp.lt.s32.totalorder %s9, 3
    %p113 = pnand %p111, %p112
    %p114 = pneg %p113
    // Predicated region
    $region9: #{icil_forward.10} parent=5 // pred_check
      _
    $region10: #{icil_forward.10} parent=5 // pred_check_branch
      %116 = sbr.rel (%p113) target = $region12
    $region11: #{icil_forward.10} parent=5 // pred_region
      %s117 = ssub.s32 %s9, 1
      // Predicated region
      $region13: #{icil_forward.10} parent=11 // pred_check
        %p118 = pneg %p30
      $region14: #{icil_forward.10} parent=11 // pred_check_branch
        %120 = sbr.rel (%p118) target = $region16
      $region15: #{icil_forward.10} parent=11 // pred_region
        _
      $region16: #{icil_forward.10} parent=11 // pred_fallthru
        _
      // Predicated region
      $region17: #{icil_forward.10} parent=11 // pred_check
        %p121 = pneg %p77
      $region18: #{icil_forward.10} parent=11 // pred_check_branch
        %123 = sbr.rel (%p121) target = $region20
      $region19: #{icil_forward.10} parent=11 // pred_region
        _
      $region20: #{icil_forward.10} parent=11 // pred_fallthru
        _
    $region12: #{icil_forward.10} parent=5 // pred_fallthru
      _
    %p124 = scmp.lt.s32.totalorder %s9, 2
    // Predicated region
    $region21: #{icil_forward.10} parent=5 // pred_check
      %p125 = pneg %p124
    $region22: #{icil_forward.10} parent=5 // pred_check_branch
      %127 = sbr.rel (%p125) target = $region24
    $region23: #{icil_forward.10} parent=5 // pred_region
      // Predicated region
      $region25: #{icil_forward.10} parent=23 // pred_check
        %p128 = pneg %p50
      $region26: #{icil_forward.10} parent=23 // pred_check_branch
        %130 = sbr.rel (%p128) target = $region28
      $region27: #{icil_forward.10} parent=23 // pred_region
        %p131 = scmp.lt.s32.totalorder %s9, 1
        %s132 = scalar_select %p131, %s9, 1
        %s133 = smul.addr %s132, 96
        %s134 = smul.addr %s133, 4
        %s135 = scalar_lea.vmem %s1, %s134
      $region28: #{icil_forward.10} parent=23 // pred_fallthru
        _
    $region24: #{icil_forward.10} parent=5 // pred_fallthru
      _
    %p136 = scmp.le.s32.totalorder 1, %s9
    %p137 = scmp.lt.s32.totalorder %s9, 3
    %p138 = pnand %p136, %p137
    %p139 = pneg %p138
    // Predicated region
    $region29: #{icil_forward.10} parent=5 // pred_check
      _
    $region30: #{icil_forward.10} parent=5 // pred_check_branch
      %141 = sbr.rel (%p138) target = $region32
    $region31: #{icil_forward.10} parent=5 // pred_region
      %s142 = ssub.s32 %s9, 1
      %p143 = pneg %p30
      %p144 = pneg %p27
      %p145 = scmp.lt.s32.totalorder %s14, 1
      %s146 = scalar_select %p145, %s14, 1
      %s147 = smul.addr %s146, 96
      %s148 = smul.addr %s147, 4
      %s149 = scalar_lea.vmem %s1, %s148
      %p150 = pneg %p56
      %p151 = pneg %p53
      %p152 = pneg %p77
      %p153 = pneg %p74
      %p154 = pneg %p103
      %p155 = pneg %p100
      %p156 = scmp.lt.s32.totalorder %s14, 1
      %s157 = scalar_select %p156, %s14, 1
      %s158 = smul.addr %s157, 16
      %s159 = smul.addr %s158, 8
      %s160 = scalar_lea.vmem %s3, %s159
      %p161 = scmp.lt.s32.totalorder %s14, 1
      %s162 = scalar_select %p161, %s14, 1
      %s163 = smul.addr %s162, 96
      %s164 = smul.addr %s163, 4
      %s165 = scalar_lea.vmem %s1, %s164
      %p166 = scmp.lt.s32.totalorder %s14, 1
      %s167 = scalar_select %p166, %s14, 1
      %s168 = smul.addr %s167, 16
      %s169 = smul.addr %s168, 8
      %s170 = scalar_lea.vmem %s3, %s169
      %v172 = vld [vmem:[%s0] sm:$0xff]
      %v173 = vld [vmem:[%s0 + $0x8] sm:$0xff]
      %v174 = vld [vmem:[%s0 + $0x10] sm:$0xff]
      %v175 = vld [vmem:[%s0 + $0x18] sm:$0xff]
      %v176 = vld [vmem:[%s165] sm:$0xff]
      %v177 = vld [vmem:[%s165 + $0x8] sm:$0xff]
      %v178 = vld [vmem:[%s165 + $0x10] sm:$0xff]
      %v179 = vld [vmem:[%s165 + $0x18] sm:$0xff]
      %v180 = vld [vmem:[%s165 + $0x20] sm:$0xff]
      %v181 = vld [vmem:[%s165 + $0x28] sm:$0xff]
      %v182 = vld [vmem:[%s165 + $0x30] sm:$0xff]
      %v183 = vld [vmem:[%s165 + $0x38] sm:$0xff]
      %v184 = vld [vmem:[%s165 + $0x40] sm:$0xff]
      %v185 = vld [vmem:[%s165 + $0x48] sm:$0xff]
      %v186 = vld [vmem:[%s165 + $0x50] sm:$0xff]
      %v187 = vld [vmem:[%s165 + $0x58] sm:$0xff]
      %v188 = vld [vmem:[%s165 + $0x60] sm:$0xff]
      %v189 = vld [vmem:[%s165 + $0x68] sm:$0xff]
      %v190 = vld [vmem:[%s165 + $0x70] sm:$0xff]
      %v191 = vld [vmem:[%s165 + $0x78] sm:$0xff]
      %v192 = vld [vmem:[%s165 + $0x80] sm:$0xff]
      %v193 = vld [vmem:[%s165 + $0x88] sm:$0xff]
      %v194 = vld [vmem:[%s165 + $0x90] sm:$0xff]
      %v195 = vld [vmem:[%s165 + $0x98] sm:$0xff]
      %v196 = vld [vmem:[%s165 + $0xa0] sm:$0xff]
      %v197 = vld [vmem:[%s165 + $0xa8] sm:$0xff]
      %v198 = vld [vmem:[%s165 + $0xb0] sm:$0xff]
      %v199 = vld [vmem:[%s165 + $0xb8] sm:$0xff]
      %v200 = vld [vmem:[%s165 + $0xc0] sm:$0xff]
      %v201 = vld [vmem:[%s165 + $0xc8] sm:$0xff]
      %v202 = vld [vmem:[%s165 + $0xd0] sm:$0xff]
      %v203 = vld [vmem:[%s165 + $0xd8] sm:$0xff]
      %v204 = vld [vmem:[%s165 + $0xe0] sm:$0xff]
      %v205 = vld [vmem:[%s165 + $0xe8] sm:$0xff]
      %v206 = vld [vmem:[%s165 + $0xf0] sm:$0xff]
      %v207 = vld [vmem:[%s165 + $0xf8] sm:$0xff]
      %v208 = vld [vmem:[%s165 + $0x100] sm:$0xff]
      %v209 = vld [vmem:[%s165 + $0x108] sm:$0xff]
      %v210 = vld [vmem:[%s165 + $0x110] sm:$0xff]
      %v211 = vld [vmem:[%s165 + $0x118] sm:$0xff]
      %v212 = vld [vmem:[%s165 + $0x120] sm:$0xff]
      %v213 = vld [vmem:[%s165 + $0x128] sm:$0xff]
      %v214 = vld [vmem:[%s165 + $0x130] sm:$0xff]
      %v215 = vld [vmem:[%s165 + $0x138] sm:$0xff]
      %v216 = vld [vmem:[%s165 + $0x140] sm:$0xff]
      %v217 = vld [vmem:[%s165 + $0x148] sm:$0xff]
      %v218 = vld [vmem:[%s165 + $0x150] sm:$0xff]
      %v219 = vld [vmem:[%s165 + $0x158] sm:$0xff]
      %v220 = vld [vmem:[%s165 + $0x160] sm:$0xff]
      %v221 = vld [vmem:[%s165 + $0x168] sm:$0xff]
      %v222 = vld [vmem:[%s165 + $0x170] sm:$0xff]
      %v223 = vld [vmem:[%s165 + $0x178] sm:$0xff]
      %v224 = vld [vmem:[%s2] sm:$0xff]
      %v225 = vld [vmem:[%s2 + $0x8] sm:$0xff]
      %v226 = vld [vmem:[%s2 + $0x10] sm:$0xff]
      %v227 = vld [vmem:[%s2 + $0x18] sm:$0xff]
      %229 = vset.pattern.permute.xlu0 0
      %230 = vperm.xlu0 %229, %v224
      %v231 = vpop.permute.xlu0 %230
      %234 = vset.pattern.permute.xlu0 0
      %235 = vperm.xlu0 %234, %v225
      %v236 = vpop.permute.xlu0 %235
      %239 = vset.pattern.permute.xlu0 0
      %240 = vperm.xlu0 %239, %v226
      %v241 = vpop.permute.xlu0 %240
      %244 = vset.pattern.permute.xlu0 0
      %245 = vperm.xlu0 %244, %v227
      %v246 = vpop.permute.xlu0 %245
      %v252 = vunpack.c.l.b16 %v172
      %v253 = vunpack.c.h.b16 %v172
      %v254 = vunpack.c.l.b16 %v173
      %v255 = vunpack.c.h.b16 %v173
      %v256 = vunpack.c.l.b16 %v174
      %v257 = vunpack.c.h.b16 %v174
      %v258 = vunpack.c.l.b16 %v175
      %v259 = vunpack.c.h.b16 %v175
      %v260 = vpack.c.b16 %v254, %v252
      %v261 = vpack.c.b16 %v255, %v253
      %v262 = vpack.c.b16 %v258, %v256
      %v263 = vpack.c.b16 %v259, %v257
      %v314 = vunpack.c.l.b16 %v176
      %v315 = vunpack.c.h.b16 %v176
      %v316 = vunpack.c.l.b16 %v177
      %v317 = vunpack.c.h.b16 %v177
      %v318 = vunpack.c.l.b16 %v178
      %v319 = vunpack.c.h.b16 %v178
      %v320 = vunpack.c.l.b16 %v179
      %v321 = vunpack.c.h.b16 %v179
      %v322 = vunpack.c.l.b16 %v180
      %v323 = vunpack.c.h.b16 %v180
      %v324 = vunpack.c.l.b16 %v181
      %v325 = vunpack.c.h.b16 %v181
      %v326 = vunpack.c.l.b16 %v182
      %v327 = vunpack.c.h.b16 %v182
      %v328 = vunpack.c.l.b16 %v183
      %v329 = vunpack.c.h.b16 %v183
      %v330 = vunpack.c.l.b16 %v184
      %v331 = vunpack.c.h.b16 %v184
      %v332 = vunpack.c.l.b16 %v185
      %v333 = vunpack.c.h.b16 %v185
      %v334 = vunpack.c.l.b16 %v186
      %v335 = vunpack.c.h.b16 %v186
      %v336 = vunpack.c.l.b16 %v187
      %v337 = vunpack.c.h.b16 %v187
      %v338 = vunpack.c.l.b16 %v188
      %v339 = vunpack.c.h.b16 %v188
      %v340 = vunpack.c.l.b16 %v189
      %v341 = vunpack.c.h.b16 %v189
      %v342 = vunpack.c.l.b16 %v190
      %v343 = vunpack.c.h.b16 %v190
      %v344 = vunpack.c.l.b16 %v191
      %v345 = vunpack.c.h.b16 %v191
      %v346 = vunpack.c.l.b16 %v192
      %v347 = vunpack.c.h.b16 %v192
      %v348 = vunpack.c.l.b16 %v193
      %v349 = vunpack.c.h.b16 %v193
      %v350 = vunpack.c.l.b16 %v194
      %v351 = vunpack.c.h.b16 %v194
      %v352 = vunpack.c.l.b16 %v195
      %v353 = vunpack.c.h.b16 %v195
      %v354 = vunpack.c.l.b16 %v196
      %v355 = vunpack.c.h.b16 %v196
      %v356 = vunpack.c.l.b16 %v197
      %v357 = vunpack.c.h.b16 %v197
      %v358 = vunpack.c.l.b16 %v198
      %v359 = vunpack.c.h.b16 %v198
      %v360 = vunpack.c.l.b16 %v199
      %v361 = vunpack.c.h.b16 %v199
      %v362 = vunpack.c.l.b16 %v200
      %v363 = vunpack.c.h.b16 %v200
      %v364 = vunpack.c.l.b16 %v201
      %v365 = vunpack.c.h.b16 %v201
      %v366 = vunpack.c.l.b16 %v202
      %v367 = vunpack.c.h.b16 %v202
      %v368 = vunpack.c.l.b16 %v203
      %v369 = vunpack.c.h.b16 %v203
      %v370 = vunpack.c.l.b16 %v204
      %v371 = vunpack.c.h.b16 %v204
      %v372 = vunpack.c.l.b16 %v205
      %v373 = vunpack.c.h.b16 %v205
      %v374 = vunpack.c.l.b16 %v206
      %v375 = vunpack.c.h.b16 %v206
      %v376 = vunpack.c.l.b16 %v207
      %v377 = vunpack.c.h.b16 %v207
      %v378 = vunpack.c.l.b16 %v208
      %v379 = vunpack.c.h.b16 %v208
      %v380 = vunpack.c.l.b16 %v209
      %v381 = vunpack.c.h.b16 %v209
      %v382 = vunpack.c.l.b16 %v210
      %v383 = vunpack.c.h.b16 %v210
      %v384 = vunpack.c.l.b16 %v211
      %v385 = vunpack.c.h.b16 %v211
      %v386 = vunpack.c.l.b16 %v212
      %v387 = vunpack.c.h.b16 %v212
      %v388 = vunpack.c.l.b16 %v213
      %v389 = vunpack.c.h.b16 %v213
      %v390 = vunpack.c.l.b16 %v214
      %v391 = vunpack.c.h.b16 %v214
      %v392 = vunpack.c.l.b16 %v215
      %v393 = vunpack.c.h.b16 %v215
      %v394 = vunpack.c.l.b16 %v216
      %v395 = vunpack.c.h.b16 %v216
      %v396 = vunpack.c.l.b16 %v217
      %v397 = vunpack.c.h.b16 %v217
      %v398 = vunpack.c.l.b16 %v218
      %v399 = vunpack.c.h.b16 %v218
      %v400 = vunpack.c.l.b16 %v219
      %v401 = vunpack.c.h.b16 %v219
      %v402 = vunpack.c.l.b16 %v220
      %v403 = vunpack.c.h.b16 %v220
      %v404 = vunpack.c.l.b16 %v221
      %v405 = vunpack.c.h.b16 %v221
      %v406 = vunpack.c.l.b16 %v222
      %v407 = vunpack.c.h.b16 %v222
      %v408 = vunpack.c.l.b16 %v223
      %v409 = vunpack.c.h.b16 %v223
      %v410 = vpack.c.b16 %v318, %v314
      %v411 = vpack.c.b16 %v319, %v315
      %v412 = vpack.c.b16 %v320, %v316
      %v413 = vpack.c.b16 %v321, %v317
      %v414 = vpack.c.b16 %v326, %v322
      %v415 = vpack.c.b16 %v327, %v323
      %v416 = vpack.c.b16 %v328, %v324
      %v417 = vpack.c.b16 %v329, %v325
      %v418 = vpack.c.b16 %v334, %v330
      %v419 = vpack.c.b16 %v335, %v331
      %v420 = vpack.c.b16 %v336, %v332
      %v421 = vpack.c.b16 %v337, %v333
      %v422 = vpack.c.b16 %v342, %v338
      %v423 = vpack.c.b16 %v343, %v339
      %v424 = vpack.c.b16 %v344, %v340
      %v425 = vpack.c.b16 %v345, %v341
      %v426 = vpack.c.b16 %v350, %v346
      %v427 = vpack.c.b16 %v351, %v347
      %v428 = vpack.c.b16 %v352, %v348
      %v429 = vpack.c.b16 %v353, %v349
      %v430 = vpack.c.b16 %v358, %v354
      %v431 = vpack.c.b16 %v359, %v355
      %v432 = vpack.c.b16 %v360, %v356
      %v433 = vpack.c.b16 %v361, %v357
      %v434 = vpack.c.b16 %v366, %v362
      %v435 = vpack.c.b16 %v367, %v363
      %v436 = vpack.c.b16 %v368, %v364
      %v437 = vpack.c.b16 %v369, %v365
      %v438 = vpack.c.b16 %v374, %v370
      %v439 = vpack.c.b16 %v375, %v371
      %v440 = vpack.c.b16 %v376, %v372
      %v441 = vpack.c.b16 %v377, %v373
      %v442 = vpack.c.b16 %v382, %v378
      %v443 = vpack.c.b16 %v383, %v379
      %v444 = vpack.c.b16 %v384, %v380
      %v445 = vpack.c.b16 %v385, %v381
      %v446 = vpack.c.b16 %v390, %v386
      %v447 = vpack.c.b16 %v391, %v387
      %v448 = vpack.c.b16 %v392, %v388
      %v449 = vpack.c.b16 %v393, %v389
      %v450 = vpack.c.b16 %v398, %v394
      %v451 = vpack.c.b16 %v399, %v395
      %v452 = vpack.c.b16 %v400, %v396
      %v453 = vpack.c.b16 %v401, %v397
      %v454 = vpack.c.b16 %v406, %v402
      %v455 = vpack.c.b16 %v407, %v403
      %v456 = vpack.c.b16 %v408, %v404
      %v457 = vpack.c.b16 %v409, %v405
      %vm506 = vcmask 523264
      %v508 = vsel %vm506, %v261, 0
      %v511 = vsel %vm506, %v263, 0
      %513 = vmatpush.bf16.msra.mxu0 %v438
      %514 = vmatpush.bf16.msra.mxu0 %v434
      %515 = vmatpush.bf16.msra.mxu0 %v430
      %516 = vmatpush.bf16.msra.mxu0 %v426
      %517 = vmatpush.bf16.msra.mxu0 %v422
      %518 = vmatpush.bf16.msra.mxu0 %v418
      %519 = vmatpush.bf16.msra.mxu0 %v414
      %520 = vmatpush.bf16.msra.mxu0 %v410
      %521 = vmatmul.bf16.gmra.mxu0 %v260
      %v522 = vpop.f32.mrf.mxu0
      %v523 = vadd.f32 %v231, %v522
      %v524 = vpop.f32.mrf.mxu0
      %v525 = vadd.f32 %v236, %v524
      %526 = vmatmul.bf16.gmra.mxu0 %v262
      %v527 = vpop.f32.mrf.mxu0
      %v528 = vadd.f32 %v241, %v527
      %v529 = vpop.f32.mrf.mxu0
      %v530 = vadd.f32 %v246, %v529
      %531 = vdwg.mxu0
      %532 = vmatpush.bf16.msra.mxu0 0
      %533 = vmatpush.bf16.msra.mxu0 0
      %534 = vmatpush.bf16.msra.mxu0 0
      %535 = vmatpush.bf16.msra.mxu0 0
      %536 = vmatpush.bf16.msra.mxu0 %v454
      %537 = vmatpush.bf16.msra.mxu0 %v450
      %538 = vmatpush.bf16.msra.mxu0 %v446
      %539 = vmatpush.bf16.msra.mxu0 %v442
      %540 = vmatmul.bf16.gmra.mxu0 %v508
      %v541 = vpop.f32.mrf.mxu0
      %v542 = vadd.f32 %v523, %v541
      %v543 = vpop.f32.mrf.mxu0
      %v544 = vadd.f32 %v525, %v543
      %545 = vmatmul.bf16.gmra.mxu0 %v511
      %v546 = vpop.f32.mrf.mxu0
      %v547 = vadd.f32 %v528, %v546
      %v548 = vpop.f32.mrf.mxu0
      %v549 = vadd.f32 %v530, %v548
      %550 = vdwg.mxu0
      %551 = vmatpush.bf16.msra.mxu0 %v439
      %552 = vmatpush.bf16.msra.mxu0 %v435
      %553 = vmatpush.bf16.msra.mxu0 %v431
      %554 = vmatpush.bf16.msra.mxu0 %v427
      %555 = vmatpush.bf16.msra.mxu0 %v423
      %556 = vmatpush.bf16.msra.mxu0 %v419
      %557 = vmatpush.bf16.msra.mxu0 %v415
      %558 = vmatpush.bf16.msra.mxu0 %v411
      %559 = vmatmul.bf16.gmra.mxu0 %v260
      %v560 = vpop.f32.mrf.mxu0
      %v561 = vadd.f32 %v231, %v560
      %v562 = vpop.f32.mrf.mxu0
      %v563 = vadd.f32 %v236, %v562
      %564 = vmatmul.bf16.gmra.mxu0 %v262
      %v565 = vpop.f32.mrf.mxu0
      %v566 = vadd.f32 %v241, %v565
      %v567 = vpop.f32.mrf.mxu0
      %v568 = vadd.f32 %v246, %v567
      %569 = vdwg.mxu0
      %570 = vmatpush.bf16.msra.mxu0 0
      %571 = vmatpush.bf16.msra.mxu0 0
      %572 = vmatpush.bf16.msra.mxu0 0
      %573 = vmatpush.bf16.msra.mxu0 0
      %574 = vmatpush.bf16.msra.mxu0 %v455
      %575 = vmatpush.bf16.msra.mxu0 %v451
      %576 = vmatpush.bf16.msra.mxu0 %v447
      %577 = vmatpush.bf16.msra.mxu0 %v443
      %578 = vmatmul.bf16.gmra.mxu0 %v508
      %v579 = vpop.f32.mrf.mxu0
      %v580 = vadd.f32 %v561, %v579
      %v581 = vpop.f32.mrf.mxu0
      %v582 = vadd.f32 %v563, %v581
      %583 = vmatmul.bf16.gmra.mxu0 %v511
      %v584 = vpop.f32.mrf.mxu0
      %v585 = vadd.f32 %v566, %v584
      %v586 = vpop.f32.mrf.mxu0
      %v587 = vadd.f32 %v568, %v586
      %588 = vdwg.mxu0
      %589 = vmatpush.bf16.msra.mxu0 %v440
      %590 = vmatpush.bf16.msra.mxu0 %v436
      %591 = vmatpush.bf16.msra.mxu0 %v432
      %592 = vmatpush.bf16.msra.mxu0 %v428
      %593 = vmatpush.bf16.msra.mxu0 %v424
      %594 = vmatpush.bf16.msra.mxu0 %v420
      %595 = vmatpush.bf16.msra.mxu0 %v416
      %596 = vmatpush.bf16.msra.mxu0 %v412
      %597 = vmatmul.bf16.gmra.mxu0 %v260
      %v598 = vpop.f32.mrf.mxu0
      %v599 = vadd.f32 %v231, %v598
      %v600 = vpop.f32.mrf.mxu0
      %v601 = vadd.f32 %v236, %v600
      %602 = vmatmul.bf16.gmra.mxu0 %v262
      %v603 = vpop.f32.mrf.mxu0
      %v604 = vadd.f32 %v241, %v603
      %v605 = vpop.f32.mrf.mxu0
      %v606 = vadd.f32 %v246, %v605
      %607 = vdwg.mxu0
      %608 = vmatpush.bf16.msra.mxu0 0
      %609 = vmatpush.bf16.msra.mxu0 0
      %610 = vmatpush.bf16.msra.mxu0 0
      %611 = vmatpush.bf16.msra.mxu0 0
      %612 = vmatpush.bf16.msra.mxu0 %v456
      %613 = vmatpush.bf16.msra.mxu0 %v452
      %614 = vmatpush.bf16.msra.mxu0 %v448
      %615 = vmatpush.bf16.msra.mxu0 %v444
      %616 = vmatmul.bf16.gmra.mxu0 %v508
      %v617 = vpop.f32.mrf.mxu0
      %v618 = vadd.f32 %v599, %v617
      %v619 = vpop.f32.mrf.mxu0
      %v620 = vadd.f32 %v601, %v619
      %621 = vmatmul.bf16.gmra.mxu0 %v511
      %v622 = vpop.f32.mrf.mxu0
      %v623 = vadd.f32 %v604, %v622
      %v624 = vpop.f32.mrf.mxu0
      %v625 = vadd.f32 %v606, %v624
      %626 = vdwg.mxu0
      %627 = vmatpush.bf16.msra.mxu0 %v441
      %628 = vmatpush.bf16.msra.mxu0 %v437
      %629 = vmatpush.bf16.msra.mxu0 %v433
      %630 = vmatpush.bf16.msra.mxu0 %v429
      %631 = vmatpush.bf16.msra.mxu0 %v425
      %632 = vmatpush.bf16.msra.mxu0 %v421
      %633 = vmatpush.bf16.msra.mxu0 %v417
      %634 = vmatpush.bf16.msra.mxu0 %v413
      %635 = vmatmul.bf16.gmra.mxu0 %v260
      %v636 = vpop.f32.mrf.mxu0
      %v637 = vadd.f32 %v231, %v636
      %v638 = vpop.f32.mrf.mxu0
      %v639 = vadd.f32 %v236, %v638
      %640 = vmatmul.bf16.gmra.mxu0 %v262
      %v641 = vpop.f32.mrf.mxu0
      %v642 = vadd.f32 %v241, %v641
      %v643 = vpop.f32.mrf.mxu0
      %v644 = vadd.f32 %v246, %v643
      %645 = vdwg.mxu0
      %646 = vmatpush.bf16.msra.mxu0 0
      %647 = vmatpush.bf16.msra.mxu0 0
      %648 = vmatpush.bf16.msra.mxu0 0
      %649 = vmatpush.bf16.msra.mxu0 0
      %650 = vmatpush.bf16.msra.mxu0 %v457
      %651 = vmatpush.bf16.msra.mxu0 %v453
      %652 = vmatpush.bf16.msra.mxu0 %v449
      %653 = vmatpush.bf16.msra.mxu0 %v445
      %654 = vmatmul.bf16.gmra.mxu0 %v508
      %v655 = vpop.f32.mrf.mxu0
      %v656 = vadd.f32 %v637, %v655
      %v657 = vpop.f32.mrf.mxu0
      %v658 = vadd.f32 %v639, %v657
      %659 = vmatmul.bf16.gmra.mxu0 %v511
      %v660 = vpop.f32.mrf.mxu0
      %v661 = vadd.f32 %v642, %v660
      %v662 = vpop.f32.mrf.mxu0
      %v663 = vadd.f32 %v644, %v662
      %664 = vdwg.mxu0
      %v665 = vmax.f32 %v542, 0.0
      %v666 = vmax.f32 %v580, 0.0
      %v667 = vmax.f32 %v618, 0.0
      %v668 = vmax.f32 %v656, 0.0
      %v669 = vmax.f32 %v544, 0.0
      %v670 = vmax.f32 %v582, 0.0
      %v671 = vmax.f32 %v620, 0.0
      %v672 = vmax.f32 %v658, 0.0
      %v673 = vmax.f32 %v547, 0.0
      %v674 = vmax.f32 %v585, 0.0
      %v675 = vmax.f32 %v623, 0.0
      %v676 = vmax.f32 %v661, 0.0
      %v677 = vmax.f32 %v549, 0.0
      %v678 = vmax.f32 %v587, 0.0
      %v679 = vmax.f32 %v625, 0.0
      %v680 = vmax.f32 %v663, 0.0
      %681 = vst [vmem:[%s170] sm:$0xff] %v665
      %682 = vst [vmem:[%s170 + $0x8] sm:$0xff] %v666
      %683 = vst [vmem:[%s170 + $0x10] sm:$0xff] %v667
      %vm684 = vcmask 130048
      %685 = vst.msk [vmem:[%s170 + $0x18] sm:$0xff] %vm684, %v668
      %686 = vst [vmem:[%s170 + $0x20] sm:$0xff] %v669
      %687 = vst [vmem:[%s170 + $0x28] sm:$0xff] %v670
      %688 = vst [vmem:[%s170 + $0x30] sm:$0xff] %v671
      %689 = vst.msk [vmem:[%s170 + $0x38] sm:$0xff] %vm684, %v672
      %690 = vst [vmem:[%s170 + $0x40] sm:$0xff] %v673
      %691 = vst [vmem:[%s170 + $0x48] sm:$0xff] %v674
      %692 = vst [vmem:[%s170 + $0x50] sm:$0xff] %v675
      %693 = vst.msk [vmem:[%s170 + $0x58] sm:$0xff] %vm684, %v676
      %694 = vst [vmem:[%s170 + $0x60] sm:$0xff] %v677
      %695 = vst [vmem:[%s170 + $0x68] sm:$0xff] %v678
      %696 = vst [vmem:[%s170 + $0x70] sm:$0xff] %v679
      %697 = vst.msk [vmem:[%s170 + $0x78] sm:$0xff] %vm684, %v680
      %p698 = scmp.lt.s32.totalorder %s14, 1
      %s699 = scalar_select %p698, %s14, 1
      %s700 = smul.addr %s699, 16
      %s701 = smul.addr %s700, 8
      %s702 = scalar_lea.vmem %s3, %s701
      // Predicated region
      $region33: #{icil_forward.10} parent=31 // pred_check
        %p703 = pneg %p100
      $region34: #{icil_forward.10} parent=31 // pred_check_branch
        %705 = sbr.rel (%p703) target = $region36
      $region35: #{icil_forward.10} parent=31 // pred_region
        _
      $region36: #{icil_forward.10} parent=31 // pred_fallthru
        _
    $region32: #{icil_forward.10} parent=5 // pred_fallthru
      _
    %p706 = scmp.le.s32.totalorder 2, %s9
    // Predicated region
    $region37: #{icil_forward.10} parent=5 // pred_check
      %p707 = pneg %p706
    $region38: #{icil_forward.10} parent=5 // pred_check_branch
      %709 = sbr.rel (%p707) target = $region40
    $region39: #{icil_forward.10} parent=5 // pred_region
      %s710 = ssub.s32 %s9, 2
      // Predicated region
      $region41: #{icil_forward.10} parent=39 // pred_check
        %p711 = pneg %p106
      $region42: #{icil_forward.10} parent=39 // pred_check_branch
        %713 = sbr.rel (%p711) target = $region44
      $region43: #{icil_forward.10} parent=39 // pred_region
        %p714 = scmp.lt.s32.totalorder %s15, 1
        %s715 = scalar_select %p714, %s15, 1
        %s716 = smul.addr %s715, 16
        %s717 = smul.addr %s716, 8
        %s718 = scalar_lea.vmem %s3, %s717
      $region44: #{icil_forward.10} parent=39 // pred_fallthru
        _
    $region40: #{icil_forward.10} parent=5 // pred_fallthru
      _
  $region6: #{icil_forward.10} parent=0 // loop_footer
    %s13 = sadd.s32 1, %s9
  $region7: #{icil_forward.10} parent=0 // loop_footer_branch
    %8 = sbr.rel target = $region3
  $region8: #{icil_forward.10} parent=0 // loop_exit
    _

// kernel: icil_forward.11
$region0: #{icil_forward.11}
  #allocation0 [shape = 'u32[]', space=smem, size = 0x4, offset = 0x4, fixed_abs, tag = 'smem constant byte address 0x4 - core index']
  #allocation1 [shape = 'u32[72,128]{1,0:T(1,128)}', space=vmem, size = 0x9000, scoped, tag = 'internal scratch']
  %s0 = inlined_call_operand.vmem [shape: bf16[2,32,256], index: 0, kind: input, shape index: {}]
  %s1 = inlined_call_operand.vmem [shape: bf16[2,512,81], index: 1, kind: input, shape index: {}]
  %s2 = inlined_call_operand.vmem [shape: f32[2,32,1], index: 2, kind: input, shape index: {}]
  %s3 = inlined_call_operand.vmem [shape: f32[2,64,81], index: 3, kind: output, shape index: {}]
  %s4 = sld [smem:[#allocation0]]
  $region45: #{icil_forward.11} parent=0
    _
  %s6 = ssub.s32 1, %s4
  %s7 = scalar_select 0, %s6, %s4
  loop: start=0, step=1, limit=6
  $region2: #{icil_forward.11} parent=0 // loop_pre_header
    _
  $region3: #{icil_forward.11} parent=0 // loop_header
    %s9 = sphi 0, %s13
    %p10 = scmp.ge.s32.totalorder %s9, 6
    %s16 = sphi 0, %s28
    %s17 = sphi 0, %s24
    %s18 = sphi 0, %s16
    %s19 = sphi 0, %s17
    %s20 = sphi 0, %s18
    %s21 = sphi 0, %s19
    %s31 = sphi 0, %s33
    %s34 = sphi 0, %s31
    %s35 = sphi 0, %s34
    %s51 = sphi 0, %s35
    %s59 = sphi 0, %s61
    %s62 = sphi 0, %s59
    %s63 = sphi 0, %s62
    %s79 = sphi 0, %s63
    %s85 = sphi 0, %s87
    %s88 = sphi 0, %s85
    %s89 = sphi 0, %s88
    %s105 = sphi 0, %s89
    %s113 = sphi 0, %s115
    %s116 = sphi 0, %s113
    %s117 = sphi 0, %s116
    %s133 = sphi 0, %s117
  $region4: #{icil_forward.11} parent=0 // loop_header_branch
    %12 = sbr.rel (%p10) target = $region8
  $region5: #{icil_forward.11} parent=0 // loop_body
    %s14 = ssub.s32 %s9, 1
    %s15 = ssub.s32 %s9, 2
    %s22 = sadd.s32 1, %s17
    %p23 = scmp.ge.s32.totalorder %s22, 2
    %s24 = scalar_select %p23, 0, %s22
    %s25 = sadd.s32 1, %s16
    %s26 = scalar_select %p23, %s25, %s16
    %p27 = scmp.ge.s32.totalorder %s26, 2
    %s28 = scalar_select %p27, 0, %s26
    %s29 = ssub.s32 %s16, %s28
    %p30 = scmp.eq.s32.totalorder %s29, 0
    %s32 = sadd.s32 %s31, 1
    %s33 = scalar_select %p30, %s31, %s32
    %p36 = pneg %p30
    %p37 = scmp.eq.s32.totalorder %s9, 3
    %p38 = por %p36, %p37
    %p39 = scmp.ne.s32.totalorder %s31, %s34
    %p40 = scmp.eq.s32.totalorder %s9, 0
    %p41 = por %p39, %p40
    %p42 = scmp.ne.s32.totalorder %s31, %s34
    %p43 = scmp.eq.s32.totalorder %s14, 3
    %p44 = por %p42, %p43
    %p45 = scmp.ne.s32.totalorder %s34, %s35
    %p46 = scmp.eq.s32.totalorder %s14, 0
    %p47 = por %p45, %p46
    %p48 = scmp.ne.s32.totalorder %s34, %s35
    %p49 = scmp.eq.s32.totalorder %s15, 3
    %p50 = por %p48, %p49
    %p52 = scmp.ne.s32.totalorder %s35, %s51
    %p53 = scmp.eq.s32.totalorder %s15, 0
    %p54 = por %p52, %p53
    %s55 = ssub.s32 %s17, %s24
    %s56 = ssub.s32 %s16, %s28
    %s57 = sor.u32 %s55, %s56
    %p58 = scmp.eq.s32.totalorder %s57, 0
    %s60 = sadd.s32 %s59, 1
    %s61 = scalar_select %p58, %s59, %s60
    %p64 = pneg %p58
    %p65 = scmp.eq.s32.totalorder %s9, 3
    %p66 = por %p64, %p65
    %p67 = scmp.ne.s32.totalorder %s59, %s62
    %p68 = scmp.eq.s32.totalorder %s9, 0
    %p69 = por %p67, %p68
    %p70 = scmp.ne.s32.totalorder %s59, %s62
    %p71 = scmp.eq.s32.totalorder %s14, 3
    %p72 = por %p70, %p71
    %p73 = scmp.ne.s32.totalorder %s62, %s63
    %p74 = scmp.eq.s32.totalorder %s14, 0
    %p75 = por %p73, %p74
    %p76 = scmp.ne.s32.totalorder %s62, %s63
    %p77 = scmp.eq.s32.totalorder %s15, 3
    %p78 = por %p76, %p77
    %p80 = scmp.ne.s32.totalorder %s63, %s79
    %p81 = scmp.eq.s32.totalorder %s15, 0
    %p82 = por %p80, %p81
    %s83 = ssub.s32 %s16, %s28
    %p84 = scmp.eq.s32.totalorder %s83, 0
    %s86 = sadd.s32 %s85, 1
    %s87 = scalar_select %p84, %s85, %s86
    %p90 = pneg %p84
    %p91 = scmp.eq.s32.totalorder %s9, 3
    %p92 = por %p90, %p91
    %p93 = scmp.ne.s32.totalorder %s85, %s88
    %p94 = scmp.eq.s32.totalorder %s9, 0
    %p95 = por %p93, %p94
    %p96 = scmp.ne.s32.totalorder %s85, %s88
    %p97 = scmp.eq.s32.totalorder %s14, 3
    %p98 = por %p96, %p97
    %p99 = scmp.ne.s32.totalorder %s88, %s89
    %p100 = scmp.eq.s32.totalorder %s14, 0
    %p101 = por %p99, %p100
    %p102 = scmp.ne.s32.totalorder %s88, %s89
    %p103 = scmp.eq.s32.totalorder %s15, 3
    %p104 = por %p102, %p103
    %p106 = scmp.ne.s32.totalorder %s89, %s105
    %p107 = scmp.eq.s32.totalorder %s15, 0
    %p108 = por %p106, %p107
    %s109 = ssub.s32 %s17, %s24
    %s110 = ssub.s32 %s16, %s28
    %s111 = sor.u32 %s109, %s110
    %p112 = scmp.eq.s32.totalorder %s111, 0
    %s114 = sadd.s32 %s113, 1
    %s115 = scalar_select %p112, %s113, %s114
    %p118 = pneg %p112
    %p119 = scmp.eq.s32.totalorder %s9, 3
    %p120 = por %p118, %p119
    %p121 = scmp.ne.s32.totalorder %s113, %s116
    %p122 = scmp.eq.s32.totalorder %s9, 0
    %p123 = por %p121, %p122
    %p124 = scmp.ne.s32.totalorder %s113, %s116
    %p125 = scmp.eq.s32.totalorder %s14, 3
    %p126 = por %p124, %p125
    %p127 = scmp.ne.s32.totalorder %s116, %s117
    %p128 = scmp.eq.s32.totalorder %s14, 0
    %p129 = por %p127, %p128
    %p130 = scmp.ne.s32.totalorder %s116, %s117
    %p131 = scmp.eq.s32.totalorder %s15, 3
    %p132 = por %p130, %p131
    %p134 = scmp.ne.s32.totalorder %s117, %s133
    %p135 = scmp.eq.s32.totalorder %s15, 0
    %p136 = por %p134, %p135
    %p137 = scmp.le.s32.totalorder 1, %s9
    %p138 = scmp.lt.s32.totalorder %s9, 5
    %p139 = pnand %p137, %p138
    %p140 = pneg %p139
    // Predicated region
    $region9: #{icil_forward.11} parent=5 // pred_check
      _
    $region10: #{icil_forward.11} parent=5 // pred_check_branch
      %142 = sbr.rel (%p139) target = $region12
    $region11: #{icil_forward.11} parent=5 // pred_region
      %s143 = ssub.s32 %s9, 1
    $region12: #{icil_forward.11} parent=5 // pred_fallthru
      _
    %p144 = scmp.lt.s32.totalorder %s9, 4
    // Predicated region
    $region13: #{icil_forward.11} parent=5 // pred_check
      %p145 = pneg %p144
    $region14: #{icil_forward.11} parent=5 // pred_check_branch
      %147 = sbr.rel (%p145) target = $region16
    $region15: #{icil_forward.11} parent=5 // pred_region
      // Predicated region
      $region17: #{icil_forward.11} parent=15 // pred_check
        %p148 = pneg %p41
      $region18: #{icil_forward.11} parent=15 // pred_check_branch
        %150 = sbr.rel (%p148) target = $region20
      $region19: #{icil_forward.11} parent=15 // pred_region
        %p151 = scmp.lt.s32.totalorder %s16, 1
        %s152 = scalar_select %p151, %s16, 1
        %s153 = smul.addr %s152, 8
        %s154 = smul.addr %s153, 4
        %s155 = scalar_lea.vmem %s0, %s154
      $region20: #{icil_forward.11} parent=15 // pred_fallthru
        _
      // Predicated region
      $region21: #{icil_forward.11} parent=15 // pred_check
        %p156 = pneg %p69
      $region22: #{icil_forward.11} parent=15 // pred_check_branch
        %158 = sbr.rel (%p156) target = $region24
      $region23: #{icil_forward.11} parent=15 // pred_region
        %s159 = smul.u32 32, %s16
        %p160 = scmp.lt.s32.totalorder %s17, 1
        %s161 = scalar_select %p160, %s17, 1
        %p162 = scmp.lt.s32.totalorder %s159, 63
        %s163 = scalar_select %p162, %s159, 63
        %s164 = smul.addr %s161, 64
        %s165 = sadd.s32 %s163, %s164
        %s166 = smul.addr %s165, 4
        %s167 = scalar_lea.vmem %s1, %s166
        %s168 = smul.u32 32, %s16
      $region24: #{icil_forward.11} parent=15 // pred_fallthru
        _
      // Predicated region
      $region25: #{icil_forward.11} parent=15 // pred_check
        %p169 = pneg %p95
      $region26: #{icil_forward.11} parent=15 // pred_check_branch
        %171 = sbr.rel (%p169) target = $region28
      $region27: #{icil_forward.11} parent=15 // pred_region
        %p172 = scmp.lt.s32.totalorder %s16, 1
        %s173 = scalar_select %p172, %s16, 1
        %s174 = smul.addr %s173, 4
        %s175 = smul.addr %s174, 8
        %s176 = scalar_lea.vmem %s2, %s175
      $region28: #{icil_forward.11} parent=15 // pred_fallthru
        _
    $region16: #{icil_forward.11} parent=5 // pred_fallthru
      _
    %p177 = scmp.le.s32.totalorder 1, %s9
    %p178 = scmp.lt.s32.totalorder %s9, 5
    %p179 = pnand %p177, %p178
    %p180 = pneg %p179
    // Predicated region
    $region29: #{icil_forward.11} parent=5 // pred_check
      _
    $region30: #{icil_forward.11} parent=5 // pred_check_branch
      %182 = sbr.rel (%p179) target = $region32
    $region31: #{icil_forward.11} parent=5 // pred_region
      %s183 = ssub.s32 %s9, 1
      %p184 = scmp.lt.s32.totalorder %s18, 1
      %s185 = scalar_select %p184, %s18, 1
      %s186 = smul.addr %s185, 8
      %s187 = smul.addr %s186, 4
      %s188 = scalar_lea.vmem %s0, %s187
      %p189 = pneg %p47
      %p190 = pneg %p44
      %s191 = smul.u32 32, %s18
      %p192 = scmp.lt.s32.totalorder %s19, 1
      %s193 = scalar_select %p192, %s19, 1
      %p194 = scmp.lt.s32.totalorder %s191, 63
      %s195 = scalar_select %p194, %s191, 63
      %s196 = smul.addr %s193, 64
      %s197 = sadd.s32 %s195, %s196
      %s198 = smul.addr %s197, 4
      %s199 = scalar_lea.vmem %s1, %s198
      %p200 = pneg %p75
      %p201 = pneg %p72
      %p202 = scmp.lt.s32.totalorder %s18, 1
      %s203 = scalar_select %p202, %s18, 1
      %s204 = smul.addr %s203, 4
      %s205 = smul.addr %s204, 8
      %s206 = scalar_lea.vmem %s2, %s205
      %p207 = pneg %p101
      %p208 = pneg %p98
      %p209 = pneg %p129
      %p210 = pneg %p126
      %s211 = smul.u32 4, %s18
      %p212 = scmp.lt.s32.totalorder %s19, 1
      %s213 = scalar_select %p212, %s19, 1
      %p214 = scmp.lt.s32.totalorder %s211, 7
      %s215 = scalar_select %p214, %s211, 7
      %s216 = smul.addr %s213, 8
      %s217 = sadd.s32 %s215, %s216
      %s218 = smul.addr %s217, 8
      %s219 = scalar_lea.vmem %s3, %s218
      %p220 = scmp.lt.s32.totalorder %s18, 1
      %s221 = scalar_select %p220, %s18, 1
      %s222 = smul.addr %s221, 8
      %s223 = smul.addr %s222, 4
      %s224 = scalar_lea.vmem %s0, %s223
      %s225 = smul.u32 32, %s18
      %p226 = scmp.lt.s32.totalorder %s19, 1
      %s227 = scalar_select %p226, %s19, 1
      %p228 = scmp.lt.s32.totalorder %s225, 63
      %s229 = scalar_select %p228, %s225, 63
      %s230 = smul.addr %s227, 64
      %s231 = sadd.s32 %s229, %s230
      %s232 = smul.addr %s231, 4
      %s233 = scalar_lea.vmem %s1, %s232
      %s234 = smul.u32 32, %s18
      %p235 = scmp.lt.s32.totalorder %s18, 1
      %s236 = scalar_select %p235, %s18, 1
      %s237 = smul.addr %s236, 4
      %s238 = smul.addr %s237, 8
      %s239 = scalar_lea.vmem %s2, %s238
      %s240 = smul.u32 4, %s18
      %p241 = scmp.lt.s32.totalorder %s19, 1
      %s242 = scalar_select %p241, %s19, 1
      %p243 = scmp.lt.s32.totalorder %s240, 7
      %s244 = scalar_select %p243, %s240, 7
      %s245 = smul.addr %s242, 8
      %s246 = sadd.s32 %s244, %s245
      %s247 = smul.addr %s246, 8
      %s248 = scalar_lea.vmem %s3, %s247
      %s249 = smul.u32 4, %s18
      %v250 = vld [vmem:[%s224] sm:$0xff]
      %v251 = vld [vmem:[%s224 + $0x8] sm:$0xff]
      %v252 = vld [vmem:[%s224 + $0x10] sm:$0xff]
      %v253 = vld [vmem:[%s224 + $0x18] sm:$0xff]
      %v254 = vld [vmem:[%s233] sm:$0xf]
      %v255 = vld [vmem:[%s233 + $0x4] sm:$0xf]
      %v256 = vld [vmem:[%s233 + $0x8] sm:$0xf]
      %v257 = vld [vmem:[%s233 + $0xc] sm:$0xf]
      %v258 = vld [vmem:[%s233 + $0x10] sm:$0xf]
      %v259 = vld [vmem:[%s233 + $0x14] sm:$0xf]
      %v260 = vld [vmem:[%s233 + $0x18] sm:$0xf]
      %v261 = vld [vmem:[%s233 + $0x1c] sm:$0xf]
      %v262 = vld [vmem:[%s233 + $0x20] sm:$0xf]
      %v263 = vld [vmem:[%s233 + $0x24] sm:$0xf]
      %v264 = vld [vmem:[%s233 + $0x28] sm:$0xf]
      %v265 = vld [vmem:[%s233 + $0x2c] sm:$0xf]
      %v266 = vld [vmem:[%s233 + $0x30] sm:$0xf]
      %v267 = vld [vmem:[%s233 + $0x34] sm:$0xf]
      %v268 = vld [vmem:[%s233 + $0x38] sm:$0xf]
      %v269 = vld [vmem:[%s233 + $0x3c] sm:$0xf]
      %v270 = vld [vmem:[%s233 + $0x40] sm:$0xf]
      %v271 = vld [vmem:[%s233 + $0x44] sm:$0xf]
      %v272 = vld [vmem:[%s233 + $0x48] sm:$0xf]
      %v273 = vld [vmem:[%s233 + $0x4c] sm:$0xf]
      %v274 = vld [vmem:[%s233 + $0x50] sm:$0xf]
      %v275 = vld [vmem:[%s233 + $0x54] sm:$0xf]
      %v276 = vld [vmem:[%s233 + $0x58] sm:$0xf]
      %v277 = vld [vmem:[%s233 + $0x5c] sm:$0xf]
      %v278 = vld [vmem:[%s233 + $0x60] sm:$0xf]
      %v279 = vld [vmem:[%s233 + $0x64] sm:$0xf]
      %v280 = vld [vmem:[%s233 + $0x68] sm:$0xf]
      %v281 = vld [vmem:[%s233 + $0x6c] sm:$0xf]
      %v282 = vld [vmem:[%s233 + $0x70] sm:$0xf]
      %v283 = vld [vmem:[%s233 + $0x74] sm:$0xf]
      %v284 = vld [vmem:[%s233 + $0x78] sm:$0xf]
      %v285 = vld [vmem:[%s233 + $0x7c] sm:$0xf]
      %v286 = vld [vmem:[%s239] sm:$0xff]
      %v287 = vld [vmem:[%s239 + $0x8] sm:$0xff]
      %v288 = vld [vmem:[%s239 + $0x10] sm:$0xff]
      %v289 = vld [vmem:[%s239 + $0x18] sm:$0xff]
      %291 = vset.pattern.permute.xlu0 0
      %292 = vperm.xlu0 %291, %v286
      %v293 = vpop.permute.xlu0 %292
      %296 = vset.pattern.permute.xlu0 0
      %297 = vperm.xlu0 %296, %v287
      %v298 = vpop.permute.xlu0 %297
      %301 = vset.pattern.permute.xlu0 0
      %302 = vperm.xlu0 %301, %v288
      %v303 = vpop.permute.xlu0 %302
      %306 = vset.pattern.permute.xlu0 0
      %307 = vperm.xlu0 %306, %v289
      %v308 = vpop.permute.xlu0 %307
      %v314 = vunpack.c.l.b16 %v250
      %v315 = vunpack.c.h.b16 %v250
      %v316 = vunpack.c.l.b16 %v251
      %v317 = vunpack.c.h.b16 %v251
      %v318 = vunpack.c.l.b16 %v252
      %v319 = vunpack.c.h.b16 %v252
      %v320 = vunpack.c.l.b16 %v253
      %v321 = vunpack.c.h.b16 %v253
      %v322 = vpack.c.b16 %v316, %v314
      %v323 = vpack.c.b16 %v317, %v315
      %v324 = vpack.c.b16 %v320, %v318
      %v325 = vpack.c.b16 %v321, %v319
      %v362 = vunpack.c.l.b16 %v254
      %v363 = vunpack.c.l.b16 %v255
      %v364 = vunpack.c.l.b16 %v256
      %v365 = vunpack.c.l.b16 %v257
      %v366 = vunpack.c.l.b16 %v258
      %v367 = vunpack.c.l.b16 %v259
      %v368 = vunpack.c.l.b16 %v260
      %v369 = vunpack.c.l.b16 %v261
      %v370 = vunpack.c.l.b16 %v262
      %v371 = vunpack.c.l.b16 %v263
      %v372 = vunpack.c.l.b16 %v264
      %v373 = vunpack.c.l.b16 %v265
      %v374 = vunpack.c.l.b16 %v266
      %v375 = vunpack.c.l.b16 %v267
      %v376 = vunpack.c.l.b16 %v268
      %v377 = vunpack.c.l.b16 %v269
      %v378 = vunpack.c.l.b16 %v270
      %v379 = vunpack.c.l.b16 %v271
      %v380 = vunpack.c.l.b16 %v272
      %v381 = vunpack.c.l.b16 %v273
      %v382 = vunpack.c.l.b16 %v274
      %v383 = vunpack.c.l.b16 %v275
      %v384 = vunpack.c.l.b16 %v276
      %v385 = vunpack.c.l.b16 %v277
      %v386 = vunpack.c.l.b16 %v278
      %v387 = vunpack.c.l.b16 %v279
      %v388 = vunpack.c.l.b16 %v280
      %v389 = vunpack.c.l.b16 %v281
      %v390 = vunpack.c.l.b16 %v282
      %v391 = vunpack.c.l.b16 %v283
      %v392 = vunpack.c.l.b16 %v284
      %v393 = vunpack.c.l.b16 %v285
      %v394 = vpack.c.b16 %v363, %v362
      %v395 = vpack.c.b16 %v365, %v364
      %v396 = vpack.c.b16 %v367, %v366
      %v397 = vpack.c.b16 %v369, %v368
      %v398 = vpack.c.b16 %v371, %v370
      %v399 = vpack.c.b16 %v373, %v372
      %v400 = vpack.c.b16 %v375, %v374
      %v401 = vpack.c.b16 %v377, %v376
      %v402 = vpack.c.b16 %v379, %v378
      %v403 = vpack.c.b16 %v381, %v380
      %v404 = vpack.c.b16 %v383, %v382
      %v405 = vpack.c.b16 %v385, %v384
      %v406 = vpack.c.b16 %v387, %v386
      %v407 = vpack.c.b16 %v389, %v388
      %v408 = vpack.c.b16 %v391, %v390
      %v409 = vpack.c.b16 %v393, %v392
      %426 = vmatpush.bf16.msra.mxu0 %v401
      %427 = vmatpush.bf16.msra.mxu0 %v400
      %428 = vmatpush.bf16.msra.mxu0 %v399
      %429 = vmatpush.bf16.msra.mxu0 %v398
      %430 = vmatpush.bf16.msra.mxu0 %v397
      %431 = vmatpush.bf16.msra.mxu0 %v396
      %432 = vmatpush.bf16.msra.mxu0 %v395
      %433 = vmatpush.bf16.msra.mxu0 %v394
      %434 = vmatmul.bf16.gmra.mxu0 %v322
      %v435 = vpop.f32.mrf.mxu0
      %v436 = vadd.f32 %v293, %v435
      %v437 = vpop.f32.mrf.mxu0
      %v438 = vadd.f32 %v298, %v437
      %439 = vmatmul.bf16.gmra.mxu0 %v324
      %v440 = vpop.f32.mrf.mxu0
      %v441 = vadd.f32 %v303, %v440
      %v442 = vpop.f32.mrf.mxu0
      %v443 = vadd.f32 %v308, %v442
      %444 = vdwg.mxu0
      %445 = vmatpush.bf16.msra.mxu0 %v409
      %446 = vmatpush.bf16.msra.mxu0 %v408
      %447 = vmatpush.bf16.msra.mxu0 %v407
      %448 = vmatpush.bf16.msra.mxu0 %v406
      %449 = vmatpush.bf16.msra.mxu0 %v405
      %450 = vmatpush.bf16.msra.mxu0 %v404
      %451 = vmatpush.bf16.msra.mxu0 %v403
      %452 = vmatpush.bf16.msra.mxu0 %v402
      %453 = vmatmul.bf16.gmra.mxu0 %v323
      %v454 = vpop.f32.mrf.mxu0
      %v455 = vadd.f32 %v436, %v454
      %v456 = vpop.f32.mrf.mxu0
      %v457 = vadd.f32 %v438, %v456
      %458 = vmatmul.bf16.gmra.mxu0 %v325
      %v459 = vpop.f32.mrf.mxu0
      %v460 = vadd.f32 %v441, %v459
      %v461 = vpop.f32.mrf.mxu0
      %v462 = vadd.f32 %v443, %v461
      %463 = vdwg.mxu0
      %v464 = vmax.f32 %v455, 0.0
      %v465 = vmax.f32 %v457, 0.0
      %v466 = vmax.f32 %v460, 0.0
      %v467 = vmax.f32 %v462, 0.0
      %vm468 = vcmask 662528
      %469 = vst.msk [vmem:[%s248] sm:$0xff] %vm468, %v464
      %470 = vst.msk [vmem:[%s248 + $0x8] sm:$0xff] %vm468, %v465
      %471 = vst.msk [vmem:[%s248 + $0x10] sm:$0xff] %vm468, %v466
      %472 = vst.msk [vmem:[%s248 + $0x18] sm:$0xff] %vm468, %v467
      %s473 = smul.u32 4, %s18
      %p474 = scmp.lt.s32.totalorder %s19, 1
      %s475 = scalar_select %p474, %s19, 1
      %p476 = scmp.lt.s32.totalorder %s473, 7
      %s477 = scalar_select %p476, %s473, 7
      %s478 = smul.addr %s475, 8
      %s479 = sadd.s32 %s477, %s478
      %s480 = smul.addr %s479, 8
      %s481 = scalar_lea.vmem %s3, %s480
      // Predicated region
      $region33: #{icil_forward.11} parent=31 // pred_check
        %p482 = pneg %p126
      $region34: #{icil_forward.11} parent=31 // pred_check_branch
        %484 = sbr.rel (%p482) target = $region36
      $region35: #{icil_forward.11} parent=31 // pred_region
        %s485 = smul.u32 4, %s18
      $region36: #{icil_forward.11} parent=31 // pred_fallthru
        _
    $region32: #{icil_forward.11} parent=5 // pred_fallthru
      _
    %p486 = scmp.le.s32.totalorder 2, %s9
    // Predicated region
    $region37: #{icil_forward.11} parent=5 // pred_check
      %p487 = pneg %p486
    $region38: #{icil_forward.11} parent=5 // pred_check_branch
      %489 = sbr.rel (%p487) target = $region40
    $region39: #{icil_forward.11} parent=5 // pred_region
      %s490 = ssub.s32 %s9, 2
      // Predicated region
      $region41: #{icil_forward.11} parent=39 // pred_check
        %p491 = pneg %p132
      $region42: #{icil_forward.11} parent=39 // pred_check_branch
        %493 = sbr.rel (%p491) target = $region44
      $region43: #{icil_forward.11} parent=39 // pred_region
        %s494 = smul.u32 4, %s20
        %p495 = scmp.lt.s32.totalorder %s21, 1
        %s496 = scalar_select %p495, %s21, 1
        %p497 = scmp.lt.s32.totalorder %s494, 7
        %s498 = scalar_select %p497, %s494, 7
        %s499 = smul.addr %s496, 8
        %s500 = sadd.s32 %s498, %s499
        %s501 = smul.addr %s500, 8
        %s502 = scalar_lea.vmem %s3, %s501
      $region44: #{icil_forward.11} parent=39 // pred_fallthru
        _
    $region40: #{icil_forward.11} parent=5 // pred_fallthru
      _
  $region6: #{icil_forward.11} parent=0 // loop_footer
    %s13 = sadd.s32 1, %s9
  $region7: #{icil_forward.11} parent=0 // loop_footer_branch
    %8 = sbr.rel target = $region3
  $region8: #{icil_forward.11} parent=0 // loop_exit
    _

// kernel: icil_forward.13
$region0: #{icil_forward.13}
  #allocation0 [shape = 'u32[]', space=smem, size = 0x4, offset = 0x4, fixed_abs, tag = 'smem constant byte address 0x4 - core index']
  #allocation1 [shape = 'u32[72,128]{1,0:T(1,128)}', space=vmem, size = 0x9000, scoped, tag = 'internal scratch']
  %s0 = inlined_call_operand.vmem [shape: bf16[8,64], index: 0, kind: input, shape index: {}]
  %s1 = inlined_call_operand.vmem [shape: bf16[2,64,32], index: 1, kind: input, shape index: {}]
  %s2 = inlined_call_operand.vmem [shape: f32[2,1,32], index: 2, kind: input, shape index: {}]
  %s3 = inlined_call_operand.vmem [shape: bf16[2,32,32], index: 3, kind: input, shape index: {}]
  %s4 = inlined_call_operand.vmem [shape: f32[2,1,32], index: 4, kind: input, shape index: {}]
  %s5 = inlined_call_operand.vmem [shape: bf16[2,32,4], index: 5, kind: input, shape index: {}]
  %s6 = inlined_call_operand.vmem [shape: f32[2,1,4], index: 6, kind: input, shape index: {}]
  %s7 = inlined_call_operand.vmem [shape: f32[2,8,4], index: 7, kind: output, shape index: {}]
  %s8 = sld [smem:[#allocation0]]
  $region61: #{icil_forward.13} parent=0
    _
  %s10 = ssub.s32 1, %s8
  %s11 = scalar_select 0, %s10, %s8
  loop: start=0, step=1, limit=4
  $region2: #{icil_forward.13} parent=0 // loop_pre_header
    _
  $region3: #{icil_forward.13} parent=0 // loop_header
    %s13 = sphi 0, %s17
    %p14 = scmp.ge.s32.totalorder %s13, 4
    %s21 = sphi 0, %s21
    %s23 = sphi 0, %s21
    %s24 = sphi 0, %s23
    %s38 = sphi 0, %s24
    %s44 = sphi 0, %s46
    %s47 = sphi 0, %s44
    %s48 = sphi 0, %s47
    %s64 = sphi 0, %s48
    %s70 = sphi 0, %s72
    %s73 = sphi 0, %s70
    %s74 = sphi 0, %s73
    %s90 = sphi 0, %s74
    %s96 = sphi 0, %s98
    %s99 = sphi 0, %s96
    %s100 = sphi 0, %s99
    %s116 = sphi 0, %s100
    %s122 = sphi 0, %s124
    %s125 = sphi 0, %s122
    %s126 = sphi 0, %s125
    %s142 = sphi 0, %s126
    %s148 = sphi 0, %s150
    %s151 = sphi 0, %s148
    %s152 = sphi 0, %s151
    %s168 = sphi 0, %s152
    %s174 = sphi 0, %s176
    %s177 = sphi 0, %s174
    %s178 = sphi 0, %s177
    %s194 = sphi 0, %s178
    %s200 = sphi 0, %s202
    %s203 = sphi 0, %s200
    %s204 = sphi 0, %s203
    %s220 = sphi 0, %s204
  $region4: #{icil_forward.13} parent=0 // loop_header_branch
    %16 = sbr.rel (%p14) target = $region8
  $region5: #{icil_forward.13} parent=0 // loop_body
    %s18 = ssub.s32 %s13, 1
    %s19 = ssub.s32 %s13, 2
    %s20 = sadd.s32 %s13, 1
    %s22 = sadd.s32 %s21, 1
    %p25 = scmp.eq.s32.totalorder %s13, 1
    %p26 = scmp.ne.s32.totalorder %s21, %s23
    %p27 = scmp.eq.s32.totalorder %s13, 0
    %p28 = por %p26, %p27
    %p29 = scmp.ne.s32.totalorder %s21, %s23
    %p30 = scmp.eq.s32.totalorder %s18, 1
    %p31 = por %p29, %p30
    %p32 = scmp.ne.s32.totalorder %s23, %s24
    %p33 = scmp.eq.s32.totalorder %s18, 0
    %p34 = por %p32, %p33
    %p35 = scmp.ne.s32.totalorder %s23, %s24
    %p36 = scmp.eq.s32.totalorder %s19, 1
    %p37 = por %p35, %p36
    %p39 = scmp.ne.s32.totalorder %s24, %s38
    %p40 = scmp.eq.s32.totalorder %s19, 0
    %p41 = por %p39, %p40
    %s42 = ssub.s32 %s13, %s20
    %p43 = scmp.eq.s32.totalorder %s42, 0
    %s45 = sadd.s32 %s44, 1
    %s46 = scalar_select %p43, %s44, %s45
    %p49 = pneg %p43
    %p50 = scmp.eq.s32.totalorder %s13, 1
    %p51 = por %p49, %p50
    %p52 = scmp.ne.s32.totalorder %s44, %s47
    %p53 = scmp.eq.s32.totalorder %s13, 0
    %p54 = por %p52, %p53
    %p55 = scmp.ne.s32.totalorder %s44, %s47
    %p56 = scmp.eq.s32.totalorder %s18, 1
    %p57 = por %p55, %p56
    %p58 = scmp.ne.s32.totalorder %s47, %s48
    %p59 = scmp.eq.s32.totalorder %s18, 0
    %p60 = por %p58, %p59
    %p61 = scmp.ne.s32.totalorder %s47, %s48
    %p62 = scmp.eq.s32.totalorder %s19, 1
    %p63 = por %p61, %p62
    %p65 = scmp.ne.s32.totalorder %s48, %s64
    %p66 = scmp.eq.s32.totalorder %s19, 0
    %p67 = por %p65, %p66
    %s68 = ssub.s32 %s13, %s20
    %p69 = scmp.eq.s32.totalorder %s68, 0
    %s71 = sadd.s32 %s70, 1
    %s72 = scalar_select %p69, %s70, %s71
    %p75 = pneg %p69
    %p76 = scmp.eq.s32.totalorder %s13, 1
    %p77 = por %p75, %p76
    %p78 = scmp.ne.s32.totalorder %s70, %s73
    %p79 = scmp.eq.s32.totalorder %s13, 0
    %p80 = por %p78, %p79
    %p81 = scmp.ne.s32.totalorder %s70, %s73
    %p82 = scmp.eq.s32.totalorder %s18, 1
    %p83 = por %p81, %p82
    %p84 = scmp.ne.s32.totalorder %s73, %s74
    %p85 = scmp.eq.s32.totalorder %s18, 0
    %p86 = por %p84, %p85
    %p87 = scmp.ne.s32.totalorder %s73, %s74
    %p88 = scmp.eq.s32.totalorder %s19, 1
    %p89 = por %p87, %p88
    %p91 = scmp.ne.s32.totalorder %s74, %s90
    %p92 = scmp.eq.s32.totalorder %s19, 0
    %p93 = por %p91, %p92
    %s94 = ssub.s32 %s13, %s20
    %p95 = scmp.eq.s32.totalorder %s94, 0
    %s97 = sadd.s32 %s96, 1
    %s98 = scalar_select %p95, %s96, %s97
    %p101 = pneg %p95
    %p102 = scmp.eq.s32.totalorder %s13, 1
    %p103 = por %p101, %p102
    %p104 = scmp.ne.s32.totalorder %s96, %s99
    %p105 = scmp.eq.s32.totalorder %s13, 0
    %p106 = por %p104, %p105
    %p107 = scmp.ne.s32.totalorder %s96, %s99
    %p108 = scmp.eq.s32.totalorder %s18, 1
    %p109 = por %p107, %p108
    %p110 = scmp.ne.s32.totalorder %s99, %s100
    %p111 = scmp.eq.s32.totalorder %s18, 0
    %p112 = por %p110, %p111
    %p113 = scmp.ne.s32.totalorder %s99, %s100
    %p114 = scmp.eq.s32.totalorder %s19, 1
    %p115 = por %p113, %p114
    %p117 = scmp.ne.s32.totalorder %s100, %s116
    %p118 = scmp.eq.s32.totalorder %s19, 0
    %p119 = por %p117, %p118
    %s120 = ssub.s32 %s13, %s20
    %p121 = scmp.eq.s32.totalorder %s120, 0
    %s123 = sadd.s32 %s122, 1
    %s124 = scalar_select %p121, %s122, %s123
    %p127 = pneg %p121
    %p128 = scmp.eq.s32.totalorder %s13, 1
    %p129 = por %p127, %p128
    %p130 = scmp.ne.s32.totalorder %s122, %s125
    %p131 = scmp.eq.s32.totalorder %s13, 0
    %p132 = por %p130, %p131
    %p133 = scmp.ne.s32.totalorder %s122, %s125
    %p134 = scmp.eq.s32.totalorder %s18, 1
    %p135 = por %p133, %p134
    %p136 = scmp.ne.s32.totalorder %s125, %s126
    %p137 = scmp.eq.s32.totalorder %s18, 0
    %p138 = por %p136, %p137
    %p139 = scmp.ne.s32.totalorder %s125, %s126
    %p140 = scmp.eq.s32.totalorder %s19, 1
    %p141 = por %p139, %p140
    %p143 = scmp.ne.s32.totalorder %s126, %s142
    %p144 = scmp.eq.s32.totalorder %s19, 0
    %p145 = por %p143, %p144
    %s146 = ssub.s32 %s13, %s20
    %p147 = scmp.eq.s32.totalorder %s146, 0
    %s149 = sadd.s32 %s148, 1
    %s150 = scalar_select %p147, %s148, %s149
    %p153 = pneg %p147
    %p154 = scmp.eq.s32.totalorder %s13, 1
    %p155 = por %p153, %p154
    %p156 = scmp.ne.s32.totalorder %s148, %s151
    %p157 = scmp.eq.s32.totalorder %s13, 0
    %p158 = por %p156, %p157
    %p159 = scmp.ne.s32.totalorder %s148, %s151
    %p160 = scmp.eq.s32.totalorder %s18, 1
    %p161 = por %p159, %p160
    %p162 = scmp.ne.s32.totalorder %s151, %s152
    %p163 = scmp.eq.s32.totalorder %s18, 0
    %p164 = por %p162, %p163
    %p165 = scmp.ne.s32.totalorder %s151, %s152
    %p166 = scmp.eq.s32.totalorder %s19, 1
    %p167 = por %p165, %p166
    %p169 = scmp.ne.s32.totalorder %s152, %s168
    %p170 = scmp.eq.s32.totalorder %s19, 0
    %p171 = por %p169, %p170
    %s172 = ssub.s32 %s13, %s20
    %p173 = scmp.eq.s32.totalorder %s172, 0
    %s175 = sadd.s32 %s174, 1
    %s176 = scalar_select %p173, %s174, %s175
    %p179 = pneg %p173
    %p180 = scmp.eq.s32.totalorder %s13, 1
    %p181 = por %p179, %p180
    %p182 = scmp.ne.s32.totalorder %s174, %s177
    %p183 = scmp.eq.s32.totalorder %s13, 0
    %p184 = por %p182, %p183
    %p185 = scmp.ne.s32.totalorder %s174, %s177
    %p186 = scmp.eq.s32.totalorder %s18, 1
    %p187 = por %p185, %p186
    %p188 = scmp.ne.s32.totalorder %s177, %s178
    %p189 = scmp.eq.s32.totalorder %s18, 0
    %p190 = por %p188, %p189
    %p191 = scmp.ne.s32.totalorder %s177, %s178
    %p192 = scmp.eq.s32.totalorder %s19, 1
    %p193 = por %p191, %p192
    %p195 = scmp.ne.s32.totalorder %s178, %s194
    %p196 = scmp.eq.s32.totalorder %s19, 0
    %p197 = por %p195, %p196
    %s198 = ssub.s32 %s13, %s20
    %p199 = scmp.eq.s32.totalorder %s198, 0
    %s201 = sadd.s32 %s200, 1
    %s202 = scalar_select %p199, %s200, %s201
    %p205 = pneg %p199
    %p206 = scmp.eq.s32.totalorder %s13, 1
    %p207 = por %p205, %p206
    %p208 = scmp.ne.s32.totalorder %s200, %s203
    %p209 = scmp.eq.s32.totalorder %s13, 0
    %p210 = por %p208, %p209
    %p211 = scmp.ne.s32.totalorder %s200, %s203
    %p212 = scmp.eq.s32.totalorder %s18, 1
    %p213 = por %p211, %p212
    %p214 = scmp.ne.s32.totalorder %s203, %s204
    %p215 = scmp.eq.s32.totalorder %s18, 0
    %p216 = por %p214, %p215
    %p217 = scmp.ne.s32.totalorder %s203, %s204
    %p218 = scmp.eq.s32.totalorder %s19, 1
    %p219 = por %p217, %p218
    %p221 = scmp.ne.s32.totalorder %s204, %s220
    %p222 = scmp.eq.s32.totalorder %s19, 0
    %p223 = por %p221, %p222
    %p224 = scmp.le.s32.totalorder 1, %s13
    %p225 = scmp.lt.s32.totalorder %s13, 3
    %p226 = pnand %p224, %p225
    %p227 = pneg %p226
    // Predicated region
    $region9: #{icil_forward.13} parent=5 // pred_check
      _
    $region10: #{icil_forward.13} parent=5 // pred_check_branch
      %229 = sbr.rel (%p226) target = $region12
    $region11: #{icil_forward.13} parent=5 // pred_region
      %s230 = ssub.s32 %s13, 1
      // Predicated region
      $region13: #{icil_forward.13} parent=11 // pred_check
        %p231 = pneg %p34
      $region14: #{icil_forward.13} parent=11 // pred_check_branch
        %233 = sbr.rel (%p231) target = $region16
      $region15: #{icil_forward.13} parent=11 // pred_region
        _
      $region16: #{icil_forward.13} parent=11 // pred_fallthru
        _
    $region12: #{icil_forward.13} parent=5 // pred_fallthru
      _
    %p234 = scmp.lt.s32.totalorder %s13, 2
    // Predicated region
    $region17: #{icil_forward.13} parent=5 // pred_check
      %p235 = pneg %p234
    $region18: #{icil_forward.13} parent=5 // pred_check_branch
      %237 = sbr.rel (%p235) target = $region20
    $region19: #{icil_forward.13} parent=5 // pred_region
      // Predicated region
      $region21: #{icil_forward.13} parent=19 // pred_check
        %p238 = pneg %p54
      $region22: #{icil_forward.13} parent=19 // pred_check_branch
        %240 = sbr.rel (%p238) target = $region24
      $region23: #{icil_forward.13} parent=19 // pred_region
        %p241 = scmp.lt.s32.totalorder %s13, 1
        %s242 = scalar_select %p241, %s13, 1
        %s243 = smul.addr %s242, 8
        %s244 = smul.addr %s243, 4
        %s245 = scalar_lea.vmem %s1, %s244
      $region24: #{icil_forward.13} parent=19 // pred_fallthru
        _
      // Predicated region
      $region25: #{icil_forward.13} parent=19 // pred_check
        %p246 = pneg %p80
      $region26: #{icil_forward.13} parent=19 // pred_check_branch
        %248 = sbr.rel (%p246) target = $region28
      $region27: #{icil_forward.13} parent=19 // pred_region
        %p249 = scmp.lt.s32.totalorder %s13, 1
        %s250 = scalar_select %p249, %s13, 1
        %s251 = scalar_lea.vmem %s2, %s250
      $region28: #{icil_forward.13} parent=19 // pred_fallthru
        _
      // Predicated region
      $region29: #{icil_forward.13} parent=19 // pred_check
        %p252 = pneg %p106
      $region30: #{icil_forward.13} parent=19 // pred_check_branch
        %254 = sbr.rel (%p252) target = $region32
      $region31: #{icil_forward.13} parent=19 // pred_region
        %p255 = scmp.lt.s32.totalorder %s13, 1
        %s256 = scalar_select %p255, %s13, 1
        %s257 = smul.addr %s256, 4
        %s258 = smul.addr %s257, 4
        %s259 = scalar_lea.vmem %s3, %s258
      $region32: #{icil_forward.13} parent=19 // pred_fallthru
        _
      // Predicated region
      $region33: #{icil_forward.13} parent=19 // pred_check
        %p260 = pneg %p132
      $region34: #{icil_forward.13} parent=19 // pred_check_branch
        %262 = sbr.rel (%p260) target = $region36
      $region35: #{icil_forward.13} parent=19 // pred_region
        %p263 = scmp.lt.s32.totalorder %s13, 1
        %s264 = scalar_select %p263, %s13, 1
        %s265 = scalar_lea.vmem %s4, %s264
      $region36: #{icil_forward.13} parent=19 // pred_fallthru
        _
      // Predicated region
      $region37: #{icil_forward.13} parent=19 // pred_check
        %p266 = pneg %p158
      $region38: #{icil_forward.13} parent=19 // pred_check_branch
        %268 = sbr.rel (%p266) target = $region40
      $region39: #{icil_forward.13} parent=19 // pred_region
        %p269 = scmp.lt.s32.totalorder %s13, 1
        %s270 = scalar_select %p269, %s13, 1
        %s271 = smul.addr %s270, 4
        %s272 = smul.addr %s271, 4
        %s273 = scalar_lea.vmem %s5, %s272
      $region40: #{icil_forward.13} parent=19 // pred_fallthru
        _
      // Predicated region
      $region41: #{icil_forward.13} parent=19 // pred_check
        %p274 = pneg %p184
      $region42: #{icil_forward.13} parent=19 // pred_check_branch
        %276 = sbr.rel (%p274) target = $region44
      $region43: #{icil_forward.13} parent=19 // pred_region
        %p277 = scmp.lt.s32.totalorder %s13, 1
        %s278 = scalar_select %p277, %s13, 1
        %s279 = scalar_lea.vmem %s6, %s278
      $region44: #{icil_forward.13} parent=19 // pred_fallthru
        _
    $region20: #{icil_forward.13} parent=5 // pred_fallthru
      _
    %p280 = scmp.le.s32.totalorder 1, %s13
    %p281 = scmp.lt.s32.totalorder %s13, 3
    %p282 = pnand %p280, %p281
    %p283 = pneg %p282
    // Predicated region
    $region45: #{icil_forward.13} parent=5 // pred_check
      _
    $region46: #{icil_forward.13} parent=5 // pred_check_branch
      %285 = sbr.rel (%p282) target = $region48
    $region47: #{icil_forward.13} parent=5 // pred_region
      %s286 = ssub.s32 %s13, 1
      %p287 = pneg %p34
      %p288 = pneg %p31
      %p289 = scmp.lt.s32.totalorder %s18, 1
      %s290 = scalar_select %p289, %s18, 1
      %s291 = smul.addr %s290, 8
      %s292 = smul.addr %s291, 4
      %s293 = scalar_lea.vmem %s1, %s292
      %p294 = pneg %p60
      %p295 = pneg %p57
      %p296 = scmp.lt.s32.totalorder %s18, 1
      %s297 = scalar_select %p296, %s18, 1
      %s298 = scalar_lea.vmem %s2, %s297
      %p299 = pneg %p86
      %p300 = pneg %p83
      %p301 = scmp.lt.s32.totalorder %s18, 1
      %s302 = scalar_select %p301, %s18, 1
      %s303 = smul.addr %s302, 4
      %s304 = smul.addr %s303, 4
      %s305 = scalar_lea.vmem %s3, %s304
      %p306 = pneg %p112
      %p307 = pneg %p109
      %p308 = scmp.lt.s32.totalorder %s18, 1
      %s309 = scalar_select %p308, %s18, 1
      %s310 = scalar_lea.vmem %s4, %s309
      %p311 = pneg %p138
      %p312 = pneg %p135
      %p313 = scmp.lt.s32.totalorder %s18, 1
      %s314 = scalar_select %p313, %s18, 1
      %s315 = smul.addr %s314, 4
      %s316 = smul.addr %s315, 4
      %s317 = scalar_lea.vmem %s5, %s316
      %p318 = pneg %p164
      %p319 = pneg %p161
      %p320 = scmp.lt.s32.totalorder %s18, 1
      %s321 = scalar_select %p320, %s18, 1
      %s322 = scalar_lea.vmem %s6, %s321
      %p323 = pneg %p190
      %p324 = pneg %p187
      %p325 = pneg %p216
      %p326 = pneg %p213
      %p327 = scmp.lt.s32.totalorder %s18, 1
      %s328 = scalar_select %p327, %s18, 1
      %s329 = smul.addr %s328, 8
      %s330 = scalar_lea.vmem %s7, %s329
      %p331 = scmp.lt.s32.totalorder %s18, 1
      %s332 = scalar_select %p331, %s18, 1
      %s333 = smul.addr %s332, 8
      %s334 = smul.addr %s333, 4
      %s335 = scalar_lea.vmem %s1, %s334
      %p336 = scmp.lt.s32.totalorder %s18, 1
      %s337 = scalar_select %p336, %s18, 1
      %s338 = scalar_lea.vmem %s2, %s337
      %p339 = scmp.lt.s32.totalorder %s18, 1
      %s340 = scalar_select %p339, %s18, 1
      %s341 = smul.addr %s340, 4
      %s342 = smul.addr %s341, 4
      %s343 = scalar_lea.vmem %s3, %s342
      %p344 = scmp.lt.s32.totalorder %s18, 1
      %s345 = scalar_select %p344, %s18, 1
      %s346 = scalar_lea.vmem %s4, %s345
      %p347 = scmp.lt.s32.totalorder %s18, 1
      %s348 = scalar_select %p347, %s18, 1
      %s349 = smul.addr %s348, 4
      %s350 = smul.addr %s349, 4
      %s351 = scalar_lea.vmem %s5, %s350
      %p352 = scmp.lt.s32.totalorder %s18, 1
      %s353 = scalar_select %p352, %s18, 1
      %s354 = scalar_lea.vmem %s6, %s353
      %p355 = scmp.lt.s32.totalorder %s18, 1
      %s356 = scalar_select %p355, %s18, 1
      %s357 = smul.addr %s356, 8
      %s358 = scalar_lea.vmem %s7, %s357
      %v360 = vld [vmem:[%s0] sm:$0xf]
      %v361 = vld [vmem:[%s335] sm:$0xf]
      %v362 = vld [vmem:[%s335 + $0x4] sm:$0xf]
      %v363 = vld [vmem:[%s335 + $0x8] sm:$0xf]
      %v364 = vld [vmem:[%s335 + $0xc] sm:$0xf]
      %v365 = vld [vmem:[%s335 + $0x10] sm:$0xf]
      %v366 = vld [vmem:[%s335 + $0x14] sm:$0xf]
      %v367 = vld [vmem:[%s335 + $0x18] sm:$0xf]
      %v368 = vld [vmem:[%s335 + $0x1c] sm:$0xf]
      %v369 = vld [vmem:[%s338] sm:$0x1]
      %v371 = vperm.slane %v369, 0
      %v381 = vunpack.c.l.b16 %v361
      %v382 = vunpack.c.l.b16 %v362
      %v383 = vunpack.c.l.b16 %v363
      %v384 = vunpack.c.l.b16 %v364
      %v385 = vunpack.c.l.b16 %v365
      %v386 = vunpack.c.l.b16 %v366
      %v387 = vunpack.c.l.b16 %v367
      %v388 = vunpack.c.l.b16 %v368
      %v389 = vpack.c.b16 %v382, %v381
      %v390 = vpack.c.b16 %v384, %v383
      %v391 = vpack.c.b16 %v386, %v385
      %v392 = vpack.c.b16 %v388, %v387
      %vm397 = vcmask 523264
      %v399 = vsel %vm397, %v360, 0
      %401 = vmatpush.bf16.msra.mxu0 0
      %402 = vmatpush.bf16.msra.mxu0 0
      %403 = vmatpush.bf16.msra.mxu0 0
      %404 = vmatpush.bf16.msra.mxu0 0
      %405 = vmatpush.bf16.msra.mxu0 %v392
      %406 = vmatpush.bf16.msra.mxu0 %v391
      %407 = vmatpush.bf16.msra.mxu0 %v390
      %408 = vmatpush.bf16.msra.mxu0 %v389
      %409 = vmatmul.bf16.gmra.mxu0 %v399
      %v410 = vpop.f32.mrf.mxu0
      %v411 = vadd.f32 %v371, %v410
      %v412 = vpop.f32.mrf.mxu0
      %413 = vdwg.mxu0
      %vm414 = vcmp.gt.f32.partialorder %v411, 0.0
      %v415 = vmin.f32 %v411, 0.0
      %v416 = vmul.f32 %v415, 1.442695
      %v417 = vpow.pop %v416
      %v418 = vsub.f32 %v417, 1.0
      %v419 = vsel %vm414, %v411, %v418
      %v420 = vpack.c.bf16 %v419, %v419
      %v421 = vld [vmem:[%s343] sm:$0xf]
      %v422 = vld [vmem:[%s343 + $0x4] sm:$0xf]
      %v423 = vld [vmem:[%s343 + $0x8] sm:$0xf]
      %v424 = vld [vmem:[%s343 + $0xc] sm:$0xf]
      %v425 = vld [vmem:[%s346] sm:$0x1]
      %v427 = vperm.slane %v425, 0
      %v433 = vunpack.c.l.b16 %v421
      %v434 = vunpack.c.l.b16 %v422
      %v435 = vunpack.c.l.b16 %v423
      %v436 = vunpack.c.l.b16 %v424
      %v437 = vpack.c.b16 %v434, %v433
      %v438 = vpack.c.b16 %v436, %v435
      %vm441 = vcmask 261120
      %v443 = vsel %vm441, %v420, 0
      %445 = vmatpush.bf16.msra.mxu0 0
      %446 = vmatpush.bf16.msra.mxu0 0
      %447 = vmatpush.bf16.msra.mxu0 0
      %448 = vmatpush.bf16.msra.mxu0 0
      %449 = vmatpush.bf16.msra.mxu0 0
      %450 = vmatpush.bf16.msra.mxu0 0
      %451 = vmatpush.bf16.msra.mxu0 %v438
      %452 = vmatpush.bf16.msra.mxu0 %v437
      %453 = vmatmul.bf16.gmra.mxu0 %v443
      %v454 = vpop.f32.mrf.mxu0
      %v455 = vadd.f32 %v427, %v454
      %v456 = vpop.f32.mrf.mxu0
      %457 = vdwg.mxu0
      %vm458 = vcmp.gt.f32.partialorder %v455, 0.0
      %v459 = vmin.f32 %v455, 0.0
      %v460 = vmul.f32 %v459, 1.442695
      %v461 = vpow.pop %v460
      %v462 = vsub.f32 %v461, 1.0
      %v463 = vsel %vm458, %v455, %v462
      %v464 = vpack.c.bf16 %v463, %v463
      %v465 = vld [vmem:[%s351] sm:$0xf]
      %v466 = vld [vmem:[%s351 + $0x4] sm:$0xf]
      %v467 = vld [vmem:[%s351 + $0x8] sm:$0xf]
      %v468 = vld [vmem:[%s351 + $0xc] sm:$0xf]
      %v469 = vld [vmem:[%s354] sm:$0x1]
      %v471 = vperm.slane %v469, 0
      %v477 = vunpack.c.l.b16 %v465
      %v478 = vunpack.c.l.b16 %v466
      %v479 = vunpack.c.l.b16 %v467
      %v480 = vunpack.c.l.b16 %v468
      %v481 = vpack.c.b16 %v478, %v477
      %v482 = vpack.c.b16 %v480, %v479
      %v486 = vsel %vm441, %v464, 0
      %488 = vmatpush.bf16.msra.mxu0 0
      %489 = vmatpush.bf16.msra.mxu0 0
      %490 = vmatpush.bf16.msra.mxu0 0
      %491 = vmatpush.bf16.msra.mxu0 0
      %492 = vmatpush.bf16.msra.mxu0 0
      %493 = vmatpush.bf16.msra.mxu0 0
      %494 = vmatpush.bf16.msra.mxu0 %v482
      %495 = vmatpush.bf16.msra.mxu0 %v481
      %496 = vmatmul.bf16.gmra.mxu0 %v486
      %v497 = vpop.f32.mrf.mxu0
      %v498 = vadd.f32 %v471, %v497
      %v499 = vpop.f32.mrf.mxu0
      %500 = vdwg.mxu0
      %vm501 = vcmask 31744
      %502 = vst.msk [vmem:[%s358] sm:$0xff] %vm501, %v498
      %p503 = scmp.lt.s32.totalorder %s18, 1
      %s504 = scalar_select %p503, %s18, 1
      %s505 = smul.addr %s504, 8
      %s506 = scalar_lea.vmem %s7, %s505
      // Predicated region
      $region49: #{icil_forward.13} parent=47 // pred_check
        %p507 = pneg %p213
      $region50: #{icil_forward.13} parent=47 // pred_check_branch
        %509 = sbr.rel (%p507) target = $region52
      $region51: #{icil_forward.13} parent=47 // pred_region
        _
      $region52: #{icil_forward.13} parent=47 // pred_fallthru
        _
    $region48: #{icil_forward.13} parent=5 // pred_fallthru
      _
    %p510 = scmp.le.s32.totalorder 2, %s13
    // Predicated region
    $region53: #{icil_forward.13} parent=5 // pred_check
      %p511 = pneg %p510
    $region54: #{icil_forward.13} parent=5 // pred_check_branch
      %513 = sbr.rel (%p511) target = $region56
    $region55: #{icil_forward.13} parent=5 // pred_region
      %s514 = ssub.s32 %s13, 2
      // Predicated region
      $region57: #{icil_forward.13} parent=55 // pred_check
        %p515 = pneg %p219
      $region58: #{icil_forward.13} parent=55 // pred_check_branch
        %517 = sbr.rel (%p515) target = $region60
      $region59: #{icil_forward.13} parent=55 // pred_region
        %p518 = scmp.lt.s32.totalorder %s19, 1
        %s519 = scalar_select %p518, %s19, 1
        %s520 = smul.addr %s519, 8
        %s521 = scalar_lea.vmem %s7, %s520
      $region60: #{icil_forward.13} parent=55 // pred_fallthru
        _
    $region56: #{icil_forward.13} parent=5 // pred_fallthru
      _
  $region6: #{icil_forward.13} parent=0 // loop_footer
    %s17 = sadd.s32 1, %s13
  $region7: #{icil_forward.13} parent=0 // loop_footer_branch
    %12 = sbr.rel target = $region3
  $region8: #{icil_forward.13} parent=0 // loop_exit
    _

// kernel: icil_forward.12
$region0: #{icil_forward.12}
  #allocation0 [shape = 'u32[]', space=smem, size = 0x4, offset = 0x4, fixed_abs, tag = 'smem constant byte address 0x4 - core index']
  #allocation1 [shape = 'u32[72,128]{1,0:T(1,128)}', space=vmem, size = 0x9000, scoped, tag = 'internal scratch']
  %s0 = inlined_call_operand.vmem [shape: bf16[2,2,2592], index: 0, kind: input, shape index: {}]
  %s1 = inlined_call_operand.vmem [shape: bf16[2,2592,256], index: 1, kind: input, shape index: {}]
  %s2 = inlined_call_operand.vmem [shape: f32[2,1,256], index: 2, kind: input, shape index: {}]
  %s3 = inlined_call_operand.vmem [shape: bf16[2,256,32], index: 3, kind: input, shape index: {}]
  %s4 = inlined_call_operand.vmem [shape: f32[2,1,32], index: 4, kind: input, shape index: {}]
  %s5 = inlined_call_operand.vmem [shape: f32[2,2,32], index: 5, kind: output, shape index: {}]
  %s6 = sld [smem:[#allocation0]]
  $region53: #{icil_forward.12} parent=0
    _
  %s8 = ssub.s32 1, %s6
  %s9 = scalar_select 0, %s8, %s6
  loop: start=0, step=1, limit=4
  $region2: #{icil_forward.12} parent=0 // loop_pre_header
    _
  $region3: #{icil_forward.12} parent=0 // loop_header
    %s11 = sphi 0, %s15
    %p12 = scmp.ge.s32.totalorder %s11, 4
    %s21 = sphi 0, %s23
    %s24 = sphi 0, %s21
    %s25 = sphi 0, %s24
    %s41 = sphi 0, %s25
    %s47 = sphi 0, %s49
    %s50 = sphi 0, %s47
    %s51 = sphi 0, %s50
    %s67 = sphi 0, %s51
    %s73 = sphi 0, %s75
    %s76 = sphi 0, %s73
    %s77 = sphi 0, %s76
    %s93 = sphi 0, %s77
    %s99 = sphi 0, %s101
    %s102 = sphi 0, %s99
    %s103 = sphi 0, %s102
    %s119 = sphi 0, %s103
    %s125 = sphi 0, %s127
    %s128 = sphi 0, %s125
    %s129 = sphi 0, %s128
    %s145 = sphi 0, %s129
    %s151 = sphi 0, %s153
    %s154 = sphi 0, %s151
    %s155 = sphi 0, %s154
    %s171 = sphi 0, %s155
  $region4: #{icil_forward.12} parent=0 // loop_header_branch
    %14 = sbr.rel (%p12) target = $region8
  $region5: #{icil_forward.12} parent=0 // loop_body
    %s16 = ssub.s32 %s11, 1
    %s17 = ssub.s32 %s11, 2
    %s18 = sadd.s32 %s11, 1
    %s19 = ssub.s32 %s11, %s18
    %p20 = scmp.eq.s32.totalorder %s19, 0
    %s22 = sadd.s32 %s21, 1
    %s23 = scalar_select %p20, %s21, %s22
    %p26 = pneg %p20
    %p27 = scmp.eq.s32.totalorder %s11, 1
    %p28 = por %p26, %p27
    %p29 = scmp.ne.s32.totalorder %s21, %s24
    %p30 = scmp.eq.s32.totalorder %s11, 0
    %p31 = por %p29, %p30
    %p32 = scmp.ne.s32.totalorder %s21, %s24
    %p33 = scmp.eq.s32.totalorder %s16, 1
    %p34 = por %p32, %p33
    %p35 = scmp.ne.s32.totalorder %s24, %s25
    %p36 = scmp.eq.s32.totalorder %s16, 0
    %p37 = por %p35, %p36
    %p38 = scmp.ne.s32.totalorder %s24, %s25
    %p39 = scmp.eq.s32.totalorder %s17, 1
    %p40 = por %p38, %p39
    %p42 = scmp.ne.s32.totalorder %s25, %s41
    %p43 = scmp.eq.s32.totalorder %s17, 0
    %p44 = por %p42, %p43
    %s45 = ssub.s32 %s11, %s18
    %p46 = scmp.eq.s32.totalorder %s45, 0
    %s48 = sadd.s32 %s47, 1
    %s49 = scalar_select %p46, %s47, %s48
    %p52 = pneg %p46
    %p53 = scmp.eq.s32.totalorder %s11, 1
    %p54 = por %p52, %p53
    %p55 = scmp.ne.s32.totalorder %s47, %s50
    %p56 = scmp.eq.s32.totalorder %s11, 0
    %p57 = por %p55, %p56
    %p58 = scmp.ne.s32.totalorder %s47, %s50
    %p59 = scmp.eq.s32.totalorder %s16, 1
    %p60 = por %p58, %p59
    %p61 = scmp.ne.s32.totalorder %s50, %s51
    %p62 = scmp.eq.s32.totalorder %s16, 0
    %p63 = por %p61, %p62
    %p64 = scmp.ne.s32.totalorder %s50, %s51
    %p65 = scmp.eq.s32.totalorder %s17, 1
    %p66 = por %p64, %p65
    %p68 = scmp.ne.s32.totalorder %s51, %s67
    %p69 = scmp.eq.s32.totalorder %s17, 0
    %p70 = por %p68, %p69
    %s71 = ssub.s32 %s11, %s18
    %p72 = scmp.eq.s32.totalorder %s71, 0
    %s74 = sadd.s32 %s73, 1
    %s75 = scalar_select %p72, %s73, %s74
    %p78 = pneg %p72
    %p79 = scmp.eq.s32.totalorder %s11, 1
    %p80 = por %p78, %p79
    %p81 = scmp.ne.s32.totalorder %s73, %s76
    %p82 = scmp.eq.s32.totalorder %s11, 0
    %p83 = por %p81, %p82
    %p84 = scmp.ne.s32.totalorder %s73, %s76
    %p85 = scmp.eq.s32.totalorder %s16, 1
    %p86 = por %p84, %p85
    %p87 = scmp.ne.s32.totalorder %s76, %s77
    %p88 = scmp.eq.s32.totalorder %s16, 0
    %p89 = por %p87, %p88
    %p90 = scmp.ne.s32.totalorder %s76, %s77
    %p91 = scmp.eq.s32.totalorder %s17, 1
    %p92 = por %p90, %p91
    %p94 = scmp.ne.s32.totalorder %s77, %s93
    %p95 = scmp.eq.s32.totalorder %s17, 0
    %p96 = por %p94, %p95
    %s97 = ssub.s32 %s11, %s18
    %p98 = scmp.eq.s32.totalorder %s97, 0
    %s100 = sadd.s32 %s99, 1
    %s101 = scalar_select %p98, %s99, %s100
    %p104 = pneg %p98
    %p105 = scmp.eq.s32.totalorder %s11, 1
    %p106 = por %p104, %p105
    %p107 = scmp.ne.s32.totalorder %s99, %s102
    %p108 = scmp.eq.s32.totalorder %s11, 0
    %p109 = por %p107, %p108
    %p110 = scmp.ne.s32.totalorder %s99, %s102
    %p111 = scmp.eq.s32.totalorder %s16, 1
    %p112 = por %p110, %p111
    %p113 = scmp.ne.s32.totalorder %s102, %s103
    %p114 = scmp.eq.s32.totalorder %s16, 0
    %p115 = por %p113, %p114
    %p116 = scmp.ne.s32.totalorder %s102, %s103
    %p117 = scmp.eq.s32.totalorder %s17, 1
    %p118 = por %p116, %p117
    %p120 = scmp.ne.s32.totalorder %s103, %s119
    %p121 = scmp.eq.s32.totalorder %s17, 0
    %p122 = por %p120, %p121
    %s123 = ssub.s32 %s11, %s18
    %p124 = scmp.eq.s32.totalorder %s123, 0
    %s126 = sadd.s32 %s125, 1
    %s127 = scalar_select %p124, %s125, %s126
    %p130 = pneg %p124
    %p131 = scmp.eq.s32.totalorder %s11, 1
    %p132 = por %p130, %p131
    %p133 = scmp.ne.s32.totalorder %s125, %s128
    %p134 = scmp.eq.s32.totalorder %s11, 0
    %p135 = por %p133, %p134
    %p136 = scmp.ne.s32.totalorder %s125, %s128
    %p137 = scmp.eq.s32.totalorder %s16, 1
    %p138 = por %p136, %p137
    %p139 = scmp.ne.s32.totalorder %s128, %s129
    %p140 = scmp.eq.s32.totalorder %s16, 0
    %p141 = por %p139, %p140
    %p142 = scmp.ne.s32.totalorder %s128, %s129
    %p143 = scmp.eq.s32.totalorder %s17, 1
    %p144 = por %p142, %p143
    %p146 = scmp.ne.s32.totalorder %s129, %s145
    %p147 = scmp.eq.s32.totalorder %s17, 0
    %p148 = por %p146, %p147
    %s149 = ssub.s32 %s11, %s18
    %p150 = scmp.eq.s32.totalorder %s149, 0
    %s152 = sadd.s32 %s151, 1
    %s153 = scalar_select %p150, %s151, %s152
    %p156 = pneg %p150
    %p157 = scmp.eq.s32.totalorder %s11, 1
    %p158 = por %p156, %p157
    %p159 = scmp.ne.s32.totalorder %s151, %s154
    %p160 = scmp.eq.s32.totalorder %s11, 0
    %p161 = por %p159, %p160
    %p162 = scmp.ne.s32.totalorder %s151, %s154
    %p163 = scmp.eq.s32.totalorder %s16, 1
    %p164 = por %p162, %p163
    %p165 = scmp.ne.s32.totalorder %s154, %s155
    %p166 = scmp.eq.s32.totalorder %s16, 0
    %p167 = por %p165, %p166
    %p168 = scmp.ne.s32.totalorder %s154, %s155
    %p169 = scmp.eq.s32.totalorder %s17, 1
    %p170 = por %p168, %p169
    %p172 = scmp.ne.s32.totalorder %s155, %s171
    %p173 = scmp.eq.s32.totalorder %s17, 0
    %p174 = por %p172, %p173
    %p175 = scmp.le.s32.totalorder 1, %s11
    %p176 = scmp.lt.s32.totalorder %s11, 3
    %p177 = pnand %p175, %p176
    %p178 = pneg %p177
    // Predicated region
    $region9: #{icil_forward.12} parent=5 // pred_check
      _
    $region10: #{icil_forward.12} parent=5 // pred_check_branch
      %180 = sbr.rel (%p177) target = $region12
    $region11: #{icil_forward.12} parent=5 // pred_region
      %s181 = ssub.s32 %s11, 1
    $region12: #{icil_forward.12} parent=5 // pred_fallthru
      _
    %p182 = scmp.lt.s32.totalorder %s11, 2
    // Predicated region
    $region13: #{icil_forward.12} parent=5 // pred_check
      %p183 = pneg %p182
    $region14: #{icil_forward.12} parent=5 // pred_check_branch
      %185 = sbr.rel (%p183) target = $region16
    $region15: #{icil_forward.12} parent=5 // pred_region
      // Predicated region
      $region17: #{icil_forward.12} parent=15 // pred_check
        %p186 = pneg %p31
      $region18: #{icil_forward.12} parent=15 // pred_check_branch
        %188 = sbr.rel (%p186) target = $region20
      $region19: #{icil_forward.12} parent=15 // pred_region
        %p189 = scmp.lt.s32.totalorder %s11, 1
        %s190 = scalar_select %p189, %s11, 1
        %s191 = smul.addr %s190, 21
        %s192 = scalar_lea.vmem %s0, %s191
      $region20: #{icil_forward.12} parent=15 // pred_fallthru
        _
      // Predicated region
      $region21: #{icil_forward.12} parent=15 // pred_check
        %p193 = pneg %p57
      $region22: #{icil_forward.12} parent=15 // pred_check_branch
        %195 = sbr.rel (%p193) target = $region24
      $region23: #{icil_forward.12} parent=15 // pred_region
        %p196 = scmp.lt.s32.totalorder %s11, 1
        %s197 = scalar_select %p196, %s11, 1
        %s198 = smul.addr %s197, 648
        %s199 = smul.addr %s198, 4
        %s200 = scalar_lea.vmem %s1, %s199
      $region24: #{icil_forward.12} parent=15 // pred_fallthru
        _
      // Predicated region
      $region25: #{icil_forward.12} parent=15 // pred_check
        %p201 = pneg %p83
      $region26: #{icil_forward.12} parent=15 // pred_check_branch
        %203 = sbr.rel (%p201) target = $region28
      $region27: #{icil_forward.12} parent=15 // pred_region
        %p204 = scmp.lt.s32.totalorder %s11, 1
        %s205 = scalar_select %p204, %s11, 1
        %s206 = smul.addr %s205, 2
        %s207 = scalar_lea.vmem %s2, %s206
      $region28: #{icil_forward.12} parent=15 // pred_fallthru
        _
      // Predicated region
      $region29: #{icil_forward.12} parent=15 // pred_check
        %p208 = pneg %p109
      $region30: #{icil_forward.12} parent=15 // pred_check_branch
        %210 = sbr.rel (%p208) target = $region32
      $region31: #{icil_forward.12} parent=15 // pred_region
        %p211 = scmp.lt.s32.totalorder %s11, 1
        %s212 = scalar_select %p211, %s11, 1
        %s213 = smul.addr %s212, 32
        %s214 = smul.addr %s213, 4
        %s215 = scalar_lea.vmem %s3, %s214
      $region32: #{icil_forward.12} parent=15 // pred_fallthru
        _
      // Predicated region
      $region33: #{icil_forward.12} parent=15 // pred_check
        %p216 = pneg %p135
      $region34: #{icil_forward.12} parent=15 // pred_check_branch
        %218 = sbr.rel (%p216) target = $region36
      $region35: #{icil_forward.12} parent=15 // pred_region
        %p219 = scmp.lt.s32.totalorder %s11, 1
        %s220 = scalar_select %p219, %s11, 1
        %s221 = scalar_lea.vmem %s4, %s220
      $region36: #{icil_forward.12} parent=15 // pred_fallthru
        _
    $region16: #{icil_forward.12} parent=5 // pred_fallthru
      _
    %p222 = scmp.le.s32.totalorder 1, %s11
    %p223 = scmp.lt.s32.totalorder %s11, 3
    %p224 = pnand %p222, %p223
    %p225 = pneg %p224
    // Predicated region
    $region37: #{icil_forward.12} parent=5 // pred_check
      _
    $region38: #{icil_forward.12} parent=5 // pred_check_branch
      %227 = sbr.rel (%p224) target = $region40
    $region39: #{icil_forward.12} parent=5 // pred_region
      %s228 = ssub.s32 %s11, 1
      %p229 = scmp.lt.s32.totalorder %s16, 1
      %s230 = scalar_select %p229, %s16, 1
      %s231 = smul.addr %s230, 21
      %s232 = scalar_lea.vmem %s0, %s231
      %p233 = pneg %p37
      %p234 = pneg %p34
      %p235 = scmp.lt.s32.totalorder %s16, 1
      %s236 = scalar_select %p235, %s16, 1
      %s237 = smul.addr %s236, 648
      %s238 = smul.addr %s237, 4
      %s239 = scalar_lea.vmem %s1, %s238
      %p240 = pneg %p63
      %p241 = pneg %p60
      %p242 = scmp.lt.s32.totalorder %s16, 1
      %s243 = scalar_select %p242, %s16, 1
      %s244 = smul.addr %s243, 2
      %s245 = scalar_lea.vmem %s2, %s244
      %p246 = pneg %p89
      %p247 = pneg %p86
      %p248 = scmp.lt.s32.totalorder %s16, 1
      %s249 = scalar_select %p248, %s16, 1
      %s250 = smul.addr %s249, 32
      %s251 = smul.addr %s250, 4
      %s252 = scalar_lea.vmem %s3, %s251
      %p253 = pneg %p115
      %p254 = pneg %p112
      %p255 = scmp.lt.s32.totalorder %s16, 1
      %s256 = scalar_select %p255, %s16, 1
      %s257 = scalar_lea.vmem %s4, %s256
      %p258 = pneg %p141
      %p259 = pneg %p138
      %p260 = pneg %p167
      %p261 = pneg %p164
      %p262 = scmp.lt.s32.totalorder %s16, 1
      %s263 = scalar_select %p262, %s16, 1
      %s264 = smul.addr %s263, 2
      %s265 = scalar_lea.vmem %s5, %s264
      %p266 = scmp.lt.s32.totalorder %s16, 1
      %s267 = scalar_select %p266, %s16, 1
      %s268 = smul.addr %s267, 21
      %s269 = scalar_lea.vmem %s0, %s268
      %p270 = scmp.lt.s32.totalorder %s16, 1
      %s271 = scalar_select %p270, %s16, 1
      %s272 = smul.addr %s271, 648
      %s273 = smul.addr %s272, 4
      %s274 = scalar_lea.vmem %s1, %s273
      %p275 = scmp.lt.s32.totalorder %s16, 1
      %s276 = scalar_select %p275, %s16, 1
      %s277 = smul.addr %s276, 2
      %s278 = scalar_lea.vmem %s2, %s277
      %p279 = scmp.lt.s32.totalorder %s16, 1
      %s280 = scalar_select %p279, %s16, 1
      %s281 = smul.addr %s280, 32
      %s282 = smul.addr %s281, 4
      %s283 = scalar_lea.vmem %s3, %s282
      %p284 = scmp.lt.s32.totalorder %s16, 1
      %s285 = scalar_select %p284, %s16, 1
      %s286 = scalar_lea.vmem %s4, %s285
      %p287 = scmp.lt.s32.totalorder %s16, 1
      %s288 = scalar_select %p287, %s16, 1
      %s289 = smul.addr %s288, 2
      %s290 = scalar_lea.vmem %s5, %s289
      %v292 = vld [vmem:[%s269] sm:$0xff]
      %v293 = vld [vmem:[%s269 + $0x8] sm:$0xff]
      %v294 = vld [vmem:[%s269 + $0x10] sm:$0x1f]
      %v295 = vld [vmem:[%s274] sm:$0xff]
      %v296 = vld [vmem:[%s274 + $0x8] sm:$0xff]
      %v297 = vld [vmem:[%s274 + $0x10] sm:$0xff]
      %v298 = vld [vmem:[%s274 + $0x18] sm:$0xff]
      %v299 = vld [vmem:[%s274 + $0x20] sm:$0xff]
      %v300 = vld [vmem:[%s274 + $0x28] sm:$0xff]
      %v301 = vld [vmem:[%s274 + $0x30] sm:$0xff]
      %v302 = vld [vmem:[%s274 + $0x38] sm:$0xff]
      %v303 = vld [vmem:[%s274 + $0x40] sm:$0xff]
      %v304 = vld [vmem:[%s274 + $0x48] sm:$0xff]
      %v305 = vld [vmem:[%s274 + $0x50] sm:$0xff]
      %v306 = vld [vmem:[%s274 + $0x58] sm:$0xff]
      %v307 = vld [vmem:[%s274 + $0x60] sm:$0xff]
      %v308 = vld [vmem:[%s274 + $0x68] sm:$0xff]
      %v309 = vld [vmem:[%s274 + $0x70] sm:$0xff]
      %v310 = vld [vmem:[%s274 + $0x78] sm:$0xff]
      %v311 = vld [vmem:[%s274 + $0x80] sm:$0xff]
      %v312 = vld [vmem:[%s274 + $0x88] sm:$0xff]
      %v313 = vld [vmem:[%s274 + $0x90] sm:$0xff]
      %v314 = vld [vmem:[%s274 + $0x98] sm:$0xff]
      %v315 = vld [vmem:[%s274 + $0xa0] sm:$0xff]
      %v316 = vld [vmem:[%s274 + $0xa8] sm:$0xff]
      %v317 = vld [vmem:[%s274 + $0xb0] sm:$0xff]
      %v318 = vld [vmem:[%s274 + $0xb8] sm:$0xff]
      %v319 = vld [vmem:[%s274 + $0xc0] sm:$0xff]
      %v320 = vld [vmem:[%s274 + $0xc8] sm:$0xff]
      %v321 = vld [vmem:[%s274 + $0xd0] sm:$0xff]
      %v322 = vld [vmem:[%s274 + $0xd8] sm:$0xff]
      %v323 = vld [vmem:[%s274 + $0xe0] sm:$0xff]
      %v324 = vld [vmem:[%s274 + $0xe8] sm:$0xff]
      %v325 = vld [vmem:[%s274 + $0xf0] sm:$0xff]
      %v326 = vld [vmem:[%s274 + $0xf8] sm:$0xff]
      %v327 = vld [vmem:[%s274 + $0x100] sm:$0xff]
      %v328 = vld [vmem:[%s274 + $0x108] sm:$0xff]
      %v329 = vld [vmem:[%s274 + $0x110] sm:$0xff]
      %v330 = vld [vmem:[%s274 + $0x118] sm:$0xff]
      %v331 = vld [vmem:[%s274 + $0x120] sm:$0xff]
      %v332 = vld [vmem:[%s274 + $0x128] sm:$0xff]
      %v333 = vld [vmem:[%s274 + $0x130] sm:$0xff]
      %v334 = vld [vmem:[%s274 + $0x138] sm:$0xff]
      %v335 = vld [vmem:[%s274 + $0x140] sm:$0xff]
      %v336 = vld [vmem:[%s274 + $0x148] sm:$0xff]
      %v337 = vld [vmem:[%s274 + $0x150] sm:$0xff]
      %v338 = vld [vmem:[%s274 + $0x158] sm:$0xff]
      %v339 = vld [vmem:[%s274 + $0x160] sm:$0xff]
      %v340 = vld [vmem:[%s274 + $0x168] sm:$0xff]
      %v341 = vld [vmem:[%s274 + $0x170] sm:$0xff]
      %v342 = vld [vmem:[%s274 + $0x178] sm:$0xff]
      %v343 = vld [vmem:[%s274 + $0x180] sm:$0xff]
      %v344 = vld [vmem:[%s274 + $0x188] sm:$0xff]
      %v345 = vld [vmem:[%s274 + $0x190] sm:$0xff]
      %v346 = vld [vmem:[%s274 + $0x198] sm:$0xff]
      %v347 = vld [vmem:[%s274 + $0x1a0] sm:$0xff]
      %v348 = vld [vmem:[%s274 + $0x1a8] sm:$0xff]
      %v349 = vld [vmem:[%s274 + $0x1b0] sm:$0xff]
      %v350 = vld [vmem:[%s274 + $0x1b8] sm:$0xff]
      %v351 = vld [vmem:[%s274 + $0x1c0] sm:$0xff]
      %v352 = vld [vmem:[%s274 + $0x1c8] sm:$0xff]
      %v353 = vld [vmem:[%s274 + $0x1d0] sm:$0xff]
      %v354 = vld [vmem:[%s274 + $0x1d8] sm:$0xff]
      %v355 = vld [vmem:[%s274 + $0x1e0] sm:$0xff]
      %v356 = vld [vmem:[%s274 + $0x1e8] sm:$0xff]
      %v357 = vld [vmem:[%s274 + $0x1f0] sm:$0xff]
      %v358 = vld [vmem:[%s274 + $0x1f8] sm:$0xff]
      %v359 = vld [vmem:[%s274 + $0x200] sm:$0xff]
      %v360 = vld [vmem:[%s274 + $0x208] sm:$0xff]
      %v361 = vld [vmem:[%s274 + $0x210] sm:$0xff]
      %v362 = vld [vmem:[%s274 + $0x218] sm:$0xff]
      %v363 = vld [vmem:[%s274 + $0x220] sm:$0xff]
      %v364 = vld [vmem:[%s274 + $0x228] sm:$0xff]
      %v365 = vld [vmem:[%s274 + $0x230] sm:$0xff]
      %v366 = vld [vmem:[%s274 + $0x238] sm:$0xff]
      %v367 = vld [vmem:[%s274 + $0x240] sm:$0xff]
      %v368 = vld [vmem:[%s274 + $0x248] sm:$0xff]
      %v369 = vld [vmem:[%s274 + $0x250] sm:$0xff]
      %v370 = vld [vmem:[%s274 + $0x258] sm:$0xff]
      %v371 = vld [vmem:[%s274 + $0x260] sm:$0xff]
      %v372 = vld [vmem:[%s274 + $0x268] sm:$0xff]
      %v373 = vld [vmem:[%s274 + $0x270] sm:$0xff]
      %v374 = vld [vmem:[%s274 + $0x278] sm:$0xff]
      %v375 = vld [vmem:[%s274 + $0x280] sm:$0xff]
      %v376 = vld [vmem:[%s274 + $0x288] sm:$0xff]
      %v377 = vld [vmem:[%s274 + $0x290] sm:$0xff]
      %v378 = vld [vmem:[%s274 + $0x298] sm:$0xff]
      %v379 = vld [vmem:[%s274 + $0x2a0] sm:$0xff]
      %v380 = vld [vmem:[%s274 + $0x2a8] sm:$0xff]
      %v381 = vld [vmem:[%s274 + $0x2b0] sm:$0xff]
      %v382 = vld [vmem:[%s274 + $0x2b8] sm:$0xff]
      %v383 = vld [vmem:[%s274 + $0x2c0] sm:$0xff]
      %v384 = vld [vmem:[%s274 + $0x2c8] sm:$0xff]
      %v385 = vld [vmem:[%s274 + $0x2d0] sm:$0xff]
      %v386 = vld [vmem:[%s274 + $0x2d8] sm:$0xff]
      %v387 = vld [vmem:[%s274 + $0x2e0] sm:$0xff]
      %v388 = vld [vmem:[%s274 + $0x2e8] sm:$0xff]
      %v389 = vld [vmem:[%s274 + $0x2f0] sm:$0xff]
      %v390 = vld [vmem:[%s274 + $0x2f8] sm:$0xff]
      %v391 = vld [vmem:[%s274 + $0x300] sm:$0xff]
      %v392 = vld [vmem:[%s274 + $0x308] sm:$0xff]
      %v393 = vld [vmem:[%s274 + $0x310] sm:$0xff]
      %v394 = vld [vmem:[%s274 + $0x318] sm:$0xff]
      %v395 = vld [vmem:[%s274 + $0x320] sm:$0xff]
      %v396 = vld [vmem:[%s274 + $0x328] sm:$0xff]
      %v397 = vld [vmem:[%s274 + $0x330] sm:$0xff]
      %v398 = vld [vmem:[%s274 + $0x338] sm:$0xff]
      %v399 = vld [vmem:[%s274 + $0x340] sm:$0xff]
      %v400 = vld [vmem:[%s274 + $0x348] sm:$0xff]
      %v401 = vld [vmem:[%s274 + $0x350] sm:$0xff]
      %v402 = vld [vmem:[%s274 + $0x358] sm:$0xff]
      %v403 = vld [vmem:[%s274 + $0x360] sm:$0xff]
      %v404 = vld [vmem:[%s274 + $0x368] sm:$0xff]
      %v405 = vld [vmem:[%s274 + $0x370] sm:$0xff]
      %v406 = vld [vmem:[%s274 + $0x378] sm:$0xff]
      %v407 = vld [vmem:[%s274 + $0x380] sm:$0xff]
      %v408 = vld [vmem:[%s274 + $0x388] sm:$0xff]
      %v409 = vld [vmem:[%s274 + $0x390] sm:$0xff]
      %v410 = vld [vmem:[%s274 + $0x398] sm:$0xff]
      %v411 = vld [vmem:[%s274 + $0x3a0] sm:$0xff]
      %v412 = vld [vmem:[%s274 + $0x3a8] sm:$0xff]
      %v413 = vld [vmem:[%s274 + $0x3b0] sm:$0xff]
      %v414 = vld [vmem:[%s274 + $0x3b8] sm:$0xff]
      %v415 = vld [vmem:[%s274 + $0x3c0] sm:$0xff]
      %v416 = vld [vmem:[%s274 + $0x3c8] sm:$0xff]
      %v417 = vld [vmem:[%s274 + $0x3d0] sm:$0xff]
      %v418 = vld [vmem:[%s274 + $0x3d8] sm:$0xff]
      %v419 = vld [vmem:[%s274 + $0x3e0] sm:$0xff]
      %v420 = vld [vmem:[%s274 + $0x3e8] sm:$0xff]
      %v421 = vld [vmem:[%s274 + $0x3f0] sm:$0xff]
      %v422 = vld [vmem:[%s274 + $0x3f8] sm:$0xff]
      %v423 = vld [vmem:[%s274 + $0x400] sm:$0xff]
      %v424 = vld [vmem:[%s274 + $0x408] sm:$0xff]
      %v425 = vld [vmem:[%s274 + $0x410] sm:$0xff]
      %v426 = vld [vmem:[%s274 + $0x418] sm:$0xff]
      %v427 = vld [vmem:[%s274 + $0x420] sm:$0xff]
      %v428 = vld [vmem:[%s274 + $0x428] sm:$0xff]
      %v429 = vld [vmem:[%s274 + $0x430] sm:$0xff]
      %v430 = vld [vmem:[%s274 + $0x438] sm:$0xff]
      %v431 = vld [vmem:[%s274 + $0x440] sm:$0xff]
      %v432 = vld [vmem:[%s274 + $0x448] sm:$0xff]
      %v433 = vld [vmem:[%s274 + $0x450] sm:$0xff]
      %v434 = vld [vmem:[%s274 + $0x458] sm:$0xff]
      %v435 = vld [vmem:[%s274 + $0x460] sm:$0xff]
      %v436 = vld [vmem:[%s274 + $0x468] sm:$0xff]
      %v437 = vld [vmem:[%s274 + $0x470] sm:$0xff]
      %v438 = vld [vmem:[%s274 + $0x478] sm:$0xff]
      %v439 = vld [vmem:[%s274 + $0x480] sm:$0xff]
      %v440 = vld [vmem:[%s274 + $0x488] sm:$0xff]
      %v441 = vld [vmem:[%s274 + $0x490] sm:$0xff]
      %v442 = vld [vmem:[%s274 + $0x498] sm:$0xff]
      %v443 = vld [vmem:[%s274 + $0x4a0] sm:$0xff]
      %v444 = vld [vmem:[%s274 + $0x4a8] sm:$0xff]
      %v445 = vld [vmem:[%s274 + $0x4b0] sm:$0xff]
      %v446 = vld [vmem:[%s274 + $0x4b8] sm:$0xff]
      %v447 = vld [vmem:[%s274 + $0x4c0] sm:$0xff]
      %v448 = vld [vmem:[%s274 + $0x4c8] sm:$0xff]
      %v449 = vld [vmem:[%s274 + $0x4d0] sm:$0xff]
      %v450 = vld [vmem:[%s274 + $0x4d8] sm:$0xff]
      %v451 = vld [vmem:[%s274 + $0x4e0] sm:$0xff]
      %v452 = vld [vmem:[%s274 + $0x4e8] sm:$0xff]
      %v453 = vld [vmem:[%s274 + $0x4f0] sm:$0xff]
      %v454 = vld [vmem:[%s274 + $0x4f8] sm:$0xff]
      %v455 = vld [vmem:[%s274 + $0x500] sm:$0xff]
      %v456 = vld [vmem:[%s274 + $0x508] sm:$0xff]
      %v457 = vld [vmem:[%s274 + $0x510] sm:$0xff]
      %v458 = vld [vmem:[%s274 + $0x518] sm:$0xff]
      %v459 = vld [vmem:[%s274 + $0x520] sm:$0xff]
      %v460 = vld [vmem:[%s274 + $0x528] sm:$0xff]
      %v461 = vld [vmem:[%s274 + $0x530] sm:$0xff]
      %v462 = vld [vmem:[%s274 + $0x538] sm:$0xff]
      %v463 = vld [vmem:[%s274 + $0x540] sm:$0xff]
      %v464 = vld [vmem:[%s274 + $0x548] sm:$0xff]
      %v465 = vld [vmem:[%s274 + $0x550] sm:$0xff]
      %v466 = vld [vmem:[%s274 + $0x558] sm:$0xff]
      %v467 = vld [vmem:[%s274 + $0x560] sm:$0xff]
      %v468 = vld [vmem:[%s274 + $0x568] sm:$0xff]
      %v469 = vld [vmem:[%s274 + $0x570] sm:$0xff]
      %v470 = vld [vmem:[%s274 + $0x578] sm:$0xff]
      %v471 = vld [vmem:[%s274 + $0x580] sm:$0xff]
      %v472 = vld [vmem:[%s274 + $0x588] sm:$0xff]
      %v473 = vld [vmem:[%s274 + $0x590] sm:$0xff]
      %v474 = vld [vmem:[%s274 + $0x598] sm:$0xff]
      %v475 = vld [vmem:[%s274 + $0x5a0] sm:$0xff]
      %v476 = vld [vmem:[%s274 + $0x5a8] sm:$0xff]
      %v477 = vld [vmem:[%s274 + $0x5b0] sm:$0xff]
      %v478 = vld [vmem:[%s274 + $0x5b8] sm:$0xff]
      %v479 = vld [vmem:[%s274 + $0x5c0] sm:$0xff]
      %v480 = vld [vmem:[%s274 + $0x5c8] sm:$0xff]
      %v481 = vld [vmem:[%s274 + $0x5d0] sm:$0xff]
      %v482 = vld [vmem:[%s274 + $0x5d8] sm:$0xff]
      %v483 = vld [vmem:[%s274 + $0x5e0] sm:$0xff]
      %v484 = vld [vmem:[%s274 + $0x5e8] sm:$0xff]
      %v485 = vld [vmem:[%s274 + $0x5f0] sm:$0xff]
      %v486 = vld [vmem:[%s274 + $0x5f8] sm:$0xff]
      %v487 = vld [vmem:[%s274 + $0x600] sm:$0xff]
      %v488 = vld [vmem:[%s274 + $0x608] sm:$0xff]
      %v489 = vld [vmem:[%s274 + $0x610] sm:$0xff]
      %v490 = vld [vmem:[%s274 + $0x618] sm:$0xff]
      %v491 = vld [vmem:[%s274 + $0x620] sm:$0xff]
      %v492 = vld [vmem:[%s274 + $0x628] sm:$0xff]
      %v493 = vld [vmem:[%s274 + $0x630] sm:$0xff]
      %v494 = vld [vmem:[%s274 + $0x638] sm:$0xff]
      %v495 = vld [vmem:[%s274 + $0x640] sm:$0xff]
      %v496 = vld [vmem:[%s274 + $0x648] sm:$0xff]
      %v497 = vld [vmem:[%s274 + $0x650] sm:$0xff]
      %v498 = vld [vmem:[%s274 + $0x658] sm:$0xff]
      %v499 = vld [vmem:[%s274 + $0x660] sm:$0xff]
      %v500 = vld [vmem:[%s274 + $0x668] sm:$0xff]
      %v501 = vld [vmem:[%s274 + $0x670] sm:$0xff]
      %v502 = vld [vmem:[%s274 + $0x678] sm:$0xff]
      %v503 = vld [vmem:[%s274 + $0x680] sm:$0xff]
      %v504 = vld [vmem:[%s274 + $0x688] sm:$0xff]
      %v505 = vld [vmem:[%s274 + $0x690] sm:$0xff]
      %v506 = vld [vmem:[%s274 + $0x698] sm:$0xff]
      %v507 = vld [vmem:[%s274 + $0x6a0] sm:$0xff]
      %v508 = vld [vmem:[%s274 + $0x6a8] sm:$0xff]
      %v509 = vld [vmem:[%s274 + $0x6b0] sm:$0xff]
      %v510 = vld [vmem:[%s274 + $0x6b8] sm:$0xff]
      %v511 = vld [vmem:[%s274 + $0x6c0] sm:$0xff]
      %v512 = vld [vmem:[%s274 + $0x6c8] sm:$0xff]
      %v513 = vld [vmem:[%s274 + $0x6d0] sm:$0xff]
      %v514 = vld [vmem:[%s274 + $0x6d8] sm:$0xff]
      %v515 = vld [vmem:[%s274 + $0x6e0] sm:$0xff]
      %v516 = vld [vmem:[%s274 + $0x6e8] sm:$0xff]
      %v517 = vld [vmem:[%s274 + $0x6f0] sm:$0xff]
      %v518 = vld [vmem:[%s274 + $0x6f8] sm:$0xff]
      %v519 = vld [vmem:[%s274 + $0x700] sm:$0xff]
      %v520 = vld [vmem:[%s274 + $0x708] sm:$0xff]
      %v521 = vld [vmem:[%s274 + $0x710] sm:$0xff]
      %v522 = vld [vmem:[%s274 + $0x718] sm:$0xff]
      %v523 = vld [vmem:[%s274 + $0x720] sm:$0xff]
      %v524 = vld [vmem:[%s274 + $0x728] sm:$0xff]
      %v525 = vld [vmem:[%s274 + $0x730] sm:$0xff]
      %v526 = vld [vmem:[%s274 + $0x738] sm:$0xff]
      %v527 = vld [vmem:[%s274 + $0x740] sm:$0xff]
      %v528 = vld [vmem:[%s274 + $0x748] sm:$0xff]
      %v529 = vld [vmem:[%s274 + $0x750] sm:$0xff]
      %v530 = vld [vmem:[%s274 + $0x758] sm:$0xff]
      %v531 = vld [vmem:[%s274 + $0x760] sm:$0xff]
      %v532 = vld [vmem:[%s274 + $0x768] sm:$0xff]
      %v533 = vld [vmem:[%s274 + $0x770] sm:$0xff]
      %v534 = vld [vmem:[%s274 + $0x778] sm:$0xff]
      %v535 = vld [vmem:[%s274 + $0x780] sm:$0xff]
      %v536 = vld [vmem:[%s274 + $0x788] sm:$0xff]
      %v537 = vld [vmem:[%s274 + $0x790] sm:$0xff]
      %v538 = vld [vmem:[%s274 + $0x798] sm:$0xff]
      %v539 = vld [vmem:[%s274 + $0x7a0] sm:$0xff]
      %v540 = vld [vmem:[%s274 + $0x7a8] sm:$0xff]
      %v541 = vld [vmem:[%s274 + $0x7b0] sm:$0xff]
      %v542 = vld [vmem:[%s274 + $0x7b8] sm:$0xff]
      %v543 = vld [vmem:[%s274 + $0x7c0] sm:$0xff]
      %v544 = vld [vmem:[%s274 + $0x7c8] sm:$0xff]
      %v545 = vld [vmem:[%s274 + $0x7d0] sm:$0xff]
      %v546 = vld [vmem:[%s274 + $0x7d8] sm:$0xff]
      %v547 = vld [vmem:[%s274 + $0x7e0] sm:$0xff]
      %v548 = vld [vmem:[%s274 + $0x7e8] sm:$0xff]
      %v549 = vld [vmem:[%s274 + $0x7f0] sm:$0xff]
      %v550 = vld [vmem:[%s274 + $0x7f8] sm:$0xff]
      %v551 = vld [vmem:[%s274 + $0x800] sm:$0xff]
      %v552 = vld [vmem:[%s274 + $0x808] sm:$0xff]
      %v553 = vld [vmem:[%s274 + $0x810] sm:$0xff]
      %v554 = vld [vmem:[%s274 + $0x818] sm:$0xff]
      %v555 = vld [vmem:[%s274 + $0x820] sm:$0xff]
      %v556 = vld [vmem:[%s274 + $0x828] sm:$0xff]
      %v557 = vld [vmem:[%s274 + $0x830] sm:$0xff]
      %v558 = vld [vmem:[%s274 + $0x838] sm:$0xff]
      %v559 = vld [vmem:[%s274 + $0x840] sm:$0xff]
      %v560 = vld [vmem:[%s274 + $0x848] sm:$0xff]
      %v561 = vld [vmem:[%s274 + $0x850] sm:$0xff]
      %v562 = vld [vmem:[%s274 + $0x858] sm:$0xff]
      %v563 = vld [vmem:[%s274 + $0x860] sm:$0xff]
      %v564 = vld [vmem:[%s274 + $0x868] sm:$0xff]
      %v565 = vld [vmem:[%s274 + $0x870] sm:$0xff]
      %v566 = vld [vmem:[%s274 + $0x878] sm:$0xff]
      %v567 = vld [vmem:[%s274 + $0x880] sm:$0xff]
      %v568 = vld [vmem:[%s274 + $0x888] sm:$0xff]
      %v569 = vld [vmem:[%s274 + $0x890] sm:$0xff]
      %v570 = vld [vmem:[%s274 + $0x898] sm:$0xff]
      %v571 = vld [vmem:[%s274 + $0x8a0] sm:$0xff]
      %v572 = vld [vmem:[%s274 + $0x8a8] sm:$0xff]
      %v573 = vld [vmem:[%s274 + $0x8b0] sm:$0xff]
      %v574 = vld [vmem:[%s274 + $0x8b8] sm:$0xff]
      %v575 = vld [vmem:[%s274 + $0x8c0] sm:$0xff]
      %v576 = vld [vmem:[%s274 + $0x8c8] sm:$0xff]
      %v577 = vld [vmem:[%s274 + $0x8d0] sm:$0xff]
      %v578 = vld [vmem:[%s274 + $0x8d8] sm:$0xff]
      %v579 = vld [vmem:[%s274 + $0x8e0] sm:$0xff]
      %v580 = vld [vmem:[%s274 + $0x8e8] sm:$0xff]
      %v581 = vld [vmem:[%s274 + $0x8f0] sm:$0xff]
      %v582 = vld [vmem:[%s274 + $0x8f8] sm:$0xff]
      %v583 = vld [vmem:[%s274 + $0x900] sm:$0xff]
      %v584 = vld [vmem:[%s274 + $0x908] sm:$0xff]
      %v585 = vld [vmem:[%s274 + $0x910] sm:$0xff]
      %v586 = vld [vmem:[%s274 + $0x918] sm:$0xff]
      %v587 = vld [vmem:[%s274 + $0x920] sm:$0xff]
      %v588 = vld [vmem:[%s274 + $0x928] sm:$0xff]
      %v589 = vld [vmem:[%s274 + $0x930] sm:$0xff]
      %v590 = vld [vmem:[%s274 + $0x938] sm:$0xff]
      %v591 = vld [vmem:[%s274 + $0x940] sm:$0xff]
      %v592 = vld [vmem:[%s274 + $0x948] sm:$0xff]
      %v593 = vld [vmem:[%s274 + $0x950] sm:$0xff]
      %v594 = vld [vmem:[%s274 + $0x958] sm:$0xff]
      %v595 = vld [vmem:[%s274 + $0x960] sm:$0xff]
      %v596 = vld [vmem:[%s274 + $0x968] sm:$0xff]
      %v597 = vld [vmem:[%s274 + $0x970] sm:$0xff]
      %v598 = vld [vmem:[%s274 + $0x978] sm:$0xff]
      %v599 = vld [vmem:[%s274 + $0x980] sm:$0xff]
      %v600 = vld [vmem:[%s274 + $0x988] sm:$0xff]
      %v601 = vld [vmem:[%s274 + $0x990] sm:$0xff]
      %v602 = vld [vmem:[%s274 + $0x998] sm:$0xff]
      %v603 = vld [vmem:[%s274 + $0x9a0] sm:$0xff]
      %v604 = vld [vmem:[%s274 + $0x9a8] sm:$0xff]
      %v605 = vld [vmem:[%s274 + $0x9b0] sm:$0xff]
      %v606 = vld [vmem:[%s274 + $0x9b8] sm:$0xff]
      %v607 = vld [vmem:[%s274 + $0x9c0] sm:$0xff]
      %v608 = vld [vmem:[%s274 + $0x9c8] sm:$0xff]
      %v609 = vld [vmem:[%s274 + $0x9d0] sm:$0xff]
      %v610 = vld [vmem:[%s274 + $0x9d8] sm:$0xff]
      %v611 = vld [vmem:[%s274 + $0x9e0] sm:$0xff]
      %v612 = vld [vmem:[%s274 + $0x9e8] sm:$0xff]
      %v613 = vld [vmem:[%s274 + $0x9f0] sm:$0xff]
      %v614 = vld [vmem:[%s274 + $0x9f8] sm:$0xff]
      %v615 = vld [vmem:[%s274 + $0xa00] sm:$0xff]
      %v616 = vld [vmem:[%s274 + $0xa08] sm:$0xff]
      %v617 = vld [vmem:[%s274 + $0xa10] sm:$0xff]
      %v618 = vld [vmem:[%s274 + $0xa18] sm:$0xff]
      %v619 = vld [vmem:[%s278] sm:$0x3]
      %v621 = vperm.slane %v619, 0
      %v622 = vperm.slane %v619, 1
      %626 = vst [vmem:[#allocation1] ss:$9 sm:$0xff] %v292
      %v627 = vld [vmem:[#allocation1] sm:$0xff]
      %v628 = vld [vmem:[#allocation1 + $0x9] sm:$0xff]
      %v629 = vld [vmem:[#allocation1 + $0x12] sm:$0xff]
      %v630 = vld [vmem:[#allocation1 + $0x1b] sm:$0xff]
      %v631 = vld [vmem:[#allocation1 + $0x24] sm:$0xff]
      %v632 = vld [vmem:[#allocation1 + $0x2d] sm:$0xff]
      %v633 = vld [vmem:[#allocation1 + $0x36] sm:$0xff]
      %v634 = vld [vmem:[#allocation1 + $0x3f] sm:$0xff]
      %636 = vst [vmem:[#allocation1] ss:$9 sm:$0xff] %v293
      %v637 = vld [vmem:[#allocation1] sm:$0xff]
      %v638 = vld [vmem:[#allocation1 + $0x9] sm:$0xff]
      %v639 = vld [vmem:[#allocation1 + $0x12] sm:$0xff]
      %v640 = vld [vmem:[#allocation1 + $0x1b] sm:$0xff]
      %v641 = vld [vmem:[#allocation1 + $0x24] sm:$0xff]
      %v642 = vld [vmem:[#allocation1 + $0x2d] sm:$0xff]
      %v643 = vld [vmem:[#allocation1 + $0x36] sm:$0xff]
      %v644 = vld [vmem:[#allocation1 + $0x3f] sm:$0xff]
      %646 = vst [vmem:[#allocation1] ss:$9 sm:$0xff] %v294
      %v647 = vld [vmem:[#allocation1] sm:$0xff]
      %v648 = vld [vmem:[#allocation1 + $0x9] sm:$0xff]
      %v649 = vld [vmem:[#allocation1 + $0x12] sm:$0xff]
      %v650 = vld [vmem:[#allocation1 + $0x1b] sm:$0xff]
      %v651 = vld [vmem:[#allocation1 + $0x24] sm:$0xff]
      %v996 = vunpack.c.l.b16 %v295
      %v997 = vunpack.c.h.b16 %v295
      %v998 = vunpack.c.l.b16 %v296
      %v999 = vunpack.c.h.b16 %v296
      %v1000 = vunpack.c.l.b16 %v297
      %v1001 = vunpack.c.h.b16 %v297
      %v1002 = vunpack.c.l.b16 %v298
      %v1003 = vunpack.c.h.b16 %v298
      %v1004 = vunpack.c.l.b16 %v299
      %v1005 = vunpack.c.h.b16 %v299
      %v1006 = vunpack.c.l.b16 %v300
      %v1007 = vunpack.c.h.b16 %v300
      %v1008 = vunpack.c.l.b16 %v301
      %v1009 = vunpack.c.h.b16 %v301
      %v1010 = vunpack.c.l.b16 %v302
      %v1011 = vunpack.c.h.b16 %v302
      %v1012 = vunpack.c.l.b16 %v303
      %v1013 = vunpack.c.h.b16 %v303
      %v1014 = vunpack.c.l.b16 %v304
      %v1015 = vunpack.c.h.b16 %v304
      %v1016 = vunpack.c.l.b16 %v305
      %v1017 = vunpack.c.h.b16 %v305
      %v1018 = vunpack.c.l.b16 %v306
      %v1019 = vunpack.c.h.b16 %v306
      %v1020 = vunpack.c.l.b16 %v307
      %v1021 = vunpack.c.h.b16 %v307
      %v1022 = vunpack.c.l.b16 %v308
      %v1023 = vunpack.c.h.b16 %v308
      %v1024 = vunpack.c.l.b16 %v309
      %v1025 = vunpack.c.h.b16 %v309
      %v1026 = vunpack.c.l.b16 %v310
      %v1027 = vunpack.c.h.b16 %v310
      %v1028 = vunpack.c.l.b16 %v311
      %v1029 = vunpack.c.h.b16 %v311
      %v1030 = vunpack.c.l.b16 %v312
      %v1031 = vunpack.c.h.b16 %v312
      %v1032 = vunpack.c.l.b16 %v313
      %v1033 = vunpack.c.h.b16 %v313
      %v1034 = vunpack.c.l.b16 %v314
      %v1035 = vunpack.c.h.b16 %v314
      %v1036 = vunpack.c.l.b16 %v315
      %v1037 = vunpack.c.h.b16 %v315
      %v1038 = vunpack.c.l.b16 %v316
      %v1039 = vunpack.c.h.b16 %v316
      %v1040 = vunpack.c.l.b16 %v317
      %v1041 = vunpack.c.h.b16 %v317
      %v1042 = vunpack.c.l.b16 %v318
      %v1043 = vunpack.c.h.b16 %v318
      %v1044 = vunpack.c.l.b16 %v319
      %v1045 = vunpack.c.h.b16 %v319
      %v1046 = vunpack.c.l.b16 %v320
      %v1047 = vunpack.c.h.b16 %v320
      %v1048 = vunpack.c.l.b16 %v321
      %v1049 = vunpack.c.h.b16 %v321
      %v1050 = vunpack.c.l.b16 %v322
      %v1051 = vunpack.c.h.b16 %v322
      %v1052 = vunpack.c.l.b16 %v323
      %v1053 = vunpack.c.h.b16 %v323
      %v1054 = vunpack.c.l.b16 %v324
      %v1055 = vunpack.c.h.b16 %v324
      %v1056 = vunpack.c.l.b16 %v325
      %v1057 = vunpack.c.h.b16 %v325
      %v1058 = vunpack.c.l.b16 %v326
      %v1059 = vunpack.c.h.b16 %v326
      %v1060 = vunpack.c.l.b16 %v327
      %v1061 = vunpack.c.h.b16 %v327
      %v1062 = vunpack.c.l.b16 %v328
      %v1063 = vunpack.c.h.b16 %v328
      %v1064 = vunpack.c.l.b16 %v329
      %v1065 = vunpack.c.h.b16 %v329
      %v1066 = vunpack.c.l.b16 %v330
      %v1067 = vunpack.c.h.b16 %v330
      %v1068 = vunpack.c.l.b16 %v331
      %v1069 = vunpack.c.h.b16 %v331
      %v1070 = vunpack.c.l.b16 %v332
      %v1071 = vunpack.c.h.b16 %v332
      %v1072 = vunpack.c.l.b16 %v333
      %v1073 = vunpack.c.h.b16 %v333
      %v1074 = vunpack.c.l.b16 %v334
      %v1075 = vunpack.c.h.b16 %v334
      %v1076 = vunpack.c.l.b16 %v335
      %v1077 = vunpack.c.h.b16 %v335
      %v1078 = vunpack.c.l.b16 %v336
      %v1079 = vunpack.c.h.b16 %v336
      %v1080 = vunpack.c.l.b16 %v337
      %v1081 = vunpack.c.h.b16 %v337
      %v1082 = vunpack.c.l.b16 %v338
      %v1083 = vunpack.c.h.b16 %v338
      %v1084 = vunpack.c.l.b16 %v339
      %v1085 = vunpack.c.h.b16 %v339
      %v1086 = vunpack.c.l.b16 %v340
      %v1087 = vunpack.c.h.b16 %v340
      %v1088 = vunpack.c.l.b16 %v341
      %v1089 = vunpack.c.h.b16 %v341
      %v1090 = vunpack.c.l.b16 %v342
      %v1091 = vunpack.c.h.b16 %v342
      %v1092 = vunpack.c.l.b16 %v343
      %v1093 = vunpack.c.h.b16 %v343
      %v1094 = vunpack.c.l.b16 %v344
      %v1095 = vunpack.c.h.b16 %v344
      %v1096 = vunpack.c.l.b16 %v345
      %v1097 = vunpack.c.h.b16 %v345
      %v1098 = vunpack.c.l.b16 %v346
      %v1099 = vunpack.c.h.b16 %v346
      %v1100 = vunpack.c.l.b16 %v347
      %v1101 = vunpack.c.h.b16 %v347
      %v1102 = vunpack.c.l.b16 %v348
      %v1103 = vunpack.c.h.b16 %v348
      %v1104 = vunpack.c.l.b16 %v349
      %v1105 = vunpack.c.h.b16 %v349
      %v1106 = vunpack.c.l.b16 %v350
      %v1107 = vunpack.c.h.b16 %v350
      %v1108 = vunpack.c.l.b16 %v351
      %v1109 = vunpack.c.h.b16 %v351
      %v1110 = vunpack.c.l.b16 %v352
      %v1111 = vunpack.c.h.b16 %v352
      %v1112 = vunpack.c.l.b16 %v353
      %v1113 = vunpack.c.h.b16 %v353
      %v1114 = vunpack.c.l.b16 %v354
      %v1115 = vunpack.c.h.b16 %v354
      %v1116 = vunpack.c.l.b16 %v355
      %v1117 = vunpack.c.h.b16 %v355
      %v1118 = vunpack.c.l.b16 %v356
      %v1119 = vunpack.c.h.b16 %v356
      %v1120 = vunpack.c.l.b16 %v357
      %v1121 = vunpack.c.h.b16 %v357
      %v1122 = vunpack.c.l.b16 %v358
      %v1123 = vunpack.c.h.b16 %v358
      %v1124 = vunpack.c.l.b16 %v359
      %v1125 = vunpack.c.h.b16 %v359
      %v1126 = vunpack.c.l.b16 %v360
      %v1127 = vunpack.c.h.b16 %v360
      %v1128 = vunpack.c.l.b16 %v361
      %v1129 = vunpack.c.h.b16 %v361
      %v1130 = vunpack.c.l.b16 %v362
      %v1131 = vunpack.c.h.b16 %v362
      %v1132 = vunpack.c.l.b16 %v363
      %v1133 = vunpack.c.h.b16 %v363
      %v1134 = vunpack.c.l.b16 %v364
      %v1135 = vunpack.c.h.b16 %v364
      %v1136 = vunpack.c.l.b16 %v365
      %v1137 = vunpack.c.h.b16 %v365
      %v1138 = vunpack.c.l.b16 %v366
      %v1139 = vunpack.c.h.b16 %v366
      %v1140 = vunpack.c.l.b16 %v367
      %v1141 = vunpack.c.h.b16 %v367
      %v1142 = vunpack.c.l.b16 %v368
      %v1143 = vunpack.c.h.b16 %v368
      %v1144 = vunpack.c.l.b16 %v369
      %v1145 = vunpack.c.h.b16 %v369
      %v1146 = vunpack.c.l.b16 %v370
      %v1147 = vunpack.c.h.b16 %v370
      %v1148 = vunpack.c.l.b16 %v371
      %v1149 = vunpack.c.h.b16 %v371
      %v1150 = vunpack.c.l.b16 %v372
      %v1151 = vunpack.c.h.b16 %v372
      %v1152 = vunpack.c.l.b16 %v373
      %v1153 = vunpack.c.h.b16 %v373
      %v1154 = vunpack.c.l.b16 %v374
      %v1155 = vunpack.c.h.b16 %v374
      %v1156 = vunpack.c.l.b16 %v375
      %v1157 = vunpack.c.h.b16 %v375
      %v1158 = vunpack.c.l.b16 %v376
      %v1159 = vunpack.c.h.b16 %v376
      %v1160 = vunpack.c.l.b16 %v377
      %v1161 = vunpack.c.h.b16 %v377
      %v1162 = vunpack.c.l.b16 %v378
      %v1163 = vunpack.c.h.b16 %v378
      %v1164 = vunpack.c.l.b16 %v379
      %v1165 = vunpack.c.h.b16 %v379
      %v1166 = vunpack.c.l.b16 %v380
      %v1167 = vunpack.c.h.b16 %v380
      %v1168 = vunpack.c.l.b16 %v381
      %v1169 = vunpack.c.h.b16 %v381
      %v1170 = vunpack.c.l.b16 %v382
      %v1171 = vunpack.c.h.b16 %v382
      %v1172 = vunpack.c.l.b16 %v383
      %v1173 = vunpack.c.h.b16 %v383
      %v1174 = vunpack.c.l.b16 %v384
      %v1175 = vunpack.c.h.b16 %v384
      %v1176 = vunpack.c.l.b16 %v385
      %v1177 = vunpack.c.h.b16 %v385
      %v1178 = vunpack.c.l.b16 %v386
      %v1179 = vunpack.c.h.b16 %v386
      %v1180 = vunpack.c.l.b16 %v387
      %v1181 = vunpack.c.h.b16 %v387
      %v1182 = vunpack.c.l.b16 %v388
      %v1183 = vunpack.c.h.b16 %v388
      %v1184 = vunpack.c.l.b16 %v389
      %v1185 = vunpack.c.h.b16 %v389
      %v1186 = vunpack.c.l.b16 %v390
      %v1187 = vunpack.c.h.b16 %v390
      %v1188 = vunpack.c.l.b16 %v391
      %v1189 = vunpack.c.h.b16 %v391
      %v1190 = vunpack.c.l.b16 %v392
      %v1191 = vunpack.c.h.b16 %v392
      %v1192 = vunpack.c.l.b16 %v393
      %v1193 = vunpack.c.h.b16 %v393
      %v1194 = vunpack.c.l.b16 %v394
      %v1195 = vunpack.c.h.b16 %v394
      %v1196 = vunpack.c.l.b16 %v395
      %v1197 = vunpack.c.h.b16 %v395
      %v1198 = vunpack.c.l.b16 %v396
      %v1199 = vunpack.c.h.b16 %v396
      %v1200 = vunpack.c.l.b16 %v397
      %v1201 = vunpack.c.h.b16 %v397
      %v1202 = vunpack.c.l.b16 %v398
      %v1203 = vunpack.c.h.b16 %v398
      %v1204 = vunpack.c.l.b16 %v399
      %v1205 = vunpack.c.h.b16 %v399
      %v1206 = vunpack.c.l.b16 %v400
      %v1207 = vunpack.c.h.b16 %v400
      %v1208 = vunpack.c.l.b16 %v401
      %v1209 = vunpack.c.h.b16 %v401
      %v1210 = vunpack.c.l.b16 %v402
      %v1211 = vunpack.c.h.b16 %v402
      %v1212 = vunpack.c.l.b16 %v403
      %v1213 = vunpack.c.h.b16 %v403
      %v1214 = vunpack.c.l.b16 %v404
      %v1215 = vunpack.c.h.b16 %v404
      %v1216 = vunpack.c.l.b16 %v405
      %v1217 = vunpack.c.h.b16 %v405
      %v1218 = vunpack.c.l.b16 %v406
      %v1219 = vunpack.c.h.b16 %v406
      %v1220 = vunpack.c.l.b16 %v407
      %v1221 = vunpack.c.h.b16 %v407
      %v1222 = vunpack.c.l.b16 %v408
      %v1223 = vunpack.c.h.b16 %v408
      %v1224 = vunpack.c.l.b16 %v409
      %v1225 = vunpack.c.h.b16 %v409
      %v1226 = vunpack.c.l.b16 %v410
      %v1227 = vunpack.c.h.b16 %v410
      %v1228 = vunpack.c.l.b16 %v411
      %v1229 = vunpack.c.h.b16 %v411
      %v1230 = vunpack.c.l.b16 %v412
      %v1231 = vunpack.c.h.b16 %v412
      %v1232 = vunpack.c.l.b16 %v413
      %v1233 = vunpack.c.h.b16 %v413
      %v1234 = vunpack.c.l.b16 %v414
      %v1235 = vunpack.c.h.b16 %v414
      %v1236 = vunpack.c.l.b16 %v415
      %v1237 = vunpack.c.h.b16 %v415
      %v1238 = vunpack.c.l.b16 %v416
      %v1239 = vunpack.c.h.b16 %v416
      %v1240 = vunpack.c.l.b16 %v417
      %v1241 = vunpack.c.h.b16 %v417
      %v1242 = vunpack.c.l.b16 %v418
      %v1243 = vunpack.c.h.b16 %v418
      %v1244 = vunpack.c.l.b16 %v419
      %v1245 = vunpack.c.h.b16 %v419
      %v1246 = vunpack.c.l.b16 %v420
      %v1247 = vunpack.c.h.b16 %v420
      %v1248 = vunpack.c.l.b16 %v421
      %v1249 = vunpack.c.h.b16 %v421
      %v1250 = vunpack.c.l.b16 %v422
      %v1251 = vunpack.c.h.b16 %v422
      %v1252 = vunpack.c.l.b16 %v423
      %v1253 = vunpack.c.h.b16 %v423
      %v1254 = vunpack.c.l.b16 %v424
      %v1255 = vunpack.c.h.b16 %v424
      %v1256 = vunpack.c.l.b16 %v425
      %v1257 = vunpack.c.h.b16 %v425
      %v1258 = vunpack.c.l.b16 %v426
      %v1259 = vunpack.c.h.b16 %v426
      %v1260 = vunpack.c.l.b16 %v427
      %v1261 = vunpack.c.h.b16 %v427
      %v1262 = vunpack.c.l.b16 %v428
      %v1263 = vunpack.c.h.b16 %v428
      %v1264 = vunpack.c.l.b16 %v429
      %v1265 = vunpack.c.h.b16 %v429
      %v1266 = vunpack.c.l.b16 %v430
      %v1267 = vunpack.c.h.b16 %v430
      %v1268 = vunpack.c.l.b16 %v431
      %v1269 = vunpack.c.h.b16 %v431
      %v1270 = vunpack.c.l.b16 %v432
      %v1271 = vunpack.c.h.b16 %v432
      %v1272 = vunpack.c.l.b16 %v433
      %v1273 = vunpack.c.h.b16 %v433
      %v1274 = vunpack.c.l.b16 %v434
      %v1275 = vunpack.c.h.b16 %v434
      %v1276 = vunpack.c.l.b16 %v435
      %v1277 = vunpack.c.h.b16 %v435
      %v1278 = vunpack.c.l.b16 %v436
      %v1279 = vunpack.c.h.b16 %v436
      %v1280 = vunpack.c.l.b16 %v437
      %v1281 = vunpack.c.h.b16 %v437
      %v1282 = vunpack.c.l.b16 %v438
      %v1283 = vunpack.c.h.b16 %v438
      %v1284 = vunpack.c.l.b16 %v439
      %v1285 = vunpack.c.h.b16 %v439
      %v1286 = vunpack.c.l.b16 %v440
      %v1287 = vunpack.c.h.b16 %v440
      %v1288 = vunpack.c.l.b16 %v441
      %v1289 = vunpack.c.h.b16 %v441
      %v1290 = vunpack.c.l.b16 %v442
      %v1291 = vunpack.c.h.b16 %v442
      %v1292 = vunpack.c.l.b16 %v443
      %v1293 = vunpack.c.h.b16 %v443
      %v1294 = vunpack.c.l.b16 %v444
      %v1295 = vunpack.c.h.b16 %v444
      %v1296 = vunpack.c.l.b16 %v445
      %v1297 = vunpack.c.h.b16 %v445
      %v1298 = vunpack.c.l.b16 %v446
      %v1299 = vunpack.c.h.b16 %v446
      %v1300 = vunpack.c.l.b16 %v447
      %v1301 = vunpack.c.h.b16 %v447
      %v1302 = vunpack.c.l.b16 %v448
      %v1303 = vunpack.c.h.b16 %v448
      %v1304 = vunpack.c.l.b16 %v449
      %v1305 = vunpack.c.h.b16 %v449
      %v1306 = vunpack.c.l.b16 %v450
      %v1307 = vunpack.c.h.b16 %v450
      %v1308 = vunpack.c.l.b16 %v451
      %v1309 = vunpack.c.h.b16 %v451
      %v1310 = vunpack.c.l.b16 %v452
      %v1311 = vunpack.c.h.b16 %v452
      %v1312 = vunpack.c.l.b16 %v453
      %v1313 = vunpack.c.h.b16 %v453
      %v1314 = vunpack.c.l.b16 %v454
      %v1315 = vunpack.c.h.b16 %v454
      %v1316 = vunpack.c.l.b16 %v455
      %v1317 = vunpack.c.h.b16 %v455
      %v1318 = vunpack.c.l.b16 %v456
      %v1319 = vunpack.c.h.b16 %v456
      %v1320 = vunpack.c.l.b16 %v457
      %v1321 = vunpack.c.h.b16 %v457
      %v1322 = vunpack.c.l.b16 %v458
      %v1323 = vunpack.c.h.b16 %v458
      %v1324 = vunpack.c.l.b16 %v459
      %v1325 = vunpack.c.h.b16 %v459
      %v1326 = vunpack.c.l.b16 %v460
      %v1327 = vunpack.c.h.b16 %v460
      %v1328 = vunpack.c.l.b16 %v461
      %v1329 = vunpack.c.h.b16 %v461
      %v1330 = vunpack.c.l.b16 %v462
      %v1331 = vunpack.c.h.b16 %v462
      %v1332 = vunpack.c.l.b16 %v463
      %v1333 = vunpack.c.h.b16 %v463
      %v1334 = vunpack.c.l.b16 %v464
      %v1335 = vunpack.c.h.b16 %v464
      %v1336 = vunpack.c.l.b16 %v465
      %v1337 = vunpack.c.h.b16 %v465
      %v1338 = vunpack.c.l.b16 %v466
      %v1339 = vunpack.c.h.b16 %v466
      %v1340 = vunpack.c.l.b16 %v467
      %v1341 = vunpack.c.h.b16 %v467
      %v1342 = vunpack.c.l.b16 %v468
      %v1343 = vunpack.c.h.b16 %v468
      %v1344 = vunpack.c.l.b16 %v469
      %v1345 = vunpack.c.h.b16 %v469
      %v1346 = vunpack.c.l.b16 %v470
      %v1347 = vunpack.c.h.b16 %v470
      %v1348 = vunpack.c.l.b16 %v471
      %v1349 = vunpack.c.h.b16 %v471
      %v1350 = vunpack.c.l.b16 %v472
      %v1351 = vunpack.c.h.b16 %v472
      %v1352 = vunpack.c.l.b16 %v473
      %v1353 = vunpack.c.h.b16 %v473
      %v1354 = vunpack.c.l.b16 %v474
      %v1355 = vunpack.c.h.b16 %v474
      %v1356 = vunpack.c.l.b16 %v475
      %v1357 = vunpack.c.h.b16 %v475
      %v1358 = vunpack.c.l.b16 %v476
      %v1359 = vunpack.c.h.b16 %v476
      %v1360 = vunpack.c.l.b16 %v477
      %v1361 = vunpack.c.h.b16 %v477
      %v1362 = vunpack.c.l.b16 %v478
      %v1363 = vunpack.c.h.b16 %v478
      %v1364 = vunpack.c.l.b16 %v479
      %v1365 = vunpack.c.h.b16 %v479
      %v1366 = vunpack.c.l.b16 %v480
      %v1367 = vunpack.c.h.b16 %v480
      %v1368 = vunpack.c.l.b16 %v481
      %v1369 = vunpack.c.h.b16 %v481
      %v1370 = vunpack.c.l.b16 %v482
      %v1371 = vunpack.c.h.b16 %v482
      %v1372 = vunpack.c.l.b16 %v483
      %v1373 = vunpack.c.h.b16 %v483
      %v1374 = vunpack.c.l.b16 %v484
      %v1375 = vunpack.c.h.b16 %v484
      %v1376 = vunpack.c.l.b16 %v485
      %v1377 = vunpack.c.h.b16 %v485
      %v1378 = vunpack.c.l.b16 %v486
      %v1379 = vunpack.c.h.b16 %v486
      %v1380 = vunpack.c.l.b16 %v487
      %v1381 = vunpack.c.h.b16 %v487
      %v1382 = vunpack.c.l.b16 %v488
      %v1383 = vunpack.c.h.b16 %v488
      %v1384 = vunpack.c.l.b16 %v489
      %v1385 = vunpack.c.h.b16 %v489
      %v1386 = vunpack.c.l.b16 %v490
      %v1387 = vunpack.c.h.b16 %v490
      %v1388 = vunpack.c.l.b16 %v491
      %v1389 = vunpack.c.h.b16 %v491
      %v1390 = vunpack.c.l.b16 %v492
      %v1391 = vunpack.c.h.b16 %v492
      %v1392 = vunpack.c.l.b16 %v493
      %v1393 = vunpack.c.h.b16 %v493
      %v1394 = vunpack.c.l.b16 %v494
      %v1395 = vunpack.c.h.b16 %v494
      %v1396 = vunpack.c.l.b16 %v495
      %v1397 = vunpack.c.h.b16 %v495
      %v1398 = vunpack.c.l.b16 %v496
      %v1399 = vunpack.c.h.b16 %v496
      %v1400 = vunpack.c.l.b16 %v497
      %v1401 = vunpack.c.h.b16 %v497
      %v1402 = vunpack.c.l.b16 %v498
      %v1403 = vunpack.c.h.b16 %v498
      %v1404 = vunpack.c.l.b16 %v499
      %v1405 = vunpack.c.h.b16 %v499
      %v1406 = vunpack.c.l.b16 %v500
      %v1407 = vunpack.c.h.b16 %v500
      %v1408 = vunpack.c.l.b16 %v501
      %v1409 = vunpack.c.h.b16 %v501
      %v1410 = vunpack.c.l.b16 %v502
      %v1411 = vunpack.c.h.b16 %v502
      %v1412 = vunpack.c.l.b16 %v503
      %v1413 = vunpack.c.h.b16 %v503
      %v1414 = vunpack.c.l.b16 %v504
      %v1415 = vunpack.c.h.b16 %v504
      %v1416 = vunpack.c.l.b16 %v505
      %v1417 = vunpack.c.h.b16 %v505
      %v1418 = vunpack.c.l.b16 %v506
      %v1419 = vunpack.c.h.b16 %v506
      %v1420 = vunpack.c.l.b16 %v507
      %v1421 = vunpack.c.h.b16 %v507
      %v1422 = vunpack.c.l.b16 %v508
      %v1423 = vunpack.c.h.b16 %v508
      %v1424 = vunpack.c.l.b16 %v509
      %v1425 = vunpack.c.h.b16 %v509
      %v1426 = vunpack.c.l.b16 %v510
      %v1427 = vunpack.c.h.b16 %v510
      %v1428 = vunpack.c.l.b16 %v511
      %v1429 = vunpack.c.h.b16 %v511
      %v1430 = vunpack.c.l.b16 %v512
      %v1431 = vunpack.c.h.b16 %v512
      %v1432 = vunpack.c.l.b16 %v513
      %v1433 = vunpack.c.h.b16 %v513
      %v1434 = vunpack.c.l.b16 %v514
      %v1435 = vunpack.c.h.b16 %v514
      %v1436 = vunpack.c.l.b16 %v515
      %v1437 = vunpack.c.h.b16 %v515
      %v1438 = vunpack.c.l.b16 %v516
      %v1439 = vunpack.c.h.b16 %v516
      %v1440 = vunpack.c.l.b16 %v517
      %v1441 = vunpack.c.h.b16 %v517
      %v1442 = vunpack.c.l.b16 %v518
      %v1443 = vunpack.c.h.b16 %v518
      %v1444 = vunpack.c.l.b16 %v519
      %v1445 = vunpack.c.h.b16 %v519
      %v1446 = vunpack.c.l.b16 %v520
      %v1447 = vunpack.c.h.b16 %v520
      %v1448 = vunpack.c.l.b16 %v521
      %v1449 = vunpack.c.h.b16 %v521
      %v1450 = vunpack.c.l.b16 %v522
      %v1451 = vunpack.c.h.b16 %v522
      %v1452 = vunpack.c.l.b16 %v523
      %v1453 = vunpack.c.h.b16 %v523
      %v1454 = vunpack.c.l.b16 %v524
      %v1455 = vunpack.c.h.b16 %v524
      %v1456 = vunpack.c.l.b16 %v525
      %v1457 = vunpack.c.h.b16 %v525
      %v1458 = vunpack.c.l.b16 %v526
      %v1459 = vunpack.c.h.b16 %v526
      %v1460 = vunpack.c.l.b16 %v527
      %v1461 = vunpack.c.h.b16 %v527
      %v1462 = vunpack.c.l.b16 %v528
      %v1463 = vunpack.c.h.b16 %v528
      %v1464 = vunpack.c.l.b16 %v529
      %v1465 = vunpack.c.h.b16 %v529
      %v1466 = vunpack.c.l.b16 %v530
      %v1467 = vunpack.c.h.b16 %v530
      %v1468 = vunpack.c.l.b16 %v531
      %v1469 = vunpack.c.h.b16 %v531
      %v1470 = vunpack.c.l.b16 %v532
      %v1471 = vunpack.c.h.b16 %v532
      %v1472 = vunpack.c.l.b16 %v533
      %v1473 = vunpack.c.h.b16 %v533
      %v1474 = vunpack.c.l.b16 %v534
      %v1475 = vunpack.c.h.b16 %v534
      %v1476 = vunpack.c.l.b16 %v535
      %v1477 = vunpack.c.h.b16 %v535
      %v1478 = vunpack.c.l.b16 %v536
      %v1479 = vunpack.c.h.b16 %v536
      %v1480 = vunpack.c.l.b16 %v537
      %v1481 = vunpack.c.h.b16 %v537
      %v1482 = vunpack.c.l.b16 %v538
      %v1483 = vunpack.c.h.b16 %v538
      %v1484 = vunpack.c.l.b16 %v539
      %v1485 = vunpack.c.h.b16 %v539
      %v1486 = vunpack.c.l.b16 %v540
      %v1487 = vunpack.c.h.b16 %v540
      %v1488 = vunpack.c.l.b16 %v541
      %v1489 = vunpack.c.h.b16 %v541
      %v1490 = vunpack.c.l.b16 %v542
      %v1491 = vunpack.c.h.b16 %v542
      %v1492 = vunpack.c.l.b16 %v543
      %v1493 = vunpack.c.h.b16 %v543
      %v1494 = vunpack.c.l.b16 %v544
      %v1495 = vunpack.c.h.b16 %v544
      %v1496 = vunpack.c.l.b16 %v545
      %v1497 = vunpack.c.h.b16 %v545
      %v1498 = vunpack.c.l.b16 %v546
      %v1499 = vunpack.c.h.b16 %v546
      %v1500 = vunpack.c.l.b16 %v547
      %v1501 = vunpack.c.h.b16 %v547
      %v1502 = vunpack.c.l.b16 %v548
      %v1503 = vunpack.c.h.b16 %v548
      %v1504 = vunpack.c.l.b16 %v549
      %v1505 = vunpack.c.h.b16 %v549
      %v1506 = vunpack.c.l.b16 %v550
      %v1507 = vunpack.c.h.b16 %v550
      %v1508 = vunpack.c.l.b16 %v551
      %v1509 = vunpack.c.h.b16 %v551
      %v1510 = vunpack.c.l.b16 %v552
      %v1511 = vunpack.c.h.b16 %v552
      %v1512 = vunpack.c.l.b16 %v553
      %v1513 = vunpack.c.h.b16 %v553
      %v1514 = vunpack.c.l.b16 %v554
      %v1515 = vunpack.c.h.b16 %v554
      %v1516 = vunpack.c.l.b16 %v555
      %v1517 = vunpack.c.h.b16 %v555
      %v1518 = vunpack.c.l.b16 %v556
      %v1519 = vunpack.c.h.b16 %v556
      %v1520 = vunpack.c.l.b16 %v557
      %v1521 = vunpack.c.h.b16 %v557
      %v1522 = vunpack.c.l.b16 %v558
      %v1523 = vunpack.c.h.b16 %v558
      %v1524 = vunpack.c.l.b16 %v559
      %v1525 = vunpack.c.h.b16 %v559
      %v1526 = vunpack.c.l.b16 %v560
      %v1527 = vunpack.c.h.b16 %v560
      %v1528 = vunpack.c.l.b16 %v561
      %v1529 = vunpack.c.h.b16 %v561
      %v1530 = vunpack.c.l.b16 %v562
      %v1531 = vunpack.c.h.b16 %v562
      %v1532 = vunpack.c.l.b16 %v563
      %v1533 = vunpack.c.h.b16 %v563
      %v1534 = vunpack.c.l.b16 %v564
      %v1535 = vunpack.c.h.b16 %v564
      %v1536 = vunpack.c.l.b16 %v565
      %v1537 = vunpack.c.h.b16 %v565
      %v1538 = vunpack.c.l.b16 %v566
      %v1539 = vunpack.c.h.b16 %v566
      %v1540 = vunpack.c.l.b16 %v567
      %v1541 = vunpack.c.h.b16 %v567
      %v1542 = vunpack.c.l.b16 %v568
      %v1543 = vunpack.c.h.b16 %v568
      %v1544 = vunpack.c.l.b16 %v569
      %v1545 = vunpack.c.h.b16 %v569
      %v1546 = vunpack.c.l.b16 %v570
      %v1547 = vunpack.c.h.b16 %v570
      %v1548 = vunpack.c.l.b16 %v571
      %v1549 = vunpack.c.h.b16 %v571
      %v1550 = vunpack.c.l.b16 %v572
      %v1551 = vunpack.c.h.b16 %v572
      %v1552 = vunpack.c.l.b16 %v573
      %v1553 = vunpack.c.h.b16 %v573
      %v1554 = vunpack.c.l.b16 %v574
      %v1555 = vunpack.c.h.b16 %v574
      %v1556 = vunpack.c.l.b16 %v575
      %v1557 = vunpack.c.h.b16 %v575
      %v1558 = vunpack.c.l.b16 %v576
      %v1559 = vunpack.c.h.b16 %v576
      %v1560 = vunpack.c.l.b16 %v577
      %v1561 = vunpack.c.h.b16 %v577
      %v1562 = vunpack.c.l.b16 %v578
      %v1563 = vunpack.c.h.b16 %v578
      %v1564 = vunpack.c.l.b16 %v579
      %v1565 = vunpack.c.h.b16 %v579
      %v1566 = vunpack.c.l.b16 %v580
      %v1567 = vunpack.c.h.b16 %v580
      %v1568 = vunpack.c.l.b16 %v581
      %v1569 = vunpack.c.h.b16 %v581
      %v1570 = vunpack.c.l.b16 %v582
      %v1571 = vunpack.c.h.b16 %v582
      %v1572 = vunpack.c.l.b16 %v583
      %v1573 = vunpack.c.h.b16 %v583
      %v1574 = vunpack.c.l.b16 %v584
      %v1575 = vunpack.c.h.b16 %v584
      %v1576 = vunpack.c.l.b16 %v585
      %v1577 = vunpack.c.h.b16 %v585
      %v1578 = vunpack.c.l.b16 %v586
      %v1579 = vunpack.c.h.b16 %v586
      %v1580 = vunpack.c.l.b16 %v587
      %v1581 = vunpack.c.h.b16 %v587
      %v1582 = vunpack.c.l.b16 %v588
      %v1583 = vunpack.c.h.b16 %v588
      %v1584 = vunpack.c.l.b16 %v589
      %v1585 = vunpack.c.h.b16 %v589
      %v1586 = vunpack.c.l.b16 %v590
      %v1587 = vunpack.c.h.b16 %v590
      %v1588 = vunpack.c.l.b16 %v591
      %v1589 = vunpack.c.h.b16 %v591
      %v1590 = vunpack.c.l.b16 %v592
      %v1591 = vunpack.c.h.b16 %v592
      %v1592 = vunpack.c.l.b16 %v593
      %v1593 = vunpack.c.h.b16 %v593
      %v1594 = vunpack.c.l.b16 %v594
      %v1595 = vunpack.c.h.b16 %v594
      %v1596 = vunpack.c.l.b16 %v595
      %v1597 = vunpack.c.h.b16 %v595
      %v1598 = vunpack.c.l.b16 %v596
      %v1599 = vunpack.c.h.b16 %v596
      %v1600 = vunpack.c.l.b16 %v597
      %v1601 = vunpack.c.h.b16 %v597
      %v1602 = vunpack.c.l.b16 %v598
      %v1603 = vunpack.c.h.b16 %v598
      %v1604 = vunpack.c.l.b16 %v599
      %v1605 = vunpack.c.h.b16 %v599
      %v1606 = vunpack.c.l.b16 %v600
      %v1607 = vunpack.c.h.b16 %v600
      %v1608 = vunpack.c.l.b16 %v601
      %v1609 = vunpack.c.h.b16 %v601
      %v1610 = vunpack.c.l.b16 %v602
      %v1611 = vunpack.c.h.b16 %v602
      %v1612 = vunpack.c.l.b16 %v603
      %v1613 = vunpack.c.h.b16 %v603
      %v1614 = vunpack.c.l.b16 %v604
      %v1615 = vunpack.c.h.b16 %v604
      %v1616 = vunpack.c.l.b16 %v605
      %v1617 = vunpack.c.h.b16 %v605
      %v1618 = vunpack.c.l.b16 %v606
      %v1619 = vunpack.c.h.b16 %v606
      %v1620 = vunpack.c.l.b16 %v607
      %v1621 = vunpack.c.h.b16 %v607
      %v1622 = vunpack.c.l.b16 %v608
      %v1623 = vunpack.c.h.b16 %v608
      %v1624 = vunpack.c.l.b16 %v609
      %v1625 = vunpack.c.h.b16 %v609
      %v1626 = vunpack.c.l.b16 %v610
      %v1627 = vunpack.c.h.b16 %v610
      %v1628 = vunpack.c.l.b16 %v611
      %v1629 = vunpack.c.h.b16 %v611
      %v1630 = vunpack.c.l.b16 %v612
      %v1631 = vunpack.c.h.b16 %v612
      %v1632 = vunpack.c.l.b16 %v613
      %v1633 = vunpack.c.h.b16 %v613
      %v1634 = vunpack.c.l.b16 %v614
      %v1635 = vunpack.c.h.b16 %v614
      %v1636 = vunpack.c.l.b16 %v615
      %v1637 = vunpack.c.h.b16 %v615
      %v1638 = vunpack.c.l.b16 %v616
      %v1639 = vunpack.c.h.b16 %v616
      %v1640 = vunpack.c.l.b16 %v617
      %v1641 = vunpack.c.h.b16 %v617
      %v1642 = vunpack.c.l.b16 %v618
      %v1643 = vunpack.c.h.b16 %v618
      %v1644 = vpack.c.b16 %v998, %v996
      %v1645 = vpack.c.b16 %v999, %v997
      %v1646 = vpack.c.b16 %v1002, %v1000
      %v1647 = vpack.c.b16 %v1003, %v1001
      %v1648 = vpack.c.b16 %v1006, %v1004
      %v1649 = vpack.c.b16 %v1007, %v1005
      %v1650 = vpack.c.b16 %v1010, %v1008
      %v1651 = vpack.c.b16 %v1011, %v1009
      %v1652 = vpack.c.b16 %v1014, %v1012
      %v1653 = vpack.c.b16 %v1015, %v1013
      %v1654 = vpack.c.b16 %v1018, %v1016
      %v1655 = vpack.c.b16 %v1019, %v1017
      %v1656 = vpack.c.b16 %v1022, %v1020
      %v1657 = vpack.c.b16 %v1023, %v1021
      %v1658 = vpack.c.b16 %v1026, %v1024
      %v1659 = vpack.c.b16 %v1027, %v1025
      %v1660 = vpack.c.b16 %v1030, %v1028
      %v1661 = vpack.c.b16 %v1031, %v1029
      %v1662 = vpack.c.b16 %v1034, %v1032
      %v1663 = vpack.c.b16 %v1035, %v1033
      %v1664 = vpack.c.b16 %v1038, %v1036
      %v1665 = vpack.c.b16 %v1039, %v1037
      %v1666 = vpack.c.b16 %v1042, %v1040
      %v1667 = vpack.c.b16 %v1043, %v1041
      %v1668 = vpack.c.b16 %v1046, %v1044
      %v1669 = vpack.c.b16 %v1047, %v1045
      %v1670 = vpack.c.b16 %v1050, %v1048
      %v1671 = vpack.c.b16 %v1051, %v1049
      %v1672 = vpack.c.b16 %v1054, %v1052
      %v1673 = vpack.c.b16 %v1055, %v1053
      %v1674 = vpack.c.b16 %v1058, %v1056
      %v1675 = vpack.c.b16 %v1059, %v1057
      %v1676 = vpack.c.b16 %v1062, %v1060
      %v1677 = vpack.c.b16 %v1063, %v1061
      %v1678 = vpack.c.b16 %v1066, %v1064
      %v1679 = vpack.c.b16 %v1067, %v1065
      %v1680 = vpack.c.b16 %v1070, %v1068
      %v1681 = vpack.c.b16 %v1071, %v1069
      %v1682 = vpack.c.b16 %v1074, %v1072
      %v1683 = vpack.c.b16 %v1075, %v1073
      %v1684 = vpack.c.b16 %v1078, %v1076
      %v1685 = vpack.c.b16 %v1079, %v1077
      %v1686 = vpack.c.b16 %v1082, %v1080
      %v1687 = vpack.c.b16 %v1083, %v1081
      %v1688 = vpack.c.b16 %v1086, %v1084
      %v1689 = vpack.c.b16 %v1087, %v1085
      %v1690 = vpack.c.b16 %v1090, %v1088
      %v1691 = vpack.c.b16 %v1091, %v1089
      %v1692 = vpack.c.b16 %v1094, %v1092
      %v1693 = vpack.c.b16 %v1095, %v1093
      %v1694 = vpack.c.b16 %v1098, %v1096
      %v1695 = vpack.c.b16 %v1099, %v1097
      %v1696 = vpack.c.b16 %v1102, %v1100
      %v1697 = vpack.c.b16 %v1103, %v1101
      %v1698 = vpack.c.b16 %v1106, %v1104
      %v1699 = vpack.c.b16 %v1107, %v1105
      %v1700 = vpack.c.b16 %v1110, %v1108
      %v1701 = vpack.c.b16 %v1111, %v1109
      %v1702 = vpack.c.b16 %v1114, %v1112
      %v1703 = vpack.c.b16 %v1115, %v1113
      %v1704 = vpack.c.b16 %v1118, %v1116
      %v1705 = vpack.c.b16 %v1119, %v1117
      %v1706 = vpack.c.b16 %v1122, %v1120
      %v1707 = vpack.c.b16 %v1123, %v1121
      %v1708 = vpack.c.b16 %v1126, %v1124
      %v1709 = vpack.c.b16 %v1127, %v1125
      %v1710 = vpack.c.b16 %v1130, %v1128
      %v1711 = vpack.c.b16 %v1131, %v1129
      %v1712 = vpack.c.b16 %v1134, %v1132
      %v1713 = vpack.c.b16 %v1135, %v1133
      %v1714 = vpack.c.b16 %v1138, %v1136
      %v1715 = vpack.c.b16 %v1139, %v1137
      %v1716 = vpack.c.b16 %v1142, %v1140
      %v1717 = vpack.c.b16 %v1143, %v1141
      %v1718 = vpack.c.b16 %v1146, %v1144
      %v1719 = vpack.c.b16 %v1147, %v1145
      %v1720 = vpack.c.b16 %v1150, %v1148
      %v1721 = vpack.c.b16 %v1151, %v1149
      %v1722 = vpack.c.b16 %v1154, %v1152
      %v1723 = vpack.c.b16 %v1155, %v1153
      %v1724 = vpack.c.b16 %v1158, %v1156
      %v1725 = vpack.c.b16 %v1159, %v1157
      %v1726 = vpack.c.b16 %v1162, %v1160
      %v1727 = vpack.c.b16 %v1163, %v1161
      %v1728 = vpack.c.b16 %v1166, %v1164
      %v1729 = vpack.c.b16 %v1167, %v1165
      %v1730 = vpack.c.b16 %v1170, %v1168
      %v1731 = vpack.c.b16 %v1171, %v1169
      %v1732 = vpack.c.b16 %v1174, %v1172
      %v1733 = vpack.c.b16 %v1175, %v1173
      %v1734 = vpack.c.b16 %v1178, %v1176
      %v1735 = vpack.c.b16 %v1179, %v1177
      %v1736 = vpack.c.b16 %v1182, %v1180
      %v1737 = vpack.c.b16 %v1183, %v1181
      %v1738 = vpack.c.b16 %v1186, %v1184
      %v1739 = vpack.c.b16 %v1187, %v1185
      %v1740 = vpack.c.b16 %v1190, %v1188
      %v1741 = vpack.c.b16 %v1191, %v1189
      %v1742 = vpack.c.b16 %v1194, %v1192
      %v1743 = vpack.c.b16 %v1195, %v1193
      %v1744 = vpack.c.b16 %v1198, %v1196
      %v1745 = vpack.c.b16 %v1199, %v1197
      %v1746 = vpack.c.b16 %v1202, %v1200
      %v1747 = vpack.c.b16 %v1203, %v1201
      %v1748 = vpack.c.b16 %v1206, %v1204
      %v1749 = vpack.c.b16 %v1207, %v1205
      %v1750 = vpack.c.b16 %v1210, %v1208
      %v1751 = vpack.c.b16 %v1211, %v1209
      %v1752 = vpack.c.b16 %v1214, %v1212
      %v1753 = vpack.c.b16 %v1215, %v1213
      %v1754 = vpack.c.b16 %v1218, %v1216
      %v1755 = vpack.c.b16 %v1219, %v1217
      %v1756 = vpack.c.b16 %v1222, %v1220
      %v1757 = vpack.c.b16 %v1223, %v1221
      %v1758 = vpack.c.b16 %v1226, %v1224
      %v1759 = vpack.c.b16 %v1227, %v1225
      %v1760 = vpack.c.b16 %v1230, %v1228
      %v1761 = vpack.c.b16 %v1231, %v1229
      %v1762 = vpack.c.b16 %v1234, %v1232
      %v1763 = vpack.c.b16 %v1235, %v1233
      %v1764 = vpack.c.b16 %v1238, %v1236
      %v1765 = vpack.c.b16 %v1239, %v1237
      %v1766 = vpack.c.b16 %v1242, %v1240
      %v1767 = vpack.c.b16 %v1243, %v1241
      %v1768 = vpack.c.b16 %v1246, %v1244
      %v1769 = vpack.c.b16 %v1247, %v1245
      %v1770 = vpack.c.b16 %v1250, %v1248
      %v1771 = vpack.c.b16 %v1251, %v1249
      %v1772 = vpack.c.b16 %v1254, %v1252
      %v1773 = vpack.c.b16 %v1255, %v1253
      %v1774 = vpack.c.b16 %v1258, %v1256
      %v1775 = vpack.c.b16 %v1259, %v1257
      %v1776 = vpack.c.b16 %v1262, %v1260
      %v1777 = vpack.c.b16 %v1263, %v1261
      %v1778 = vpack.c.b16 %v1266, %v1264
      %v1779 = vpack.c.b16 %v1267, %v1265
      %v1780 = vpack.c.b16 %v1270, %v1268
      %v1781 = vpack.c.b16 %v1271, %v1269
      %v1782 = vpack.c.b16 %v1274, %v1272
      %v1783 = vpack.c.b16 %v1275, %v1273
      %v1784 = vpack.c.b16 %v1278, %v1276
      %v1785 = vpack.c.b16 %v1279, %v1277
      %v1786 = vpack.c.b16 %v1282, %v1280
      %v1787 = vpack.c.b16 %v1283, %v1281
      %v1788 = vpack.c.b16 %v1286, %v1284
      %v1789 = vpack.c.b16 %v1287, %v1285
      %v1790 = vpack.c.b16 %v1290, %v1288
      %v1791 = vpack.c.b16 %v1291, %v1289
      %v1792 = vpack.c.b16 %v1294, %v1292
      %v1793 = vpack.c.b16 %v1295, %v1293
      %v1794 = vpack.c.b16 %v1298, %v1296
      %v1795 = vpack.c.b16 %v1299, %v1297
      %v1796 = vpack.c.b16 %v1302, %v1300
      %v1797 = vpack.c.b16 %v1303, %v1301
      %v1798 = vpack.c.b16 %v1306, %v1304
      %v1799 = vpack.c.b16 %v1307, %v1305
      %v1800 = vpack.c.b16 %v1310, %v1308
      %v1801 = vpack.c.b16 %v1311, %v1309
      %v1802 = vpack.c.b16 %v1314, %v1312
      %v1803 = vpack.c.b16 %v1315, %v1313
      %v1804 = vpack.c.b16 %v1318, %v1316
      %v1805 = vpack.c.b16 %v1319, %v1317
      %v1806 = vpack.c.b16 %v1322, %v1320
      %v1807 = vpack.c.b16 %v1323, %v1321
      %v1808 = vpack.c.b16 %v1326, %v1324
      %v1809 = vpack.c.b16 %v1327, %v1325
      %v1810 = vpack.c.b16 %v1330, %v1328
      %v1811 = vpack.c.b16 %v1331, %v1329
      %v1812 = vpack.c.b16 %v1334, %v1332
      %v1813 = vpack.c.b16 %v1335, %v1333
      %v1814 = vpack.c.b16 %v1338, %v1336
      %v1815 = vpack.c.b16 %v1339, %v1337
      %v1816 = vpack.c.b16 %v1342, %v1340
      %v1817 = vpack.c.b16 %v1343, %v1341
      %v1818 = vpack.c.b16 %v1346, %v1344
      %v1819 = vpack.c.b16 %v1347, %v1345
      %v1820 = vpack.c.b16 %v1350, %v1348
      %v1821 = vpack.c.b16 %v1351, %v1349
      %v1822 = vpack.c.b16 %v1354, %v1352
      %v1823 = vpack.c.b16 %v1355, %v1353
      %v1824 = vpack.c.b16 %v1358, %v1356
      %v1825 = vpack.c.b16 %v1359, %v1357
      %v1826 = vpack.c.b16 %v1362, %v1360
      %v1827 = vpack.c.b16 %v1363, %v1361
      %v1828 = vpack.c.b16 %v1366, %v1364
      %v1829 = vpack.c.b16 %v1367, %v1365
      %v1830 = vpack.c.b16 %v1370, %v1368
      %v1831 = vpack.c.b16 %v1371, %v1369
      %v1832 = vpack.c.b16 %v1374, %v1372
      %v1833 = vpack.c.b16 %v1375, %v1373
      %v1834 = vpack.c.b16 %v1378, %v1376
      %v1835 = vpack.c.b16 %v1379, %v1377
      %v1836 = vpack.c.b16 %v1382, %v1380
      %v1837 = vpack.c.b16 %v1383, %v1381
      %v1838 = vpack.c.b16 %v1386, %v1384
      %v1839 = vpack.c.b16 %v1387, %v1385
      %v1840 = vpack.c.b16 %v1390, %v1388
      %v1841 = vpack.c.b16 %v1391, %v1389
      %v1842 = vpack.c.b16 %v1394, %v1392
      %v1843 = vpack.c.b16 %v1395, %v1393
      %v1844 = vpack.c.b16 %v1398, %v1396
      %v1845 = vpack.c.b16 %v1399, %v1397
      %v1846 = vpack.c.b16 %v1402, %v1400
      %v1847 = vpack.c.b16 %v1403, %v1401
      %v1848 = vpack.c.b16 %v1406, %v1404
      %v1849 = vpack.c.b16 %v1407, %v1405
      %v1850 = vpack.c.b16 %v1410, %v1408
      %v1851 = vpack.c.b16 %v1411, %v1409
      %v1852 = vpack.c.b16 %v1414, %v1412
      %v1853 = vpack.c.b16 %v1415, %v1413
      %v1854 = vpack.c.b16 %v1418, %v1416
      %v1855 = vpack.c.b16 %v1419, %v1417
      %v1856 = vpack.c.b16 %v1422, %v1420
      %v1857 = vpack.c.b16 %v1423, %v1421
      %v1858 = vpack.c.b16 %v1426, %v1424
      %v1859 = vpack.c.b16 %v1427, %v1425
      %v1860 = vpack.c.b16 %v1430, %v1428
      %v1861 = vpack.c.b16 %v1431, %v1429
      %v1862 = vpack.c.b16 %v1434, %v1432
      %v1863 = vpack.c.b16 %v1435, %v1433
      %v1864 = vpack.c.b16 %v1438, %v1436
      %v1865 = vpack.c.b16 %v1439, %v1437
      %v1866 = vpack.c.b16 %v1442, %v1440
      %v1867 = vpack.c.b16 %v1443, %v1441
      %v1868 = vpack.c.b16 %v1446, %v1444
      %v1869 = vpack.c.b16 %v1447, %v1445
      %v1870 = vpack.c.b16 %v1450, %v1448
      %v1871 = vpack.c.b16 %v1451, %v1449
      %v1872 = vpack.c.b16 %v1454, %v1452
      %v1873 = vpack.c.b16 %v1455, %v1453
      %v1874 = vpack.c.b16 %v1458, %v1456
      %v1875 = vpack.c.b16 %v1459, %v1457
      %v1876 = vpack.c.b16 %v1462, %v1460
      %v1877 = vpack.c.b16 %v1463, %v1461
      %v1878 = vpack.c.b16 %v1466, %v1464
      %v1879 = vpack.c.b16 %v1467, %v1465
      %v1880 = vpack.c.b16 %v1470, %v1468
      %v1881 = vpack.c.b16 %v1471, %v1469
      %v1882 = vpack.c.b16 %v1474, %v1472
      %v1883 = vpack.c.b16 %v1475, %v1473
      %v1884 = vpack.c.b16 %v1478, %v1476
      %v1885 = vpack.c.b16 %v1479, %v1477
      %v1886 = vpack.c.b16 %v1482, %v1480
      %v1887 = vpack.c.b16 %v1483, %v1481
      %v1888 = vpack.c.b16 %v1486, %v1484
      %v1889 = vpack.c.b16 %v1487, %v1485
      %v1890 = vpack.c.b16 %v1490, %v1488
      %v1891 = vpack.c.b16 %v1491, %v1489
      %v1892 = vpack.c.b16 %v1494, %v1492
      %v1893 = vpack.c.b16 %v1495, %v1493
      %v1894 = vpack.c.b16 %v1498, %v1496
      %v1895 = vpack.c.b16 %v1499, %v1497
      %v1896 = vpack.c.b16 %v1502, %v1500
      %v1897 = vpack.c.b16 %v1503, %v1501
      %v1898 = vpack.c.b16 %v1506, %v1504
      %v1899 = vpack.c.b16 %v1507, %v1505
      %v1900 = vpack.c.b16 %v1510, %v1508
      %v1901 = vpack.c.b16 %v1511, %v1509
      %v1902 = vpack.c.b16 %v1514, %v1512
      %v1903 = vpack.c.b16 %v1515, %v1513
      %v1904 = vpack.c.b16 %v1518, %v1516
      %v1905 = vpack.c.b16 %v1519, %v1517
      %v1906 = vpack.c.b16 %v1522, %v1520
      %v1907 = vpack.c.b16 %v1523, %v1521
      %v1908 = vpack.c.b16 %v1526, %v1524
      %v1909 = vpack.c.b16 %v1527, %v1525
      %v1910 = vpack.c.b16 %v1530, %v1528
      %v1911 = vpack.c.b16 %v1531, %v1529
      %v1912 = vpack.c.b16 %v1534, %v1532
      %v1913 = vpack.c.b16 %v1535, %v1533
      %v1914 = vpack.c.b16 %v1538, %v1536
      %v1915 = vpack.c.b16 %v1539, %v1537
      %v1916 = vpack.c.b16 %v1542, %v1540
      %v1917 = vpack.c.b16 %v1543, %v1541
      %v1918 = vpack.c.b16 %v1546, %v1544
      %v1919 = vpack.c.b16 %v1547, %v1545
      %v1920 = vpack.c.b16 %v1550, %v1548
      %v1921 = vpack.c.b16 %v1551, %v1549
      %v1922 = vpack.c.b16 %v1554, %v1552
      %v1923 = vpack.c.b16 %v1555, %v1553
      %v1924 = vpack.c.b16 %v1558, %v1556
      %v1925 = vpack.c.b16 %v1559, %v1557
      %v1926 = vpack.c.b16 %v1562, %v1560
      %v1927 = vpack.c.b16 %v1563, %v1561
      %v1928 = vpack.c.b16 %v1566, %v1564
      %v1929 = vpack.c.b16 %v1567, %v1565
      %v1930 = vpack.c.b16 %v1570, %v1568
      %v1931 = vpack.c.b16 %v1571, %v1569
      %v1932 = vpack.c.b16 %v1574, %v1572
      %v1933 = vpack.c.b16 %v1575, %v1573
      %v1934 = vpack.c.b16 %v1578, %v1576
      %v1935 = vpack.c.b16 %v1579, %v1577
      %v1936 = vpack.c.b16 %v1582, %v1580
      %v1937 = vpack.c.b16 %v1583, %v1581
      %v1938 = vpack.c.b16 %v1586, %v1584
      %v1939 = vpack.c.b16 %v1587, %v1585
      %v1940 = vpack.c.b16 %v1590, %v1588
      %v1941 = vpack.c.b16 %v1591, %v1589
      %v1942 = vpack.c.b16 %v1594, %v1592
      %v1943 = vpack.c.b16 %v1595, %v1593
      %v1944 = vpack.c.b16 %v1598, %v1596
      %v1945 = vpack.c.b16 %v1599, %v1597
      %v1946 = vpack.c.b16 %v1602, %v1600
      %v1947 = vpack.c.b16 %v1603, %v1601
      %v1948 = vpack.c.b16 %v1606, %v1604
      %v1949 = vpack.c.b16 %v1607, %v1605
      %v1950 = vpack.c.b16 %v1610, %v1608
      %v1951 = vpack.c.b16 %v1611, %v1609
      %v1952 = vpack.c.b16 %v1614, %v1612
      %v1953 = vpack.c.b16 %v1615, %v1613
      %v1954 = vpack.c.b16 %v1618, %v1616
      %v1955 = vpack.c.b16 %v1619, %v1617
      %v1956 = vpack.c.b16 %v1622, %v1620
      %v1957 = vpack.c.b16 %v1623, %v1621
      %v1958 = vpack.c.b16 %v1626, %v1624
      %v1959 = vpack.c.b16 %v1627, %v1625
      %v1960 = vpack.c.b16 %v1630, %v1628
      %v1961 = vpack.c.b16 %v1631, %v1629
      %v1962 = vpack.c.b16 %v1634, %v1632
      %v1963 = vpack.c.b16 %v1635, %v1633
      %v1964 = vpack.c.b16 %v1638, %v1636
      %v1965 = vpack.c.b16 %v1639, %v1637
      %v1966 = vpack.c.b16 %v1642, %v1640
      %v1967 = vpack.c.b16 %v1643, %v1641
      %vm2292 = vcmask 261120
      %v2293 = vsel %vm2292, %v651, 0
      %2295 = vmatpush.bf16.msra.mxu0 %v1658
      %2296 = vmatpush.bf16.msra.mxu0 %v1656
      %2297 = vmatpush.bf16.msra.mxu0 %v1654
      %2298 = vmatpush.bf16.msra.mxu0 %v1652
      %2299 = vmatpush.bf16.msra.mxu0 %v1650
      %2300 = vmatpush.bf16.msra.mxu0 %v1648
      %2301 = vmatpush.bf16.msra.mxu0 %v1646
      %2302 = vmatpush.bf16.msra.mxu0 %v1644
      %2303 = vmatmul.bf16.gmra.mxu0 %v627
      %v2304 = vpop.f32.mrf.mxu0
      %v2305 = vadd.f32 %v621, %v2304
      %v2306 = vpop.f32.mrf.mxu0
      %2307 = vdwg.mxu0
      %2308 = vmatpush.bf16.msra.mxu0 %v1674
      %2309 = vmatpush.bf16.msra.mxu0 %v1672
      %2310 = vmatpush.bf16.msra.mxu0 %v1670
      %2311 = vmatpush.bf16.msra.mxu0 %v1668
      %2312 = vmatpush.bf16.msra.mxu0 %v1666
      %2313 = vmatpush.bf16.msra.mxu0 %v1664
      %2314 = vmatpush.bf16.msra.mxu0 %v1662
      %2315 = vmatpush.bf16.msra.mxu0 %v1660
      %2316 = vmatmul.bf16.gmra.mxu0 %v628
      %v2317 = vpop.f32.mrf.mxu0
      %v2318 = vadd.f32 %v2305, %v2317
      %v2319 = vpop.f32.mrf.mxu0
      %2320 = vdwg.mxu0
      %2321 = vmatpush.bf16.msra.mxu0 %v1690
      %2322 = vmatpush.bf16.msra.mxu0 %v1688
      %2323 = vmatpush.bf16.msra.mxu0 %v1686
      %2324 = vmatpush.bf16.msra.mxu0 %v1684
      %2325 = vmatpush.bf16.msra.mxu0 %v1682
      %2326 = vmatpush.bf16.msra.mxu0 %v1680
      %2327 = vmatpush.bf16.msra.mxu0 %v1678
      %2328 = vmatpush.bf16.msra.mxu0 %v1676
      %2329 = vmatmul.bf16.gmra.mxu0 %v629
      %v2330 = vpop.f32.mrf.mxu0
      %v2331 = vadd.f32 %v2318, %v2330
      %v2332 = vpop.f32.mrf.mxu0
      %2333 = vdwg.mxu0
      %2334 = vmatpush.bf16.msra.mxu0 %v1706
      %2335 = vmatpush.bf16.msra.mxu0 %v1704
      %2336 = vmatpush.bf16.msra.mxu0 %v1702
      %2337 = vmatpush.bf16.msra.mxu0 %v1700
      %2338 = vmatpush.bf16.msra.mxu0 %v1698
      %2339 = vmatpush.bf16.msra.mxu0 %v1696
      %2340 = vmatpush.bf16.msra.mxu0 %v1694
      %2341 = vmatpush.bf16.msra.mxu0 %v1692
      %2342 = vmatmul.bf16.gmra.mxu0 %v630
      %v2343 = vpop.f32.mrf.mxu0
      %v2344 = vadd.f32 %v2331, %v2343
      %v2345 = vpop.f32.mrf.mxu0
      %2346 = vdwg.mxu0
      %2347 = vmatpush.bf16.msra.mxu0 %v1722
      %2348 = vmatpush.bf16.msra.mxu0 %v1720
      %2349 = vmatpush.bf16.msra.mxu0 %v1718
      %2350 = vmatpush.bf16.msra.mxu0 %v1716
      %2351 = vmatpush.bf16.msra.mxu0 %v1714
      %2352 = vmatpush.bf16.msra.mxu0 %v1712
      %2353 = vmatpush.bf16.msra.mxu0 %v1710
      %2354 = vmatpush.bf16.msra.mxu0 %v1708
      %2355 = vmatmul.bf16.gmra.mxu0 %v631
      %v2356 = vpop.f32.mrf.mxu0
      %v2357 = vadd.f32 %v2344, %v2356
      %v2358 = vpop.f32.mrf.mxu0
      %2359 = vdwg.mxu0
      %2360 = vmatpush.bf16.msra.mxu0 %v1738
      %2361 = vmatpush.bf16.msra.mxu0 %v1736
      %2362 = vmatpush.bf16.msra.mxu0 %v1734
      %2363 = vmatpush.bf16.msra.mxu0 %v1732
      %2364 = vmatpush.bf16.msra.mxu0 %v1730
      %2365 = vmatpush.bf16.msra.mxu0 %v1728
      %2366 = vmatpush.bf16.msra.mxu0 %v1726
      %2367 = vmatpush.bf16.msra.mxu0 %v1724
      %2368 = vmatmul.bf16.gmra.mxu0 %v632
      %v2369 = vpop.f32.mrf.mxu0
      %v2370 = vadd.f32 %v2357, %v2369
      %v2371 = vpop.f32.mrf.mxu0
      %2372 = vdwg.mxu0
      %2373 = vmatpush.bf16.msra.mxu0 %v1754
      %2374 = vmatpush.bf16.msra.mxu0 %v1752
      %2375 = vmatpush.bf16.msra.mxu0 %v1750
      %2376 = vmatpush.bf16.msra.mxu0 %v1748
      %2377 = vmatpush.bf16.msra.mxu0 %v1746
      %2378 = vmatpush.bf16.msra.mxu0 %v1744
      %2379 = vmatpush.bf16.msra.mxu0 %v1742
      %2380 = vmatpush.bf16.msra.mxu0 %v1740
      %2381 = vmatmul.bf16.gmra.mxu0 %v633
      %v2382 = vpop.f32.mrf.mxu0
      %v2383 = vadd.f32 %v2370, %v2382
      %v2384 = vpop.f32.mrf.mxu0
      %2385 = vdwg.mxu0
      %2386 = vmatpush.bf16.msra.mxu0 %v1770
      %2387 = vmatpush.bf16.msra.mxu0 %v1768
      %2388 = vmatpush.bf16.msra.mxu0 %v1766
      %2389 = vmatpush.bf16.msra.mxu0 %v1764
      %2390 = vmatpush.bf16.msra.mxu0 %v1762
      %2391 = vmatpush.bf16.msra.mxu0 %v1760
      %2392 = vmatpush.bf16.msra.mxu0 %v1758
      %2393 = vmatpush.bf16.msra.mxu0 %v1756
      %2394 = vmatmul.bf16.gmra.mxu0 %v634
      %v2395 = vpop.f32.mrf.mxu0
      %v2396 = vadd.f32 %v2383, %v2395
      %v2397 = vpop.f32.mrf.mxu0
      %2398 = vdwg.mxu0
      %2399 = vmatpush.bf16.msra.mxu0 %v1786
      %2400 = vmatpush.bf16.msra.mxu0 %v1784
      %2401 = vmatpush.bf16.msra.mxu0 %v1782
      %2402 = vmatpush.bf16.msra.mxu0 %v1780
      %2403 = vmatpush.bf16.msra.mxu0 %v1778
      %2404 = vmatpush.bf16.msra.mxu0 %v1776
      %2405 = vmatpush.bf16.msra.mxu0 %v1774
      %2406 = vmatpush.bf16.msra.mxu0 %v1772
      %2407 = vmatmul.bf16.gmra.mxu0 %v637
      %v2408 = vpop.f32.mrf.mxu0
      %v2409 = vadd.f32 %v2396, %v2408
      %v2410 = vpop.f32.mrf.mxu0
      %2411 = vdwg.mxu0
      %2412 = vmatpush.bf16.msra.mxu0 %v1802
      %2413 = vmatpush.bf16.msra.mxu0 %v1800
      %2414 = vmatpush.bf16.msra.mxu0 %v1798
      %2415 = vmatpush.bf16.msra.mxu0 %v1796
      %2416 = vmatpush.bf16.msra.mxu0 %v1794
      %2417 = vmatpush.bf16.msra.mxu0 %v1792
      %2418 = vmatpush.bf16.msra.mxu0 %v1790
      %2419 = vmatpush.bf16.msra.mxu0 %v1788
      %2420 = vmatmul.bf16.gmra.mxu0 %v638
      %v2421 = vpop.f32.mrf.mxu0
      %v2422 = vadd.f32 %v2409, %v2421
      %v2423 = vpop.f32.mrf.mxu0
      %2424 = vdwg.mxu0
      %2425 = vmatpush.bf16.msra.mxu0 %v1818
      %2426 = vmatpush.bf16.msra.mxu0 %v1816
      %2427 = vmatpush.bf16.msra.mxu0 %v1814
      %2428 = vmatpush.bf16.msra.mxu0 %v1812
      %2429 = vmatpush.bf16.msra.mxu0 %v1810
      %2430 = vmatpush.bf16.msra.mxu0 %v1808
      %2431 = vmatpush.bf16.msra.mxu0 %v1806
      %2432 = vmatpush.bf16.msra.mxu0 %v1804
      %2433 = vmatmul.bf16.gmra.mxu0 %v639
      %v2434 = vpop.f32.mrf.mxu0
      %v2435 = vadd.f32 %v2422, %v2434
      %v2436 = vpop.f32.mrf.mxu0
      %2437 = vdwg.mxu0
      %2438 = vmatpush.bf16.msra.mxu0 %v1834
      %2439 = vmatpush.bf16.msra.mxu0 %v1832
      %2440 = vmatpush.bf16.msra.mxu0 %v1830
      %2441 = vmatpush.bf16.msra.mxu0 %v1828
      %2442 = vmatpush.bf16.msra.mxu0 %v1826
      %2443 = vmatpush.bf16.msra.mxu0 %v1824
      %2444 = vmatpush.bf16.msra.mxu0 %v1822
      %2445 = vmatpush.bf16.msra.mxu0 %v1820
      %2446 = vmatmul.bf16.gmra.mxu0 %v640
      %v2447 = vpop.f32.mrf.mxu0
      %v2448 = vadd.f32 %v2435, %v2447
      %v2449 = vpop.f32.mrf.mxu0
      %2450 = vdwg.mxu0
      %2451 = vmatpush.bf16.msra.mxu0 %v1850
      %2452 = vmatpush.bf16.msra.mxu0 %v1848
      %2453 = vmatpush.bf16.msra.mxu0 %v1846
      %2454 = vmatpush.bf16.msra.mxu0 %v1844
      %2455 = vmatpush.bf16.msra.mxu0 %v1842
      %2456 = vmatpush.bf16.msra.mxu0 %v1840
      %2457 = vmatpush.bf16.msra.mxu0 %v1838
      %2458 = vmatpush.bf16.msra.mxu0 %v1836
      %2459 = vmatmul.bf16.gmra.mxu0 %v641
      %v2460 = vpop.f32.mrf.mxu0
      %v2461 = vadd.f32 %v2448, %v2460
      %v2462 = vpop.f32.mrf.mxu0
      %2463 = vdwg.mxu0
      %2464 = vmatpush.bf16.msra.mxu0 %v1866
      %2465 = vmatpush.bf16.msra.mxu0 %v1864
      %2466 = vmatpush.bf16.msra.mxu0 %v1862
      %2467 = vmatpush.bf16.msra.mxu0 %v1860
      %2468 = vmatpush.bf16.msra.mxu0 %v1858
      %2469 = vmatpush.bf16.msra.mxu0 %v1856
      %2470 = vmatpush.bf16.msra.mxu0 %v1854
      %2471 = vmatpush.bf16.msra.mxu0 %v1852
      %2472 = vmatmul.bf16.gmra.mxu0 %v642
      %v2473 = vpop.f32.mrf.mxu0
      %v2474 = vadd.f32 %v2461, %v2473
      %v2475 = vpop.f32.mrf.mxu0
      %2476 = vdwg.mxu0
      %2477 = vmatpush.bf16.msra.mxu0 %v1882
      %2478 = vmatpush.bf16.msra.mxu0 %v1880
      %2479 = vmatpush.bf16.msra.mxu0 %v1878
      %2480 = vmatpush.bf16.msra.mxu0 %v1876
      %2481 = vmatpush.bf16.msra.mxu0 %v1874
      %2482 = vmatpush.bf16.msra.mxu0 %v1872
      %2483 = vmatpush.bf16.msra.mxu0 %v1870
      %2484 = vmatpush.bf16.msra.mxu0 %v1868
      %2485 = vmatmul.bf16.gmra.mxu0 %v643
      %v2486 = vpop.f32.mrf.mxu0
      %v2487 = vadd.f32 %v2474, %v2486
      %v2488 = vpop.f32.mrf.mxu0
      %2489 = vdwg.mxu0
      %2490 = vmatpush.bf16.msra.mxu0 %v1898
      %2491 = vmatpush.bf16.msra.mxu0 %v1896
      %2492 = vmatpush.bf16.msra.mxu0 %v1894
      %2493 = vmatpush.bf16.msra.mxu0 %v1892
      %2494 = vmatpush.bf16.msra.mxu0 %v1890
      %2495 = vmatpush.bf16.msra.mxu0 %v1888
      %2496 = vmatpush.bf16.msra.mxu0 %v1886
      %2497 = vmatpush.bf16.msra.mxu0 %v1884
      %2498 = vmatmul.bf16.gmra.mxu0 %v644
      %v2499 = vpop.f32.mrf.mxu0
      %v2500 = vadd.f32 %v2487, %v2499
      %v2501 = vpop.f32.mrf.mxu0
      %2502 = vdwg.mxu0
      %2503 = vmatpush.bf16.msra.mxu0 %v1914
      %2504 = vmatpush.bf16.msra.mxu0 %v1912
      %2505 = vmatpush.bf16.msra.mxu0 %v1910
      %2506 = vmatpush.bf16.msra.mxu0 %v1908
      %2507 = vmatpush.bf16.msra.mxu0 %v1906
      %2508 = vmatpush.bf16.msra.mxu0 %v1904
      %2509 = vmatpush.bf16.msra.mxu0 %v1902
      %2510 = vmatpush.bf16.msra.mxu0 %v1900
      %2511 = vmatmul.bf16.gmra.mxu0 %v647
      %v2512 = vpop.f32.mrf.mxu0
      %v2513 = vadd.f32 %v2500, %v2512
      %v2514 = vpop.f32.mrf.mxu0
      %2515 = vdwg.mxu0
      %2516 = vmatpush.bf16.msra.mxu0 %v1930
      %2517 = vmatpush.bf16.msra.mxu0 %v1928
      %2518 = vmatpush.bf16.msra.mxu0 %v1926
      %2519 = vmatpush.bf16.msra.mxu0 %v1924
      %2520 = vmatpush.bf16.msra.mxu0 %v1922
      %2521 = vmatpush.bf16.msra.mxu0 %v1920
      %2522 = vmatpush.bf16.msra.mxu0 %v1918
      %2523 = vmatpush.bf16.msra.mxu0 %v1916
      %2524 = vmatmul.bf16.gmra.mxu0 %v648
      %v2525 = vpop.f32.mrf.mxu0
      %v2526 = vadd.f32 %v2513, %v2525
      %v2527 = vpop.f32.mrf.mxu0
      %2528 = vdwg.mxu0
      %2529 = vmatpush.bf16.msra.mxu0 %v1946
      %2530 = vmatpush.bf16.msra.mxu0 %v1944
      %2531 = vmatpush.bf16.msra.mxu0 %v1942
      %2532 = vmatpush.bf16.msra.mxu0 %v1940
      %2533 = vmatpush.bf16.msra.mxu0 %v1938
      %2534 = vmatpush.bf16.msra.mxu0 %v1936
      %2535 = vmatpush.bf16.msra.mxu0 %v1934
      %2536 = vmatpush.bf16.msra.mxu0 %v1932
      %2537 = vmatmul.bf16.gmra.mxu0 %v649
      %v2538 = vpop.f32.mrf.mxu0
      %v2539 = vadd.f32 %v2526, %v2538
      %v2540 = vpop.f32.mrf.mxu0
      %2541 = vdwg.mxu0
      %2542 = vmatpush.bf16.msra.mxu0 %v1962
      %2543 = vmatpush.bf16.msra.mxu0 %v1960
      %2544 = vmatpush.bf16.msra.mxu0 %v1958
      %2545 = vmatpush.bf16.msra.mxu0 %v1956
      %2546 = vmatpush.bf16.msra.mxu0 %v1954
      %2547 = vmatpush.bf16.msra.mxu0 %v1952
      %2548 = vmatpush.bf16.msra.mxu0 %v1950
      %2549 = vmatpush.bf16.msra.mxu0 %v1948
      %2550 = vmatmul.bf16.gmra.mxu0 %v650
      %v2551 = vpop.f32.mrf.mxu0
      %v2552 = vadd.f32 %v2539, %v2551
      %v2553 = vpop.f32.mrf.mxu0
      %2554 = vdwg.mxu0
      %2555 = vmatpush.bf16.msra.mxu0 0
      %2556 = vmatpush.bf16.msra.mxu0 0
      %2557 = vmatpush.bf16.msra.mxu0 0
      %2558 = vmatpush.bf16.msra.mxu0 0
      %2559 = vmatpush.bf16.msra.mxu0 0
      %2560 = vmatpush.bf16.msra.mxu0 0
      %2561 = vmatpush.bf16.msra.mxu0 %v1966
      %2562 = vmatpush.bf16.msra.mxu0 %v1964
      %2563 = vmatmul.bf16.gmra.mxu0 %v2293
      %v2564 = vpop.f32.mrf.mxu0
      %v2565 = vadd.f32 %v2552, %v2564
      %v2566 = vpop.f32.mrf.mxu0
      %2567 = vdwg.mxu0
      %2568 = vmatpush.bf16.msra.mxu0 %v1659
      %2569 = vmatpush.bf16.msra.mxu0 %v1657
      %2570 = vmatpush.bf16.msra.mxu0 %v1655
      %2571 = vmatpush.bf16.msra.mxu0 %v1653
      %2572 = vmatpush.bf16.msra.mxu0 %v1651
      %2573 = vmatpush.bf16.msra.mxu0 %v1649
      %2574 = vmatpush.bf16.msra.mxu0 %v1647
      %2575 = vmatpush.bf16.msra.mxu0 %v1645
      %2576 = vmatmul.bf16.gmra.mxu0 %v627
      %v2577 = vpop.f32.mrf.mxu0
      %v2578 = vadd.f32 %v622, %v2577
      %v2579 = vpop.f32.mrf.mxu0
      %2580 = vdwg.mxu0
      %2581 = vmatpush.bf16.msra.mxu0 %v1675
      %2582 = vmatpush.bf16.msra.mxu0 %v1673
      %2583 = vmatpush.bf16.msra.mxu0 %v1671
      %2584 = vmatpush.bf16.msra.mxu0 %v1669
      %2585 = vmatpush.bf16.msra.mxu0 %v1667
      %2586 = vmatpush.bf16.msra.mxu0 %v1665
      %2587 = vmatpush.bf16.msra.mxu0 %v1663
      %2588 = vmatpush.bf16.msra.mxu0 %v1661
      %2589 = vmatmul.bf16.gmra.mxu0 %v628
      %v2590 = vpop.f32.mrf.mxu0
      %v2591 = vadd.f32 %v2578, %v2590
      %v2592 = vpop.f32.mrf.mxu0
      %2593 = vdwg.mxu0
      %2594 = vmatpush.bf16.msra.mxu0 %v1691
      %2595 = vmatpush.bf16.msra.mxu0 %v1689
      %2596 = vmatpush.bf16.msra.mxu0 %v1687
      %2597 = vmatpush.bf16.msra.mxu0 %v1685
      %2598 = vmatpush.bf16.msra.mxu0 %v1683
      %2599 = vmatpush.bf16.msra.mxu0 %v1681
      %2600 = vmatpush.bf16.msra.mxu0 %v1679
      %2601 = vmatpush.bf16.msra.mxu0 %v1677
      %2602 = vmatmul.bf16.gmra.mxu0 %v629
      %v2603 = vpop.f32.mrf.mxu0
      %v2604 = vadd.f32 %v2591, %v2603
      %v2605 = vpop.f32.mrf.mxu0
      %2606 = vdwg.mxu0
      %2607 = vmatpush.bf16.msra.mxu0 %v1707
      %2608 = vmatpush.bf16.msra.mxu0 %v1705
      %2609 = vmatpush.bf16.msra.mxu0 %v1703
      %2610 = vmatpush.bf16.msra.mxu0 %v1701
      %2611 = vmatpush.bf16.msra.mxu0 %v1699
      %2612 = vmatpush.bf16.msra.mxu0 %v1697
      %2613 = vmatpush.bf16.msra.mxu0 %v1695
      %2614 = vmatpush.bf16.msra.mxu0 %v1693
      %2615 = vmatmul.bf16.gmra.mxu0 %v630
      %v2616 = vpop.f32.mrf.mxu0
      %v2617 = vadd.f32 %v2604, %v2616
      %v2618 = vpop.f32.mrf.mxu0
      %2619 = vdwg.mxu0
      %2620 = vmatpush.bf16.msra.mxu0 %v1723
      %2621 = vmatpush.bf16.msra.mxu0 %v1721
      %2622 = vmatpush.bf16.msra.mxu0 %v1719
      %2623 = vmatpush.bf16.msra.mxu0 %v1717
      %2624 = vmatpush.bf16.msra.mxu0 %v1715
      %2625 = vmatpush.bf16.msra.mxu0 %v1713
      %2626 = vmatpush.bf16.msra.mxu0 %v1711
      %2627 = vmatpush.bf16.msra.mxu0 %v1709
      %2628 = vmatmul.bf16.gmra.mxu0 %v631
      %v2629 = vpop.f32.mrf.mxu0
      %v2630 = vadd.f32 %v2617, %v2629
      %v2631 = vpop.f32.mrf.mxu0
      %2632 = vdwg.mxu0
      %2633 = vmatpush.bf16.msra.mxu0 %v1739
      %2634 = vmatpush.bf16.msra.mxu0 %v1737
      %2635 = vmatpush.bf16.msra.mxu0 %v1735
      %2636 = vmatpush.bf16.msra.mxu0 %v1733
      %2637 = vmatpush.bf16.msra.mxu0 %v1731
      %2638 = vmatpush.bf16.msra.mxu0 %v1729
      %2639 = vmatpush.bf16.msra.mxu0 %v1727
      %2640 = vmatpush.bf16.msra.mxu0 %v1725
      %2641 = vmatmul.bf16.gmra.mxu0 %v632
      %v2642 = vpop.f32.mrf.mxu0
      %v2643 = vadd.f32 %v2630, %v2642
      %v2644 = vpop.f32.mrf.mxu0
      %2645 = vdwg.mxu0
      %2646 = vmatpush.bf16.msra.mxu0 %v1755
      %2647 = vmatpush.bf16.msra.mxu0 %v1753
      %2648 = vmatpush.bf16.msra.mxu0 %v1751
      %2649 = vmatpush.bf16.msra.mxu0 %v1749
      %2650 = vmatpush.bf16.msra.mxu0 %v1747
      %2651 = vmatpush.bf16.msra.mxu0 %v1745
      %2652 = vmatpush.bf16.msra.mxu0 %v1743
      %2653 = vmatpush.bf16.msra.mxu0 %v1741
      %2654 = vmatmul.bf16.gmra.mxu0 %v633
      %v2655 = vpop.f32.mrf.mxu0
      %v2656 = vadd.f32 %v2643, %v2655
      %v2657 = vpop.f32.mrf.mxu0
      %2658 = vdwg.mxu0
      %2659 = vmatpush.bf16.msra.mxu0 %v1771
      %2660 = vmatpush.bf16.msra.mxu0 %v1769
      %2661 = vmatpush.bf16.msra.mxu0 %v1767
      %2662 = vmatpush.bf16.msra.mxu0 %v1765
      %2663 = vmatpush.bf16.msra.mxu0 %v1763
      %2664 = vmatpush.bf16.msra.mxu0 %v1761
      %2665 = vmatpush.bf16.msra.mxu0 %v1759
      %2666 = vmatpush.bf16.msra.mxu0 %v1757
      %2667 = vmatmul.bf16.gmra.mxu0 %v634
      %v2668 = vpop.f32.mrf.mxu0
      %v2669 = vadd.f32 %v2656, %v2668
      %v2670 = vpop.f32.mrf.mxu0
      %2671 = vdwg.mxu0
      %2672 = vmatpush.bf16.msra.mxu0 %v1787
      %2673 = vmatpush.bf16.msra.mxu0 %v1785
      %2674 = vmatpush.bf16.msra.mxu0 %v1783
      %2675 = vmatpush.bf16.msra.mxu0 %v1781
      %2676 = vmatpush.bf16.msra.mxu0 %v1779
      %2677 = vmatpush.bf16.msra.mxu0 %v1777
      %2678 = vmatpush.bf16.msra.mxu0 %v1775
      %2679 = vmatpush.bf16.msra.mxu0 %v1773
      %2680 = vmatmul.bf16.gmra.mxu0 %v637
      %v2681 = vpop.f32.mrf.mxu0
      %v2682 = vadd.f32 %v2669, %v2681
      %v2683 = vpop.f32.mrf.mxu0
      %2684 = vdwg.mxu0
      %2685 = vmatpush.bf16.msra.mxu0 %v1803
      %2686 = vmatpush.bf16.msra.mxu0 %v1801
      %2687 = vmatpush.bf16.msra.mxu0 %v1799
      %2688 = vmatpush.bf16.msra.mxu0 %v1797
      %2689 = vmatpush.bf16.msra.mxu0 %v1795
      %2690 = vmatpush.bf16.msra.mxu0 %v1793
      %2691 = vmatpush.bf16.msra.mxu0 %v1791
      %2692 = vmatpush.bf16.msra.mxu0 %v1789
      %2693 = vmatmul.bf16.gmra.mxu0 %v638
      %v2694 = vpop.f32.mrf.mxu0
      %v2695 = vadd.f32 %v2682, %v2694
      %v2696 = vpop.f32.mrf.mxu0
      %2697 = vdwg.mxu0
      %2698 = vmatpush.bf16.msra.mxu0 %v1819
      %2699 = vmatpush.bf16.msra.mxu0 %v1817
      %2700 = vmatpush.bf16.msra.mxu0 %v1815
      %2701 = vmatpush.bf16.msra.mxu0 %v1813
      %2702 = vmatpush.bf16.msra.mxu0 %v1811
      %2703 = vmatpush.bf16.msra.mxu0 %v1809
      %2704 = vmatpush.bf16.msra.mxu0 %v1807
      %2705 = vmatpush.bf16.msra.mxu0 %v1805
      %2706 = vmatmul.bf16.gmra.mxu0 %v639
      %v2707 = vpop.f32.mrf.mxu0
      %v2708 = vadd.f32 %v2695, %v2707
      %v2709 = vpop.f32.mrf.mxu0
      %2710 = vdwg.mxu0
      %2711 = vmatpush.bf16.msra.mxu0 %v1835
      %2712 = vmatpush.bf16.msra.mxu0 %v1833
      %2713 = vmatpush.bf16.msra.mxu0 %v1831
      %2714 = vmatpush.bf16.msra.mxu0 %v1829
      %2715 = vmatpush.bf16.msra.mxu0 %v1827
      %2716 = vmatpush.bf16.msra.mxu0 %v1825
      %2717 = vmatpush.bf16.msra.mxu0 %v1823
      %2718 = vmatpush.bf16.msra.mxu0 %v1821
      %2719 = vmatmul.bf16.gmra.mxu0 %v640
      %v2720 = vpop.f32.mrf.mxu0
      %v2721 = vadd.f32 %v2708, %v2720
      %v2722 = vpop.f32.mrf.mxu0
      %2723 = vdwg.mxu0
      %2724 = vmatpush.bf16.msra.mxu0 %v1851
      %2725 = vmatpush.bf16.msra.mxu0 %v1849
      %2726 = vmatpush.bf16.msra.mxu0 %v1847
      %2727 = vmatpush.bf16.msra.mxu0 %v1845
      %2728 = vmatpush.bf16.msra.mxu0 %v1843
      %2729 = vmatpush.bf16.msra.mxu0 %v1841
      %2730 = vmatpush.bf16.msra.mxu0 %v1839
      %2731 = vmatpush.bf16.msra.mxu0 %v1837
      %2732 = vmatmul.bf16.gmra.mxu0 %v641
      %v2733 = vpop.f32.mrf.mxu0
      %v2734 = vadd.f32 %v2721, %v2733
      %v2735 = vpop.f32.mrf.mxu0
      %2736 = vdwg.mxu0
      %2737 = vmatpush.bf16.msra.mxu0 %v1867
      %2738 = vmatpush.bf16.msra.mxu0 %v1865
      %2739 = vmatpush.bf16.msra.mxu0 %v1863
      %2740 = vmatpush.bf16.msra.mxu0 %v1861
      %2741 = vmatpush.bf16.msra.mxu0 %v1859
      %2742 = vmatpush.bf16.msra.mxu0 %v1857
      %2743 = vmatpush.bf16.msra.mxu0 %v1855
      %2744 = vmatpush.bf16.msra.mxu0 %v1853
      %2745 = vmatmul.bf16.gmra.mxu0 %v642
      %v2746 = vpop.f32.mrf.mxu0
      %v2747 = vadd.f32 %v2734, %v2746
      %v2748 = vpop.f32.mrf.mxu0
      %2749 = vdwg.mxu0
      %2750 = vmatpush.bf16.msra.mxu0 %v1883
      %2751 = vmatpush.bf16.msra.mxu0 %v1881
      %2752 = vmatpush.bf16.msra.mxu0 %v1879
      %2753 = vmatpush.bf16.msra.mxu0 %v1877
      %2754 = vmatpush.bf16.msra.mxu0 %v1875
      %2755 = vmatpush.bf16.msra.mxu0 %v1873
      %2756 = vmatpush.bf16.msra.mxu0 %v1871
      %2757 = vmatpush.bf16.msra.mxu0 %v1869
      %2758 = vmatmul.bf16.gmra.mxu0 %v643
      %v2759 = vpop.f32.mrf.mxu0
      %v2760 = vadd.f32 %v2747, %v2759
      %v2761 = vpop.f32.mrf.mxu0
      %2762 = vdwg.mxu0
      %2763 = vmatpush.bf16.msra.mxu0 %v1899
      %2764 = vmatpush.bf16.msra.mxu0 %v1897
      %2765 = vmatpush.bf16.msra.mxu0 %v1895
      %2766 = vmatpush.bf16.msra.mxu0 %v1893
      %2767 = vmatpush.bf16.msra.mxu0 %v1891
      %2768 = vmatpush.bf16.msra.mxu0 %v1889
      %2769 = vmatpush.bf16.msra.mxu0 %v1887
      %2770 = vmatpush.bf16.msra.mxu0 %v1885
      %2771 = vmatmul.bf16.gmra.mxu0 %v644
      %v2772 = vpop.f32.mrf.mxu0
      %v2773 = vadd.f32 %v2760, %v2772
      %v2774 = vpop.f32.mrf.mxu0
      %2775 = vdwg.mxu0
      %2776 = vmatpush.bf16.msra.mxu0 %v1915
      %2777 = vmatpush.bf16.msra.mxu0 %v1913
      %2778 = vmatpush.bf16.msra.mxu0 %v1911
      %2779 = vmatpush.bf16.msra.mxu0 %v1909
      %2780 = vmatpush.bf16.msra.mxu0 %v1907
      %2781 = vmatpush.bf16.msra.mxu0 %v1905
      %2782 = vmatpush.bf16.msra.mxu0 %v1903
      %2783 = vmatpush.bf16.msra.mxu0 %v1901
      %2784 = vmatmul.bf16.gmra.mxu0 %v647
      %v2785 = vpop.f32.mrf.mxu0
      %v2786 = vadd.f32 %v2773, %v2785
      %v2787 = vpop.f32.mrf.mxu0
      %2788 = vdwg.mxu0
      %2789 = vmatpush.bf16.msra.mxu0 %v1931
      %2790 = vmatpush.bf16.msra.mxu0 %v1929
      %2791 = vmatpush.bf16.msra.mxu0 %v1927
      %2792 = vmatpush.bf16.msra.mxu0 %v1925
      %2793 = vmatpush.bf16.msra.mxu0 %v1923
      %2794 = vmatpush.bf16.msra.mxu0 %v1921
      %2795 = vmatpush.bf16.msra.mxu0 %v1919
      %2796 = vmatpush.bf16.msra.mxu0 %v1917
      %2797 = vmatmul.bf16.gmra.mxu0 %v648
      %v2798 = vpop.f32.mrf.mxu0
      %v2799 = vadd.f32 %v2786, %v2798
      %v2800 = vpop.f32.mrf.mxu0
      %2801 = vdwg.mxu0
      %2802 = vmatpush.bf16.msra.mxu0 %v1947
      %2803 = vmatpush.bf16.msra.mxu0 %v1945
      %2804 = vmatpush.bf16.msra.mxu0 %v1943
      %2805 = vmatpush.bf16.msra.mxu0 %v1941
      %2806 = vmatpush.bf16.msra.mxu0 %v1939
      %2807 = vmatpush.bf16.msra.mxu0 %v1937
      %2808 = vmatpush.bf16.msra.mxu0 %v1935
      %2809 = vmatpush.bf16.msra.mxu0 %v1933
      %2810 = vmatmul.bf16.gmra.mxu0 %v649
      %v2811 = vpop.f32.mrf.mxu0
      %v2812 = vadd.f32 %v2799, %v2811
      %v2813 = vpop.f32.mrf.mxu0
      %2814 = vdwg.mxu0
      %2815 = vmatpush.bf16.msra.mxu0 %v1963
      %2816 = vmatpush.bf16.msra.mxu0 %v1961
      %2817 = vmatpush.bf16.msra.mxu0 %v1959
      %2818 = vmatpush.bf16.msra.mxu0 %v1957
      %2819 = vmatpush.bf16.msra.mxu0 %v1955
      %2820 = vmatpush.bf16.msra.mxu0 %v1953
      %2821 = vmatpush.bf16.msra.mxu0 %v1951
      %2822 = vmatpush.bf16.msra.mxu0 %v1949
      %2823 = vmatmul.bf16.gmra.mxu0 %v650
      %v2824 = vpop.f32.mrf.mxu0
      %v2825 = vadd.f32 %v2812, %v2824
      %v2826 = vpop.f32.mrf.mxu0
      %2827 = vdwg.mxu0
      %2828 = vmatpush.bf16.msra.mxu0 0
      %2829 = vmatpush.bf16.msra.mxu0 0
      %2830 = vmatpush.bf16.msra.mxu0 0
      %2831 = vmatpush.bf16.msra.mxu0 0
      %2832 = vmatpush.bf16.msra.mxu0 0
      %2833 = vmatpush.bf16.msra.mxu0 0
      %2834 = vmatpush.bf16.msra.mxu0 %v1967
      %2835 = vmatpush.bf16.msra.mxu0 %v1965
      %2836 = vmatmul.bf16.gmra.mxu0 %v2293
      %v2837 = vpop.f32.mrf.mxu0
      %v2838 = vadd.f32 %v2825, %v2837
      %v2839 = vpop.f32.mrf.mxu0
      %2840 = vdwg.mxu0
      %v2841 = vtanh.pop %v2565
      %v2842 = vtanh.pop %v2838
      %v2843 = vpack.c.bf16 %v2841, %v2841
      %v2844 = vpack.c.bf16 %v2842, %v2842
      %v2845 = vld [vmem:[%s283] sm:$0xf]
      %v2846 = vld [vmem:[%s283 + $0x4] sm:$0xf]
      %v2847 = vld [vmem:[%s283 + $0x8] sm:$0xf]
      %v2848 = vld [vmem:[%s283 + $0xc] sm:$0xf]
      %v2849 = vld [vmem:[%s283 + $0x10] sm:$0xf]
      %v2850 = vld [vmem:[%s283 + $0x14] sm:$0xf]
      %v2851 = vld [vmem:[%s283 + $0x18] sm:$0xf]
      %v2852 = vld [vmem:[%s283 + $0x1c] sm:$0xf]
      %v2853 = vld [vmem:[%s283 + $0x20] sm:$0xf]
      %v2854 = vld [vmem:[%s283 + $0x24] sm:$0xf]
      %v2855 = vld [vmem:[%s283 + $0x28] sm:$0xf]
      %v2856 = vld [vmem:[%s283 + $0x2c] sm:$0xf]
      %v2857 = vld [vmem:[%s283 + $0x30] sm:$0xf]
      %v2858 = vld [vmem:[%s283 + $0x34] sm:$0xf]
      %v2859 = vld [vmem:[%s283 + $0x38] sm:$0xf]
      %v2860 = vld [vmem:[%s283 + $0x3c] sm:$0xf]
      %v2861 = vld [vmem:[%s283 + $0x40] sm:$0xf]
      %v2862 = vld [vmem:[%s283 + $0x44] sm:$0xf]
      %v2863 = vld [vmem:[%s283 + $0x48] sm:$0xf]
      %v2864 = vld [vmem:[%s283 + $0x4c] sm:$0xf]
      %v2865 = vld [vmem:[%s283 + $0x50] sm:$0xf]
      %v2866 = vld [vmem:[%s283 + $0x54] sm:$0xf]
      %v2867 = vld [vmem:[%s283 + $0x58] sm:$0xf]
      %v2868 = vld [vmem:[%s283 + $0x5c] sm:$0xf]
      %v2869 = vld [vmem:[%s283 + $0x60] sm:$0xf]
      %v2870 = vld [vmem:[%s283 + $0x64] sm:$0xf]
      %v2871 = vld [vmem:[%s283 + $0x68] sm:$0xf]
      %v2872 = vld [vmem:[%s283 + $0x6c] sm:$0xf]
      %v2873 = vld [vmem:[%s283 + $0x70] sm:$0xf]
      %v2874 = vld [vmem:[%s283 + $0x74] sm:$0xf]
      %v2875 = vld [vmem:[%s283 + $0x78] sm:$0xf]
      %v2876 = vld [vmem:[%s283 + $0x7c] sm:$0xf]
      %v2877 = vld [vmem:[%s286] sm:$0x1]
      %v2879 = vperm.slane %v2877, 0
      %v2913 = vunpack.c.l.b16 %v2845
      %v2914 = vunpack.c.l.b16 %v2846
      %v2915 = vunpack.c.l.b16 %v2847
      %v2916 = vunpack.c.l.b16 %v2848
      %v2917 = vunpack.c.l.b16 %v2849
      %v2918 = vunpack.c.l.b16 %v2850
      %v2919 = vunpack.c.l.b16 %v2851
      %v2920 = vunpack.c.l.b16 %v2852
      %v2921 = vunpack.c.l.b16 %v2853
      %v2922 = vunpack.c.l.b16 %v2854
      %v2923 = vunpack.c.l.b16 %v2855
      %v2924 = vunpack.c.l.b16 %v2856
      %v2925 = vunpack.c.l.b16 %v2857
      %v2926 = vunpack.c.l.b16 %v2858
      %v2927 = vunpack.c.l.b16 %v2859
      %v2928 = vunpack.c.l.b16 %v2860
      %v2929 = vunpack.c.l.b16 %v2861
      %v2930 = vunpack.c.l.b16 %v2862
      %v2931 = vunpack.c.l.b16 %v2863
      %v2932 = vunpack.c.l.b16 %v2864
      %v2933 = vunpack.c.l.b16 %v2865
      %v2934 = vunpack.c.l.b16 %v2866
      %v2935 = vunpack.c.l.b16 %v2867
      %v2936 = vunpack.c.l.b16 %v2868
      %v2937 = vunpack.c.l.b16 %v2869
      %v2938 = vunpack.c.l.b16 %v2870
      %v2939 = vunpack.c.l.b16 %v2871
      %v2940 = vunpack.c.l.b16 %v2872
      %v2941 = vunpack.c.l.b16 %v2873
      %v2942 = vunpack.c.l.b16 %v2874
      %v2943 = vunpack.c.l.b16 %v2875
      %v2944 = vunpack.c.l.b16 %v2876
      %v2945 = vpack.c.b16 %v2914, %v2913
      %v2946 = vpack.c.b16 %v2916, %v2915
      %v2947 = vpack.c.b16 %v2918, %v2917
      %v2948 = vpack.c.b16 %v2920, %v2919
      %v2949 = vpack.c.b16 %v2922, %v2921
      %v2950 = vpack.c.b16 %v2924, %v2923
      %v2951 = vpack.c.b16 %v2926, %v2925
      %v2952 = vpack.c.b16 %v2928, %v2927
      %v2953 = vpack.c.b16 %v2930, %v2929
      %v2954 = vpack.c.b16 %v2932, %v2931
      %v2955 = vpack.c.b16 %v2934, %v2933
      %v2956 = vpack.c.b16 %v2936, %v2935
      %v2957 = vpack.c.b16 %v2938, %v2937
      %v2958 = vpack.c.b16 %v2940, %v2939
      %v2959 = vpack.c.b16 %v2942, %v2941
      %v2960 = vpack.c.b16 %v2944, %v2943
      %2977 = vmatpush.bf16.msra.mxu0 %v2952
      %2978 = vmatpush.bf16.msra.mxu0 %v2951
      %2979 = vmatpush.bf16.msra.mxu0 %v2950
      %2980 = vmatpush.bf16.msra.mxu0 %v2949
      %2981 = vmatpush.bf16.msra.mxu0 %v2948
      %2982 = vmatpush.bf16.msra.mxu0 %v2947
      %2983 = vmatpush.bf16.msra.mxu0 %v2946
      %2984 = vmatpush.bf16.msra.mxu0 %v2945
      %2985 = vmatmul.bf16.gmra.mxu0 %v2843
      %v2986 = vpop.f32.mrf.mxu0
      %v2987 = vadd.f32 %v2879, %v2986
      %v2988 = vpop.f32.mrf.mxu0
      %2989 = vdwg.mxu0
      %2990 = vmatpush.bf16.msra.mxu0 %v2960
      %2991 = vmatpush.bf16.msra.mxu0 %v2959
      %2992 = vmatpush.bf16.msra.mxu0 %v2958
      %2993 = vmatpush.bf16.msra.mxu0 %v2957
      %2994 = vmatpush.bf16.msra.mxu0 %v2956
      %2995 = vmatpush.bf16.msra.mxu0 %v2955
      %2996 = vmatpush.bf16.msra.mxu0 %v2954
      %2997 = vmatpush.bf16.msra.mxu0 %v2953
      %2998 = vmatmul.bf16.gmra.mxu0 %v2844
      %v2999 = vpop.f32.mrf.mxu0
      %v3000 = vadd.f32 %v2987, %v2999
      %v3001 = vpop.f32.mrf.mxu0
      %3002 = vdwg.mxu0
      %vm3003 = vcmask 254976
      %3004 = vst.msk [vmem:[%s290] sm:$0x3] %vm3003, %v3000
      %p3005 = scmp.lt.s32.totalorder %s16, 1
      %s3006 = scalar_select %p3005, %s16, 1
      %s3007 = smul.addr %s3006, 2
      %s3008 = scalar_lea.vmem %s5, %s3007
      // Predicated region
      $region41: #{icil_forward.12} parent=39 // pred_check
        %p3009 = pneg %p164
      $region42: #{icil_forward.12} parent=39 // pred_check_branch
        %3011 = sbr.rel (%p3009) target = $region44
      $region43: #{icil_forward.12} parent=39 // pred_region
        _
      $region44: #{icil_forward.12} parent=39 // pred_fallthru
        _
    $region40: #{icil_forward.12} parent=5 // pred_fallthru
      _
    %p3012 = scmp.le.s32.totalorder 2, %s11
    // Predicated region
    $region45: #{icil_forward.12} parent=5 // pred_check
      %p3013 = pneg %p3012
    $region46: #{icil_forward.12} parent=5 // pred_check_branch
      %3015 = sbr.rel (%p3013) target = $region48
    $region47: #{icil_forward.12} parent=5 // pred_region
      %s3016 = ssub.s32 %s11, 2
      // Predicated region
      $region49: #{icil_forward.12} parent=47 // pred_check
        %p3017 = pneg %p170
      $region50: #{icil_forward.12} parent=47 // pred_check_branch
        %3019 = sbr.rel (%p3017) target = $region52
      $region51: #{icil_forward.12} parent=47 // pred_region
        %p3020 = scmp.lt.s32.totalorder %s17, 1
        %s3021 = scalar_select %p3020, %s17, 1
        %s3022 = smul.addr %s3021, 2
        %s3023 = scalar_lea.vmem %s5, %s3022
      $region52: #{icil_forward.12} parent=47 // pred_fallthru
        _
    $region48: #{icil_forward.12} parent=5 // pred_fallthru
      _
  $region6: #{icil_forward.12} parent=0 // loop_footer
    %s15 = sadd.s32 1, %s11
  $region7: #{icil_forward.12} parent=0 // loop_footer_branch
    %10 = sbr.rel target = $region3
  $region8: #{icil_forward.12} parent=0 // loop_exit
    _

// kernel: icil_forward.14
$region0: #{icil_forward.14}
  #allocation0 [shape = 'u32[]', space=smem, size = 0x4, offset = 0x4, fixed_abs, tag = 'smem constant byte address 0x4 - core index']
  #allocation1 [shape = 'u32[72,128]{1,0:T(1,128)}', space=vmem, size = 0x9000, scoped, tag = 'internal scratch']
  %s0 = inlined_call_operand.vmem [shape: bf16[4,2,34], index: 0, kind: input, shape index: {}]
  %s1 = inlined_call_operand.vmem [shape: bf16[4,34,32], index: 1, kind: input, shape index: {}]
  %s2 = inlined_call_operand.vmem [shape: f32[4,1,32], index: 2, kind: input, shape index: {}]
  %s3 = inlined_call_operand.vmem [shape: bf16[4,32,32], index: 3, kind: input, shape index: {}]
  %s4 = inlined_call_operand.vmem [shape: f32[4,1,32], index: 4, kind: input, shape index: {}]
  %s5 = inlined_call_operand.vmem [shape: bf16[4,32,32], index: 5, kind: input, shape index: {}]
  %s6 = inlined_call_operand.vmem [shape: f32[4,1,32], index: 6, kind: input, shape index: {}]
  %s7 = inlined_call_operand.vmem [shape: f32[4,2,32], index: 7, kind: output, shape index: {}]
  %s8 = sld [smem:[#allocation0]]
  $region61: #{icil_forward.14} parent=0
    _
  %s10 = ssub.s32 1, %s8
  %s11 = scalar_select 0, %s10, %s8
  loop: start=0, step=1, limit=6
  $region2: #{icil_forward.14} parent=0 // loop_pre_header
    _
  $region3: #{icil_forward.14} parent=0 // loop_header
    %s13 = sphi 0, %s17
    %p14 = scmp.ge.s32.totalorder %s13, 6
    %s23 = sphi 0, %s25
    %s26 = sphi 0, %s23
    %s27 = sphi 0, %s26
    %s43 = sphi 0, %s27
    %s49 = sphi 0, %s51
    %s52 = sphi 0, %s49
    %s53 = sphi 0, %s52
    %s69 = sphi 0, %s53
    %s75 = sphi 0, %s77
    %s78 = sphi 0, %s75
    %s79 = sphi 0, %s78
    %s95 = sphi 0, %s79
    %s101 = sphi 0, %s103
    %s104 = sphi 0, %s101
    %s105 = sphi 0, %s104
    %s121 = sphi 0, %s105
    %s127 = sphi 0, %s129
    %s130 = sphi 0, %s127
    %s131 = sphi 0, %s130
    %s147 = sphi 0, %s131
    %s153 = sphi 0, %s155
    %s156 = sphi 0, %s153
    %s157 = sphi 0, %s156
    %s173 = sphi 0, %s157
    %s179 = sphi 0, %s181
    %s182 = sphi 0, %s179
    %s183 = sphi 0, %s182
    %s199 = sphi 0, %s183
    %s205 = sphi 0, %s207
    %s208 = sphi 0, %s205
    %s209 = sphi 0, %s208
    %s225 = sphi 0, %s209
  $region4: #{icil_forward.14} parent=0 // loop_header_branch
    %16 = sbr.rel (%p14) target = $region8
  $region5: #{icil_forward.14} parent=0 // loop_body
    %s18 = ssub.s32 %s13, 1
    %s19 = ssub.s32 %s13, 2
    %s20 = sadd.s32 %s13, 1
    %s21 = ssub.s32 %s13, %s20
    %p22 = scmp.eq.s32.totalorder %s21, 0
    %s24 = sadd.s32 %s23, 1
    %s25 = scalar_select %p22, %s23, %s24
    %p28 = pneg %p22
    %p29 = scmp.eq.s32.totalorder %s13, 3
    %p30 = por %p28, %p29
    %p31 = scmp.ne.s32.totalorder %s23, %s26
    %p32 = scmp.eq.s32.totalorder %s13, 0
    %p33 = por %p31, %p32
    %p34 = scmp.ne.s32.totalorder %s23, %s26
    %p35 = scmp.eq.s32.totalorder %s18, 3
    %p36 = por %p34, %p35
    %p37 = scmp.ne.s32.totalorder %s26, %s27
    %p38 = scmp.eq.s32.totalorder %s18, 0
    %p39 = por %p37, %p38
    %p40 = scmp.ne.s32.totalorder %s26, %s27
    %p41 = scmp.eq.s32.totalorder %s19, 3
    %p42 = por %p40, %p41
    %p44 = scmp.ne.s32.totalorder %s27, %s43
    %p45 = scmp.eq.s32.totalorder %s19, 0
    %p46 = por %p44, %p45
    %s47 = ssub.s32 %s13, %s20
    %p48 = scmp.eq.s32.totalorder %s47, 0
    %s50 = sadd.s32 %s49, 1
    %s51 = scalar_select %p48, %s49, %s50
    %p54 = pneg %p48
    %p55 = scmp.eq.s32.totalorder %s13, 3
    %p56 = por %p54, %p55
    %p57 = scmp.ne.s32.totalorder %s49, %s52
    %p58 = scmp.eq.s32.totalorder %s13, 0
    %p59 = por %p57, %p58
    %p60 = scmp.ne.s32.totalorder %s49, %s52
    %p61 = scmp.eq.s32.totalorder %s18, 3
    %p62 = por %p60, %p61
    %p63 = scmp.ne.s32.totalorder %s52, %s53
    %p64 = scmp.eq.s32.totalorder %s18, 0
    %p65 = por %p63, %p64
    %p66 = scmp.ne.s32.totalorder %s52, %s53
    %p67 = scmp.eq.s32.totalorder %s19, 3
    %p68 = por %p66, %p67
    %p70 = scmp.ne.s32.totalorder %s53, %s69
    %p71 = scmp.eq.s32.totalorder %s19, 0
    %p72 = por %p70, %p71
    %s73 = ssub.s32 %s13, %s20
    %p74 = scmp.eq.s32.totalorder %s73, 0
    %s76 = sadd.s32 %s75, 1
    %s77 = scalar_select %p74, %s75, %s76
    %p80 = pneg %p74
    %p81 = scmp.eq.s32.totalorder %s13, 3
    %p82 = por %p80, %p81
    %p83 = scmp.ne.s32.totalorder %s75, %s78
    %p84 = scmp.eq.s32.totalorder %s13, 0
    %p85 = por %p83, %p84
    %p86 = scmp.ne.s32.totalorder %s75, %s78
    %p87 = scmp.eq.s32.totalorder %s18, 3
    %p88 = por %p86, %p87
    %p89 = scmp.ne.s32.totalorder %s78, %s79
    %p90 = scmp.eq.s32.totalorder %s18, 0
    %p91 = por %p89, %p90
    %p92 = scmp.ne.s32.totalorder %s78, %s79
    %p93 = scmp.eq.s32.totalorder %s19, 3
    %p94 = por %p92, %p93
    %p96 = scmp.ne.s32.totalorder %s79, %s95
    %p97 = scmp.eq.s32.totalorder %s19, 0
    %p98 = por %p96, %p97
    %s99 = ssub.s32 %s13, %s20
    %p100 = scmp.eq.s32.totalorder %s99, 0
    %s102 = sadd.s32 %s101, 1
    %s103 = scalar_select %p100, %s101, %s102
    %p106 = pneg %p100
    %p107 = scmp.eq.s32.totalorder %s13, 3
    %p108 = por %p106, %p107
    %p109 = scmp.ne.s32.totalorder %s101, %s104
    %p110 = scmp.eq.s32.totalorder %s13, 0
    %p111 = por %p109, %p110
    %p112 = scmp.ne.s32.totalorder %s101, %s104
    %p113 = scmp.eq.s32.totalorder %s18, 3
    %p114 = por %p112, %p113
    %p115 = scmp.ne.s32.totalorder %s104, %s105
    %p116 = scmp.eq.s32.totalorder %s18, 0
    %p117 = por %p115, %p116
    %p118 = scmp.ne.s32.totalorder %s104, %s105
    %p119 = scmp.eq.s32.totalorder %s19, 3
    %p120 = por %p118, %p119
    %p122 = scmp.ne.s32.totalorder %s105, %s121
    %p123 = scmp.eq.s32.totalorder %s19, 0
    %p124 = por %p122, %p123
    %s125 = ssub.s32 %s13, %s20
    %p126 = scmp.eq.s32.totalorder %s125, 0
    %s128 = sadd.s32 %s127, 1
    %s129 = scalar_select %p126, %s127, %s128
    %p132 = pneg %p126
    %p133 = scmp.eq.s32.totalorder %s13, 3
    %p134 = por %p132, %p133
    %p135 = scmp.ne.s32.totalorder %s127, %s130
    %p136 = scmp.eq.s32.totalorder %s13, 0
    %p137 = por %p135, %p136
    %p138 = scmp.ne.s32.totalorder %s127, %s130
    %p139 = scmp.eq.s32.totalorder %s18, 3
    %p140 = por %p138, %p139
    %p141 = scmp.ne.s32.totalorder %s130, %s131
    %p142 = scmp.eq.s32.totalorder %s18, 0
    %p143 = por %p141, %p142
    %p144 = scmp.ne.s32.totalorder %s130, %s131
    %p145 = scmp.eq.s32.totalorder %s19, 3
    %p146 = por %p144, %p145
    %p148 = scmp.ne.s32.totalorder %s131, %s147
    %p149 = scmp.eq.s32.totalorder %s19, 0
    %p150 = por %p148, %p149
    %s151 = ssub.s32 %s13, %s20
    %p152 = scmp.eq.s32.totalorder %s151, 0
    %s154 = sadd.s32 %s153, 1
    %s155 = scalar_select %p152, %s153, %s154
    %p158 = pneg %p152
    %p159 = scmp.eq.s32.totalorder %s13, 3
    %p160 = por %p158, %p159
    %p161 = scmp.ne.s32.totalorder %s153, %s156
    %p162 = scmp.eq.s32.totalorder %s13, 0
    %p163 = por %p161, %p162
    %p164 = scmp.ne.s32.totalorder %s153, %s156
    %p165 = scmp.eq.s32.totalorder %s18, 3
    %p166 = por %p164, %p165
    %p167 = scmp.ne.s32.totalorder %s156, %s157
    %p168 = scmp.eq.s32.totalorder %s18, 0
    %p169 = por %p167, %p168
    %p170 = scmp.ne.s32.totalorder %s156, %s157
    %p171 = scmp.eq.s32.totalorder %s19, 3
    %p172 = por %p170, %p171
    %p174 = scmp.ne.s32.totalorder %s157, %s173
    %p175 = scmp.eq.s32.totalorder %s19, 0
    %p176 = por %p174, %p175
    %s177 = ssub.s32 %s13, %s20
    %p178 = scmp.eq.s32.totalorder %s177, 0
    %s180 = sadd.s32 %s179, 1
    %s181 = scalar_select %p178, %s179, %s180
    %p184 = pneg %p178
    %p185 = scmp.eq.s32.totalorder %s13, 3
    %p186 = por %p184, %p185
    %p187 = scmp.ne.s32.totalorder %s179, %s182
    %p188 = scmp.eq.s32.totalorder %s13, 0
    %p189 = por %p187, %p188
    %p190 = scmp.ne.s32.totalorder %s179, %s182
    %p191 = scmp.eq.s32.totalorder %s18, 3
    %p192 = por %p190, %p191
    %p193 = scmp.ne.s32.totalorder %s182, %s183
    %p194 = scmp.eq.s32.totalorder %s18, 0
    %p195 = por %p193, %p194
    %p196 = scmp.ne.s32.totalorder %s182, %s183
    %p197 = scmp.eq.s32.totalorder %s19, 3
    %p198 = por %p196, %p197
    %p200 = scmp.ne.s32.totalorder %s183, %s199
    %p201 = scmp.eq.s32.totalorder %s19, 0
    %p202 = por %p200, %p201
    %s203 = ssub.s32 %s13, %s20
    %p204 = scmp.eq.s32.totalorder %s203, 0
    %s206 = sadd.s32 %s205, 1
    %s207 = scalar_select %p204, %s205, %s206
    %p210 = pneg %p204
    %p211 = scmp.eq.s32.totalorder %s13, 3
    %p212 = por %p210, %p211
    %p213 = scmp.ne.s32.totalorder %s205, %s208
    %p214 = scmp.eq.s32.totalorder %s13, 0
    %p215 = por %p213, %p214
    %p216 = scmp.ne.s32.totalorder %s205, %s208
    %p217 = scmp.eq.s32.totalorder %s18, 3
    %p218 = por %p216, %p217
    %p219 = scmp.ne.s32.totalorder %s208, %s209
    %p220 = scmp.eq.s32.totalorder %s18, 0
    %p221 = por %p219, %p220
    %p222 = scmp.ne.s32.totalorder %s208, %s209
    %p223 = scmp.eq.s32.totalorder %s19, 3
    %p224 = por %p222, %p223
    %p226 = scmp.ne.s32.totalorder %s209, %s225
    %p227 = scmp.eq.s32.totalorder %s19, 0
    %p228 = por %p226, %p227
    %p229 = scmp.le.s32.totalorder 1, %s13
    %p230 = scmp.lt.s32.totalorder %s13, 5
    %p231 = pnand %p229, %p230
    %p232 = pneg %p231
    // Predicated region
    $region9: #{icil_forward.14} parent=5 // pred_check
      _
    $region10: #{icil_forward.14} parent=5 // pred_check_branch
      %234 = sbr.rel (%p231) target = $region12
    $region11: #{icil_forward.14} parent=5 // pred_region
      %s235 = ssub.s32 %s13, 1
    $region12: #{icil_forward.14} parent=5 // pred_fallthru
      _
    %p236 = scmp.lt.s32.totalorder %s13, 4
    // Predicated region
    $region13: #{icil_forward.14} parent=5 // pred_check
      %p237 = pneg %p236
    $region14: #{icil_forward.14} parent=5 // pred_check_branch
      %239 = sbr.rel (%p237) target = $region16
    $region15: #{icil_forward.14} parent=5 // pred_region
      // Predicated region
      $region17: #{icil_forward.14} parent=15 // pred_check
        %p240 = pneg %p33
      $region18: #{icil_forward.14} parent=15 // pred_check_branch
        %242 = sbr.rel (%p240) target = $region20
      $region19: #{icil_forward.14} parent=15 // pred_region
        %p243 = scmp.lt.s32.totalorder %s13, 3
        %s244 = scalar_select %p243, %s13, 3
        %s245 = scalar_lea.vmem %s0, %s244
      $region20: #{icil_forward.14} parent=15 // pred_fallthru
        _
      // Predicated region
      $region21: #{icil_forward.14} parent=15 // pred_check
        %p246 = pneg %p59
      $region22: #{icil_forward.14} parent=15 // pred_check_branch
        %248 = sbr.rel (%p246) target = $region24
      $region23: #{icil_forward.14} parent=15 // pred_region
        %p249 = scmp.lt.s32.totalorder %s13, 3
        %s250 = scalar_select %p249, %s13, 3
        %s251 = smul.addr %s250, 5
        %s252 = smul.addr %s251, 4
        %s253 = scalar_lea.vmem %s1, %s252
      $region24: #{icil_forward.14} parent=15 // pred_fallthru
        _
      // Predicated region
      $region25: #{icil_forward.14} parent=15 // pred_check
        %p254 = pneg %p85
      $region26: #{icil_forward.14} parent=15 // pred_check_branch
        %256 = sbr.rel (%p254) target = $region28
      $region27: #{icil_forward.14} parent=15 // pred_region
        %p257 = scmp.lt.s32.totalorder %s13, 3
        %s258 = scalar_select %p257, %s13, 3
        %s259 = scalar_lea.vmem %s2, %s258
      $region28: #{icil_forward.14} parent=15 // pred_fallthru
        _
      // Predicated region
      $region29: #{icil_forward.14} parent=15 // pred_check
        %p260 = pneg %p111
      $region30: #{icil_forward.14} parent=15 // pred_check_branch
        %262 = sbr.rel (%p260) target = $region32
      $region31: #{icil_forward.14} parent=15 // pred_region
        %p263 = scmp.lt.s32.totalorder %s13, 3
        %s264 = scalar_select %p263, %s13, 3
        %s265 = smul.addr %s264, 4
        %s266 = smul.addr %s265, 4
        %s267 = scalar_lea.vmem %s3, %s266
      $region32: #{icil_forward.14} parent=15 // pred_fallthru
        _
      // Predicated region
      $region33: #{icil_forward.14} parent=15 // pred_check
        %p268 = pneg %p137
      $region34: #{icil_forward.14} parent=15 // pred_check_branch
        %270 = sbr.rel (%p268) target = $region36
      $region35: #{icil_forward.14} parent=15 // pred_region
        %p271 = scmp.lt.s32.totalorder %s13, 3
        %s272 = scalar_select %p271, %s13, 3
        %s273 = scalar_lea.vmem %s4, %s272
      $region36: #{icil_forward.14} parent=15 // pred_fallthru
        _
      // Predicated region
      $region37: #{icil_forward.14} parent=15 // pred_check
        %p274 = pneg %p163
      $region38: #{icil_forward.14} parent=15 // pred_check_branch
        %276 = sbr.rel (%p274) target = $region40
      $region39: #{icil_forward.14} parent=15 // pred_region
        %p277 = scmp.lt.s32.totalorder %s13, 3
        %s278 = scalar_select %p277, %s13, 3
        %s279 = smul.addr %s278, 4
        %s280 = smul.addr %s279, 4
        %s281 = scalar_lea.vmem %s5, %s280
      $region40: #{icil_forward.14} parent=15 // pred_fallthru
        _
      // Predicated region
      $region41: #{icil_forward.14} parent=15 // pred_check
        %p282 = pneg %p189
      $region42: #{icil_forward.14} parent=15 // pred_check_branch
        %284 = sbr.rel (%p282) target = $region44
      $region43: #{icil_forward.14} parent=15 // pred_region
        %p285 = scmp.lt.s32.totalorder %s13, 3
        %s286 = scalar_select %p285, %s13, 3
        %s287 = scalar_lea.vmem %s6, %s286
      $region44: #{icil_forward.14} parent=15 // pred_fallthru
        _
    $region16: #{icil_forward.14} parent=5 // pred_fallthru
      _
    %p288 = scmp.le.s32.totalorder 1, %s13
    %p289 = scmp.lt.s32.totalorder %s13, 5
    %p290 = pnand %p288, %p289
    %p291 = pneg %p290
    // Predicated region
    $region45: #{icil_forward.14} parent=5 // pred_check
      _
    $region46: #{icil_forward.14} parent=5 // pred_check_branch
      %293 = sbr.rel (%p290) target = $region48
    $region47: #{icil_forward.14} parent=5 // pred_region
      %s294 = ssub.s32 %s13, 1
      %p295 = scmp.lt.s32.totalorder %s18, 3
      %s296 = scalar_select %p295, %s18, 3
      %s297 = scalar_lea.vmem %s0, %s296
      %p298 = pneg %p39
      %p299 = pneg %p36
      %p300 = scmp.lt.s32.totalorder %s18, 3
      %s301 = scalar_select %p300, %s18, 3
      %s302 = smul.addr %s301, 5
      %s303 = smul.addr %s302, 4
      %s304 = scalar_lea.vmem %s1, %s303
      %p305 = pneg %p65
      %p306 = pneg %p62
      %p307 = scmp.lt.s32.totalorder %s18, 3
      %s308 = scalar_select %p307, %s18, 3
      %s309 = scalar_lea.vmem %s2, %s308
      %p310 = pneg %p91
      %p311 = pneg %p88
      %p312 = scmp.lt.s32.totalorder %s18, 3
      %s313 = scalar_select %p312, %s18, 3
      %s314 = smul.addr %s313, 4
      %s315 = smul.addr %s314, 4
      %s316 = scalar_lea.vmem %s3, %s315
      %p317 = pneg %p117
      %p318 = pneg %p114
      %p319 = scmp.lt.s32.totalorder %s18, 3
      %s320 = scalar_select %p319, %s18, 3
      %s321 = scalar_lea.vmem %s4, %s320
      %p322 = pneg %p143
      %p323 = pneg %p140
      %p324 = scmp.lt.s32.totalorder %s18, 3
      %s325 = scalar_select %p324, %s18, 3
      %s326 = smul.addr %s325, 4
      %s327 = smul.addr %s326, 4
      %s328 = scalar_lea.vmem %s5, %s327
      %p329 = pneg %p169
      %p330 = pneg %p166
      %p331 = scmp.lt.s32.totalorder %s18, 3
      %s332 = scalar_select %p331, %s18, 3
      %s333 = scalar_lea.vmem %s6, %s332
      %p334 = pneg %p195
      %p335 = pneg %p192
      %p336 = pneg %p221
      %p337 = pneg %p218
      %p338 = scmp.lt.s32.totalorder %s18, 3
      %s339 = scalar_select %p338, %s18, 3
      %s340 = smul.addr %s339, 2
      %s341 = scalar_lea.vmem %s7, %s340
      %p342 = scmp.lt.s32.totalorder %s18, 3
      %s343 = scalar_select %p342, %s18, 3
      %s344 = scalar_lea.vmem %s0, %s343
      %p345 = scmp.lt.s32.totalorder %s18, 3
      %s346 = scalar_select %p345, %s18, 3
      %s347 = smul.addr %s346, 5
      %s348 = smul.addr %s347, 4
      %s349 = scalar_lea.vmem %s1, %s348
      %p350 = scmp.lt.s32.totalorder %s18, 3
      %s351 = scalar_select %p350, %s18, 3
      %s352 = scalar_lea.vmem %s2, %s351
      %p353 = scmp.lt.s32.totalorder %s18, 3
      %s354 = scalar_select %p353, %s18, 3
      %s355 = smul.addr %s354, 4
      %s356 = smul.addr %s355, 4
      %s357 = scalar_lea.vmem %s3, %s356
      %p358 = scmp.lt.s32.totalorder %s18, 3
      %s359 = scalar_select %p358, %s18, 3
      %s360 = scalar_lea.vmem %s4, %s359
      %p361 = scmp.lt.s32.totalorder %s18, 3
      %s362 = scalar_select %p361, %s18, 3
      %s363 = smul.addr %s362, 4
      %s364 = smul.addr %s363, 4
      %s365 = scalar_lea.vmem %s5, %s364
      %p366 = scmp.lt.s32.totalorder %s18, 3
      %s367 = scalar_select %p366, %s18, 3
      %s368 = scalar_lea.vmem %s6, %s367
      %p369 = scmp.lt.s32.totalorder %s18, 3
      %s370 = scalar_select %p369, %s18, 3
      %s371 = smul.addr %s370, 2
      %s372 = scalar_lea.vmem %s7, %s371
      %v374 = vld [vmem:[%s344] sm:$0x1]
      %v375 = vld [vmem:[%s349] sm:$0xf]
      %v376 = vld [vmem:[%s349 + $0x4] sm:$0xf]
      %v377 = vld [vmem:[%s349 + $0x8] sm:$0xf]
      %v378 = vld [vmem:[%s349 + $0xc] sm:$0xf]
      %v379 = vld [vmem:[%s349 + $0x10] sm:$0x1]
      %v380 = vld [vmem:[%s352] sm:$0x1]
      %v382 = vperm.slane %v380, 0
      %v389 = vunpack.c.l.b16 %v375
      %v390 = vunpack.c.l.b16 %v376
      %v391 = vunpack.c.l.b16 %v377
      %v392 = vunpack.c.l.b16 %v378
      %v393 = vunpack.c.l.b16 %v379
      %v394 = vpack.c.b16 %v390, %v389
      %v395 = vpack.c.b16 %v392, %v391
      %v396 = vpack.c.b16 %v393, %v393
      %vm399 = vcmask 277504
      %v401 = vsel %vm399, %v374, 0
      %vm403 = vcmask 1040384
      %v405 = vsel %vm403, %v396, 0
      %407 = vmatpush.bf16.msra.mxu0 0
      %408 = vmatpush.bf16.msra.mxu0 0
      %409 = vmatpush.bf16.msra.mxu0 0
      %410 = vmatpush.bf16.msra.mxu0 0
      %411 = vmatpush.bf16.msra.mxu0 0
      %412 = vmatpush.bf16.msra.mxu0 %v405
      %413 = vmatpush.bf16.msra.mxu0 %v395
      %414 = vmatpush.bf16.msra.mxu0 %v394
      %415 = vmatmul.bf16.gmra.mxu0 %v401
      %v416 = vpop.f32.mrf.mxu0
      %v417 = vadd.f32 %v382, %v416
      %v418 = vpop.f32.mrf.mxu0
      %419 = vdwg.mxu0
      %vm420 = vcmp.gt.f32.partialorder %v417, 0.0
      %v421 = vmin.f32 %v417, 0.0
      %v422 = vmul.f32 %v421, 1.442695
      %v423 = vpow.pop %v422
      %v424 = vsub.f32 %v423, 1.0
      %v425 = vsel %vm420, %v417, %v424
      %v426 = vpack.c.bf16 %v425, %v425
      %v427 = vld [vmem:[%s357] sm:$0xf]
      %v428 = vld [vmem:[%s357 + $0x4] sm:$0xf]
      %v429 = vld [vmem:[%s357 + $0x8] sm:$0xf]
      %v430 = vld [vmem:[%s357 + $0xc] sm:$0xf]
      %v431 = vld [vmem:[%s360] sm:$0x1]
      %v433 = vperm.slane %v431, 0
      %v439 = vunpack.c.l.b16 %v427
      %v440 = vunpack.c.l.b16 %v428
      %v441 = vunpack.c.l.b16 %v429
      %v442 = vunpack.c.l.b16 %v430
      %v443 = vpack.c.b16 %v440, %v439
      %v444 = vpack.c.b16 %v442, %v441
      %vm447 = vcmask 261120
      %v449 = vsel %vm447, %v426, 0
      %451 = vmatpush.bf16.msra.mxu0 0
      %452 = vmatpush.bf16.msra.mxu0 0
      %453 = vmatpush.bf16.msra.mxu0 0
      %454 = vmatpush.bf16.msra.mxu0 0
      %455 = vmatpush.bf16.msra.mxu0 0
      %456 = vmatpush.bf16.msra.mxu0 0
      %457 = vmatpush.bf16.msra.mxu0 %v444
      %458 = vmatpush.bf16.msra.mxu0 %v443
      %459 = vmatmul.bf16.gmra.mxu0 %v449
      %v460 = vpop.f32.mrf.mxu0
      %v461 = vadd.f32 %v433, %v460
      %v462 = vpop.f32.mrf.mxu0
      %463 = vdwg.mxu0
      %vm464 = vcmp.gt.f32.partialorder %v461, 0.0
      %v465 = vmin.f32 %v461, 0.0
      %v466 = vmul.f32 %v465, 1.442695
      %v467 = vpow.pop %v466
      %v468 = vsub.f32 %v467, 1.0
      %v469 = vsel %vm464, %v461, %v468
      %v470 = vpack.c.bf16 %v469, %v469
      %v471 = vld [vmem:[%s365] sm:$0xf]
      %v472 = vld [vmem:[%s365 + $0x4] sm:$0xf]
      %v473 = vld [vmem:[%s365 + $0x8] sm:$0xf]
      %v474 = vld [vmem:[%s365 + $0xc] sm:$0xf]
      %v475 = vld [vmem:[%s368] sm:$0x1]
      %v477 = vperm.slane %v475, 0
      %v483 = vunpack.c.l.b16 %v471
      %v484 = vunpack.c.l.b16 %v472
      %v485 = vunpack.c.l.b16 %v473
      %v486 = vunpack.c.l.b16 %v474
      %v487 = vpack.c.b16 %v484, %v483
      %v488 = vpack.c.b16 %v486, %v485
      %v492 = vsel %vm447, %v470, 0
      %494 = vmatpush.bf16.msra.mxu0 0
      %495 = vmatpush.bf16.msra.mxu0 0
      %496 = vmatpush.bf16.msra.mxu0 0
      %497 = vmatpush.bf16.msra.mxu0 0
      %498 = vmatpush.bf16.msra.mxu0 0
      %499 = vmatpush.bf16.msra.mxu0 0
      %500 = vmatpush.bf16.msra.mxu0 %v488
      %501 = vmatpush.bf16.msra.mxu0 %v487
      %502 = vmatmul.bf16.gmra.mxu0 %v492
      %v503 = vpop.f32.mrf.mxu0
      %v504 = vadd.f32 %v477, %v503
      %v505 = vpop.f32.mrf.mxu0
      %506 = vdwg.mxu0
      %vm507 = vcmask 254976
      %508 = vst.msk [vmem:[%s372] sm:$0x3] %vm507, %v504
      %p509 = scmp.lt.s32.totalorder %s18, 3
      %s510 = scalar_select %p509, %s18, 3
      %s511 = smul.addr %s510, 2
      %s512 = scalar_lea.vmem %s7, %s511
      // Predicated region
      $region49: #{icil_forward.14} parent=47 // pred_check
        %p513 = pneg %p218
      $region50: #{icil_forward.14} parent=47 // pred_check_branch
        %515 = sbr.rel (%p513) target = $region52
      $region51: #{icil_forward.14} parent=47 // pred_region
        _
      $region52: #{icil_forward.14} parent=47 // pred_fallthru
        _
    $region48: #{icil_forward.14} parent=5 // pred_fallthru
      _
    %p516 = scmp.le.s32.totalorder 2, %s13
    // Predicated region
    $region53: #{icil_forward.14} parent=5 // pred_check
      %p517 = pneg %p516
    $region54: #{icil_forward.14} parent=5 // pred_check_branch
      %519 = sbr.rel (%p517) target = $region56
    $region55: #{icil_forward.14} parent=5 // pred_region
      %s520 = ssub.s32 %s13, 2
      // Predicated region
      $region57: #{icil_forward.14} parent=55 // pred_check
        %p521 = pneg %p224
      $region58: #{icil_forward.14} parent=55 // pred_check_branch
        %523 = sbr.rel (%p521) target = $region60
      $region59: #{icil_forward.14} parent=55 // pred_region
        %p524 = scmp.lt.s32.totalorder %s19, 3
        %s525 = scalar_select %p524, %s19, 3
        %s526 = smul.addr %s525, 2
        %s527 = scalar_lea.vmem %s7, %s526
      $region60: #{icil_forward.14} parent=55 // pred_fallthru
        _
    $region56: #{icil_forward.14} parent=5 // pred_fallthru
      _
  $region6: #{icil_forward.14} parent=0 // loop_footer
    %s17 = sadd.s32 1, %s13
  $region7: #{icil_forward.14} parent=0 // loop_footer_branch
    %12 = sbr.rel target = $region3
  $region8: #{icil_forward.14} parent=0 // loop_exit
    _

// kernel: icil_forward.15
$region0: #{icil_forward.15}
  #allocation0 [shape = 'u32[]', space=smem, size = 0x4, offset = 0x4, fixed_abs, tag = 'smem constant byte address 0x4 - core index']
  #allocation1 [shape = 'u32[72,128]{1,0:T(1,128)}', space=vmem, size = 0x9000, scoped, tag = 'internal scratch']
  %s0 = inlined_call_operand.vmem [shape: bf16[4,64], index: 0, kind: input, shape index: {}]
  %s1 = inlined_call_operand.vmem [shape: bf16[1,64,256], index: 1, kind: input, shape index: {}]
  %s2 = inlined_call_operand.vmem [shape: f32[1,1,256], index: 2, kind: input, shape index: {}]
  %s3 = inlined_call_operand.vmem [shape: bf16[1,256,2592], index: 3, kind: input, shape index: {}]
  %s4 = inlined_call_operand.vmem [shape: f32[1,1,2592], index: 4, kind: input, shape index: {}]
  %s5 = inlined_call_operand.vmem [shape: f32[1,4,2592], index: 5, kind: output, shape index: {}]
  %s6 = sld [smem:[#allocation0]]
  $region30: #{icil_forward.15} parent=0
    _
  %s8 = ssub.s32 1, %s6
  %s9 = scalar_select 0, %s8, %s6
  // Predicated region
  $region2: #{icil_forward.15} parent=0 // pred_check
    _
  $region3: #{icil_forward.15} parent=0 // pred_check_branch
    %11 = sbr.rel (0) target = $region5
  $region4: #{icil_forward.15} parent=0 // pred_region
    _
  $region5: #{icil_forward.15} parent=0 // pred_fallthru
    _
  // Predicated region
  $region6: #{icil_forward.15} parent=0 // pred_check
    _
  $region7: #{icil_forward.15} parent=0 // pred_check_branch
    %13 = sbr.rel (0) target = $region9
  $region8: #{icil_forward.15} parent=0 // pred_region
    _
  $region9: #{icil_forward.15} parent=0 // pred_fallthru
    _
  // Predicated region
  $region10: #{icil_forward.15} parent=0 // pred_check
    _
  $region11: #{icil_forward.15} parent=0 // pred_check_branch
    %15 = sbr.rel (0) target = $region13
  $region12: #{icil_forward.15} parent=0 // pred_region
    _
  $region13: #{icil_forward.15} parent=0 // pred_fallthru
    _
  // Predicated region
  $region14: #{icil_forward.15} parent=0 // pred_check
    _
  $region15: #{icil_forward.15} parent=0 // pred_check_branch
    %17 = sbr.rel (0) target = $region17
  $region16: #{icil_forward.15} parent=0 // pred_region
    _
  $region17: #{icil_forward.15} parent=0 // pred_fallthru
    _
  // Predicated region
  $region18: #{icil_forward.15} parent=0 // pred_check
    _
  $region19: #{icil_forward.15} parent=0 // pred_check_branch
    %19 = sbr.rel (0) target = $region21
  $region20: #{icil_forward.15} parent=0 // pred_region
    _
  $region21: #{icil_forward.15} parent=0 // pred_fallthru
    _
  %v21 = vld [vmem:[%s0] sm:$0x3]
  %v22 = vld [vmem:[%s1] sm:$0xff]
  %v23 = vld [vmem:[%s1 + $0x8] sm:$0xff]
  %v24 = vld [vmem:[%s1 + $0x10] sm:$0xff]
  %v25 = vld [vmem:[%s1 + $0x18] sm:$0xff]
  %v26 = vld [vmem:[%s1 + $0x20] sm:$0xff]
  %v27 = vld [vmem:[%s1 + $0x28] sm:$0xff]
  %v28 = vld [vmem:[%s1 + $0x30] sm:$0xff]
  %v29 = vld [vmem:[%s1 + $0x38] sm:$0xff]
  %v30 = vld [vmem:[%s2] sm:$0x3]
  %v32 = vperm.slane %v30, 0
  %v33 = vperm.slane %v30, 1
  %v44 = vunpack.c.l.b16 %v22
  %v45 = vunpack.c.h.b16 %v22
  %v46 = vunpack.c.l.b16 %v23
  %v47 = vunpack.c.h.b16 %v23
  %v48 = vunpack.c.l.b16 %v24
  %v49 = vunpack.c.h.b16 %v24
  %v50 = vunpack.c.l.b16 %v25
  %v51 = vunpack.c.h.b16 %v25
  %v52 = vunpack.c.l.b16 %v26
  %v53 = vunpack.c.h.b16 %v26
  %v54 = vunpack.c.l.b16 %v27
  %v55 = vunpack.c.h.b16 %v27
  %v56 = vunpack.c.l.b16 %v28
  %v57 = vunpack.c.h.b16 %v28
  %v58 = vunpack.c.l.b16 %v29
  %v59 = vunpack.c.h.b16 %v29
  %v60 = vpack.c.b16 %v46, %v44
  %v61 = vpack.c.b16 %v47, %v45
  %v62 = vpack.c.b16 %v50, %v48
  %v63 = vpack.c.b16 %v51, %v49
  %v64 = vpack.c.b16 %v54, %v52
  %v65 = vpack.c.b16 %v55, %v53
  %v66 = vpack.c.b16 %v58, %v56
  %v67 = vpack.c.b16 %v59, %v57
  %vm76 = vcmask 523264
  %v78 = vsel %vm76, %v21, 0
  %80 = vmatpush.bf16.msra.mxu0 0
  %81 = vmatpush.bf16.msra.mxu0 0
  %82 = vmatpush.bf16.msra.mxu0 0
  %83 = vmatpush.bf16.msra.mxu0 0
  %84 = vmatpush.bf16.msra.mxu0 %v66
  %85 = vmatpush.bf16.msra.mxu0 %v64
  %86 = vmatpush.bf16.msra.mxu0 %v62
  %87 = vmatpush.bf16.msra.mxu0 %v60
  %88 = vmatmul.bf16.gmra.mxu0 %v78
  %v89 = vpop.f32.mrf.mxu0
  %v90 = vadd.f32 %v32, %v89
  %v91 = vpop.f32.mrf.mxu0
  %92 = vdwg.mxu0
  %93 = vmatpush.bf16.msra.mxu0 0
  %94 = vmatpush.bf16.msra.mxu0 0
  %95 = vmatpush.bf16.msra.mxu0 0
  %96 = vmatpush.bf16.msra.mxu0 0
  %97 = vmatpush.bf16.msra.mxu0 %v67
  %98 = vmatpush.bf16.msra.mxu0 %v65
  %99 = vmatpush.bf16.msra.mxu0 %v63
  %100 = vmatpush.bf16.msra.mxu0 %v61
  %101 = vmatmul.bf16.gmra.mxu0 %v78
  %v102 = vpop.f32.mrf.mxu0
  %v103 = vadd.f32 %v33, %v102
  %v104 = vpop.f32.mrf.mxu0
  %105 = vdwg.mxu0
  %v106 = vtanh.pop %v90
  %v107 = vtanh.pop %v103
  %v108 = vpack.c.bf16 %v106, %v106
  %v109 = vpack.c.bf16 %v107, %v107
  %v110 = vld [vmem:[%s3] sm:$0xff]
  %v111 = vld [vmem:[%s3 + $0x8] sm:$0xff]
  %v112 = vld [vmem:[%s3 + $0x10] sm:$0xff]
  %v113 = vld [vmem:[%s3 + $0x18] sm:$0xff]
  %v114 = vld [vmem:[%s3 + $0x20] sm:$0xff]
  %v115 = vld [vmem:[%s3 + $0x28] sm:$0xff]
  %v116 = vld [vmem:[%s3 + $0x30] sm:$0xff]
  %v117 = vld [vmem:[%s3 + $0x38] sm:$0xff]
  %v118 = vld [vmem:[%s3 + $0x40] sm:$0xff]
  %v119 = vld [vmem:[%s3 + $0x48] sm:$0xff]
  %v120 = vld [vmem:[%s3 + $0x50] sm:$0xf]
  %v121 = vld [vmem:[%s3 + $0x54] sm:$0xff]
  %v122 = vld [vmem:[%s3 + $0x5c] sm:$0xff]
  %v123 = vld [vmem:[%s3 + $0x64] sm:$0xff]
  %v124 = vld [vmem:[%s3 + $0x6c] sm:$0xff]
  %v125 = vld [vmem:[%s3 + $0x74] sm:$0xff]
  %v126 = vld [vmem:[%s3 + $0x7c] sm:$0xff]
  %v127 = vld [vmem:[%s3 + $0x84] sm:$0xff]
  %v128 = vld [vmem:[%s3 + $0x8c] sm:$0xff]
  %v129 = vld [vmem:[%s3 + $0x94] sm:$0xff]
  %v130 = vld [vmem:[%s3 + $0x9c] sm:$0xff]
  %v131 = vld [vmem:[%s3 + $0xa4] sm:$0xf]
  %v132 = vld [vmem:[%s3 + $0xa8] sm:$0xff]
  %v133 = vld [vmem:[%s3 + $0xb0] sm:$0xff]
  %v134 = vld [vmem:[%s3 + $0xb8] sm:$0xff]
  %v135 = vld [vmem:[%s3 + $0xc0] sm:$0xff]
  %v136 = vld [vmem:[%s3 + $0xc8] sm:$0xff]
  %v137 = vld [vmem:[%s3 + $0xd0] sm:$0xff]
  %v138 = vld [vmem:[%s3 + $0xd8] sm:$0xff]
  %v139 = vld [vmem:[%s3 + $0xe0] sm:$0xff]
  %v140 = vld [vmem:[%s3 + $0xe8] sm:$0xff]
  %v141 = vld [vmem:[%s3 + $0xf0] sm:$0xff]
  %v142 = vld [vmem:[%s3 + $0xf8] sm:$0xf]
  %v143 = vld [vmem:[%s3 + $0xfc] sm:$0xff]
  %v144 = vld [vmem:[%s3 + $0x104] sm:$0xff]
  %v145 = vld [vmem:[%s3 + $0x10c] sm:$0xff]
  %v146 = vld [vmem:[%s3 + $0x114] sm:$0xff]
  %v147 = vld [vmem:[%s3 + $0x11c] sm:$0xff]
  %v148 = vld [vmem:[%s3 + $0x124] sm:$0xff]
  %v149 = vld [vmem:[%s3 + $0x12c] sm:$0xff]
  %v150 = vld [vmem:[%s3 + $0x134] sm:$0xff]
  %v151 = vld [vmem:[%s3 + $0x13c] sm:$0xff]
  %v152 = vld [vmem:[%s3 + $0x144] sm:$0xff]
  %v153 = vld [vmem:[%s3 + $0x14c] sm:$0xf]
  %v154 = vld [vmem:[%s3 + $0x150] sm:$0xff]
  %v155 = vld [vmem:[%s3 + $0x158] sm:$0xff]
  %v156 = vld [vmem:[%s3 + $0x160] sm:$0xff]
  %v157 = vld [vmem:[%s3 + $0x168] sm:$0xff]
  %v158 = vld [vmem:[%s3 + $0x170] sm:$0xff]
  %v159 = vld [vmem:[%s3 + $0x178] sm:$0xff]
  %v160 = vld [vmem:[%s3 + $0x180] sm:$0xff]
  %v161 = vld [vmem:[%s3 + $0x188] sm:$0xff]
  %v162 = vld [vmem:[%s3 + $0x190] sm:$0xff]
  %v163 = vld [vmem:[%s3 + $0x198] sm:$0xff]
  %v164 = vld [vmem:[%s3 + $0x1a0] sm:$0xf]
  %v165 = vld [vmem:[%s3 + $0x1a4] sm:$0xff]
  %v166 = vld [vmem:[%s3 + $0x1ac] sm:$0xff]
  %v167 = vld [vmem:[%s3 + $0x1b4] sm:$0xff]
  %v168 = vld [vmem:[%s3 + $0x1bc] sm:$0xff]
  %v169 = vld [vmem:[%s3 + $0x1c4] sm:$0xff]
  %v170 = vld [vmem:[%s3 + $0x1cc] sm:$0xff]
  %v171 = vld [vmem:[%s3 + $0x1d4] sm:$0xff]
  %v172 = vld [vmem:[%s3 + $0x1dc] sm:$0xff]
  %v173 = vld [vmem:[%s3 + $0x1e4] sm:$0xff]
  %v174 = vld [vmem:[%s3 + $0x1ec] sm:$0xff]
  %v175 = vld [vmem:[%s3 + $0x1f4] sm:$0xf]
  %v176 = vld [vmem:[%s3 + $0x1f8] sm:$0xff]
  %v177 = vld [vmem:[%s3 + $0x200] sm:$0xff]
  %v178 = vld [vmem:[%s3 + $0x208] sm:$0xff]
  %v179 = vld [vmem:[%s3 + $0x210] sm:$0xff]
  %v180 = vld [vmem:[%s3 + $0x218] sm:$0xff]
  %v181 = vld [vmem:[%s3 + $0x220] sm:$0xff]
  %v182 = vld [vmem:[%s3 + $0x228] sm:$0xff]
  %v183 = vld [vmem:[%s3 + $0x230] sm:$0xff]
  %v184 = vld [vmem:[%s3 + $0x238] sm:$0xff]
  %v185 = vld [vmem:[%s3 + $0x240] sm:$0xff]
  %v186 = vld [vmem:[%s3 + $0x248] sm:$0xf]
  %v187 = vld [vmem:[%s3 + $0x24c] sm:$0xff]
  %v188 = vld [vmem:[%s3 + $0x254] sm:$0xff]
  %v189 = vld [vmem:[%s3 + $0x25c] sm:$0xff]
  %v190 = vld [vmem:[%s3 + $0x264] sm:$0xff]
  %v191 = vld [vmem:[%s3 + $0x26c] sm:$0xff]
  %v192 = vld [vmem:[%s3 + $0x274] sm:$0xff]
  %v193 = vld [vmem:[%s3 + $0x27c] sm:$0xff]
  %v194 = vld [vmem:[%s3 + $0x284] sm:$0xff]
  %v195 = vld [vmem:[%s3 + $0x28c] sm:$0xff]
  %v196 = vld [vmem:[%s3 + $0x294] sm:$0xff]
  %v197 = vld [vmem:[%s3 + $0x29c] sm:$0xf]
  %v198 = vld [vmem:[%s3 + $0x2a0] sm:$0xff]
  %v199 = vld [vmem:[%s3 + $0x2a8] sm:$0xff]
  %v200 = vld [vmem:[%s3 + $0x2b0] sm:$0xff]
  %v201 = vld [vmem:[%s3 + $0x2b8] sm:$0xff]
  %v202 = vld [vmem:[%s3 + $0x2c0] sm:$0xff]
  %v203 = vld [vmem:[%s3 + $0x2c8] sm:$0xff]
  %v204 = vld [vmem:[%s3 + $0x2d0] sm:$0xff]
  %v205 = vld [vmem:[%s3 + $0x2d8] sm:$0xff]
  %v206 = vld [vmem:[%s3 + $0x2e0] sm:$0xff]
  %v207 = vld [vmem:[%s3 + $0x2e8] sm:$0xff]
  %v208 = vld [vmem:[%s3 + $0x2f0] sm:$0xf]
  %v209 = vld [vmem:[%s3 + $0x2f4] sm:$0xff]
  %v210 = vld [vmem:[%s3 + $0x2fc] sm:$0xff]
  %v211 = vld [vmem:[%s3 + $0x304] sm:$0xff]
  %v212 = vld [vmem:[%s3 + $0x30c] sm:$0xff]
  %v213 = vld [vmem:[%s3 + $0x314] sm:$0xff]
  %v214 = vld [vmem:[%s3 + $0x31c] sm:$0xff]
  %v215 = vld [vmem:[%s3 + $0x324] sm:$0xff]
  %v216 = vld [vmem:[%s3 + $0x32c] sm:$0xff]
  %v217 = vld [vmem:[%s3 + $0x334] sm:$0xff]
  %v218 = vld [vmem:[%s3 + $0x33c] sm:$0xff]
  %v219 = vld [vmem:[%s3 + $0x344] sm:$0xf]
  %v220 = vld [vmem:[%s3 + $0x348] sm:$0xff]
  %v221 = vld [vmem:[%s3 + $0x350] sm:$0xff]
  %v222 = vld [vmem:[%s3 + $0x358] sm:$0xff]
  %v223 = vld [vmem:[%s3 + $0x360] sm:$0xff]
  %v224 = vld [vmem:[%s3 + $0x368] sm:$0xff]
  %v225 = vld [vmem:[%s3 + $0x370] sm:$0xff]
  %v226 = vld [vmem:[%s3 + $0x378] sm:$0xff]
  %v227 = vld [vmem:[%s3 + $0x380] sm:$0xff]
  %v228 = vld [vmem:[%s3 + $0x388] sm:$0xff]
  %v229 = vld [vmem:[%s3 + $0x390] sm:$0xff]
  %v230 = vld [vmem:[%s3 + $0x398] sm:$0xf]
  %v231 = vld [vmem:[%s3 + $0x39c] sm:$0xff]
  %v232 = vld [vmem:[%s3 + $0x3a4] sm:$0xff]
  %v233 = vld [vmem:[%s3 + $0x3ac] sm:$0xff]
  %v234 = vld [vmem:[%s3 + $0x3b4] sm:$0xff]
  %v235 = vld [vmem:[%s3 + $0x3bc] sm:$0xff]
  %v236 = vld [vmem:[%s3 + $0x3c4] sm:$0xff]
  %v237 = vld [vmem:[%s3 + $0x3cc] sm:$0xff]
  %v238 = vld [vmem:[%s3 + $0x3d4] sm:$0xff]
  %v239 = vld [vmem:[%s3 + $0x3dc] sm:$0xff]
  %v240 = vld [vmem:[%s3 + $0x3e4] sm:$0xff]
  %v241 = vld [vmem:[%s3 + $0x3ec] sm:$0xf]
  %v242 = vld [vmem:[%s3 + $0x3f0] sm:$0xff]
  %v243 = vld [vmem:[%s3 + $0x3f8] sm:$0xff]
  %v244 = vld [vmem:[%s3 + $0x400] sm:$0xff]
  %v245 = vld [vmem:[%s3 + $0x408] sm:$0xff]
  %v246 = vld [vmem:[%s3 + $0x410] sm:$0xff]
  %v247 = vld [vmem:[%s3 + $0x418] sm:$0xff]
  %v248 = vld [vmem:[%s3 + $0x420] sm:$0xff]
  %v249 = vld [vmem:[%s3 + $0x428] sm:$0xff]
  %v250 = vld [vmem:[%s3 + $0x430] sm:$0xff]
  %v251 = vld [vmem:[%s3 + $0x438] sm:$0xff]
  %v252 = vld [vmem:[%s3 + $0x440] sm:$0xf]
  %v253 = vld [vmem:[%s3 + $0x444] sm:$0xff]
  %v254 = vld [vmem:[%s3 + $0x44c] sm:$0xff]
  %v255 = vld [vmem:[%s3 + $0x454] sm:$0xff]
  %v256 = vld [vmem:[%s3 + $0x45c] sm:$0xff]
  %v257 = vld [vmem:[%s3 + $0x464] sm:$0xff]
  %v258 = vld [vmem:[%s3 + $0x46c] sm:$0xff]
  %v259 = vld [vmem:[%s3 + $0x474] sm:$0xff]
  %v260 = vld [vmem:[%s3 + $0x47c] sm:$0xff]
  %v261 = vld [vmem:[%s3 + $0x484] sm:$0xff]
  %v262 = vld [vmem:[%s3 + $0x48c] sm:$0xff]
  %v263 = vld [vmem:[%s3 + $0x494] sm:$0xf]
  %v264 = vld [vmem:[%s3 + $0x498] sm:$0xff]
  %v265 = vld [vmem:[%s3 + $0x4a0] sm:$0xff]
  %v266 = vld [vmem:[%s3 + $0x4a8] sm:$0xff]
  %v267 = vld [vmem:[%s3 + $0x4b0] sm:$0xff]
  %v268 = vld [vmem:[%s3 + $0x4b8] sm:$0xff]
  %v269 = vld [vmem:[%s3 + $0x4c0] sm:$0xff]
  %v270 = vld [vmem:[%s3 + $0x4c8] sm:$0xff]
  %v271 = vld [vmem:[%s3 + $0x4d0] sm:$0xff]
  %v272 = vld [vmem:[%s3 + $0x4d8] sm:$0xff]
  %v273 = vld [vmem:[%s3 + $0x4e0] sm:$0xff]
  %v274 = vld [vmem:[%s3 + $0x4e8] sm:$0xf]
  %v275 = vld [vmem:[%s3 + $0x4ec] sm:$0xff]
  %v276 = vld [vmem:[%s3 + $0x4f4] sm:$0xff]
  %v277 = vld [vmem:[%s3 + $0x4fc] sm:$0xff]
  %v278 = vld [vmem:[%s3 + $0x504] sm:$0xff]
  %v279 = vld [vmem:[%s3 + $0x50c] sm:$0xff]
  %v280 = vld [vmem:[%s3 + $0x514] sm:$0xff]
  %v281 = vld [vmem:[%s3 + $0x51c] sm:$0xff]
  %v282 = vld [vmem:[%s3 + $0x524] sm:$0xff]
  %v283 = vld [vmem:[%s3 + $0x52c] sm:$0xff]
  %v284 = vld [vmem:[%s3 + $0x534] sm:$0xff]
  %v285 = vld [vmem:[%s3 + $0x53c] sm:$0xf]
  %v286 = vld [vmem:[%s3 + $0x540] sm:$0xff]
  %v287 = vld [vmem:[%s3 + $0x548] sm:$0xff]
  %v288 = vld [vmem:[%s3 + $0x550] sm:$0xff]
  %v289 = vld [vmem:[%s3 + $0x558] sm:$0xff]
  %v290 = vld [vmem:[%s3 + $0x560] sm:$0xff]
  %v291 = vld [vmem:[%s3 + $0x568] sm:$0xff]
  %v292 = vld [vmem:[%s3 + $0x570] sm:$0xff]
  %v293 = vld [vmem:[%s3 + $0x578] sm:$0xff]
  %v294 = vld [vmem:[%s3 + $0x580] sm:$0xff]
  %v295 = vld [vmem:[%s3 + $0x588] sm:$0xff]
  %v296 = vld [vmem:[%s3 + $0x590] sm:$0xf]
  %v297 = vld [vmem:[%s3 + $0x594] sm:$0xff]
  %v298 = vld [vmem:[%s3 + $0x59c] sm:$0xff]
  %v299 = vld [vmem:[%s3 + $0x5a4] sm:$0xff]
  %v300 = vld [vmem:[%s3 + $0x5ac] sm:$0xff]
  %v301 = vld [vmem:[%s3 + $0x5b4] sm:$0xff]
  %v302 = vld [vmem:[%s3 + $0x5bc] sm:$0xff]
  %v303 = vld [vmem:[%s3 + $0x5c4] sm:$0xff]
  %v304 = vld [vmem:[%s3 + $0x5cc] sm:$0xff]
  %v305 = vld [vmem:[%s3 + $0x5d4] sm:$0xff]
  %v306 = vld [vmem:[%s3 + $0x5dc] sm:$0xff]
  %v307 = vld [vmem:[%s3 + $0x5e4] sm:$0xf]
  %v308 = vld [vmem:[%s3 + $0x5e8] sm:$0xff]
  %v309 = vld [vmem:[%s3 + $0x5f0] sm:$0xff]
  %v310 = vld [vmem:[%s3 + $0x5f8] sm:$0xff]
  %v311 = vld [vmem:[%s3 + $0x600] sm:$0xff]
  %v312 = vld [vmem:[%s3 + $0x608] sm:$0xff]
  %v313 = vld [vmem:[%s3 + $0x610] sm:$0xff]
  %v314 = vld [vmem:[%s3 + $0x618] sm:$0xff]
  %v315 = vld [vmem:[%s3 + $0x620] sm:$0xff]
  %v316 = vld [vmem:[%s3 + $0x628] sm:$0xff]
  %v317 = vld [vmem:[%s3 + $0x630] sm:$0xff]
  %v318 = vld [vmem:[%s3 + $0x638] sm:$0xf]
  %v319 = vld [vmem:[%s3 + $0x63c] sm:$0xff]
  %v320 = vld [vmem:[%s3 + $0x644] sm:$0xff]
  %v321 = vld [vmem:[%s3 + $0x64c] sm:$0xff]
  %v322 = vld [vmem:[%s3 + $0x654] sm:$0xff]
  %v323 = vld [vmem:[%s3 + $0x65c] sm:$0xff]
  %v324 = vld [vmem:[%s3 + $0x664] sm:$0xff]
  %v325 = vld [vmem:[%s3 + $0x66c] sm:$0xff]
  %v326 = vld [vmem:[%s3 + $0x674] sm:$0xff]
  %v327 = vld [vmem:[%s3 + $0x67c] sm:$0xff]
  %v328 = vld [vmem:[%s3 + $0x684] sm:$0xff]
  %v329 = vld [vmem:[%s3 + $0x68c] sm:$0xf]
  %v330 = vld [vmem:[%s3 + $0x690] sm:$0xff]
  %v331 = vld [vmem:[%s3 + $0x698] sm:$0xff]
  %v332 = vld [vmem:[%s3 + $0x6a0] sm:$0xff]
  %v333 = vld [vmem:[%s3 + $0x6a8] sm:$0xff]
  %v334 = vld [vmem:[%s3 + $0x6b0] sm:$0xff]
  %v335 = vld [vmem:[%s3 + $0x6b8] sm:$0xff]
  %v336 = vld [vmem:[%s3 + $0x6c0] sm:$0xff]
  %v337 = vld [vmem:[%s3 + $0x6c8] sm:$0xff]
  %v338 = vld [vmem:[%s3 + $0x6d0] sm:$0xff]
  %v339 = vld [vmem:[%s3 + $0x6d8] sm:$0xff]
  %v340 = vld [vmem:[%s3 + $0x6e0] sm:$0xf]
  %v341 = vld [vmem:[%s3 + $0x6e4] sm:$0xff]
  %v342 = vld [vmem:[%s3 + $0x6ec] sm:$0xff]
  %v343 = vld [vmem:[%s3 + $0x6f4] sm:$0xff]
  %v344 = vld [vmem:[%s3 + $0x6fc] sm:$0xff]
  %v345 = vld [vmem:[%s3 + $0x704] sm:$0xff]
  %v346 = vld [vmem:[%s3 + $0x70c] sm:$0xff]
  %v347 = vld [vmem:[%s3 + $0x714] sm:$0xff]
  %v348 = vld [vmem:[%s3 + $0x71c] sm:$0xff]
  %v349 = vld [vmem:[%s3 + $0x724] sm:$0xff]
  %v350 = vld [vmem:[%s3 + $0x72c] sm:$0xff]
  %v351 = vld [vmem:[%s3 + $0x734] sm:$0xf]
  %v352 = vld [vmem:[%s3 + $0x738] sm:$0xff]
  %v353 = vld [vmem:[%s3 + $0x740] sm:$0xff]
  %v354 = vld [vmem:[%s3 + $0x748] sm:$0xff]
  %v355 = vld [vmem:[%s3 + $0x750] sm:$0xff]
  %v356 = vld [vmem:[%s3 + $0x758] sm:$0xff]
  %v357 = vld [vmem:[%s3 + $0x760] sm:$0xff]
  %v358 = vld [vmem:[%s3 + $0x768] sm:$0xff]
  %v359 = vld [vmem:[%s3 + $0x770] sm:$0xff]
  %v360 = vld [vmem:[%s3 + $0x778] sm:$0xff]
  %v361 = vld [vmem:[%s3 + $0x780] sm:$0xff]
  %v362 = vld [vmem:[%s3 + $0x788] sm:$0xf]
  %v363 = vld [vmem:[%s3 + $0x78c] sm:$0xff]
  %v364 = vld [vmem:[%s3 + $0x794] sm:$0xff]
  %v365 = vld [vmem:[%s3 + $0x79c] sm:$0xff]
  %v366 = vld [vmem:[%s3 + $0x7a4] sm:$0xff]
  %v367 = vld [vmem:[%s3 + $0x7ac] sm:$0xff]
  %v368 = vld [vmem:[%s3 + $0x7b4] sm:$0xff]
  %v369 = vld [vmem:[%s3 + $0x7bc] sm:$0xff]
  %v370 = vld [vmem:[%s3 + $0x7c4] sm:$0xff]
  %v371 = vld [vmem:[%s3 + $0x7cc] sm:$0xff]
  %v372 = vld [vmem:[%s3 + $0x7d4] sm:$0xff]
  %v373 = vld [vmem:[%s3 + $0x7dc] sm:$0xf]
  %v374 = vld [vmem:[%s3 + $0x7e0] sm:$0xff]
  %v375 = vld [vmem:[%s3 + $0x7e8] sm:$0xff]
  %v376 = vld [vmem:[%s3 + $0x7f0] sm:$0xff]
  %v377 = vld [vmem:[%s3 + $0x7f8] sm:$0xff]
  %v378 = vld [vmem:[%s3 + $0x800] sm:$0xff]
  %v379 = vld [vmem:[%s3 + $0x808] sm:$0xff]
  %v380 = vld [vmem:[%s3 + $0x810] sm:$0xff]
  %v381 = vld [vmem:[%s3 + $0x818] sm:$0xff]
  %v382 = vld [vmem:[%s3 + $0x820] sm:$0xff]
  %v383 = vld [vmem:[%s3 + $0x828] sm:$0xff]
  %v384 = vld [vmem:[%s3 + $0x830] sm:$0xf]
  %v385 = vld [vmem:[%s3 + $0x834] sm:$0xff]
  %v386 = vld [vmem:[%s3 + $0x83c] sm:$0xff]
  %v387 = vld [vmem:[%s3 + $0x844] sm:$0xff]
  %v388 = vld [vmem:[%s3 + $0x84c] sm:$0xff]
  %v389 = vld [vmem:[%s3 + $0x854] sm:$0xff]
  %v390 = vld [vmem:[%s3 + $0x85c] sm:$0xff]
  %v391 = vld [vmem:[%s3 + $0x864] sm:$0xff]
  %v392 = vld [vmem:[%s3 + $0x86c] sm:$0xff]
  %v393 = vld [vmem:[%s3 + $0x874] sm:$0xff]
  %v394 = vld [vmem:[%s3 + $0x87c] sm:$0xff]
  %v395 = vld [vmem:[%s3 + $0x884] sm:$0xf]
  %v396 = vld [vmem:[%s3 + $0x888] sm:$0xff]
  %v397 = vld [vmem:[%s3 + $0x890] sm:$0xff]
  %v398 = vld [vmem:[%s3 + $0x898] sm:$0xff]
  %v399 = vld [vmem:[%s3 + $0x8a0] sm:$0xff]
  %v400 = vld [vmem:[%s3 + $0x8a8] sm:$0xff]
  %v401 = vld [vmem:[%s3 + $0x8b0] sm:$0xff]
  %v402 = vld [vmem:[%s3 + $0x8b8] sm:$0xff]
  %v403 = vld [vmem:[%s3 + $0x8c0] sm:$0xff]
  %v404 = vld [vmem:[%s3 + $0x8c8] sm:$0xff]
  %v405 = vld [vmem:[%s3 + $0x8d0] sm:$0xff]
  %v406 = vld [vmem:[%s3 + $0x8d8] sm:$0xf]
  %v407 = vld [vmem:[%s3 + $0x8dc] sm:$0xff]
  %v408 = vld [vmem:[%s3 + $0x8e4] sm:$0xff]
  %v409 = vld [vmem:[%s3 + $0x8ec] sm:$0xff]
  %v410 = vld [vmem:[%s3 + $0x8f4] sm:$0xff]
  %v411 = vld [vmem:[%s3 + $0x8fc] sm:$0xff]
  %v412 = vld [vmem:[%s3 + $0x904] sm:$0xff]
  %v413 = vld [vmem:[%s3 + $0x90c] sm:$0xff]
  %v414 = vld [vmem:[%s3 + $0x914] sm:$0xff]
  %v415 = vld [vmem:[%s3 + $0x91c] sm:$0xff]
  %v416 = vld [vmem:[%s3 + $0x924] sm:$0xff]
  %v417 = vld [vmem:[%s3 + $0x92c] sm:$0xf]
  %v418 = vld [vmem:[%s3 + $0x930] sm:$0xff]
  %v419 = vld [vmem:[%s3 + $0x938] sm:$0xff]
  %v420 = vld [vmem:[%s3 + $0x940] sm:$0xff]
  %v421 = vld [vmem:[%s3 + $0x948] sm:$0xff]
  %v422 = vld [vmem:[%s3 + $0x950] sm:$0xff]
  %v423 = vld [vmem:[%s3 + $0x958] sm:$0xff]
  %v424 = vld [vmem:[%s3 + $0x960] sm:$0xff]
  %v425 = vld [vmem:[%s3 + $0x968] sm:$0xff]
  %v426 = vld [vmem:[%s3 + $0x970] sm:$0xff]
  %v427 = vld [vmem:[%s3 + $0x978] sm:$0xff]
  %v428 = vld [vmem:[%s3 + $0x980] sm:$0xf]
  %v429 = vld [vmem:[%s3 + $0x984] sm:$0xff]
  %v430 = vld [vmem:[%s3 + $0x98c] sm:$0xff]
  %v431 = vld [vmem:[%s3 + $0x994] sm:$0xff]
  %v432 = vld [vmem:[%s3 + $0x99c] sm:$0xff]
  %v433 = vld [vmem:[%s3 + $0x9a4] sm:$0xff]
  %v434 = vld [vmem:[%s3 + $0x9ac] sm:$0xff]
  %v435 = vld [vmem:[%s3 + $0x9b4] sm:$0xff]
  %v436 = vld [vmem:[%s3 + $0x9bc] sm:$0xff]
  %v437 = vld [vmem:[%s3 + $0x9c4] sm:$0xff]
  %v438 = vld [vmem:[%s3 + $0x9cc] sm:$0xff]
  %v439 = vld [vmem:[%s3 + $0x9d4] sm:$0xf]
  %v440 = vld [vmem:[%s3 + $0x9d8] sm:$0xff]
  %v441 = vld [vmem:[%s3 + $0x9e0] sm:$0xff]
  %v442 = vld [vmem:[%s3 + $0x9e8] sm:$0xff]
  %v443 = vld [vmem:[%s3 + $0x9f0] sm:$0xff]
  %v444 = vld [vmem:[%s3 + $0x9f8] sm:$0xff]
  %v445 = vld [vmem:[%s3 + $0xa00] sm:$0xff]
  %v446 = vld [vmem:[%s3 + $0xa08] sm:$0xff]
  %v447 = vld [vmem:[%s3 + $0xa10] sm:$0xff]
  %v448 = vld [vmem:[%s3 + $0xa18] sm:$0xff]
  %v449 = vld [vmem:[%s3 + $0xa20] sm:$0xff]
  %v450 = vld [vmem:[%s3 + $0xa28] sm:$0xf]
  %v451 = vld [vmem:[%s3 + $0xa2c] sm:$0xff]
  %v452 = vld [vmem:[%s3 + $0xa34] sm:$0xff]
  %v453 = vld [vmem:[%s3 + $0xa3c] sm:$0xff]
  %v454 = vld [vmem:[%s3 + $0xa44] sm:$0xff]
  %v455 = vld [vmem:[%s3 + $0xa4c] sm:$0xff]
  %v456 = vld [vmem:[%s3 + $0xa54] sm:$0xff]
  %v457 = vld [vmem:[%s3 + $0xa5c] sm:$0xff]
  %v458 = vld [vmem:[%s3 + $0xa64] sm:$0xff]
  %v459 = vld [vmem:[%s3 + $0xa6c] sm:$0xff]
  %v460 = vld [vmem:[%s3 + $0xa74] sm:$0xff]
  %v461 = vld [vmem:[%s3 + $0xa7c] sm:$0xf]
  %v462 = vld [vmem:[%s4] sm:$0xff]
  %v463 = vld [vmem:[%s4 + $0x8] sm:$0xff]
  %v464 = vld [vmem:[%s4 + $0x10] sm:$0x1f]
  %v468 = vperm.slane %v462, 0
  %v469 = vperm.slane %v462, 1
  %v470 = vperm.slane %v462, 2
  %v471 = vperm.slane %v462, 3
  %v472 = vperm.slane %v462, 4
  %v473 = vperm.slane %v462, 5
  %v474 = vperm.slane %v462, 6
  %v475 = vperm.slane %v462, 7
  %v476 = vperm.slane %v463, 0
  %v477 = vperm.slane %v463, 1
  %v478 = vperm.slane %v463, 2
  %v479 = vperm.slane %v463, 3
  %v480 = vperm.slane %v463, 4
  %v481 = vperm.slane %v463, 5
  %v482 = vperm.slane %v463, 6
  %v483 = vperm.slane %v463, 7
  %v484 = vperm.slane %v464, 0
  %v485 = vperm.slane %v464, 1
  %v486 = vperm.slane %v464, 2
  %v487 = vperm.slane %v464, 3
  %v488 = vperm.slane %v464, 4
  %v862 = vunpack.c.l.b16 %v110
  %v863 = vunpack.c.h.b16 %v110
  %v864 = vunpack.c.l.b16 %v111
  %v865 = vunpack.c.h.b16 %v111
  %v866 = vunpack.c.l.b16 %v112
  %v867 = vunpack.c.h.b16 %v112
  %v868 = vunpack.c.l.b16 %v113
  %v869 = vunpack.c.h.b16 %v113
  %v870 = vunpack.c.l.b16 %v114
  %v871 = vunpack.c.h.b16 %v114
  %v872 = vunpack.c.l.b16 %v115
  %v873 = vunpack.c.h.b16 %v115
  %v874 = vunpack.c.l.b16 %v116
  %v875 = vunpack.c.h.b16 %v116
  %v876 = vunpack.c.l.b16 %v117
  %v877 = vunpack.c.h.b16 %v117
  %v878 = vunpack.c.l.b16 %v118
  %v879 = vunpack.c.h.b16 %v118
  %v880 = vunpack.c.l.b16 %v119
  %v881 = vunpack.c.h.b16 %v119
  %v882 = vunpack.c.l.b16 %v120
  %v883 = vunpack.c.l.b16 %v121
  %v884 = vunpack.c.h.b16 %v121
  %v885 = vunpack.c.l.b16 %v122
  %v886 = vunpack.c.h.b16 %v122
  %v887 = vunpack.c.l.b16 %v123
  %v888 = vunpack.c.h.b16 %v123
  %v889 = vunpack.c.l.b16 %v124
  %v890 = vunpack.c.h.b16 %v124
  %v891 = vunpack.c.l.b16 %v125
  %v892 = vunpack.c.h.b16 %v125
  %v893 = vunpack.c.l.b16 %v126
  %v894 = vunpack.c.h.b16 %v126
  %v895 = vunpack.c.l.b16 %v127
  %v896 = vunpack.c.h.b16 %v127
  %v897 = vunpack.c.l.b16 %v128
  %v898 = vunpack.c.h.b16 %v128
  %v899 = vunpack.c.l.b16 %v129
  %v900 = vunpack.c.h.b16 %v129
  %v901 = vunpack.c.l.b16 %v130
  %v902 = vunpack.c.h.b16 %v130
  %v903 = vunpack.c.l.b16 %v131
  %v904 = vunpack.c.l.b16 %v132
  %v905 = vunpack.c.h.b16 %v132
  %v906 = vunpack.c.l.b16 %v133
  %v907 = vunpack.c.h.b16 %v133
  %v908 = vunpack.c.l.b16 %v134
  %v909 = vunpack.c.h.b16 %v134
  %v910 = vunpack.c.l.b16 %v135
  %v911 = vunpack.c.h.b16 %v135
  %v912 = vunpack.c.l.b16 %v136
  %v913 = vunpack.c.h.b16 %v136
  %v914 = vunpack.c.l.b16 %v137
  %v915 = vunpack.c.h.b16 %v137
  %v916 = vunpack.c.l.b16 %v138
  %v917 = vunpack.c.h.b16 %v138
  %v918 = vunpack.c.l.b16 %v139
  %v919 = vunpack.c.h.b16 %v139
  %v920 = vunpack.c.l.b16 %v140
  %v921 = vunpack.c.h.b16 %v140
  %v922 = vunpack.c.l.b16 %v141
  %v923 = vunpack.c.h.b16 %v141
  %v924 = vunpack.c.l.b16 %v142
  %v925 = vunpack.c.l.b16 %v143
  %v926 = vunpack.c.h.b16 %v143
  %v927 = vunpack.c.l.b16 %v144
  %v928 = vunpack.c.h.b16 %v144
  %v929 = vunpack.c.l.b16 %v145
  %v930 = vunpack.c.h.b16 %v145
  %v931 = vunpack.c.l.b16 %v146
  %v932 = vunpack.c.h.b16 %v146
  %v933 = vunpack.c.l.b16 %v147
  %v934 = vunpack.c.h.b16 %v147
  %v935 = vunpack.c.l.b16 %v148
  %v936 = vunpack.c.h.b16 %v148
  %v937 = vunpack.c.l.b16 %v149
  %v938 = vunpack.c.h.b16 %v149
  %v939 = vunpack.c.l.b16 %v150
  %v940 = vunpack.c.h.b16 %v150
  %v941 = vunpack.c.l.b16 %v151
  %v942 = vunpack.c.h.b16 %v151
  %v943 = vunpack.c.l.b16 %v152
  %v944 = vunpack.c.h.b16 %v152
  %v945 = vunpack.c.l.b16 %v153
  %v946 = vunpack.c.l.b16 %v154
  %v947 = vunpack.c.h.b16 %v154
  %v948 = vunpack.c.l.b16 %v155
  %v949 = vunpack.c.h.b16 %v155
  %v950 = vunpack.c.l.b16 %v156
  %v951 = vunpack.c.h.b16 %v156
  %v952 = vunpack.c.l.b16 %v157
  %v953 = vunpack.c.h.b16 %v157
  %v954 = vunpack.c.l.b16 %v158
  %v955 = vunpack.c.h.b16 %v158
  %v956 = vunpack.c.l.b16 %v159
  %v957 = vunpack.c.h.b16 %v159
  %v958 = vunpack.c.l.b16 %v160
  %v959 = vunpack.c.h.b16 %v160
  %v960 = vunpack.c.l.b16 %v161
  %v961 = vunpack.c.h.b16 %v161
  %v962 = vunpack.c.l.b16 %v162
  %v963 = vunpack.c.h.b16 %v162
  %v964 = vunpack.c.l.b16 %v163
  %v965 = vunpack.c.h.b16 %v163
  %v966 = vunpack.c.l.b16 %v164
  %v967 = vunpack.c.l.b16 %v165
  %v968 = vunpack.c.h.b16 %v165
  %v969 = vunpack.c.l.b16 %v166
  %v970 = vunpack.c.h.b16 %v166
  %v971 = vunpack.c.l.b16 %v167
  %v972 = vunpack.c.h.b16 %v167
  %v973 = vunpack.c.l.b16 %v168
  %v974 = vunpack.c.h.b16 %v168
  %v975 = vunpack.c.l.b16 %v169
  %v976 = vunpack.c.h.b16 %v169
  %v977 = vunpack.c.l.b16 %v170
  %v978 = vunpack.c.h.b16 %v170
  %v979 = vunpack.c.l.b16 %v171
  %v980 = vunpack.c.h.b16 %v171
  %v981 = vunpack.c.l.b16 %v172
  %v982 = vunpack.c.h.b16 %v172
  %v983 = vunpack.c.l.b16 %v173
  %v984 = vunpack.c.h.b16 %v173
  %v985 = vunpack.c.l.b16 %v174
  %v986 = vunpack.c.h.b16 %v174
  %v987 = vunpack.c.l.b16 %v175
  %v988 = vunpack.c.l.b16 %v176
  %v989 = vunpack.c.h.b16 %v176
  %v990 = vunpack.c.l.b16 %v177
  %v991 = vunpack.c.h.b16 %v177
  %v992 = vunpack.c.l.b16 %v178
  %v993 = vunpack.c.h.b16 %v178
  %v994 = vunpack.c.l.b16 %v179
  %v995 = vunpack.c.h.b16 %v179
  %v996 = vunpack.c.l.b16 %v180
  %v997 = vunpack.c.h.b16 %v180
  %v998 = vunpack.c.l.b16 %v181
  %v999 = vunpack.c.h.b16 %v181
  %v1000 = vunpack.c.l.b16 %v182
  %v1001 = vunpack.c.h.b16 %v182
  %v1002 = vunpack.c.l.b16 %v183
  %v1003 = vunpack.c.h.b16 %v183
  %v1004 = vunpack.c.l.b16 %v184
  %v1005 = vunpack.c.h.b16 %v184
  %v1006 = vunpack.c.l.b16 %v185
  %v1007 = vunpack.c.h.b16 %v185
  %v1008 = vunpack.c.l.b16 %v186
  %v1009 = vunpack.c.l.b16 %v187
  %v1010 = vunpack.c.h.b16 %v187
  %v1011 = vunpack.c.l.b16 %v188
  %v1012 = vunpack.c.h.b16 %v188
  %v1013 = vunpack.c.l.b16 %v189
  %v1014 = vunpack.c.h.b16 %v189
  %v1015 = vunpack.c.l.b16 %v190
  %v1016 = vunpack.c.h.b16 %v190
  %v1017 = vunpack.c.l.b16 %v191
  %v1018 = vunpack.c.h.b16 %v191
  %v1019 = vunpack.c.l.b16 %v192
  %v1020 = vunpack.c.h.b16 %v192
  %v1021 = vunpack.c.l.b16 %v193
  %v1022 = vunpack.c.h.b16 %v193
  %v1023 = vunpack.c.l.b16 %v194
  %v1024 = vunpack.c.h.b16 %v194
  %v1025 = vunpack.c.l.b16 %v195
  %v1026 = vunpack.c.h.b16 %v195
  %v1027 = vunpack.c.l.b16 %v196
  %v1028 = vunpack.c.h.b16 %v196
  %v1029 = vunpack.c.l.b16 %v197
  %v1030 = vunpack.c.l.b16 %v198
  %v1031 = vunpack.c.h.b16 %v198
  %v1032 = vunpack.c.l.b16 %v199
  %v1033 = vunpack.c.h.b16 %v199
  %v1034 = vunpack.c.l.b16 %v200
  %v1035 = vunpack.c.h.b16 %v200
  %v1036 = vunpack.c.l.b16 %v201
  %v1037 = vunpack.c.h.b16 %v201
  %v1038 = vunpack.c.l.b16 %v202
  %v1039 = vunpack.c.h.b16 %v202
  %v1040 = vunpack.c.l.b16 %v203
  %v1041 = vunpack.c.h.b16 %v203
  %v1042 = vunpack.c.l.b16 %v204
  %v1043 = vunpack.c.h.b16 %v204
  %v1044 = vunpack.c.l.b16 %v205
  %v1045 = vunpack.c.h.b16 %v205
  %v1046 = vunpack.c.l.b16 %v206
  %v1047 = vunpack.c.h.b16 %v206
  %v1048 = vunpack.c.l.b16 %v207
  %v1049 = vunpack.c.h.b16 %v207
  %v1050 = vunpack.c.l.b16 %v208
  %v1051 = vunpack.c.l.b16 %v209
  %v1052 = vunpack.c.h.b16 %v209
  %v1053 = vunpack.c.l.b16 %v210
  %v1054 = vunpack.c.h.b16 %v210
  %v1055 = vunpack.c.l.b16 %v211
  %v1056 = vunpack.c.h.b16 %v211
  %v1057 = vunpack.c.l.b16 %v212
  %v1058 = vunpack.c.h.b16 %v212
  %v1059 = vunpack.c.l.b16 %v213
  %v1060 = vunpack.c.h.b16 %v213
  %v1061 = vunpack.c.l.b16 %v214
  %v1062 = vunpack.c.h.b16 %v214
  %v1063 = vunpack.c.l.b16 %v215
  %v1064 = vunpack.c.h.b16 %v215
  %v1065 = vunpack.c.l.b16 %v216
  %v1066 = vunpack.c.h.b16 %v216
  %v1067 = vunpack.c.l.b16 %v217
  %v1068 = vunpack.c.h.b16 %v217
  %v1069 = vunpack.c.l.b16 %v218
  %v1070 = vunpack.c.h.b16 %v218
  %v1071 = vunpack.c.l.b16 %v219
  %v1072 = vunpack.c.l.b16 %v220
  %v1073 = vunpack.c.h.b16 %v220
  %v1074 = vunpack.c.l.b16 %v221
  %v1075 = vunpack.c.h.b16 %v221
  %v1076 = vunpack.c.l.b16 %v222
  %v1077 = vunpack.c.h.b16 %v222
  %v1078 = vunpack.c.l.b16 %v223
  %v1079 = vunpack.c.h.b16 %v223
  %v1080 = vunpack.c.l.b16 %v224
  %v1081 = vunpack.c.h.b16 %v224
  %v1082 = vunpack.c.l.b16 %v225
  %v1083 = vunpack.c.h.b16 %v225
  %v1084 = vunpack.c.l.b16 %v226
  %v1085 = vunpack.c.h.b16 %v226
  %v1086 = vunpack.c.l.b16 %v227
  %v1087 = vunpack.c.h.b16 %v227
  %v1088 = vunpack.c.l.b16 %v228
  %v1089 = vunpack.c.h.b16 %v228
  %v1090 = vunpack.c.l.b16 %v229
  %v1091 = vunpack.c.h.b16 %v229
  %v1092 = vunpack.c.l.b16 %v230
  %v1093 = vunpack.c.l.b16 %v231
  %v1094 = vunpack.c.h.b16 %v231
  %v1095 = vunpack.c.l.b16 %v232
  %v1096 = vunpack.c.h.b16 %v232
  %v1097 = vunpack.c.l.b16 %v233
  %v1098 = vunpack.c.h.b16 %v233
  %v1099 = vunpack.c.l.b16 %v234
  %v1100 = vunpack.c.h.b16 %v234
  %v1101 = vunpack.c.l.b16 %v235
  %v1102 = vunpack.c.h.b16 %v235
  %v1103 = vunpack.c.l.b16 %v236
  %v1104 = vunpack.c.h.b16 %v236
  %v1105 = vunpack.c.l.b16 %v237
  %v1106 = vunpack.c.h.b16 %v237
  %v1107 = vunpack.c.l.b16 %v238
  %v1108 = vunpack.c.h.b16 %v238
  %v1109 = vunpack.c.l.b16 %v239
  %v1110 = vunpack.c.h.b16 %v239
  %v1111 = vunpack.c.l.b16 %v240
  %v1112 = vunpack.c.h.b16 %v240
  %v1113 = vunpack.c.l.b16 %v241
  %v1114 = vunpack.c.l.b16 %v242
  %v1115 = vunpack.c.h.b16 %v242
  %v1116 = vunpack.c.l.b16 %v243
  %v1117 = vunpack.c.h.b16 %v243
  %v1118 = vunpack.c.l.b16 %v244
  %v1119 = vunpack.c.h.b16 %v244
  %v1120 = vunpack.c.l.b16 %v245
  %v1121 = vunpack.c.h.b16 %v245
  %v1122 = vunpack.c.l.b16 %v246
  %v1123 = vunpack.c.h.b16 %v246
  %v1124 = vunpack.c.l.b16 %v247
  %v1125 = vunpack.c.h.b16 %v247
  %v1126 = vunpack.c.l.b16 %v248
  %v1127 = vunpack.c.h.b16 %v248
  %v1128 = vunpack.c.l.b16 %v249
  %v1129 = vunpack.c.h.b16 %v249
  %v1130 = vunpack.c.l.b16 %v250
  %v1131 = vunpack.c.h.b16 %v250
  %v1132 = vunpack.c.l.b16 %v251
  %v1133 = vunpack.c.h.b16 %v251
  %v1134 = vunpack.c.l.b16 %v252
  %v1135 = vunpack.c.l.b16 %v253
  %v1136 = vunpack.c.h.b16 %v253
  %v1137 = vunpack.c.l.b16 %v254
  %v1138 = vunpack.c.h.b16 %v254
  %v1139 = vunpack.c.l.b16 %v255
  %v1140 = vunpack.c.h.b16 %v255
  %v1141 = vunpack.c.l.b16 %v256
  %v1142 = vunpack.c.h.b16 %v256
  %v1143 = vunpack.c.l.b16 %v257
  %v1144 = vunpack.c.h.b16 %v257
  %v1145 = vunpack.c.l.b16 %v258
  %v1146 = vunpack.c.h.b16 %v258
  %v1147 = vunpack.c.l.b16 %v259
  %v1148 = vunpack.c.h.b16 %v259
  %v1149 = vunpack.c.l.b16 %v260
  %v1150 = vunpack.c.h.b16 %v260
  %v1151 = vunpack.c.l.b16 %v261
  %v1152 = vunpack.c.h.b16 %v261
  %v1153 = vunpack.c.l.b16 %v262
  %v1154 = vunpack.c.h.b16 %v262
  %v1155 = vunpack.c.l.b16 %v263
  %v1156 = vunpack.c.l.b16 %v264
  %v1157 = vunpack.c.h.b16 %v264
  %v1158 = vunpack.c.l.b16 %v265
  %v1159 = vunpack.c.h.b16 %v265
  %v1160 = vunpack.c.l.b16 %v266
  %v1161 = vunpack.c.h.b16 %v266
  %v1162 = vunpack.c.l.b16 %v267
  %v1163 = vunpack.c.h.b16 %v267
  %v1164 = vunpack.c.l.b16 %v268
  %v1165 = vunpack.c.h.b16 %v268
  %v1166 = vunpack.c.l.b16 %v269
  %v1167 = vunpack.c.h.b16 %v269
  %v1168 = vunpack.c.l.b16 %v270
  %v1169 = vunpack.c.h.b16 %v270
  %v1170 = vunpack.c.l.b16 %v271
  %v1171 = vunpack.c.h.b16 %v271
  %v1172 = vunpack.c.l.b16 %v272
  %v1173 = vunpack.c.h.b16 %v272
  %v1174 = vunpack.c.l.b16 %v273
  %v1175 = vunpack.c.h.b16 %v273
  %v1176 = vunpack.c.l.b16 %v274
  %v1177 = vunpack.c.l.b16 %v275
  %v1178 = vunpack.c.h.b16 %v275
  %v1179 = vunpack.c.l.b16 %v276
  %v1180 = vunpack.c.h.b16 %v276
  %v1181 = vunpack.c.l.b16 %v277
  %v1182 = vunpack.c.h.b16 %v277
  %v1183 = vunpack.c.l.b16 %v278
  %v1184 = vunpack.c.h.b16 %v278
  %v1185 = vunpack.c.l.b16 %v279
  %v1186 = vunpack.c.h.b16 %v279
  %v1187 = vunpack.c.l.b16 %v280
  %v1188 = vunpack.c.h.b16 %v280
  %v1189 = vunpack.c.l.b16 %v281
  %v1190 = vunpack.c.h.b16 %v281
  %v1191 = vunpack.c.l.b16 %v282
  %v1192 = vunpack.c.h.b16 %v282
  %v1193 = vunpack.c.l.b16 %v283
  %v1194 = vunpack.c.h.b16 %v283
  %v1195 = vunpack.c.l.b16 %v284
  %v1196 = vunpack.c.h.b16 %v284
  %v1197 = vunpack.c.l.b16 %v285
  %v1198 = vunpack.c.l.b16 %v286
  %v1199 = vunpack.c.h.b16 %v286
  %v1200 = vunpack.c.l.b16 %v287
  %v1201 = vunpack.c.h.b16 %v287
  %v1202 = vunpack.c.l.b16 %v288
  %v1203 = vunpack.c.h.b16 %v288
  %v1204 = vunpack.c.l.b16 %v289
  %v1205 = vunpack.c.h.b16 %v289
  %v1206 = vunpack.c.l.b16 %v290
  %v1207 = vunpack.c.h.b16 %v290
  %v1208 = vunpack.c.l.b16 %v291
  %v1209 = vunpack.c.h.b16 %v291
  %v1210 = vunpack.c.l.b16 %v292
  %v1211 = vunpack.c.h.b16 %v292
  %v1212 = vunpack.c.l.b16 %v293
  %v1213 = vunpack.c.h.b16 %v293
  %v1214 = vunpack.c.l.b16 %v294
  %v1215 = vunpack.c.h.b16 %v294
  %v1216 = vunpack.c.l.b16 %v295
  %v1217 = vunpack.c.h.b16 %v295
  %v1218 = vunpack.c.l.b16 %v296
  %v1219 = vunpack.c.l.b16 %v297
  %v1220 = vunpack.c.h.b16 %v297
  %v1221 = vunpack.c.l.b16 %v298
  %v1222 = vunpack.c.h.b16 %v298
  %v1223 = vunpack.c.l.b16 %v299
  %v1224 = vunpack.c.h.b16 %v299
  %v1225 = vunpack.c.l.b16 %v300
  %v1226 = vunpack.c.h.b16 %v300
  %v1227 = vunpack.c.l.b16 %v301
  %v1228 = vunpack.c.h.b16 %v301
  %v1229 = vunpack.c.l.b16 %v302
  %v1230 = vunpack.c.h.b16 %v302
  %v1231 = vunpack.c.l.b16 %v303
  %v1232 = vunpack.c.h.b16 %v303
  %v1233 = vunpack.c.l.b16 %v304
  %v1234 = vunpack.c.h.b16 %v304
  %v1235 = vunpack.c.l.b16 %v305
  %v1236 = vunpack.c.h.b16 %v305
  %v1237 = vunpack.c.l.b16 %v306
  %v1238 = vunpack.c.h.b16 %v306
  %v1239 = vunpack.c.l.b16 %v307
  %v1240 = vunpack.c.l.b16 %v308
  %v1241 = vunpack.c.h.b16 %v308
  %v1242 = vunpack.c.l.b16 %v309
  %v1243 = vunpack.c.h.b16 %v309
  %v1244 = vunpack.c.l.b16 %v310
  %v1245 = vunpack.c.h.b16 %v310
  %v1246 = vunpack.c.l.b16 %v311
  %v1247 = vunpack.c.h.b16 %v311
  %v1248 = vunpack.c.l.b16 %v312
  %v1249 = vunpack.c.h.b16 %v312
  %v1250 = vunpack.c.l.b16 %v313
  %v1251 = vunpack.c.h.b16 %v313
  %v1252 = vunpack.c.l.b16 %v314
  %v1253 = vunpack.c.h.b16 %v314
  %v1254 = vunpack.c.l.b16 %v315
  %v1255 = vunpack.c.h.b16 %v315
  %v1256 = vunpack.c.l.b16 %v316
  %v1257 = vunpack.c.h.b16 %v316
  %v1258 = vunpack.c.l.b16 %v317
  %v1259 = vunpack.c.h.b16 %v317
  %v1260 = vunpack.c.l.b16 %v318
  %v1261 = vunpack.c.l.b16 %v319
  %v1262 = vunpack.c.h.b16 %v319
  %v1263 = vunpack.c.l.b16 %v320
  %v1264 = vunpack.c.h.b16 %v320
  %v1265 = vunpack.c.l.b16 %v321
  %v1266 = vunpack.c.h.b16 %v321
  %v1267 = vunpack.c.l.b16 %v322
  %v1268 = vunpack.c.h.b16 %v322
  %v1269 = vunpack.c.l.b16 %v323
  %v1270 = vunpack.c.h.b16 %v323
  %v1271 = vunpack.c.l.b16 %v324
  %v1272 = vunpack.c.h.b16 %v324
  %v1273 = vunpack.c.l.b16 %v325
  %v1274 = vunpack.c.h.b16 %v325
  %v1275 = vunpack.c.l.b16 %v326
  %v1276 = vunpack.c.h.b16 %v326
  %v1277 = vunpack.c.l.b16 %v327
  %v1278 = vunpack.c.h.b16 %v327
  %v1279 = vunpack.c.l.b16 %v328
  %v1280 = vunpack.c.h.b16 %v328
  %v1281 = vunpack.c.l.b16 %v329
  %v1282 = vunpack.c.l.b16 %v330
  %v1283 = vunpack.c.h.b16 %v330
  %v1284 = vunpack.c.l.b16 %v331
  %v1285 = vunpack.c.h.b16 %v331
  %v1286 = vunpack.c.l.b16 %v332
  %v1287 = vunpack.c.h.b16 %v332
  %v1288 = vunpack.c.l.b16 %v333
  %v1289 = vunpack.c.h.b16 %v333
  %v1290 = vunpack.c.l.b16 %v334
  %v1291 = vunpack.c.h.b16 %v334
  %v1292 = vunpack.c.l.b16 %v335
  %v1293 = vunpack.c.h.b16 %v335
  %v1294 = vunpack.c.l.b16 %v336
  %v1295 = vunpack.c.h.b16 %v336
  %v1296 = vunpack.c.l.b16 %v337
  %v1297 = vunpack.c.h.b16 %v337
  %v1298 = vunpack.c.l.b16 %v338
  %v1299 = vunpack.c.h.b16 %v338
  %v1300 = vunpack.c.l.b16 %v339
  %v1301 = vunpack.c.h.b16 %v339
  %v1302 = vunpack.c.l.b16 %v340
  %v1303 = vunpack.c.l.b16 %v341
  %v1304 = vunpack.c.h.b16 %v341
  %v1305 = vunpack.c.l.b16 %v342
  %v1306 = vunpack.c.h.b16 %v342
  %v1307 = vunpack.c.l.b16 %v343
  %v1308 = vunpack.c.h.b16 %v343
  %v1309 = vunpack.c.l.b16 %v344
  %v1310 = vunpack.c.h.b16 %v344
  %v1311 = vunpack.c.l.b16 %v345
  %v1312 = vunpack.c.h.b16 %v345
  %v1313 = vunpack.c.l.b16 %v346
  %v1314 = vunpack.c.h.b16 %v346
  %v1315 = vunpack.c.l.b16 %v347
  %v1316 = vunpack.c.h.b16 %v347
  %v1317 = vunpack.c.l.b16 %v348
  %v1318 = vunpack.c.h.b16 %v348
  %v1319 = vunpack.c.l.b16 %v349
  %v1320 = vunpack.c.h.b16 %v349
  %v1321 = vunpack.c.l.b16 %v350
  %v1322 = vunpack.c.h.b16 %v350
  %v1323 = vunpack.c.l.b16 %v351
  %v1324 = vunpack.c.l.b16 %v352
  %v1325 = vunpack.c.h.b16 %v352
  %v1326 = vunpack.c.l.b16 %v353
  %v1327 = vunpack.c.h.b16 %v353
  %v1328 = vunpack.c.l.b16 %v354
  %v1329 = vunpack.c.h.b16 %v354
  %v1330 = vunpack.c.l.b16 %v355
  %v1331 = vunpack.c.h.b16 %v355
  %v1332 = vunpack.c.l.b16 %v356
  %v1333 = vunpack.c.h.b16 %v356
  %v1334 = vunpack.c.l.b16 %v357
  %v1335 = vunpack.c.h.b16 %v357
  %v1336 = vunpack.c.l.b16 %v358
  %v1337 = vunpack.c.h.b16 %v358
  %v1338 = vunpack.c.l.b16 %v359
  %v1339 = vunpack.c.h.b16 %v359
  %v1340 = vunpack.c.l.b16 %v360
  %v1341 = vunpack.c.h.b16 %v360
  %v1342 = vunpack.c.l.b16 %v361
  %v1343 = vunpack.c.h.b16 %v361
  %v1344 = vunpack.c.l.b16 %v362
  %v1345 = vunpack.c.l.b16 %v363
  %v1346 = vunpack.c.h.b16 %v363
  %v1347 = vunpack.c.l.b16 %v364
  %v1348 = vunpack.c.h.b16 %v364
  %v1349 = vunpack.c.l.b16 %v365
  %v1350 = vunpack.c.h.b16 %v365
  %v1351 = vunpack.c.l.b16 %v366
  %v1352 = vunpack.c.h.b16 %v366
  %v1353 = vunpack.c.l.b16 %v367
  %v1354 = vunpack.c.h.b16 %v367
  %v1355 = vunpack.c.l.b16 %v368
  %v1356 = vunpack.c.h.b16 %v368
  %v1357 = vunpack.c.l.b16 %v369
  %v1358 = vunpack.c.h.b16 %v369
  %v1359 = vunpack.c.l.b16 %v370
  %v1360 = vunpack.c.h.b16 %v370
  %v1361 = vunpack.c.l.b16 %v371
  %v1362 = vunpack.c.h.b16 %v371
  %v1363 = vunpack.c.l.b16 %v372
  %v1364 = vunpack.c.h.b16 %v372
  %v1365 = vunpack.c.l.b16 %v373
  %v1366 = vunpack.c.l.b16 %v374
  %v1367 = vunpack.c.h.b16 %v374
  %v1368 = vunpack.c.l.b16 %v375
  %v1369 = vunpack.c.h.b16 %v375
  %v1370 = vunpack.c.l.b16 %v376
  %v1371 = vunpack.c.h.b16 %v376
  %v1372 = vunpack.c.l.b16 %v377
  %v1373 = vunpack.c.h.b16 %v377
  %v1374 = vunpack.c.l.b16 %v378
  %v1375 = vunpack.c.h.b16 %v378
  %v1376 = vunpack.c.l.b16 %v379
  %v1377 = vunpack.c.h.b16 %v379
  %v1378 = vunpack.c.l.b16 %v380
  %v1379 = vunpack.c.h.b16 %v380
  %v1380 = vunpack.c.l.b16 %v381
  %v1381 = vunpack.c.h.b16 %v381
  %v1382 = vunpack.c.l.b16 %v382
  %v1383 = vunpack.c.h.b16 %v382
  %v1384 = vunpack.c.l.b16 %v383
  %v1385 = vunpack.c.h.b16 %v383
  %v1386 = vunpack.c.l.b16 %v384
  %v1387 = vunpack.c.l.b16 %v385
  %v1388 = vunpack.c.h.b16 %v385
  %v1389 = vunpack.c.l.b16 %v386
  %v1390 = vunpack.c.h.b16 %v386
  %v1391 = vunpack.c.l.b16 %v387
  %v1392 = vunpack.c.h.b16 %v387
  %v1393 = vunpack.c.l.b16 %v388
  %v1394 = vunpack.c.h.b16 %v388
  %v1395 = vunpack.c.l.b16 %v389
  %v1396 = vunpack.c.h.b16 %v389
  %v1397 = vunpack.c.l.b16 %v390
  %v1398 = vunpack.c.h.b16 %v390
  %v1399 = vunpack.c.l.b16 %v391
  %v1400 = vunpack.c.h.b16 %v391
  %v1401 = vunpack.c.l.b16 %v392
  %v1402 = vunpack.c.h.b16 %v392
  %v1403 = vunpack.c.l.b16 %v393
  %v1404 = vunpack.c.h.b16 %v393
  %v1405 = vunpack.c.l.b16 %v394
  %v1406 = vunpack.c.h.b16 %v394
  %v1407 = vunpack.c.l.b16 %v395
  %v1408 = vunpack.c.l.b16 %v396
  %v1409 = vunpack.c.h.b16 %v396
  %v1410 = vunpack.c.l.b16 %v397
  %v1411 = vunpack.c.h.b16 %v397
  %v1412 = vunpack.c.l.b16 %v398
  %v1413 = vunpack.c.h.b16 %v398
  %v1414 = vunpack.c.l.b16 %v399
  %v1415 = vunpack.c.h.b16 %v399
  %v1416 = vunpack.c.l.b16 %v400
  %v1417 = vunpack.c.h.b16 %v400
  %v1418 = vunpack.c.l.b16 %v401
  %v1419 = vunpack.c.h.b16 %v401
  %v1420 = vunpack.c.l.b16 %v402
  %v1421 = vunpack.c.h.b16 %v402
  %v1422 = vunpack.c.l.b16 %v403
  %v1423 = vunpack.c.h.b16 %v403
  %v1424 = vunpack.c.l.b16 %v404
  %v1425 = vunpack.c.h.b16 %v404
  %v1426 = vunpack.c.l.b16 %v405
  %v1427 = vunpack.c.h.b16 %v405
  %v1428 = vunpack.c.l.b16 %v406
  %v1429 = vunpack.c.l.b16 %v407
  %v1430 = vunpack.c.h.b16 %v407
  %v1431 = vunpack.c.l.b16 %v408
  %v1432 = vunpack.c.h.b16 %v408
  %v1433 = vunpack.c.l.b16 %v409
  %v1434 = vunpack.c.h.b16 %v409
  %v1435 = vunpack.c.l.b16 %v410
  %v1436 = vunpack.c.h.b16 %v410
  %v1437 = vunpack.c.l.b16 %v411
  %v1438 = vunpack.c.h.b16 %v411
  %v1439 = vunpack.c.l.b16 %v412
  %v1440 = vunpack.c.h.b16 %v412
  %v1441 = vunpack.c.l.b16 %v413
  %v1442 = vunpack.c.h.b16 %v413
  %v1443 = vunpack.c.l.b16 %v414
  %v1444 = vunpack.c.h.b16 %v414
  %v1445 = vunpack.c.l.b16 %v415
  %v1446 = vunpack.c.h.b16 %v415
  %v1447 = vunpack.c.l.b16 %v416
  %v1448 = vunpack.c.h.b16 %v416
  %v1449 = vunpack.c.l.b16 %v417
  %v1450 = vunpack.c.l.b16 %v418
  %v1451 = vunpack.c.h.b16 %v418
  %v1452 = vunpack.c.l.b16 %v419
  %v1453 = vunpack.c.h.b16 %v419
  %v1454 = vunpack.c.l.b16 %v420
  %v1455 = vunpack.c.h.b16 %v420
  %v1456 = vunpack.c.l.b16 %v421
  %v1457 = vunpack.c.h.b16 %v421
  %v1458 = vunpack.c.l.b16 %v422
  %v1459 = vunpack.c.h.b16 %v422
  %v1460 = vunpack.c.l.b16 %v423
  %v1461 = vunpack.c.h.b16 %v423
  %v1462 = vunpack.c.l.b16 %v424
  %v1463 = vunpack.c.h.b16 %v424
  %v1464 = vunpack.c.l.b16 %v425
  %v1465 = vunpack.c.h.b16 %v425
  %v1466 = vunpack.c.l.b16 %v426
  %v1467 = vunpack.c.h.b16 %v426
  %v1468 = vunpack.c.l.b16 %v427
  %v1469 = vunpack.c.h.b16 %v427
  %v1470 = vunpack.c.l.b16 %v428
  %v1471 = vunpack.c.l.b16 %v429
  %v1472 = vunpack.c.h.b16 %v429
  %v1473 = vunpack.c.l.b16 %v430
  %v1474 = vunpack.c.h.b16 %v430
  %v1475 = vunpack.c.l.b16 %v431
  %v1476 = vunpack.c.h.b16 %v431
  %v1477 = vunpack.c.l.b16 %v432
  %v1478 = vunpack.c.h.b16 %v432
  %v1479 = vunpack.c.l.b16 %v433
  %v1480 = vunpack.c.h.b16 %v433
  %v1481 = vunpack.c.l.b16 %v434
  %v1482 = vunpack.c.h.b16 %v434
  %v1483 = vunpack.c.l.b16 %v435
  %v1484 = vunpack.c.h.b16 %v435
  %v1485 = vunpack.c.l.b16 %v436
  %v1486 = vunpack.c.h.b16 %v436
  %v1487 = vunpack.c.l.b16 %v437
  %v1488 = vunpack.c.h.b16 %v437
  %v1489 = vunpack.c.l.b16 %v438
  %v1490 = vunpack.c.h.b16 %v438
  %v1491 = vunpack.c.l.b16 %v439
  %v1492 = vunpack.c.l.b16 %v440
  %v1493 = vunpack.c.h.b16 %v440
  %v1494 = vunpack.c.l.b16 %v441
  %v1495 = vunpack.c.h.b16 %v441
  %v1496 = vunpack.c.l.b16 %v442
  %v1497 = vunpack.c.h.b16 %v442
  %v1498 = vunpack.c.l.b16 %v443
  %v1499 = vunpack.c.h.b16 %v443
  %v1500 = vunpack.c.l.b16 %v444
  %v1501 = vunpack.c.h.b16 %v444
  %v1502 = vunpack.c.l.b16 %v445
  %v1503 = vunpack.c.h.b16 %v445
  %v1504 = vunpack.c.l.b16 %v446
  %v1505 = vunpack.c.h.b16 %v446
  %v1506 = vunpack.c.l.b16 %v447
  %v1507 = vunpack.c.h.b16 %v447
  %v1508 = vunpack.c.l.b16 %v448
  %v1509 = vunpack.c.h.b16 %v448
  %v1510 = vunpack.c.l.b16 %v449
  %v1511 = vunpack.c.h.b16 %v449
  %v1512 = vunpack.c.l.b16 %v450
  %v1513 = vunpack.c.l.b16 %v451
  %v1514 = vunpack.c.h.b16 %v451
  %v1515 = vunpack.c.l.b16 %v452
  %v1516 = vunpack.c.h.b16 %v452
  %v1517 = vunpack.c.l.b16 %v453
  %v1518 = vunpack.c.h.b16 %v453
  %v1519 = vunpack.c.l.b16 %v454
  %v1520 = vunpack.c.h.b16 %v454
  %v1521 = vunpack.c.l.b16 %v455
  %v1522 = vunpack.c.h.b16 %v455
  %v1523 = vunpack.c.l.b16 %v456
  %v1524 = vunpack.c.h.b16 %v456
  %v1525 = vunpack.c.l.b16 %v457
  %v1526 = vunpack.c.h.b16 %v457
  %v1527 = vunpack.c.l.b16 %v458
  %v1528 = vunpack.c.h.b16 %v458
  %v1529 = vunpack.c.l.b16 %v459
  %v1530 = vunpack.c.h.b16 %v459
  %v1531 = vunpack.c.l.b16 %v460
  %v1532 = vunpack.c.h.b16 %v460
  %v1533 = vunpack.c.l.b16 %v461
  %v1534 = vpack.c.b16 %v883, %v862
  %v1535 = vpack.c.b16 %v884, %v863
  %v1536 = vpack.c.b16 %v885, %v864
  %v1537 = vpack.c.b16 %v886, %v865
  %v1538 = vpack.c.b16 %v887, %v866
  %v1539 = vpack.c.b16 %v888, %v867
  %v1540 = vpack.c.b16 %v889, %v868
  %v1541 = vpack.c.b16 %v890, %v869
  %v1542 = vpack.c.b16 %v891, %v870
  %v1543 = vpack.c.b16 %v892, %v871
  %v1544 = vpack.c.b16 %v893, %v872
  %v1545 = vpack.c.b16 %v894, %v873
  %v1546 = vpack.c.b16 %v895, %v874
  %v1547 = vpack.c.b16 %v896, %v875
  %v1548 = vpack.c.b16 %v897, %v876
  %v1549 = vpack.c.b16 %v898, %v877
  %v1550 = vpack.c.b16 %v899, %v878
  %v1551 = vpack.c.b16 %v900, %v879
  %v1552 = vpack.c.b16 %v901, %v880
  %v1553 = vpack.c.b16 %v902, %v881
  %v1554 = vpack.c.b16 %v903, %v882
  %v1555 = vpack.c.b16 %v925, %v904
  %v1556 = vpack.c.b16 %v926, %v905
  %v1557 = vpack.c.b16 %v927, %v906
  %v1558 = vpack.c.b16 %v928, %v907
  %v1559 = vpack.c.b16 %v929, %v908
  %v1560 = vpack.c.b16 %v930, %v909
  %v1561 = vpack.c.b16 %v931, %v910
  %v1562 = vpack.c.b16 %v932, %v911
  %v1563 = vpack.c.b16 %v933, %v912
  %v1564 = vpack.c.b16 %v934, %v913
  %v1565 = vpack.c.b16 %v935, %v914
  %v1566 = vpack.c.b16 %v936, %v915
  %v1567 = vpack.c.b16 %v937, %v916
  %v1568 = vpack.c.b16 %v938, %v917
  %v1569 = vpack.c.b16 %v939, %v918
  %v1570 = vpack.c.b16 %v940, %v919
  %v1571 = vpack.c.b16 %v941, %v920
  %v1572 = vpack.c.b16 %v942, %v921
  %v1573 = vpack.c.b16 %v943, %v922
  %v1574 = vpack.c.b16 %v944, %v923
  %v1575 = vpack.c.b16 %v945, %v924
  %v1576 = vpack.c.b16 %v967, %v946
  %v1577 = vpack.c.b16 %v968, %v947
  %v1578 = vpack.c.b16 %v969, %v948
  %v1579 = vpack.c.b16 %v970, %v949
  %v1580 = vpack.c.b16 %v971, %v950
  %v1581 = vpack.c.b16 %v972, %v951
  %v1582 = vpack.c.b16 %v973, %v952
  %v1583 = vpack.c.b16 %v974, %v953
  %v1584 = vpack.c.b16 %v975, %v954
  %v1585 = vpack.c.b16 %v976, %v955
  %v1586 = vpack.c.b16 %v977, %v956
  %v1587 = vpack.c.b16 %v978, %v957
  %v1588 = vpack.c.b16 %v979, %v958
  %v1589 = vpack.c.b16 %v980, %v959
  %v1590 = vpack.c.b16 %v981, %v960
  %v1591 = vpack.c.b16 %v982, %v961
  %v1592 = vpack.c.b16 %v983, %v962
  %v1593 = vpack.c.b16 %v984, %v963
  %v1594 = vpack.c.b16 %v985, %v964
  %v1595 = vpack.c.b16 %v986, %v965
  %v1596 = vpack.c.b16 %v987, %v966
  %v1597 = vpack.c.b16 %v1009, %v988
  %v1598 = vpack.c.b16 %v1010, %v989
  %v1599 = vpack.c.b16 %v1011, %v990
  %v1600 = vpack.c.b16 %v1012, %v991
  %v1601 = vpack.c.b16 %v1013, %v992
  %v1602 = vpack.c.b16 %v1014, %v993
  %v1603 = vpack.c.b16 %v1015, %v994
  %v1604 = vpack.c.b16 %v1016, %v995
  %v1605 = vpack.c.b16 %v1017, %v996
  %v1606 = vpack.c.b16 %v1018, %v997
  %v1607 = vpack.c.b16 %v1019, %v998
  %v1608 = vpack.c.b16 %v1020, %v999
  %v1609 = vpack.c.b16 %v1021, %v1000
  %v1610 = vpack.c.b16 %v1022, %v1001
  %v1611 = vpack.c.b16 %v1023, %v1002
  %v1612 = vpack.c.b16 %v1024, %v1003
  %v1613 = vpack.c.b16 %v1025, %v1004
  %v1614 = vpack.c.b16 %v1026, %v1005
  %v1615 = vpack.c.b16 %v1027, %v1006
  %v1616 = vpack.c.b16 %v1028, %v1007
  %v1617 = vpack.c.b16 %v1029, %v1008
  %v1618 = vpack.c.b16 %v1051, %v1030
  %v1619 = vpack.c.b16 %v1052, %v1031
  %v1620 = vpack.c.b16 %v1053, %v1032
  %v1621 = vpack.c.b16 %v1054, %v1033
  %v1622 = vpack.c.b16 %v1055, %v1034
  %v1623 = vpack.c.b16 %v1056, %v1035
  %v1624 = vpack.c.b16 %v1057, %v1036
  %v1625 = vpack.c.b16 %v1058, %v1037
  %v1626 = vpack.c.b16 %v1059, %v1038
  %v1627 = vpack.c.b16 %v1060, %v1039
  %v1628 = vpack.c.b16 %v1061, %v1040
  %v1629 = vpack.c.b16 %v1062, %v1041
  %v1630 = vpack.c.b16 %v1063, %v1042
  %v1631 = vpack.c.b16 %v1064, %v1043
  %v1632 = vpack.c.b16 %v1065, %v1044
  %v1633 = vpack.c.b16 %v1066, %v1045
  %v1634 = vpack.c.b16 %v1067, %v1046
  %v1635 = vpack.c.b16 %v1068, %v1047
  %v1636 = vpack.c.b16 %v1069, %v1048
  %v1637 = vpack.c.b16 %v1070, %v1049
  %v1638 = vpack.c.b16 %v1071, %v1050
  %v1639 = vpack.c.b16 %v1093, %v1072
  %v1640 = vpack.c.b16 %v1094, %v1073
  %v1641 = vpack.c.b16 %v1095, %v1074
  %v1642 = vpack.c.b16 %v1096, %v1075
  %v1643 = vpack.c.b16 %v1097, %v1076
  %v1644 = vpack.c.b16 %v1098, %v1077
  %v1645 = vpack.c.b16 %v1099, %v1078
  %v1646 = vpack.c.b16 %v1100, %v1079
  %v1647 = vpack.c.b16 %v1101, %v1080
  %v1648 = vpack.c.b16 %v1102, %v1081
  %v1649 = vpack.c.b16 %v1103, %v1082
  %v1650 = vpack.c.b16 %v1104, %v1083
  %v1651 = vpack.c.b16 %v1105, %v1084
  %v1652 = vpack.c.b16 %v1106, %v1085
  %v1653 = vpack.c.b16 %v1107, %v1086
  %v1654 = vpack.c.b16 %v1108, %v1087
  %v1655 = vpack.c.b16 %v1109, %v1088
  %v1656 = vpack.c.b16 %v1110, %v1089
  %v1657 = vpack.c.b16 %v1111, %v1090
  %v1658 = vpack.c.b16 %v1112, %v1091
  %v1659 = vpack.c.b16 %v1113, %v1092
  %v1660 = vpack.c.b16 %v1135, %v1114
  %v1661 = vpack.c.b16 %v1136, %v1115
  %v1662 = vpack.c.b16 %v1137, %v1116
  %v1663 = vpack.c.b16 %v1138, %v1117
  %v1664 = vpack.c.b16 %v1139, %v1118
  %v1665 = vpack.c.b16 %v1140, %v1119
  %v1666 = vpack.c.b16 %v1141, %v1120
  %v1667 = vpack.c.b16 %v1142, %v1121
  %v1668 = vpack.c.b16 %v1143, %v1122
  %v1669 = vpack.c.b16 %v1144, %v1123
  %v1670 = vpack.c.b16 %v1145, %v1124
  %v1671 = vpack.c.b16 %v1146, %v1125
  %v1672 = vpack.c.b16 %v1147, %v1126
  %v1673 = vpack.c.b16 %v1148, %v1127
  %v1674 = vpack.c.b16 %v1149, %v1128
  %v1675 = vpack.c.b16 %v1150, %v1129
  %v1676 = vpack.c.b16 %v1151, %v1130
  %v1677 = vpack.c.b16 %v1152, %v1131
  %v1678 = vpack.c.b16 %v1153, %v1132
  %v1679 = vpack.c.b16 %v1154, %v1133
  %v1680 = vpack.c.b16 %v1155, %v1134
  %v1681 = vpack.c.b16 %v1177, %v1156
  %v1682 = vpack.c.b16 %v1178, %v1157
  %v1683 = vpack.c.b16 %v1179, %v1158
  %v1684 = vpack.c.b16 %v1180, %v1159
  %v1685 = vpack.c.b16 %v1181, %v1160
  %v1686 = vpack.c.b16 %v1182, %v1161
  %v1687 = vpack.c.b16 %v1183, %v1162
  %v1688 = vpack.c.b16 %v1184, %v1163
  %v1689 = vpack.c.b16 %v1185, %v1164
  %v1690 = vpack.c.b16 %v1186, %v1165
  %v1691 = vpack.c.b16 %v1187, %v1166
  %v1692 = vpack.c.b16 %v1188, %v1167
  %v1693 = vpack.c.b16 %v1189, %v1168
  %v1694 = vpack.c.b16 %v1190, %v1169
  %v1695 = vpack.c.b16 %v1191, %v1170
  %v1696 = vpack.c.b16 %v1192, %v1171
  %v1697 = vpack.c.b16 %v1193, %v1172
  %v1698 = vpack.c.b16 %v1194, %v1173
  %v1699 = vpack.c.b16 %v1195, %v1174
  %v1700 = vpack.c.b16 %v1196, %v1175
  %v1701 = vpack.c.b16 %v1197, %v1176
  %v1702 = vpack.c.b16 %v1219, %v1198
  %v1703 = vpack.c.b16 %v1220, %v1199
  %v1704 = vpack.c.b16 %v1221, %v1200
  %v1705 = vpack.c.b16 %v1222, %v1201
  %v1706 = vpack.c.b16 %v1223, %v1202
  %v1707 = vpack.c.b16 %v1224, %v1203
  %v1708 = vpack.c.b16 %v1225, %v1204
  %v1709 = vpack.c.b16 %v1226, %v1205
  %v1710 = vpack.c.b16 %v1227, %v1206
  %v1711 = vpack.c.b16 %v1228, %v1207
  %v1712 = vpack.c.b16 %v1229, %v1208
  %v1713 = vpack.c.b16 %v1230, %v1209
  %v1714 = vpack.c.b16 %v1231, %v1210
  %v1715 = vpack.c.b16 %v1232, %v1211
  %v1716 = vpack.c.b16 %v1233, %v1212
  %v1717 = vpack.c.b16 %v1234, %v1213
  %v1718 = vpack.c.b16 %v1235, %v1214
  %v1719 = vpack.c.b16 %v1236, %v1215
  %v1720 = vpack.c.b16 %v1237, %v1216
  %v1721 = vpack.c.b16 %v1238, %v1217
  %v1722 = vpack.c.b16 %v1239, %v1218
  %v1723 = vpack.c.b16 %v1261, %v1240
  %v1724 = vpack.c.b16 %v1262, %v1241
  %v1725 = vpack.c.b16 %v1263, %v1242
  %v1726 = vpack.c.b16 %v1264, %v1243
  %v1727 = vpack.c.b16 %v1265, %v1244
  %v1728 = vpack.c.b16 %v1266, %v1245
  %v1729 = vpack.c.b16 %v1267, %v1246
  %v1730 = vpack.c.b16 %v1268, %v1247
  %v1731 = vpack.c.b16 %v1269, %v1248
  %v1732 = vpack.c.b16 %v1270, %v1249
  %v1733 = vpack.c.b16 %v1271, %v1250
  %v1734 = vpack.c.b16 %v1272, %v1251
  %v1735 = vpack.c.b16 %v1273, %v1252
  %v1736 = vpack.c.b16 %v1274, %v1253
  %v1737 = vpack.c.b16 %v1275, %v1254
  %v1738 = vpack.c.b16 %v1276, %v1255
  %v1739 = vpack.c.b16 %v1277, %v1256
  %v1740 = vpack.c.b16 %v1278, %v1257
  %v1741 = vpack.c.b16 %v1279, %v1258
  %v1742 = vpack.c.b16 %v1280, %v1259
  %v1743 = vpack.c.b16 %v1281, %v1260
  %v1744 = vpack.c.b16 %v1303, %v1282
  %v1745 = vpack.c.b16 %v1304, %v1283
  %v1746 = vpack.c.b16 %v1305, %v1284
  %v1747 = vpack.c.b16 %v1306, %v1285
  %v1748 = vpack.c.b16 %v1307, %v1286
  %v1749 = vpack.c.b16 %v1308, %v1287
  %v1750 = vpack.c.b16 %v1309, %v1288
  %v1751 = vpack.c.b16 %v1310, %v1289
  %v1752 = vpack.c.b16 %v1311, %v1290
  %v1753 = vpack.c.b16 %v1312, %v1291
  %v1754 = vpack.c.b16 %v1313, %v1292
  %v1755 = vpack.c.b16 %v1314, %v1293
  %v1756 = vpack.c.b16 %v1315, %v1294
  %v1757 = vpack.c.b16 %v1316, %v1295
  %v1758 = vpack.c.b16 %v1317, %v1296
  %v1759 = vpack.c.b16 %v1318, %v1297
  %v1760 = vpack.c.b16 %v1319, %v1298
  %v1761 = vpack.c.b16 %v1320, %v1299
  %v1762 = vpack.c.b16 %v1321, %v1300
  %v1763 = vpack.c.b16 %v1322, %v1301
  %v1764 = vpack.c.b16 %v1323, %v1302
  %v1765 = vpack.c.b16 %v1345, %v1324
  %v1766 = vpack.c.b16 %v1346, %v1325
  %v1767 = vpack.c.b16 %v1347, %v1326
  %v1768 = vpack.c.b16 %v1348, %v1327
  %v1769 = vpack.c.b16 %v1349, %v1328
  %v1770 = vpack.c.b16 %v1350, %v1329
  %v1771 = vpack.c.b16 %v1351, %v1330
  %v1772 = vpack.c.b16 %v1352, %v1331
  %v1773 = vpack.c.b16 %v1353, %v1332
  %v1774 = vpack.c.b16 %v1354, %v1333
  %v1775 = vpack.c.b16 %v1355, %v1334
  %v1776 = vpack.c.b16 %v1356, %v1335
  %v1777 = vpack.c.b16 %v1357, %v1336
  %v1778 = vpack.c.b16 %v1358, %v1337
  %v1779 = vpack.c.b16 %v1359, %v1338
  %v1780 = vpack.c.b16 %v1360, %v1339
  %v1781 = vpack.c.b16 %v1361, %v1340
  %v1782 = vpack.c.b16 %v1362, %v1341
  %v1783 = vpack.c.b16 %v1363, %v1342
  %v1784 = vpack.c.b16 %v1364, %v1343
  %v1785 = vpack.c.b16 %v1365, %v1344
  %v1786 = vpack.c.b16 %v1387, %v1366
  %v1787 = vpack.c.b16 %v1388, %v1367
  %v1788 = vpack.c.b16 %v1389, %v1368
  %v1789 = vpack.c.b16 %v1390, %v1369
  %v1790 = vpack.c.b16 %v1391, %v1370
  %v1791 = vpack.c.b16 %v1392, %v1371
  %v1792 = vpack.c.b16 %v1393, %v1372
  %v1793 = vpack.c.b16 %v1394, %v1373
  %v1794 = vpack.c.b16 %v1395, %v1374
  %v1795 = vpack.c.b16 %v1396, %v1375
  %v1796 = vpack.c.b16 %v1397, %v1376
  %v1797 = vpack.c.b16 %v1398, %v1377
  %v1798 = vpack.c.b16 %v1399, %v1378
  %v1799 = vpack.c.b16 %v1400, %v1379
  %v1800 = vpack.c.b16 %v1401, %v1380
  %v1801 = vpack.c.b16 %v1402, %v1381
  %v1802 = vpack.c.b16 %v1403, %v1382
  %v1803 = vpack.c.b16 %v1404, %v1383
  %v1804 = vpack.c.b16 %v1405, %v1384
  %v1805 = vpack.c.b16 %v1406, %v1385
  %v1806 = vpack.c.b16 %v1407, %v1386
  %v1807 = vpack.c.b16 %v1429, %v1408
  %v1808 = vpack.c.b16 %v1430, %v1409
  %v1809 = vpack.c.b16 %v1431, %v1410
  %v1810 = vpack.c.b16 %v1432, %v1411
  %v1811 = vpack.c.b16 %v1433, %v1412
  %v1812 = vpack.c.b16 %v1434, %v1413
  %v1813 = vpack.c.b16 %v1435, %v1414
  %v1814 = vpack.c.b16 %v1436, %v1415
  %v1815 = vpack.c.b16 %v1437, %v1416
  %v1816 = vpack.c.b16 %v1438, %v1417
  %v1817 = vpack.c.b16 %v1439, %v1418
  %v1818 = vpack.c.b16 %v1440, %v1419
  %v1819 = vpack.c.b16 %v1441, %v1420
  %v1820 = vpack.c.b16 %v1442, %v1421
  %v1821 = vpack.c.b16 %v1443, %v1422
  %v1822 = vpack.c.b16 %v1444, %v1423
  %v1823 = vpack.c.b16 %v1445, %v1424
  %v1824 = vpack.c.b16 %v1446, %v1425
  %v1825 = vpack.c.b16 %v1447, %v1426
  %v1826 = vpack.c.b16 %v1448, %v1427
  %v1827 = vpack.c.b16 %v1449, %v1428
  %v1828 = vpack.c.b16 %v1471, %v1450
  %v1829 = vpack.c.b16 %v1472, %v1451
  %v1830 = vpack.c.b16 %v1473, %v1452
  %v1831 = vpack.c.b16 %v1474, %v1453
  %v1832 = vpack.c.b16 %v1475, %v1454
  %v1833 = vpack.c.b16 %v1476, %v1455
  %v1834 = vpack.c.b16 %v1477, %v1456
  %v1835 = vpack.c.b16 %v1478, %v1457
  %v1836 = vpack.c.b16 %v1479, %v1458
  %v1837 = vpack.c.b16 %v1480, %v1459
  %v1838 = vpack.c.b16 %v1481, %v1460
  %v1839 = vpack.c.b16 %v1482, %v1461
  %v1840 = vpack.c.b16 %v1483, %v1462
  %v1841 = vpack.c.b16 %v1484, %v1463
  %v1842 = vpack.c.b16 %v1485, %v1464
  %v1843 = vpack.c.b16 %v1486, %v1465
  %v1844 = vpack.c.b16 %v1487, %v1466
  %v1845 = vpack.c.b16 %v1488, %v1467
  %v1846 = vpack.c.b16 %v1489, %v1468
  %v1847 = vpack.c.b16 %v1490, %v1469
  %v1848 = vpack.c.b16 %v1491, %v1470
  %v1849 = vpack.c.b16 %v1513, %v1492
  %v1850 = vpack.c.b16 %v1514, %v1493
  %v1851 = vpack.c.b16 %v1515, %v1494
  %v1852 = vpack.c.b16 %v1516, %v1495
  %v1853 = vpack.c.b16 %v1517, %v1496
  %v1854 = vpack.c.b16 %v1518, %v1497
  %v1855 = vpack.c.b16 %v1519, %v1498
  %v1856 = vpack.c.b16 %v1520, %v1499
  %v1857 = vpack.c.b16 %v1521, %v1500
  %v1858 = vpack.c.b16 %v1522, %v1501
  %v1859 = vpack.c.b16 %v1523, %v1502
  %v1860 = vpack.c.b16 %v1524, %v1503
  %v1861 = vpack.c.b16 %v1525, %v1504
  %v1862 = vpack.c.b16 %v1526, %v1505
  %v1863 = vpack.c.b16 %v1527, %v1506
  %v1864 = vpack.c.b16 %v1528, %v1507
  %v1865 = vpack.c.b16 %v1529, %v1508
  %v1866 = vpack.c.b16 %v1530, %v1509
  %v1867 = vpack.c.b16 %v1531, %v1510
  %v1868 = vpack.c.b16 %v1532, %v1511
  %v1869 = vpack.c.b16 %v1533, %v1512
  %2206 = vmatpush.bf16.msra.mxu0 %v1681
  %2207 = vmatpush.bf16.msra.mxu0 %v1660
  %2208 = vmatpush.bf16.msra.mxu0 %v1639
  %2209 = vmatpush.bf16.msra.mxu0 %v1618
  %2210 = vmatpush.bf16.msra.mxu0 %v1597
  %2211 = vmatpush.bf16.msra.mxu0 %v1576
  %2212 = vmatpush.bf16.msra.mxu0 %v1555
  %2213 = vmatpush.bf16.msra.mxu0 %v1534
  %2214 = vmatmul.bf16.gmra.mxu0 %v108
  %v2215 = vpop.f32.mrf.mxu0
  %v2216 = vadd.f32 %v468, %v2215
  %v2217 = vpop.f32.mrf.mxu0
  %2218 = vdwg.mxu0
  %2219 = vmatpush.bf16.msra.mxu0 %v1849
  %2220 = vmatpush.bf16.msra.mxu0 %v1828
  %2221 = vmatpush.bf16.msra.mxu0 %v1807
  %2222 = vmatpush.bf16.msra.mxu0 %v1786
  %2223 = vmatpush.bf16.msra.mxu0 %v1765
  %2224 = vmatpush.bf16.msra.mxu0 %v1744
  %2225 = vmatpush.bf16.msra.mxu0 %v1723
  %2226 = vmatpush.bf16.msra.mxu0 %v1702
  %2227 = vmatmul.bf16.gmra.mxu0 %v109
  %v2228 = vpop.f32.mrf.mxu0
  %v2229 = vadd.f32 %v2216, %v2228
  %v2230 = vpop.f32.mrf.mxu0
  %2231 = vdwg.mxu0
  %2232 = vmatpush.bf16.msra.mxu0 %v1682
  %2233 = vmatpush.bf16.msra.mxu0 %v1661
  %2234 = vmatpush.bf16.msra.mxu0 %v1640
  %2235 = vmatpush.bf16.msra.mxu0 %v1619
  %2236 = vmatpush.bf16.msra.mxu0 %v1598
  %2237 = vmatpush.bf16.msra.mxu0 %v1577
  %2238 = vmatpush.bf16.msra.mxu0 %v1556
  %2239 = vmatpush.bf16.msra.mxu0 %v1535
  %2240 = vmatmul.bf16.gmra.mxu0 %v108
  %v2241 = vpop.f32.mrf.mxu0
  %v2242 = vadd.f32 %v469, %v2241
  %v2243 = vpop.f32.mrf.mxu0
  %2244 = vdwg.mxu0
  %2245 = vmatpush.bf16.msra.mxu0 %v1850
  %2246 = vmatpush.bf16.msra.mxu0 %v1829
  %2247 = vmatpush.bf16.msra.mxu0 %v1808
  %2248 = vmatpush.bf16.msra.mxu0 %v1787
  %2249 = vmatpush.bf16.msra.mxu0 %v1766
  %2250 = vmatpush.bf16.msra.mxu0 %v1745
  %2251 = vmatpush.bf16.msra.mxu0 %v1724
  %2252 = vmatpush.bf16.msra.mxu0 %v1703
  %2253 = vmatmul.bf16.gmra.mxu0 %v109
  %v2254 = vpop.f32.mrf.mxu0
  %v2255 = vadd.f32 %v2242, %v2254
  %v2256 = vpop.f32.mrf.mxu0
  %2257 = vdwg.mxu0
  %2258 = vmatpush.bf16.msra.mxu0 %v1683
  %2259 = vmatpush.bf16.msra.mxu0 %v1662
  %2260 = vmatpush.bf16.msra.mxu0 %v1641
  %2261 = vmatpush.bf16.msra.mxu0 %v1620
  %2262 = vmatpush.bf16.msra.mxu0 %v1599
  %2263 = vmatpush.bf16.msra.mxu0 %v1578
  %2264 = vmatpush.bf16.msra.mxu0 %v1557
  %2265 = vmatpush.bf16.msra.mxu0 %v1536
  %2266 = vmatmul.bf16.gmra.mxu0 %v108
  %v2267 = vpop.f32.mrf.mxu0
  %v2268 = vadd.f32 %v470, %v2267
  %v2269 = vpop.f32.mrf.mxu0
  %2270 = vdwg.mxu0
  %2271 = vmatpush.bf16.msra.mxu0 %v1851
  %2272 = vmatpush.bf16.msra.mxu0 %v1830
  %2273 = vmatpush.bf16.msra.mxu0 %v1809
  %2274 = vmatpush.bf16.msra.mxu0 %v1788
  %2275 = vmatpush.bf16.msra.mxu0 %v1767
  %2276 = vmatpush.bf16.msra.mxu0 %v1746
  %2277 = vmatpush.bf16.msra.mxu0 %v1725
  %2278 = vmatpush.bf16.msra.mxu0 %v1704
  %2279 = vmatmul.bf16.gmra.mxu0 %v109
  %v2280 = vpop.f32.mrf.mxu0
  %v2281 = vadd.f32 %v2268, %v2280
  %v2282 = vpop.f32.mrf.mxu0
  %2283 = vdwg.mxu0
  %2284 = vmatpush.bf16.msra.mxu0 %v1684
  %2285 = vmatpush.bf16.msra.mxu0 %v1663
  %2286 = vmatpush.bf16.msra.mxu0 %v1642
  %2287 = vmatpush.bf16.msra.mxu0 %v1621
  %2288 = vmatpush.bf16.msra.mxu0 %v1600
  %2289 = vmatpush.bf16.msra.mxu0 %v1579
  %2290 = vmatpush.bf16.msra.mxu0 %v1558
  %2291 = vmatpush.bf16.msra.mxu0 %v1537
  %2292 = vmatmul.bf16.gmra.mxu0 %v108
  %v2293 = vpop.f32.mrf.mxu0
  %v2294 = vadd.f32 %v471, %v2293
  %v2295 = vpop.f32.mrf.mxu0
  %2296 = vdwg.mxu0
  %2297 = vmatpush.bf16.msra.mxu0 %v1852
  %2298 = vmatpush.bf16.msra.mxu0 %v1831
  %2299 = vmatpush.bf16.msra.mxu0 %v1810
  %2300 = vmatpush.bf16.msra.mxu0 %v1789
  %2301 = vmatpush.bf16.msra.mxu0 %v1768
  %2302 = vmatpush.bf16.msra.mxu0 %v1747
  %2303 = vmatpush.bf16.msra.mxu0 %v1726
  %2304 = vmatpush.bf16.msra.mxu0 %v1705
  %2305 = vmatmul.bf16.gmra.mxu0 %v109
  %v2306 = vpop.f32.mrf.mxu0
  %v2307 = vadd.f32 %v2294, %v2306
  %v2308 = vpop.f32.mrf.mxu0
  %2309 = vdwg.mxu0
  %2310 = vmatpush.bf16.msra.mxu0 %v1685
  %2311 = vmatpush.bf16.msra.mxu0 %v1664
  %2312 = vmatpush.bf16.msra.mxu0 %v1643
  %2313 = vmatpush.bf16.msra.mxu0 %v1622
  %2314 = vmatpush.bf16.msra.mxu0 %v1601
  %2315 = vmatpush.bf16.msra.mxu0 %v1580
  %2316 = vmatpush.bf16.msra.mxu0 %v1559
  %2317 = vmatpush.bf16.msra.mxu0 %v1538
  %2318 = vmatmul.bf16.gmra.mxu0 %v108
  %v2319 = vpop.f32.mrf.mxu0
  %v2320 = vadd.f32 %v472, %v2319
  %v2321 = vpop.f32.mrf.mxu0
  %2322 = vdwg.mxu0
  %2323 = vmatpush.bf16.msra.mxu0 %v1853
  %2324 = vmatpush.bf16.msra.mxu0 %v1832
  %2325 = vmatpush.bf16.msra.mxu0 %v1811
  %2326 = vmatpush.bf16.msra.mxu0 %v1790
  %2327 = vmatpush.bf16.msra.mxu0 %v1769
  %2328 = vmatpush.bf16.msra.mxu0 %v1748
  %2329 = vmatpush.bf16.msra.mxu0 %v1727
  %2330 = vmatpush.bf16.msra.mxu0 %v1706
  %2331 = vmatmul.bf16.gmra.mxu0 %v109
  %v2332 = vpop.f32.mrf.mxu0
  %v2333 = vadd.f32 %v2320, %v2332
  %v2334 = vpop.f32.mrf.mxu0
  %2335 = vdwg.mxu0
  %2336 = vmatpush.bf16.msra.mxu0 %v1686
  %2337 = vmatpush.bf16.msra.mxu0 %v1665
  %2338 = vmatpush.bf16.msra.mxu0 %v1644
  %2339 = vmatpush.bf16.msra.mxu0 %v1623
  %2340 = vmatpush.bf16.msra.mxu0 %v1602
  %2341 = vmatpush.bf16.msra.mxu0 %v1581
  %2342 = vmatpush.bf16.msra.mxu0 %v1560
  %2343 = vmatpush.bf16.msra.mxu0 %v1539
  %2344 = vmatmul.bf16.gmra.mxu0 %v108
  %v2345 = vpop.f32.mrf.mxu0
  %v2346 = vadd.f32 %v473, %v2345
  %v2347 = vpop.f32.mrf.mxu0
  %2348 = vdwg.mxu0
  %2349 = vmatpush.bf16.msra.mxu0 %v1854
  %2350 = vmatpush.bf16.msra.mxu0 %v1833
  %2351 = vmatpush.bf16.msra.mxu0 %v1812
  %2352 = vmatpush.bf16.msra.mxu0 %v1791
  %2353 = vmatpush.bf16.msra.mxu0 %v1770
  %2354 = vmatpush.bf16.msra.mxu0 %v1749
  %2355 = vmatpush.bf16.msra.mxu0 %v1728
  %2356 = vmatpush.bf16.msra.mxu0 %v1707
  %2357 = vmatmul.bf16.gmra.mxu0 %v109
  %v2358 = vpop.f32.mrf.mxu0
  %v2359 = vadd.f32 %v2346, %v2358
  %v2360 = vpop.f32.mrf.mxu0
  %2361 = vdwg.mxu0
  %2362 = vmatpush.bf16.msra.mxu0 %v1687
  %2363 = vmatpush.bf16.msra.mxu0 %v1666
  %2364 = vmatpush.bf16.msra.mxu0 %v1645
  %2365 = vmatpush.bf16.msra.mxu0 %v1624
  %2366 = vmatpush.bf16.msra.mxu0 %v1603
  %2367 = vmatpush.bf16.msra.mxu0 %v1582
  %2368 = vmatpush.bf16.msra.mxu0 %v1561
  %2369 = vmatpush.bf16.msra.mxu0 %v1540
  %2370 = vmatmul.bf16.gmra.mxu0 %v108
  %v2371 = vpop.f32.mrf.mxu0
  %v2372 = vadd.f32 %v474, %v2371
  %v2373 = vpop.f32.mrf.mxu0
  %2374 = vdwg.mxu0
  %2375 = vmatpush.bf16.msra.mxu0 %v1855
  %2376 = vmatpush.bf16.msra.mxu0 %v1834
  %2377 = vmatpush.bf16.msra.mxu0 %v1813
  %2378 = vmatpush.bf16.msra.mxu0 %v1792
  %2379 = vmatpush.bf16.msra.mxu0 %v1771
  %2380 = vmatpush.bf16.msra.mxu0 %v1750
  %2381 = vmatpush.bf16.msra.mxu0 %v1729
  %2382 = vmatpush.bf16.msra.mxu0 %v1708
  %2383 = vmatmul.bf16.gmra.mxu0 %v109
  %v2384 = vpop.f32.mrf.mxu0
  %v2385 = vadd.f32 %v2372, %v2384
  %v2386 = vpop.f32.mrf.mxu0
  %2387 = vdwg.mxu0
  %2388 = vmatpush.bf16.msra.mxu0 %v1688
  %2389 = vmatpush.bf16.msra.mxu0 %v1667
  %2390 = vmatpush.bf16.msra.mxu0 %v1646
  %2391 = vmatpush.bf16.msra.mxu0 %v1625
  %2392 = vmatpush.bf16.msra.mxu0 %v1604
  %2393 = vmatpush.bf16.msra.mxu0 %v1583
  %2394 = vmatpush.bf16.msra.mxu0 %v1562
  %2395 = vmatpush.bf16.msra.mxu0 %v1541
  %2396 = vmatmul.bf16.gmra.mxu0 %v108
  %v2397 = vpop.f32.mrf.mxu0
  %v2398 = vadd.f32 %v475, %v2397
  %v2399 = vpop.f32.mrf.mxu0
  %2400 = vdwg.mxu0
  %2401 = vmatpush.bf16.msra.mxu0 %v1856
  %2402 = vmatpush.bf16.msra.mxu0 %v1835
  %2403 = vmatpush.bf16.msra.mxu0 %v1814
  %2404 = vmatpush.bf16.msra.mxu0 %v1793
  %2405 = vmatpush.bf16.msra.mxu0 %v1772
  %2406 = vmatpush.bf16.msra.mxu0 %v1751
  %2407 = vmatpush.bf16.msra.mxu0 %v1730
  %2408 = vmatpush.bf16.msra.mxu0 %v1709
  %2409 = vmatmul.bf16.gmra.mxu0 %v109
  %v2410 = vpop.f32.mrf.mxu0
  %v2411 = vadd.f32 %v2398, %v2410
  %v2412 = vpop.f32.mrf.mxu0
  %2413 = vdwg.mxu0
  %2414 = vmatpush.bf16.msra.mxu0 %v1689
  %2415 = vmatpush.bf16.msra.mxu0 %v1668
  %2416 = vmatpush.bf16.msra.mxu0 %v1647
  %2417 = vmatpush.bf16.msra.mxu0 %v1626
  %2418 = vmatpush.bf16.msra.mxu0 %v1605
  %2419 = vmatpush.bf16.msra.mxu0 %v1584
  %2420 = vmatpush.bf16.msra.mxu0 %v1563
  %2421 = vmatpush.bf16.msra.mxu0 %v1542
  %2422 = vmatmul.bf16.gmra.mxu0 %v108
  %v2423 = vpop.f32.mrf.mxu0
  %v2424 = vadd.f32 %v476, %v2423
  %v2425 = vpop.f32.mrf.mxu0
  %2426 = vdwg.mxu0
  %2427 = vmatpush.bf16.msra.mxu0 %v1857
  %2428 = vmatpush.bf16.msra.mxu0 %v1836
  %2429 = vmatpush.bf16.msra.mxu0 %v1815
  %2430 = vmatpush.bf16.msra.mxu0 %v1794
  %2431 = vmatpush.bf16.msra.mxu0 %v1773
  %2432 = vmatpush.bf16.msra.mxu0 %v1752
  %2433 = vmatpush.bf16.msra.mxu0 %v1731
  %2434 = vmatpush.bf16.msra.mxu0 %v1710
  %2435 = vmatmul.bf16.gmra.mxu0 %v109
  %v2436 = vpop.f32.mrf.mxu0
  %v2437 = vadd.f32 %v2424, %v2436
  %v2438 = vpop.f32.mrf.mxu0
  %2439 = vdwg.mxu0
  %2440 = vmatpush.bf16.msra.mxu0 %v1690
  %2441 = vmatpush.bf16.msra.mxu0 %v1669
  %2442 = vmatpush.bf16.msra.mxu0 %v1648
  %2443 = vmatpush.bf16.msra.mxu0 %v1627
  %2444 = vmatpush.bf16.msra.mxu0 %v1606
  %2445 = vmatpush.bf16.msra.mxu0 %v1585
  %2446 = vmatpush.bf16.msra.mxu0 %v1564
  %2447 = vmatpush.bf16.msra.mxu0 %v1543
  %2448 = vmatmul.bf16.gmra.mxu0 %v108
  %v2449 = vpop.f32.mrf.mxu0
  %v2450 = vadd.f32 %v477, %v2449
  %v2451 = vpop.f32.mrf.mxu0
  %2452 = vdwg.mxu0
  %2453 = vmatpush.bf16.msra.mxu0 %v1858
  %2454 = vmatpush.bf16.msra.mxu0 %v1837
  %2455 = vmatpush.bf16.msra.mxu0 %v1816
  %2456 = vmatpush.bf16.msra.mxu0 %v1795
  %2457 = vmatpush.bf16.msra.mxu0 %v1774
  %2458 = vmatpush.bf16.msra.mxu0 %v1753
  %2459 = vmatpush.bf16.msra.mxu0 %v1732
  %2460 = vmatpush.bf16.msra.mxu0 %v1711
  %2461 = vmatmul.bf16.gmra.mxu0 %v109
  %v2462 = vpop.f32.mrf.mxu0
  %v2463 = vadd.f32 %v2450, %v2462
  %v2464 = vpop.f32.mrf.mxu0
  %2465 = vdwg.mxu0
  %2466 = vmatpush.bf16.msra.mxu0 %v1691
  %2467 = vmatpush.bf16.msra.mxu0 %v1670
  %2468 = vmatpush.bf16.msra.mxu0 %v1649
  %2469 = vmatpush.bf16.msra.mxu0 %v1628
  %2470 = vmatpush.bf16.msra.mxu0 %v1607
  %2471 = vmatpush.bf16.msra.mxu0 %v1586
  %2472 = vmatpush.bf16.msra.mxu0 %v1565
  %2473 = vmatpush.bf16.msra.mxu0 %v1544
  %2474 = vmatmul.bf16.gmra.mxu0 %v108
  %v2475 = vpop.f32.mrf.mxu0
  %v2476 = vadd.f32 %v478, %v2475
  %v2477 = vpop.f32.mrf.mxu0
  %2478 = vdwg.mxu0
  %2479 = vmatpush.bf16.msra.mxu0 %v1859
  %2480 = vmatpush.bf16.msra.mxu0 %v1838
  %2481 = vmatpush.bf16.msra.mxu0 %v1817
  %2482 = vmatpush.bf16.msra.mxu0 %v1796
  %2483 = vmatpush.bf16.msra.mxu0 %v1775
  %2484 = vmatpush.bf16.msra.mxu0 %v1754
  %2485 = vmatpush.bf16.msra.mxu0 %v1733
  %2486 = vmatpush.bf16.msra.mxu0 %v1712
  %2487 = vmatmul.bf16.gmra.mxu0 %v109
  %v2488 = vpop.f32.mrf.mxu0
  %v2489 = vadd.f32 %v2476, %v2488
  %v2490 = vpop.f32.mrf.mxu0
  %2491 = vdwg.mxu0
  %2492 = vmatpush.bf16.msra.mxu0 %v1692
  %2493 = vmatpush.bf16.msra.mxu0 %v1671
  %2494 = vmatpush.bf16.msra.mxu0 %v1650
  %2495 = vmatpush.bf16.msra.mxu0 %v1629
  %2496 = vmatpush.bf16.msra.mxu0 %v1608
  %2497 = vmatpush.bf16.msra.mxu0 %v1587
  %2498 = vmatpush.bf16.msra.mxu0 %v1566
  %2499 = vmatpush.bf16.msra.mxu0 %v1545
  %2500 = vmatmul.bf16.gmra.mxu0 %v108
  %v2501 = vpop.f32.mrf.mxu0
  %v2502 = vadd.f32 %v479, %v2501
  %v2503 = vpop.f32.mrf.mxu0
  %2504 = vdwg.mxu0
  %2505 = vmatpush.bf16.msra.mxu0 %v1860
  %2506 = vmatpush.bf16.msra.mxu0 %v1839
  %2507 = vmatpush.bf16.msra.mxu0 %v1818
  %2508 = vmatpush.bf16.msra.mxu0 %v1797
  %2509 = vmatpush.bf16.msra.mxu0 %v1776
  %2510 = vmatpush.bf16.msra.mxu0 %v1755
  %2511 = vmatpush.bf16.msra.mxu0 %v1734
  %2512 = vmatpush.bf16.msra.mxu0 %v1713
  %2513 = vmatmul.bf16.gmra.mxu0 %v109
  %v2514 = vpop.f32.mrf.mxu0
  %v2515 = vadd.f32 %v2502, %v2514
  %v2516 = vpop.f32.mrf.mxu0
  %2517 = vdwg.mxu0
  %2518 = vmatpush.bf16.msra.mxu0 %v1693
  %2519 = vmatpush.bf16.msra.mxu0 %v1672
  %2520 = vmatpush.bf16.msra.mxu0 %v1651
  %2521 = vmatpush.bf16.msra.mxu0 %v1630
  %2522 = vmatpush.bf16.msra.mxu0 %v1609
  %2523 = vmatpush.bf16.msra.mxu0 %v1588
  %2524 = vmatpush.bf16.msra.mxu0 %v1567
  %2525 = vmatpush.bf16.msra.mxu0 %v1546
  %2526 = vmatmul.bf16.gmra.mxu0 %v108
  %v2527 = vpop.f32.mrf.mxu0
  %v2528 = vadd.f32 %v480, %v2527
  %v2529 = vpop.f32.mrf.mxu0
  %2530 = vdwg.mxu0
  %2531 = vmatpush.bf16.msra.mxu0 %v1861
  %2532 = vmatpush.bf16.msra.mxu0 %v1840
  %2533 = vmatpush.bf16.msra.mxu0 %v1819
  %2534 = vmatpush.bf16.msra.mxu0 %v1798
  %2535 = vmatpush.bf16.msra.mxu0 %v1777
  %2536 = vmatpush.bf16.msra.mxu0 %v1756
  %2537 = vmatpush.bf16.msra.mxu0 %v1735
  %2538 = vmatpush.bf16.msra.mxu0 %v1714
  %2539 = vmatmul.bf16.gmra.mxu0 %v109
  %v2540 = vpop.f32.mrf.mxu0
  %v2541 = vadd.f32 %v2528, %v2540
  %v2542 = vpop.f32.mrf.mxu0
  %2543 = vdwg.mxu0
  %2544 = vmatpush.bf16.msra.mxu0 %v1694
  %2545 = vmatpush.bf16.msra.mxu0 %v1673
  %2546 = vmatpush.bf16.msra.mxu0 %v1652
  %2547 = vmatpush.bf16.msra.mxu0 %v1631
  %2548 = vmatpush.bf16.msra.mxu0 %v1610
  %2549 = vmatpush.bf16.msra.mxu0 %v1589
  %2550 = vmatpush.bf16.msra.mxu0 %v1568
  %2551 = vmatpush.bf16.msra.mxu0 %v1547
  %2552 = vmatmul.bf16.gmra.mxu0 %v108
  %v2553 = vpop.f32.mrf.mxu0
  %v2554 = vadd.f32 %v481, %v2553
  %v2555 = vpop.f32.mrf.mxu0
  %2556 = vdwg.mxu0
  %2557 = vmatpush.bf16.msra.mxu0 %v1862
  %2558 = vmatpush.bf16.msra.mxu0 %v1841
  %2559 = vmatpush.bf16.msra.mxu0 %v1820
  %2560 = vmatpush.bf16.msra.mxu0 %v1799
  %2561 = vmatpush.bf16.msra.mxu0 %v1778
  %2562 = vmatpush.bf16.msra.mxu0 %v1757
  %2563 = vmatpush.bf16.msra.mxu0 %v1736
  %2564 = vmatpush.bf16.msra.mxu0 %v1715
  %2565 = vmatmul.bf16.gmra.mxu0 %v109
  %v2566 = vpop.f32.mrf.mxu0
  %v2567 = vadd.f32 %v2554, %v2566
  %v2568 = vpop.f32.mrf.mxu0
  %2569 = vdwg.mxu0
  %2570 = vmatpush.bf16.msra.mxu0 %v1695
  %2571 = vmatpush.bf16.msra.mxu0 %v1674
  %2572 = vmatpush.bf16.msra.mxu0 %v1653
  %2573 = vmatpush.bf16.msra.mxu0 %v1632
  %2574 = vmatpush.bf16.msra.mxu0 %v1611
  %2575 = vmatpush.bf16.msra.mxu0 %v1590
  %2576 = vmatpush.bf16.msra.mxu0 %v1569
  %2577 = vmatpush.bf16.msra.mxu0 %v1548
  %2578 = vmatmul.bf16.gmra.mxu0 %v108
  %v2579 = vpop.f32.mrf.mxu0
  %v2580 = vadd.f32 %v482, %v2579
  %v2581 = vpop.f32.mrf.mxu0
  %2582 = vdwg.mxu0
  %2583 = vmatpush.bf16.msra.mxu0 %v1863
  %2584 = vmatpush.bf16.msra.mxu0 %v1842
  %2585 = vmatpush.bf16.msra.mxu0 %v1821
  %2586 = vmatpush.bf16.msra.mxu0 %v1800
  %2587 = vmatpush.bf16.msra.mxu0 %v1779
  %2588 = vmatpush.bf16.msra.mxu0 %v1758
  %2589 = vmatpush.bf16.msra.mxu0 %v1737
  %2590 = vmatpush.bf16.msra.mxu0 %v1716
  %2591 = vmatmul.bf16.gmra.mxu0 %v109
  %v2592 = vpop.f32.mrf.mxu0
  %v2593 = vadd.f32 %v2580, %v2592
  %v2594 = vpop.f32.mrf.mxu0
  %2595 = vdwg.mxu0
  %2596 = vmatpush.bf16.msra.mxu0 %v1696
  %2597 = vmatpush.bf16.msra.mxu0 %v1675
  %2598 = vmatpush.bf16.msra.mxu0 %v1654
  %2599 = vmatpush.bf16.msra.mxu0 %v1633
  %2600 = vmatpush.bf16.msra.mxu0 %v1612
  %2601 = vmatpush.bf16.msra.mxu0 %v1591
  %2602 = vmatpush.bf16.msra.mxu0 %v1570
  %2603 = vmatpush.bf16.msra.mxu0 %v1549
  %2604 = vmatmul.bf16.gmra.mxu0 %v108
  %v2605 = vpop.f32.mrf.mxu0
  %v2606 = vadd.f32 %v483, %v2605
  %v2607 = vpop.f32.mrf.mxu0
  %2608 = vdwg.mxu0
  %2609 = vmatpush.bf16.msra.mxu0 %v1864
  %2610 = vmatpush.bf16.msra.mxu0 %v1843
  %2611 = vmatpush.bf16.msra.mxu0 %v1822
  %2612 = vmatpush.bf16.msra.mxu0 %v1801
  %2613 = vmatpush.bf16.msra.mxu0 %v1780
  %2614 = vmatpush.bf16.msra.mxu0 %v1759
  %2615 = vmatpush.bf16.msra.mxu0 %v1738
  %2616 = vmatpush.bf16.msra.mxu0 %v1717
  %2617 = vmatmul.bf16.gmra.mxu0 %v109
  %v2618 = vpop.f32.mrf.mxu0
  %v2619 = vadd.f32 %v2606, %v2618
  %v2620 = vpop.f32.mrf.mxu0
  %2621 = vdwg.mxu0
  %2622 = vmatpush.bf16.msra.mxu0 %v1697
  %2623 = vmatpush.bf16.msra.mxu0 %v1676
  %2624 = vmatpush.bf16.msra.mxu0 %v1655
  %2625 = vmatpush.bf16.msra.mxu0 %v1634
  %2626 = vmatpush.bf16.msra.mxu0 %v1613
  %2627 = vmatpush.bf16.msra.mxu0 %v1592
  %2628 = vmatpush.bf16.msra.mxu0 %v1571
  %2629 = vmatpush.bf16.msra.mxu0 %v1550
  %2630 = vmatmul.bf16.gmra.mxu0 %v108
  %v2631 = vpop.f32.mrf.mxu0
  %v2632 = vadd.f32 %v484, %v2631
  %v2633 = vpop.f32.mrf.mxu0
  %2634 = vdwg.mxu0
  %2635 = vmatpush.bf16.msra.mxu0 %v1865
  %2636 = vmatpush.bf16.msra.mxu0 %v1844
  %2637 = vmatpush.bf16.msra.mxu0 %v1823
  %2638 = vmatpush.bf16.msra.mxu0 %v1802
  %2639 = vmatpush.bf16.msra.mxu0 %v1781
  %2640 = vmatpush.bf16.msra.mxu0 %v1760
  %2641 = vmatpush.bf16.msra.mxu0 %v1739
  %2642 = vmatpush.bf16.msra.mxu0 %v1718
  %2643 = vmatmul.bf16.gmra.mxu0 %v109
  %v2644 = vpop.f32.mrf.mxu0
  %v2645 = vadd.f32 %v2632, %v2644
  %v2646 = vpop.f32.mrf.mxu0
  %2647 = vdwg.mxu0
  %2648 = vmatpush.bf16.msra.mxu0 %v1698
  %2649 = vmatpush.bf16.msra.mxu0 %v1677
  %2650 = vmatpush.bf16.msra.mxu0 %v1656
  %2651 = vmatpush.bf16.msra.mxu0 %v1635
  %2652 = vmatpush.bf16.msra.mxu0 %v1614
  %2653 = vmatpush.bf16.msra.mxu0 %v1593
  %2654 = vmatpush.bf16.msra.mxu0 %v1572
  %2655 = vmatpush.bf16.msra.mxu0 %v1551
  %2656 = vmatmul.bf16.gmra.mxu0 %v108
  %v2657 = vpop.f32.mrf.mxu0
  %v2658 = vadd.f32 %v485, %v2657
  %v2659 = vpop.f32.mrf.mxu0
  %2660 = vdwg.mxu0
  %2661 = vmatpush.bf16.msra.mxu0 %v1866
  %2662 = vmatpush.bf16.msra.mxu0 %v1845
  %2663 = vmatpush.bf16.msra.mxu0 %v1824
  %2664 = vmatpush.bf16.msra.mxu0 %v1803
  %2665 = vmatpush.bf16.msra.mxu0 %v1782
  %2666 = vmatpush.bf16.msra.mxu0 %v1761
  %2667 = vmatpush.bf16.msra.mxu0 %v1740
  %2668 = vmatpush.bf16.msra.mxu0 %v1719
  %2669 = vmatmul.bf16.gmra.mxu0 %v109
  %v2670 = vpop.f32.mrf.mxu0
  %v2671 = vadd.f32 %v2658, %v2670
  %v2672 = vpop.f32.mrf.mxu0
  %2673 = vdwg.mxu0
  %2674 = vmatpush.bf16.msra.mxu0 %v1699
  %2675 = vmatpush.bf16.msra.mxu0 %v1678
  %2676 = vmatpush.bf16.msra.mxu0 %v1657
  %2677 = vmatpush.bf16.msra.mxu0 %v1636
  %2678 = vmatpush.bf16.msra.mxu0 %v1615
  %2679 = vmatpush.bf16.msra.mxu0 %v1594
  %2680 = vmatpush.bf16.msra.mxu0 %v1573
  %2681 = vmatpush.bf16.msra.mxu0 %v1552
  %2682 = vmatmul.bf16.gmra.mxu0 %v108
  %v2683 = vpop.f32.mrf.mxu0
  %v2684 = vadd.f32 %v486, %v2683
  %v2685 = vpop.f32.mrf.mxu0
  %2686 = vdwg.mxu0
  %2687 = vmatpush.bf16.msra.mxu0 %v1867
  %2688 = vmatpush.bf16.msra.mxu0 %v1846
  %2689 = vmatpush.bf16.msra.mxu0 %v1825
  %2690 = vmatpush.bf16.msra.mxu0 %v1804
  %2691 = vmatpush.bf16.msra.mxu0 %v1783
  %2692 = vmatpush.bf16.msra.mxu0 %v1762
  %2693 = vmatpush.bf16.msra.mxu0 %v1741
  %2694 = vmatpush.bf16.msra.mxu0 %v1720
  %2695 = vmatmul.bf16.gmra.mxu0 %v109
  %v2696 = vpop.f32.mrf.mxu0
  %v2697 = vadd.f32 %v2684, %v2696
  %v2698 = vpop.f32.mrf.mxu0
  %2699 = vdwg.mxu0
  %2700 = vmatpush.bf16.msra.mxu0 %v1700
  %2701 = vmatpush.bf16.msra.mxu0 %v1679
  %2702 = vmatpush.bf16.msra.mxu0 %v1658
  %2703 = vmatpush.bf16.msra.mxu0 %v1637
  %2704 = vmatpush.bf16.msra.mxu0 %v1616
  %2705 = vmatpush.bf16.msra.mxu0 %v1595
  %2706 = vmatpush.bf16.msra.mxu0 %v1574
  %2707 = vmatpush.bf16.msra.mxu0 %v1553
  %2708 = vmatmul.bf16.gmra.mxu0 %v108
  %v2709 = vpop.f32.mrf.mxu0
  %v2710 = vadd.f32 %v487, %v2709
  %v2711 = vpop.f32.mrf.mxu0
  %2712 = vdwg.mxu0
  %2713 = vmatpush.bf16.msra.mxu0 %v1868
  %2714 = vmatpush.bf16.msra.mxu0 %v1847
  %2715 = vmatpush.bf16.msra.mxu0 %v1826
  %2716 = vmatpush.bf16.msra.mxu0 %v1805
  %2717 = vmatpush.bf16.msra.mxu0 %v1784
  %2718 = vmatpush.bf16.msra.mxu0 %v1763
  %2719 = vmatpush.bf16.msra.mxu0 %v1742
  %2720 = vmatpush.bf16.msra.mxu0 %v1721
  %2721 = vmatmul.bf16.gmra.mxu0 %v109
  %v2722 = vpop.f32.mrf.mxu0
  %v2723 = vadd.f32 %v2710, %v2722
  %v2724 = vpop.f32.mrf.mxu0
  %2725 = vdwg.mxu0
  %2726 = vmatpush.bf16.msra.mxu0 %v1701
  %2727 = vmatpush.bf16.msra.mxu0 %v1680
  %2728 = vmatpush.bf16.msra.mxu0 %v1659
  %2729 = vmatpush.bf16.msra.mxu0 %v1638
  %2730 = vmatpush.bf16.msra.mxu0 %v1617
  %2731 = vmatpush.bf16.msra.mxu0 %v1596
  %2732 = vmatpush.bf16.msra.mxu0 %v1575
  %2733 = vmatpush.bf16.msra.mxu0 %v1554
  %2734 = vmatmul.bf16.gmra.mxu0 %v108
  %v2735 = vpop.f32.mrf.mxu0
  %v2736 = vadd.f32 %v488, %v2735
  %v2737 = vpop.f32.mrf.mxu0
  %2738 = vdwg.mxu0
  %2739 = vmatpush.bf16.msra.mxu0 %v1869
  %2740 = vmatpush.bf16.msra.mxu0 %v1848
  %2741 = vmatpush.bf16.msra.mxu0 %v1827
  %2742 = vmatpush.bf16.msra.mxu0 %v1806
  %2743 = vmatpush.bf16.msra.mxu0 %v1785
  %2744 = vmatpush.bf16.msra.mxu0 %v1764
  %2745 = vmatpush.bf16.msra.mxu0 %v1743
  %2746 = vmatpush.bf16.msra.mxu0 %v1722
  %2747 = vmatmul.bf16.gmra.mxu0 %v109
  %v2748 = vpop.f32.mrf.mxu0
  %v2749 = vadd.f32 %v2736, %v2748
  %v2750 = vpop.f32.mrf.mxu0
  %2751 = vdwg.mxu0
  %v2752 = vmax.f32 %v2229, 0.0
  %v2753 = vmax.f32 %v2255, 0.0
  %v2754 = vmax.f32 %v2281, 0.0
  %v2755 = vmax.f32 %v2307, 0.0
  %v2756 = vmax.f32 %v2333, 0.0
  %v2757 = vmax.f32 %v2359, 0.0
  %v2758 = vmax.f32 %v2385, 0.0
  %v2759 = vmax.f32 %v2411, 0.0
  %v2760 = vmax.f32 %v2437, 0.0
  %v2761 = vmax.f32 %v2463, 0.0
  %v2762 = vmax.f32 %v2489, 0.0
  %v2763 = vmax.f32 %v2515, 0.0
  %v2764 = vmax.f32 %v2541, 0.0
  %v2765 = vmax.f32 %v2567, 0.0
  %v2766 = vmax.f32 %v2593, 0.0
  %v2767 = vmax.f32 %v2619, 0.0
  %v2768 = vmax.f32 %v2645, 0.0
  %v2769 = vmax.f32 %v2671, 0.0
  %v2770 = vmax.f32 %v2697, 0.0
  %v2771 = vmax.f32 %v2723, 0.0
  %v2772 = vmax.f32 %v2749, 0.0
  %v2793 = vrot.slane %v2753, 4
  %v2794 = vrot.slane %v2755, 4
  %v2795 = vrot.slane %v2757, 4
  %v2796 = vrot.slane %v2759, 4
  %v2797 = vrot.slane %v2761, 4
  %v2798 = vrot.slane %v2763, 4
  %v2799 = vrot.slane %v2765, 4
  %v2800 = vrot.slane %v2767, 4
  %v2801 = vrot.slane %v2769, 4
  %v2802 = vrot.slane %v2771, 4
  %vm2803 = vcmask 1043456
  %v2804 = vsel %vm2803, %v2752, %v2793
  %v2805 = vsel %vm2803, %v2754, %v2794
  %v2806 = vsel %vm2803, %v2756, %v2795
  %v2807 = vsel %vm2803, %v2758, %v2796
  %v2808 = vsel %vm2803, %v2760, %v2797
  %v2809 = vsel %vm2803, %v2762, %v2798
  %v2810 = vsel %vm2803, %v2764, %v2799
  %v2811 = vsel %vm2803, %v2766, %v2800
  %v2812 = vsel %vm2803, %v2768, %v2801
  %v2813 = vsel %vm2803, %v2770, %v2802
  %2824 = vst [vmem:[%s5] sm:$0xff] %v2804
  %2825 = vst [vmem:[%s5 + $0x8] sm:$0xff] %v2805
  %2826 = vst [vmem:[%s5 + $0x10] sm:$0xff] %v2806
  %2827 = vst [vmem:[%s5 + $0x18] sm:$0xff] %v2807
  %2828 = vst [vmem:[%s5 + $0x20] sm:$0xff] %v2808
  %2829 = vst [vmem:[%s5 + $0x28] sm:$0xff] %v2809
  %2830 = vst [vmem:[%s5 + $0x30] sm:$0xff] %v2810
  %2831 = vst [vmem:[%s5 + $0x38] sm:$0xff] %v2811
  %2832 = vst [vmem:[%s5 + $0x40] sm:$0xff] %v2812
  %2833 = vst [vmem:[%s5 + $0x48] sm:$0xff] %v2813
  %vm2834 = vcmask 257024
  %2835 = vst.msk [vmem:[%s5 + $0x50] sm:$0xf] %vm2834, %v2772
  // Predicated region
  $region22: #{icil_forward.15} parent=0 // pred_check
    _
  $region23: #{icil_forward.15} parent=0 // pred_check_branch
    %2837 = sbr.rel (0) target = $region25
  $region24: #{icil_forward.15} parent=0 // pred_region
    _
  $region25: #{icil_forward.15} parent=0 // pred_fallthru
    _
  // Predicated region
  $region26: #{icil_forward.15} parent=0 // pred_check
    _
  $region27: #{icil_forward.15} parent=0 // pred_check_branch
    %2839 = sbr.rel (0) target = $region29
  $region28: #{icil_forward.15} parent=0 // pred_region
    _
  $region29: #{icil_forward.15} parent=0 // pred_fallthru
    _

// kernel: icil_forward.16
$region0: #{icil_forward.16}
  #allocation0 [shape = 'u32[]', space=smem, size = 0x4, offset = 0x4, fixed_abs, tag = 'smem constant byte address 0x4 - core index']
  #allocation1 [shape = 'u32[72,128]{1,0:T(1,128)}', space=vmem, size = 0x9000, scoped, tag = 'internal scratch']
  %s0 = inlined_call_operand.vmem [shape: bf16[324,32], index: 0, kind: input, shape index: {}]
  %s1 = inlined_call_operand.vmem [shape: bf16[32,256], index: 1, kind: input, shape index: {}]
  %s2 = inlined_call_operand.vmem [shape: f32[324,256], index: 2, kind: output, shape index: {}]
  %s3 = sld [smem:[#allocation0]]
  $region18: #{icil_forward.16} parent=0
    _
  %s5 = ssub.s32 1, %s3
  %s6 = scalar_select 0, %s5, %s3
  // Predicated region
  $region2: #{icil_forward.16} parent=0 // pred_check
    _
  $region3: #{icil_forward.16} parent=0 // pred_check_branch
    %8 = sbr.rel (0) target = $region5
  $region4: #{icil_forward.16} parent=0 // pred_region
    _
  $region5: #{icil_forward.16} parent=0 // pred_fallthru
    _
  // Predicated region
  $region6: #{icil_forward.16} parent=0 // pred_check
    _
  $region7: #{icil_forward.16} parent=0 // pred_check_branch
    %10 = sbr.rel (0) target = $region9
  $region8: #{icil_forward.16} parent=0 // pred_region
    _
  $region9: #{icil_forward.16} parent=0 // pred_fallthru
    _
  %v12 = vld [vmem:[%s0] sm:$0xf]
  %v13 = vld [vmem:[%s0 + $0x4] sm:$0xf]
  %v14 = vld [vmem:[%s0 + $0x8] sm:$0xf]
  %v15 = vld [vmem:[%s0 + $0xc] sm:$0xf]
  %v16 = vld [vmem:[%s0 + $0x10] sm:$0xf]
  %v17 = vld [vmem:[%s0 + $0x14] sm:$0xf]
  %v18 = vld [vmem:[%s0 + $0x18] sm:$0xf]
  %v19 = vld [vmem:[%s0 + $0x1c] sm:$0xf]
  %v20 = vld [vmem:[%s0 + $0x20] sm:$0xf]
  %v21 = vld [vmem:[%s0 + $0x24] sm:$0xf]
  %v22 = vld [vmem:[%s0 + $0x28] sm:$0xf]
  %v23 = vld [vmem:[%s0 + $0x2c] sm:$0xf]
  %v24 = vld [vmem:[%s0 + $0x30] sm:$0xf]
  %v25 = vld [vmem:[%s0 + $0x34] sm:$0xf]
  %v26 = vld [vmem:[%s0 + $0x38] sm:$0xf]
  %v27 = vld [vmem:[%s0 + $0x3c] sm:$0xf]
  %v28 = vld [vmem:[%s0 + $0x40] sm:$0xf]
  %v29 = vld [vmem:[%s0 + $0x44] sm:$0xf]
  %v30 = vld [vmem:[%s0 + $0x48] sm:$0xf]
  %v31 = vld [vmem:[%s0 + $0x4c] sm:$0xf]
  %v32 = vld [vmem:[%s0 + $0x50] sm:$0xf]
  %v33 = vld [vmem:[%s0 + $0x54] sm:$0xf]
  %v34 = vld [vmem:[%s0 + $0x58] sm:$0xf]
  %v35 = vld [vmem:[%s0 + $0x5c] sm:$0xf]
  %v36 = vld [vmem:[%s0 + $0x60] sm:$0xf]
  %v37 = vld [vmem:[%s0 + $0x64] sm:$0xf]
  %v38 = vld [vmem:[%s0 + $0x68] sm:$0xf]
  %v39 = vld [vmem:[%s0 + $0x6c] sm:$0xf]
  %v40 = vld [vmem:[%s0 + $0x70] sm:$0xf]
  %v41 = vld [vmem:[%s0 + $0x74] sm:$0xf]
  %v42 = vld [vmem:[%s0 + $0x78] sm:$0xf]
  %v43 = vld [vmem:[%s0 + $0x7c] sm:$0xf]
  %v44 = vld [vmem:[%s0 + $0x80] sm:$0xf]
  %v45 = vld [vmem:[%s0 + $0x84] sm:$0xf]
  %v46 = vld [vmem:[%s0 + $0x88] sm:$0xf]
  %v47 = vld [vmem:[%s0 + $0x8c] sm:$0xf]
  %v48 = vld [vmem:[%s0 + $0x90] sm:$0xf]
  %v49 = vld [vmem:[%s0 + $0x94] sm:$0xf]
  %v50 = vld [vmem:[%s0 + $0x98] sm:$0xf]
  %v51 = vld [vmem:[%s0 + $0x9c] sm:$0xf]
  %v52 = vld [vmem:[%s0 + $0xa0] sm:$0x3]
  %v53 = vld [vmem:[%s1] sm:$0xff]
  %v54 = vld [vmem:[%s1 + $0x8] sm:$0xff]
  %v55 = vld [vmem:[%s1 + $0x10] sm:$0xff]
  %v56 = vld [vmem:[%s1 + $0x18] sm:$0xff]
  %v98 = vunpack.c.l.b16 %v12
  %v99 = vunpack.c.l.b16 %v13
  %v100 = vunpack.c.l.b16 %v14
  %v101 = vunpack.c.l.b16 %v15
  %v102 = vunpack.c.l.b16 %v16
  %v103 = vunpack.c.l.b16 %v17
  %v104 = vunpack.c.l.b16 %v18
  %v105 = vunpack.c.l.b16 %v19
  %v106 = vunpack.c.l.b16 %v20
  %v107 = vunpack.c.l.b16 %v21
  %v108 = vunpack.c.l.b16 %v22
  %v109 = vunpack.c.l.b16 %v23
  %v110 = vunpack.c.l.b16 %v24
  %v111 = vunpack.c.l.b16 %v25
  %v112 = vunpack.c.l.b16 %v26
  %v113 = vunpack.c.l.b16 %v27
  %v114 = vunpack.c.l.b16 %v28
  %v115 = vunpack.c.l.b16 %v29
  %v116 = vunpack.c.l.b16 %v30
  %v117 = vunpack.c.l.b16 %v31
  %v118 = vunpack.c.l.b16 %v32
  %v119 = vunpack.c.l.b16 %v33
  %v120 = vunpack.c.l.b16 %v34
  %v121 = vunpack.c.l.b16 %v35
  %v122 = vunpack.c.l.b16 %v36
  %v123 = vunpack.c.l.b16 %v37
  %v124 = vunpack.c.l.b16 %v38
  %v125 = vunpack.c.l.b16 %v39
  %v126 = vunpack.c.l.b16 %v40
  %v127 = vunpack.c.l.b16 %v41
  %v128 = vunpack.c.l.b16 %v42
  %v129 = vunpack.c.l.b16 %v43
  %v130 = vunpack.c.l.b16 %v44
  %v131 = vunpack.c.l.b16 %v45
  %v132 = vunpack.c.l.b16 %v46
  %v133 = vunpack.c.l.b16 %v47
  %v134 = vunpack.c.l.b16 %v48
  %v135 = vunpack.c.l.b16 %v49
  %v136 = vunpack.c.l.b16 %v50
  %v137 = vunpack.c.l.b16 %v51
  %v138 = vunpack.c.l.b16 %v52
  %v139 = vpack.c.b16 %v99, %v98
  %v140 = vpack.c.b16 %v101, %v100
  %v141 = vpack.c.b16 %v103, %v102
  %v142 = vpack.c.b16 %v105, %v104
  %v143 = vpack.c.b16 %v107, %v106
  %v144 = vpack.c.b16 %v109, %v108
  %v145 = vpack.c.b16 %v111, %v110
  %v146 = vpack.c.b16 %v113, %v112
  %v147 = vpack.c.b16 %v115, %v114
  %v148 = vpack.c.b16 %v117, %v116
  %v149 = vpack.c.b16 %v119, %v118
  %v150 = vpack.c.b16 %v121, %v120
  %v151 = vpack.c.b16 %v123, %v122
  %v152 = vpack.c.b16 %v125, %v124
  %v153 = vpack.c.b16 %v127, %v126
  %v154 = vpack.c.b16 %v129, %v128
  %v155 = vpack.c.b16 %v131, %v130
  %v156 = vpack.c.b16 %v133, %v132
  %v157 = vpack.c.b16 %v135, %v134
  %v158 = vpack.c.b16 %v137, %v136
  %v159 = vpack.c.b16 %v138, %v138
  %v164 = vunpack.c.l.b16 %v53
  %v165 = vunpack.c.h.b16 %v53
  %v166 = vunpack.c.l.b16 %v54
  %v167 = vunpack.c.h.b16 %v54
  %v168 = vunpack.c.l.b16 %v55
  %v169 = vunpack.c.h.b16 %v55
  %v170 = vunpack.c.l.b16 %v56
  %v171 = vunpack.c.h.b16 %v56
  %v172 = vpack.c.b16 %v166, %v164
  %v173 = vpack.c.b16 %v167, %v165
  %v174 = vpack.c.b16 %v170, %v168
  %v175 = vpack.c.b16 %v171, %v169
  %vm180 = vcmask 261120
  %v182 = vsel %vm180, %v139, 0
  %v185 = vsel %vm180, %v140, 0
  %v188 = vsel %vm180, %v141, 0
  %v191 = vsel %vm180, %v142, 0
  %v194 = vsel %vm180, %v143, 0
  %v197 = vsel %vm180, %v144, 0
  %v200 = vsel %vm180, %v145, 0
  %v203 = vsel %vm180, %v146, 0
  %v206 = vsel %vm180, %v147, 0
  %v209 = vsel %vm180, %v148, 0
  %v212 = vsel %vm180, %v149, 0
  %v215 = vsel %vm180, %v150, 0
  %v218 = vsel %vm180, %v151, 0
  %v221 = vsel %vm180, %v152, 0
  %v224 = vsel %vm180, %v153, 0
  %v227 = vsel %vm180, %v154, 0
  %v230 = vsel %vm180, %v155, 0
  %v233 = vsel %vm180, %v156, 0
  %v236 = vsel %vm180, %v157, 0
  %v239 = vsel %vm180, %v158, 0
  %v242 = vsel %vm180, %v159, 0
  %244 = vmatpush.bf16.msra.mxu0 0
  %245 = vmatpush.bf16.msra.mxu0 0
  %246 = vmatpush.bf16.msra.mxu0 0
  %247 = vmatpush.bf16.msra.mxu0 0
  %248 = vmatpush.bf16.msra.mxu0 0
  %249 = vmatpush.bf16.msra.mxu0 0
  %250 = vmatpush.bf16.msra.mxu0 %v174
  %251 = vmatpush.bf16.msra.mxu0 %v172
  %252 = vmatmul.bf16.gmra.mxu0 %v182
  %v253 = vpop.f32.mrf.mxu0
  %v254 = vadd.f32 0.0, %v253
  %v255 = vpop.f32.mrf.mxu0
  %v256 = vadd.f32 0.0, %v255
  %257 = vmatmul.bf16.gmra.mxu0 %v185
  %v258 = vpop.f32.mrf.mxu0
  %v259 = vadd.f32 0.0, %v258
  %v260 = vpop.f32.mrf.mxu0
  %v261 = vadd.f32 0.0, %v260
  %262 = vmatmul.bf16.gmra.mxu0 %v188
  %v263 = vpop.f32.mrf.mxu0
  %v264 = vadd.f32 0.0, %v263
  %v265 = vpop.f32.mrf.mxu0
  %v266 = vadd.f32 0.0, %v265
  %267 = vmatmul.bf16.gmra.mxu0 %v191
  %v268 = vpop.f32.mrf.mxu0
  %v269 = vadd.f32 0.0, %v268
  %v270 = vpop.f32.mrf.mxu0
  %v271 = vadd.f32 0.0, %v270
  %272 = vmatmul.bf16.gmra.mxu0 %v194
  %v273 = vpop.f32.mrf.mxu0
  %v274 = vadd.f32 0.0, %v273
  %v275 = vpop.f32.mrf.mxu0
  %v276 = vadd.f32 0.0, %v275
  %277 = vmatmul.bf16.gmra.mxu0 %v197
  %v278 = vpop.f32.mrf.mxu0
  %v279 = vadd.f32 0.0, %v278
  %v280 = vpop.f32.mrf.mxu0
  %v281 = vadd.f32 0.0, %v280
  %282 = vmatmul.bf16.gmra.mxu0 %v200
  %v283 = vpop.f32.mrf.mxu0
  %v284 = vadd.f32 0.0, %v283
  %v285 = vpop.f32.mrf.mxu0
  %v286 = vadd.f32 0.0, %v285
  %287 = vmatmul.bf16.gmra.mxu0 %v203
  %v288 = vpop.f32.mrf.mxu0
  %v289 = vadd.f32 0.0, %v288
  %v290 = vpop.f32.mrf.mxu0
  %v291 = vadd.f32 0.0, %v290
  %292 = vmatmul.bf16.gmra.mxu0 %v206
  %v293 = vpop.f32.mrf.mxu0
  %v294 = vadd.f32 0.0, %v293
  %v295 = vpop.f32.mrf.mxu0
  %v296 = vadd.f32 0.0, %v295
  %297 = vmatmul.bf16.gmra.mxu0 %v209
  %v298 = vpop.f32.mrf.mxu0
  %v299 = vadd.f32 0.0, %v298
  %v300 = vpop.f32.mrf.mxu0
  %v301 = vadd.f32 0.0, %v300
  %302 = vmatmul.bf16.gmra.mxu0 %v212
  %v303 = vpop.f32.mrf.mxu0
  %v304 = vadd.f32 0.0, %v303
  %v305 = vpop.f32.mrf.mxu0
  %v306 = vadd.f32 0.0, %v305
  %307 = vmatmul.bf16.gmra.mxu0 %v215
  %v308 = vpop.f32.mrf.mxu0
  %v309 = vadd.f32 0.0, %v308
  %v310 = vpop.f32.mrf.mxu0
  %v311 = vadd.f32 0.0, %v310
  %312 = vmatmul.bf16.gmra.mxu0 %v218
  %v313 = vpop.f32.mrf.mxu0
  %v314 = vadd.f32 0.0, %v313
  %v315 = vpop.f32.mrf.mxu0
  %v316 = vadd.f32 0.0, %v315
  %317 = vmatmul.bf16.gmra.mxu0 %v221
  %v318 = vpop.f32.mrf.mxu0
  %v319 = vadd.f32 0.0, %v318
  %v320 = vpop.f32.mrf.mxu0
  %v321 = vadd.f32 0.0, %v320
  %322 = vmatmul.bf16.gmra.mxu0 %v224
  %v323 = vpop.f32.mrf.mxu0
  %v324 = vadd.f32 0.0, %v323
  %v325 = vpop.f32.mrf.mxu0
  %v326 = vadd.f32 0.0, %v325
  %327 = vmatmul.bf16.gmra.mxu0 %v227
  %v328 = vpop.f32.mrf.mxu0
  %v329 = vadd.f32 0.0, %v328
  %v330 = vpop.f32.mrf.mxu0
  %v331 = vadd.f32 0.0, %v330
  %332 = vmatmul.bf16.gmra.mxu0 %v230
  %v333 = vpop.f32.mrf.mxu0
  %v334 = vadd.f32 0.0, %v333
  %v335 = vpop.f32.mrf.mxu0
  %v336 = vadd.f32 0.0, %v335
  %337 = vmatmul.bf16.gmra.mxu0 %v233
  %v338 = vpop.f32.mrf.mxu0
  %v339 = vadd.f32 0.0, %v338
  %v340 = vpop.f32.mrf.mxu0
  %v341 = vadd.f32 0.0, %v340
  %342 = vmatmul.bf16.gmra.mxu0 %v236
  %v343 = vpop.f32.mrf.mxu0
  %v344 = vadd.f32 0.0, %v343
  %v345 = vpop.f32.mrf.mxu0
  %v346 = vadd.f32 0.0, %v345
  %347 = vmatmul.bf16.gmra.mxu0 %v239
  %v348 = vpop.f32.mrf.mxu0
  %v349 = vadd.f32 0.0, %v348
  %v350 = vpop.f32.mrf.mxu0
  %v351 = vadd.f32 0.0, %v350
  %352 = vmatmul.bf16.gmra.mxu0 %v242
  %v353 = vpop.f32.mrf.mxu0
  %v354 = vadd.f32 0.0, %v353
  %v355 = vpop.f32.mrf.mxu0
  %356 = vdwg.mxu0
  %357 = vmatpush.bf16.msra.mxu0 0
  %358 = vmatpush.bf16.msra.mxu0 0
  %359 = vmatpush.bf16.msra.mxu0 0
  %360 = vmatpush.bf16.msra.mxu0 0
  %361 = vmatpush.bf16.msra.mxu0 0
  %362 = vmatpush.bf16.msra.mxu0 0
  %363 = vmatpush.bf16.msra.mxu0 %v175
  %364 = vmatpush.bf16.msra.mxu0 %v173
  %365 = vmatmul.bf16.gmra.mxu0 %v182
  %v366 = vpop.f32.mrf.mxu0
  %v367 = vadd.f32 0.0, %v366
  %v368 = vpop.f32.mrf.mxu0
  %v369 = vadd.f32 0.0, %v368
  %370 = vmatmul.bf16.gmra.mxu0 %v185
  %v371 = vpop.f32.mrf.mxu0
  %v372 = vadd.f32 0.0, %v371
  %v373 = vpop.f32.mrf.mxu0
  %v374 = vadd.f32 0.0, %v373
  %375 = vmatmul.bf16.gmra.mxu0 %v188
  %v376 = vpop.f32.mrf.mxu0
  %v377 = vadd.f32 0.0, %v376
  %v378 = vpop.f32.mrf.mxu0
  %v379 = vadd.f32 0.0, %v378
  %380 = vmatmul.bf16.gmra.mxu0 %v191
  %v381 = vpop.f32.mrf.mxu0
  %v382 = vadd.f32 0.0, %v381
  %v383 = vpop.f32.mrf.mxu0
  %v384 = vadd.f32 0.0, %v383
  %385 = vmatmul.bf16.gmra.mxu0 %v194
  %v386 = vpop.f32.mrf.mxu0
  %v387 = vadd.f32 0.0, %v386
  %v388 = vpop.f32.mrf.mxu0
  %v389 = vadd.f32 0.0, %v388
  %390 = vmatmul.bf16.gmra.mxu0 %v197
  %v391 = vpop.f32.mrf.mxu0
  %v392 = vadd.f32 0.0, %v391
  %v393 = vpop.f32.mrf.mxu0
  %v394 = vadd.f32 0.0, %v393
  %395 = vmatmul.bf16.gmra.mxu0 %v200
  %v396 = vpop.f32.mrf.mxu0
  %v397 = vadd.f32 0.0, %v396
  %v398 = vpop.f32.mrf.mxu0
  %v399 = vadd.f32 0.0, %v398
  %400 = vmatmul.bf16.gmra.mxu0 %v203
  %v401 = vpop.f32.mrf.mxu0
  %v402 = vadd.f32 0.0, %v401
  %v403 = vpop.f32.mrf.mxu0
  %v404 = vadd.f32 0.0, %v403
  %405 = vmatmul.bf16.gmra.mxu0 %v206
  %v406 = vpop.f32.mrf.mxu0
  %v407 = vadd.f32 0.0, %v406
  %v408 = vpop.f32.mrf.mxu0
  %v409 = vadd.f32 0.0, %v408
  %410 = vmatmul.bf16.gmra.mxu0 %v209
  %v411 = vpop.f32.mrf.mxu0
  %v412 = vadd.f32 0.0, %v411
  %v413 = vpop.f32.mrf.mxu0
  %v414 = vadd.f32 0.0, %v413
  %415 = vmatmul.bf16.gmra.mxu0 %v212
  %v416 = vpop.f32.mrf.mxu0
  %v417 = vadd.f32 0.0, %v416
  %v418 = vpop.f32.mrf.mxu0
  %v419 = vadd.f32 0.0, %v418
  %420 = vmatmul.bf16.gmra.mxu0 %v215
  %v421 = vpop.f32.mrf.mxu0
  %v422 = vadd.f32 0.0, %v421
  %v423 = vpop.f32.mrf.mxu0
  %v424 = vadd.f32 0.0, %v423
  %425 = vmatmul.bf16.gmra.mxu0 %v218
  %v426 = vpop.f32.mrf.mxu0
  %v427 = vadd.f32 0.0, %v426
  %v428 = vpop.f32.mrf.mxu0
  %v429 = vadd.f32 0.0, %v428
  %430 = vmatmul.bf16.gmra.mxu0 %v221
  %v431 = vpop.f32.mrf.mxu0
  %v432 = vadd.f32 0.0, %v431
  %v433 = vpop.f32.mrf.mxu0
  %v434 = vadd.f32 0.0, %v433
  %435 = vmatmul.bf16.gmra.mxu0 %v224
  %v436 = vpop.f32.mrf.mxu0
  %v437 = vadd.f32 0.0, %v436
  %v438 = vpop.f32.mrf.mxu0
  %v439 = vadd.f32 0.0, %v438
  %440 = vmatmul.bf16.gmra.mxu0 %v227
  %v441 = vpop.f32.mrf.mxu0
  %v442 = vadd.f32 0.0, %v441
  %v443 = vpop.f32.mrf.mxu0
  %v444 = vadd.f32 0.0, %v443
  %445 = vmatmul.bf16.gmra.mxu0 %v230
  %v446 = vpop.f32.mrf.mxu0
  %v447 = vadd.f32 0.0, %v446
  %v448 = vpop.f32.mrf.mxu0
  %v449 = vadd.f32 0.0, %v448
  %450 = vmatmul.bf16.gmra.mxu0 %v233
  %v451 = vpop.f32.mrf.mxu0
  %v452 = vadd.f32 0.0, %v451
  %v453 = vpop.f32.mrf.mxu0
  %v454 = vadd.f32 0.0, %v453
  %455 = vmatmul.bf16.gmra.mxu0 %v236
  %v456 = vpop.f32.mrf.mxu0
  %v457 = vadd.f32 0.0, %v456
  %v458 = vpop.f32.mrf.mxu0
  %v459 = vadd.f32 0.0, %v458
  %460 = vmatmul.bf16.gmra.mxu0 %v239
  %v461 = vpop.f32.mrf.mxu0
  %v462 = vadd.f32 0.0, %v461
  %v463 = vpop.f32.mrf.mxu0
  %v464 = vadd.f32 0.0, %v463
  %465 = vmatmul.bf16.gmra.mxu0 %v242
  %v466 = vpop.f32.mrf.mxu0
  %v467 = vadd.f32 0.0, %v466
  %v468 = vpop.f32.mrf.mxu0
  %469 = vdwg.mxu0
  %470 = vst [vmem:[%s2] sm:$0xff] %v254
  %471 = vst [vmem:[%s2 + $0x8] sm:$0xff] %v367
  %472 = vst [vmem:[%s2 + $0x10] sm:$0xff] %v256
  %473 = vst [vmem:[%s2 + $0x18] sm:$0xff] %v369
  %474 = vst [vmem:[%s2 + $0x20] sm:$0xff] %v259
  %475 = vst [vmem:[%s2 + $0x28] sm:$0xff] %v372
  %476 = vst [vmem:[%s2 + $0x30] sm:$0xff] %v261
  %477 = vst [vmem:[%s2 + $0x38] sm:$0xff] %v374
  %478 = vst [vmem:[%s2 + $0x40] sm:$0xff] %v264
  %479 = vst [vmem:[%s2 + $0x48] sm:$0xff] %v377
  %480 = vst [vmem:[%s2 + $0x50] sm:$0xff] %v266
  %481 = vst [vmem:[%s2 + $0x58] sm:$0xff] %v379
  %482 = vst [vmem:[%s2 + $0x60] sm:$0xff] %v269
  %483 = vst [vmem:[%s2 + $0x68] sm:$0xff] %v382
  %484 = vst [vmem:[%s2 + $0x70] sm:$0xff] %v271
  %485 = vst [vmem:[%s2 + $0x78] sm:$0xff] %v384
  %486 = vst [vmem:[%s2 + $0x80] sm:$0xff] %v274
  %487 = vst [vmem:[%s2 + $0x88] sm:$0xff] %v387
  %488 = vst [vmem:[%s2 + $0x90] sm:$0xff] %v276
  %489 = vst [vmem:[%s2 + $0x98] sm:$0xff] %v389
  %490 = vst [vmem:[%s2 + $0xa0] sm:$0xff] %v279
  %491 = vst [vmem:[%s2 + $0xa8] sm:$0xff] %v392
  %492 = vst [vmem:[%s2 + $0xb0] sm:$0xff] %v281
  %493 = vst [vmem:[%s2 + $0xb8] sm:$0xff] %v394
  %494 = vst [vmem:[%s2 + $0xc0] sm:$0xff] %v284
  %495 = vst [vmem:[%s2 + $0xc8] sm:$0xff] %v397
  %496 = vst [vmem:[%s2 + $0xd0] sm:$0xff] %v286
  %497 = vst [vmem:[%s2 + $0xd8] sm:$0xff] %v399
  %498 = vst [vmem:[%s2 + $0xe0] sm:$0xff] %v289
  %499 = vst [vmem:[%s2 + $0xe8] sm:$0xff] %v402
  %500 = vst [vmem:[%s2 + $0xf0] sm:$0xff] %v291
  %501 = vst [vmem:[%s2 + $0xf8] sm:$0xff] %v404
  %502 = vst [vmem:[%s2 + $0x100] sm:$0xff] %v294
  %503 = vst [vmem:[%s2 + $0x108] sm:$0xff] %v407
  %504 = vst [vmem:[%s2 + $0x110] sm:$0xff] %v296
  %505 = vst [vmem:[%s2 + $0x118] sm:$0xff] %v409
  %506 = vst [vmem:[%s2 + $0x120] sm:$0xff] %v299
  %507 = vst [vmem:[%s2 + $0x128] sm:$0xff] %v412
  %508 = vst [vmem:[%s2 + $0x130] sm:$0xff] %v301
  %509 = vst [vmem:[%s2 + $0x138] sm:$0xff] %v414
  %510 = vst [vmem:[%s2 + $0x140] sm:$0xff] %v304
  %511 = vst [vmem:[%s2 + $0x148] sm:$0xff] %v417
  %512 = vst [vmem:[%s2 + $0x150] sm:$0xff] %v306
  %513 = vst [vmem:[%s2 + $0x158] sm:$0xff] %v419
  %514 = vst [vmem:[%s2 + $0x160] sm:$0xff] %v309
  %515 = vst [vmem:[%s2 + $0x168] sm:$0xff] %v422
  %516 = vst [vmem:[%s2 + $0x170] sm:$0xff] %v311
  %517 = vst [vmem:[%s2 + $0x178] sm:$0xff] %v424
  %518 = vst [vmem:[%s2 + $0x180] sm:$0xff] %v314
  %519 = vst [vmem:[%s2 + $0x188] sm:$0xff] %v427
  %520 = vst [vmem:[%s2 + $0x190] sm:$0xff] %v316
  %521 = vst [vmem:[%s2 + $0x198] sm:$0xff] %v429
  %522 = vst [vmem:[%s2 + $0x1a0] sm:$0xff] %v319
  %523 = vst [vmem:[%s2 + $0x1a8] sm:$0xff] %v432
  %524 = vst [vmem:[%s2 + $0x1b0] sm:$0xff] %v321
  %525 = vst [vmem:[%s2 + $0x1b8] sm:$0xff] %v434
  %526 = vst [vmem:[%s2 + $0x1c0] sm:$0xff] %v324
  %527 = vst [vmem:[%s2 + $0x1c8] sm:$0xff] %v437
  %528 = vst [vmem:[%s2 + $0x1d0] sm:$0xff] %v326
  %529 = vst [vmem:[%s2 + $0x1d8] sm:$0xff] %v439
  %530 = vst [vmem:[%s2 + $0x1e0] sm:$0xff] %v329
  %531 = vst [vmem:[%s2 + $0x1e8] sm:$0xff] %v442
  %532 = vst [vmem:[%s2 + $0x1f0] sm:$0xff] %v331
  %533 = vst [vmem:[%s2 + $0x1f8] sm:$0xff] %v444
  %534 = vst [vmem:[%s2 + $0x200] sm:$0xff] %v334
  %535 = vst [vmem:[%s2 + $0x208] sm:$0xff] %v447
  %536 = vst [vmem:[%s2 + $0x210] sm:$0xff] %v336
  %537 = vst [vmem:[%s2 + $0x218] sm:$0xff] %v449
  %538 = vst [vmem:[%s2 + $0x220] sm:$0xff] %v339
  %539 = vst [vmem:[%s2 + $0x228] sm:$0xff] %v452
  %540 = vst [vmem:[%s2 + $0x230] sm:$0xff] %v341
  %541 = vst [vmem:[%s2 + $0x238] sm:$0xff] %v454
  %542 = vst [vmem:[%s2 + $0x240] sm:$0xff] %v344
  %543 = vst [vmem:[%s2 + $0x248] sm:$0xff] %v457
  %544 = vst [vmem:[%s2 + $0x250] sm:$0xff] %v346
  %545 = vst [vmem:[%s2 + $0x258] sm:$0xff] %v459
  %546 = vst [vmem:[%s2 + $0x260] sm:$0xff] %v349
  %547 = vst [vmem:[%s2 + $0x268] sm:$0xff] %v462
  %548 = vst [vmem:[%s2 + $0x270] sm:$0xff] %v351
  %549 = vst [vmem:[%s2 + $0x278] sm:$0xff] %v464
  %550 = vst [vmem:[%s2 + $0x280] sm:$0xf] %v354
  %551 = vst [vmem:[%s2 + $0x288] sm:$0xf] %v467
  // Predicated region
  $region10: #{icil_forward.16} parent=0 // pred_check
    _
  $region11: #{icil_forward.16} parent=0 // pred_check_branch
    %553 = sbr.rel (0) target = $region13
  $region12: #{icil_forward.16} parent=0 // pred_region
    _
  $region13: #{icil_forward.16} parent=0 // pred_fallthru
    _
  // Predicated region
  $region14: #{icil_forward.16} parent=0 // pred_check
    _
  $region15: #{icil_forward.16} parent=0 // pred_check_branch
    %555 = sbr.rel (0) target = $region17
  $region16: #{icil_forward.16} parent=0 // pred_region
    _
  $region17: #{icil_forward.16} parent=0 // pred_fallthru
    _

// kernel: icil_forward.17
$region0: #{icil_forward.17}
  #allocation0 [shape = 'u32[]', space=smem, size = 0x4, offset = 0x4, fixed_abs, tag = 'smem constant byte address 0x4 - core index']
  #allocation1 [shape = 'u32[72,128]{1,0:T(1,128)}', space=vmem, size = 0x9000, scoped, tag = 'internal scratch']
  %s0 = inlined_call_operand.vmem [shape: bf16[1600,16], index: 0, kind: input, shape index: {}]
  %s1 = inlined_call_operand.vmem [shape: bf16[16,192], index: 1, kind: input, shape index: {}]
  %s2 = inlined_call_operand.vmem [shape: f32[1600,192], index: 2, kind: output, shape index: {}]
  %s3 = sld [smem:[#allocation0]]
  $region41: #{icil_forward.17} parent=0
    _
  %s5 = ssub.s32 1, %s3
  %s6 = scalar_select 0, %s5, %s3
  loop: start=0, step=1, limit=4
  $region2: #{icil_forward.17} parent=0 // loop_pre_header
    _
  $region3: #{icil_forward.17} parent=0 // loop_header
    %s8 = sphi 0, %s12
    %p9 = scmp.ge.s32.totalorder %s8, 4
    %s18 = sphi 0, %s20
    %s21 = sphi 0, %s18
    %s22 = sphi 0, %s21
    %s38 = sphi 0, %s22
    %s42 = sphi 0, %s42
    %s44 = sphi 0, %s42
    %s45 = sphi 0, %s44
    %s59 = sphi 0, %s45
    %s65 = sphi 0, %s67
    %s68 = sphi 0, %s65
    %s69 = sphi 0, %s68
    %s85 = sphi 0, %s69
  $region4: #{icil_forward.17} parent=0 // loop_header_branch
    %11 = sbr.rel (%p9) target = $region8
  $region5: #{icil_forward.17} parent=0 // loop_body
    %s13 = ssub.s32 %s8, 1
    %s14 = ssub.s32 %s8, 2
    %s15 = sadd.s32 %s8, 1
    %s16 = ssub.s32 %s8, %s15
    %p17 = scmp.eq.s32.totalorder %s16, 0
    %s19 = sadd.s32 %s18, 1
    %s20 = scalar_select %p17, %s18, %s19
    %p23 = pneg %p17
    %p24 = scmp.eq.s32.totalorder %s8, 1
    %p25 = por %p23, %p24
    %p26 = scmp.ne.s32.totalorder %s18, %s21
    %p27 = scmp.eq.s32.totalorder %s8, 0
    %p28 = por %p26, %p27
    %p29 = scmp.ne.s32.totalorder %s18, %s21
    %p30 = scmp.eq.s32.totalorder %s13, 1
    %p31 = por %p29, %p30
    %p32 = scmp.ne.s32.totalorder %s21, %s22
    %p33 = scmp.eq.s32.totalorder %s13, 0
    %p34 = por %p32, %p33
    %p35 = scmp.ne.s32.totalorder %s21, %s22
    %p36 = scmp.eq.s32.totalorder %s14, 1
    %p37 = por %p35, %p36
    %p39 = scmp.ne.s32.totalorder %s22, %s38
    %p40 = scmp.eq.s32.totalorder %s14, 0
    %p41 = por %p39, %p40
    %s43 = sadd.s32 %s42, 1
    %p46 = scmp.eq.s32.totalorder %s8, 1
    %p47 = scmp.ne.s32.totalorder %s42, %s44
    %p48 = scmp.eq.s32.totalorder %s8, 0
    %p49 = por %p47, %p48
    %p50 = scmp.ne.s32.totalorder %s42, %s44
    %p51 = scmp.eq.s32.totalorder %s13, 1
    %p52 = por %p50, %p51
    %p53 = scmp.ne.s32.totalorder %s44, %s45
    %p54 = scmp.eq.s32.totalorder %s13, 0
    %p55 = por %p53, %p54
    %p56 = scmp.ne.s32.totalorder %s44, %s45
    %p57 = scmp.eq.s32.totalorder %s14, 1
    %p58 = por %p56, %p57
    %p60 = scmp.ne.s32.totalorder %s45, %s59
    %p61 = scmp.eq.s32.totalorder %s14, 0
    %p62 = por %p60, %p61
    %s63 = ssub.s32 %s8, %s15
    %p64 = scmp.eq.s32.totalorder %s63, 0
    %s66 = sadd.s32 %s65, 1
    %s67 = scalar_select %p64, %s65, %s66
    %p70 = pneg %p64
    %p71 = scmp.eq.s32.totalorder %s8, 1
    %p72 = por %p70, %p71
    %p73 = scmp.ne.s32.totalorder %s65, %s68
    %p74 = scmp.eq.s32.totalorder %s8, 0
    %p75 = por %p73, %p74
    %p76 = scmp.ne.s32.totalorder %s65, %s68
    %p77 = scmp.eq.s32.totalorder %s13, 1
    %p78 = por %p76, %p77
    %p79 = scmp.ne.s32.totalorder %s68, %s69
    %p80 = scmp.eq.s32.totalorder %s13, 0
    %p81 = por %p79, %p80
    %p82 = scmp.ne.s32.totalorder %s68, %s69
    %p83 = scmp.eq.s32.totalorder %s14, 1
    %p84 = por %p82, %p83
    %p86 = scmp.ne.s32.totalorder %s69, %s85
    %p87 = scmp.eq.s32.totalorder %s14, 0
    %p88 = por %p86, %p87
    %p89 = scmp.le.s32.totalorder 1, %s8
    %p90 = scmp.lt.s32.totalorder %s8, 3
    %p91 = pnand %p89, %p90
    %p92 = pneg %p91
    // Predicated region
    $region9: #{icil_forward.17} parent=5 // pred_check
      _
    $region10: #{icil_forward.17} parent=5 // pred_check_branch
      %94 = sbr.rel (%p91) target = $region12
    $region11: #{icil_forward.17} parent=5 // pred_region
      %s95 = ssub.s32 %s8, 1
      // Predicated region
      $region13: #{icil_forward.17} parent=11 // pred_check
        %p96 = pneg %p55
      $region14: #{icil_forward.17} parent=11 // pred_check_branch
        %98 = sbr.rel (%p96) target = $region16
      $region15: #{icil_forward.17} parent=11 // pred_region
        _
      $region16: #{icil_forward.17} parent=11 // pred_fallthru
        _
    $region12: #{icil_forward.17} parent=5 // pred_fallthru
      _
    %p99 = scmp.lt.s32.totalorder %s8, 2
    // Predicated region
    $region17: #{icil_forward.17} parent=5 // pred_check
      %p100 = pneg %p99
    $region18: #{icil_forward.17} parent=5 // pred_check_branch
      %102 = sbr.rel (%p100) target = $region20
    $region19: #{icil_forward.17} parent=5 // pred_region
      // Predicated region
      $region21: #{icil_forward.17} parent=19 // pred_check
        %p103 = pneg %p28
      $region22: #{icil_forward.17} parent=19 // pred_check_branch
        %105 = sbr.rel (%p103) target = $region24
      $region23: #{icil_forward.17} parent=19 // pred_region
        %s106 = smul.u32 100, %s8
        %p107 = scmp.lt.s32.totalorder %s106, 199
        %s108 = scalar_select %p107, %s106, 199
        %s109 = smul.addr %s108, 4
        %s110 = scalar_lea.vmem %s0, %s109
        %s111 = smul.u32 100, %s8
      $region24: #{icil_forward.17} parent=19 // pred_fallthru
        _
    $region20: #{icil_forward.17} parent=5 // pred_fallthru
      _
    %p112 = scmp.le.s32.totalorder 1, %s8
    %p113 = scmp.lt.s32.totalorder %s8, 3
    %p114 = pnand %p112, %p113
    %p115 = pneg %p114
    // Predicated region
    $region25: #{icil_forward.17} parent=5 // pred_check
      _
    $region26: #{icil_forward.17} parent=5 // pred_check_branch
      %117 = sbr.rel (%p114) target = $region28
    $region27: #{icil_forward.17} parent=5 // pred_region
      %s118 = ssub.s32 %s8, 1
      %s119 = smul.u32 100, %s13
      %p120 = scmp.lt.s32.totalorder %s119, 199
      %s121 = scalar_select %p120, %s119, 199
      %s122 = smul.addr %s121, 4
      %s123 = scalar_lea.vmem %s0, %s122
      %p124 = pneg %p34
      %p125 = pneg %p31
      %p126 = pneg %p55
      %p127 = pneg %p52
      %p128 = pneg %p81
      %p129 = pneg %p78
      %s130 = smul.u32 100, %s13
      %p131 = scmp.lt.s32.totalorder %s130, 199
      %s132 = scalar_select %p131, %s130, 199
      %s133 = smul.addr %s132, 2
      %s134 = smul.addr %s133, 8
      %s135 = scalar_lea.vmem %s2, %s134
      %s136 = smul.u32 100, %s13
      %p137 = scmp.lt.s32.totalorder %s136, 199
      %s138 = scalar_select %p137, %s136, 199
      %s139 = smul.addr %s138, 4
      %s140 = scalar_lea.vmem %s0, %s139
      %s141 = smul.u32 100, %s13
      %s142 = smul.u32 100, %s13
      %p143 = scmp.lt.s32.totalorder %s142, 199
      %s144 = scalar_select %p143, %s142, 199
      %s145 = smul.addr %s144, 2
      %s146 = smul.addr %s145, 8
      %s147 = scalar_lea.vmem %s2, %s146
      %s148 = smul.u32 100, %s13
      %v150 = vld [vmem:[%s140] sm:$0xf]
      %v151 = vld [vmem:[%s140 + $0x4] sm:$0xf]
      %v152 = vld [vmem:[%s140 + $0x8] sm:$0xf]
      %v153 = vld [vmem:[%s140 + $0xc] sm:$0xf]
      %v154 = vld [vmem:[%s140 + $0x10] sm:$0xf]
      %v155 = vld [vmem:[%s140 + $0x14] sm:$0xf]
      %v156 = vld [vmem:[%s140 + $0x18] sm:$0xf]
      %v157 = vld [vmem:[%s140 + $0x1c] sm:$0xf]
      %v158 = vld [vmem:[%s140 + $0x20] sm:$0xf]
      %v159 = vld [vmem:[%s140 + $0x24] sm:$0xf]
      %v160 = vld [vmem:[%s140 + $0x28] sm:$0xf]
      %v161 = vld [vmem:[%s140 + $0x2c] sm:$0xf]
      %v162 = vld [vmem:[%s140 + $0x30] sm:$0xf]
      %v163 = vld [vmem:[%s140 + $0x34] sm:$0xf]
      %v164 = vld [vmem:[%s140 + $0x38] sm:$0xf]
      %v165 = vld [vmem:[%s140 + $0x3c] sm:$0xf]
      %v166 = vld [vmem:[%s140 + $0x40] sm:$0xf]
      %v167 = vld [vmem:[%s140 + $0x44] sm:$0xf]
      %v168 = vld [vmem:[%s140 + $0x48] sm:$0xf]
      %v169 = vld [vmem:[%s140 + $0x4c] sm:$0xf]
      %v170 = vld [vmem:[%s140 + $0x50] sm:$0xf]
      %v171 = vld [vmem:[%s140 + $0x54] sm:$0xf]
      %v172 = vld [vmem:[%s140 + $0x58] sm:$0xf]
      %v173 = vld [vmem:[%s140 + $0x5c] sm:$0xf]
      %v174 = vld [vmem:[%s140 + $0x60] sm:$0xf]
      %v175 = vld [vmem:[%s140 + $0x64] sm:$0xf]
      %v176 = vld [vmem:[%s140 + $0x68] sm:$0xf]
      %v177 = vld [vmem:[%s140 + $0x6c] sm:$0xf]
      %v178 = vld [vmem:[%s140 + $0x70] sm:$0xf]
      %v179 = vld [vmem:[%s140 + $0x74] sm:$0xf]
      %v180 = vld [vmem:[%s140 + $0x78] sm:$0xf]
      %v181 = vld [vmem:[%s140 + $0x7c] sm:$0xf]
      %v182 = vld [vmem:[%s140 + $0x80] sm:$0xf]
      %v183 = vld [vmem:[%s140 + $0x84] sm:$0xf]
      %v184 = vld [vmem:[%s140 + $0x88] sm:$0xf]
      %v185 = vld [vmem:[%s140 + $0x8c] sm:$0xf]
      %v186 = vld [vmem:[%s140 + $0x90] sm:$0xf]
      %v187 = vld [vmem:[%s140 + $0x94] sm:$0xf]
      %v188 = vld [vmem:[%s140 + $0x98] sm:$0xf]
      %v189 = vld [vmem:[%s140 + $0x9c] sm:$0xf]
      %v190 = vld [vmem:[%s140 + $0xa0] sm:$0xf]
      %v191 = vld [vmem:[%s140 + $0xa4] sm:$0xf]
      %v192 = vld [vmem:[%s140 + $0xa8] sm:$0xf]
      %v193 = vld [vmem:[%s140 + $0xac] sm:$0xf]
      %v194 = vld [vmem:[%s140 + $0xb0] sm:$0xf]
      %v195 = vld [vmem:[%s140 + $0xb4] sm:$0xf]
      %v196 = vld [vmem:[%s140 + $0xb8] sm:$0xf]
      %v197 = vld [vmem:[%s140 + $0xbc] sm:$0xf]
      %v198 = vld [vmem:[%s140 + $0xc0] sm:$0xf]
      %v199 = vld [vmem:[%s140 + $0xc4] sm:$0xf]
      %v200 = vld [vmem:[%s140 + $0xc8] sm:$0xf]
      %v201 = vld [vmem:[%s140 + $0xcc] sm:$0xf]
      %v202 = vld [vmem:[%s140 + $0xd0] sm:$0xf]
      %v203 = vld [vmem:[%s140 + $0xd4] sm:$0xf]
      %v204 = vld [vmem:[%s140 + $0xd8] sm:$0xf]
      %v205 = vld [vmem:[%s140 + $0xdc] sm:$0xf]
      %v206 = vld [vmem:[%s140 + $0xe0] sm:$0xf]
      %v207 = vld [vmem:[%s140 + $0xe4] sm:$0xf]
      %v208 = vld [vmem:[%s140 + $0xe8] sm:$0xf]
      %v209 = vld [vmem:[%s140 + $0xec] sm:$0xf]
      %v210 = vld [vmem:[%s140 + $0xf0] sm:$0xf]
      %v211 = vld [vmem:[%s140 + $0xf4] sm:$0xf]
      %v212 = vld [vmem:[%s140 + $0xf8] sm:$0xf]
      %v213 = vld [vmem:[%s140 + $0xfc] sm:$0xf]
      %v214 = vld [vmem:[%s140 + $0x100] sm:$0xf]
      %v215 = vld [vmem:[%s140 + $0x104] sm:$0xf]
      %v216 = vld [vmem:[%s140 + $0x108] sm:$0xf]
      %v217 = vld [vmem:[%s140 + $0x10c] sm:$0xf]
      %v218 = vld [vmem:[%s140 + $0x110] sm:$0xf]
      %v219 = vld [vmem:[%s140 + $0x114] sm:$0xf]
      %v220 = vld [vmem:[%s140 + $0x118] sm:$0xf]
      %v221 = vld [vmem:[%s140 + $0x11c] sm:$0xf]
      %v222 = vld [vmem:[%s140 + $0x120] sm:$0xf]
      %v223 = vld [vmem:[%s140 + $0x124] sm:$0xf]
      %v224 = vld [vmem:[%s140 + $0x128] sm:$0xf]
      %v225 = vld [vmem:[%s140 + $0x12c] sm:$0xf]
      %v226 = vld [vmem:[%s140 + $0x130] sm:$0xf]
      %v227 = vld [vmem:[%s140 + $0x134] sm:$0xf]
      %v228 = vld [vmem:[%s140 + $0x138] sm:$0xf]
      %v229 = vld [vmem:[%s140 + $0x13c] sm:$0xf]
      %v230 = vld [vmem:[%s140 + $0x140] sm:$0xf]
      %v231 = vld [vmem:[%s140 + $0x144] sm:$0xf]
      %v232 = vld [vmem:[%s140 + $0x148] sm:$0xf]
      %v233 = vld [vmem:[%s140 + $0x14c] sm:$0xf]
      %v234 = vld [vmem:[%s140 + $0x150] sm:$0xf]
      %v235 = vld [vmem:[%s140 + $0x154] sm:$0xf]
      %v236 = vld [vmem:[%s140 + $0x158] sm:$0xf]
      %v237 = vld [vmem:[%s140 + $0x15c] sm:$0xf]
      %v238 = vld [vmem:[%s140 + $0x160] sm:$0xf]
      %v239 = vld [vmem:[%s140 + $0x164] sm:$0xf]
      %v240 = vld [vmem:[%s140 + $0x168] sm:$0xf]
      %v241 = vld [vmem:[%s140 + $0x16c] sm:$0xf]
      %v242 = vld [vmem:[%s140 + $0x170] sm:$0xf]
      %v243 = vld [vmem:[%s140 + $0x174] sm:$0xf]
      %v244 = vld [vmem:[%s140 + $0x178] sm:$0xf]
      %v245 = vld [vmem:[%s140 + $0x17c] sm:$0xf]
      %v246 = vld [vmem:[%s140 + $0x180] sm:$0xf]
      %v247 = vld [vmem:[%s140 + $0x184] sm:$0xf]
      %v248 = vld [vmem:[%s140 + $0x188] sm:$0xf]
      %v249 = vld [vmem:[%s140 + $0x18c] sm:$0xf]
      %v250 = vld [vmem:[%s1] sm:$0xff]
      %v251 = vld [vmem:[%s1 + $0x8] sm:$0xff]
      %v352 = vunpack.c.l.b16 %v150
      %v353 = vunpack.c.l.b16 %v151
      %v354 = vunpack.c.l.b16 %v152
      %v355 = vunpack.c.l.b16 %v153
      %v356 = vunpack.c.l.b16 %v154
      %v357 = vunpack.c.l.b16 %v155
      %v358 = vunpack.c.l.b16 %v156
      %v359 = vunpack.c.l.b16 %v157
      %v360 = vunpack.c.l.b16 %v158
      %v361 = vunpack.c.l.b16 %v159
      %v362 = vunpack.c.l.b16 %v160
      %v363 = vunpack.c.l.b16 %v161
      %v364 = vunpack.c.l.b16 %v162
      %v365 = vunpack.c.l.b16 %v163
      %v366 = vunpack.c.l.b16 %v164
      %v367 = vunpack.c.l.b16 %v165
      %v368 = vunpack.c.l.b16 %v166
      %v369 = vunpack.c.l.b16 %v167
      %v370 = vunpack.c.l.b16 %v168
      %v371 = vunpack.c.l.b16 %v169
      %v372 = vunpack.c.l.b16 %v170
      %v373 = vunpack.c.l.b16 %v171
      %v374 = vunpack.c.l.b16 %v172
      %v375 = vunpack.c.l.b16 %v173
      %v376 = vunpack.c.l.b16 %v174
      %v377 = vunpack.c.l.b16 %v175
      %v378 = vunpack.c.l.b16 %v176
      %v379 = vunpack.c.l.b16 %v177
      %v380 = vunpack.c.l.b16 %v178
      %v381 = vunpack.c.l.b16 %v179
      %v382 = vunpack.c.l.b16 %v180
      %v383 = vunpack.c.l.b16 %v181
      %v384 = vunpack.c.l.b16 %v182
      %v385 = vunpack.c.l.b16 %v183
      %v386 = vunpack.c.l.b16 %v184
      %v387 = vunpack.c.l.b16 %v185
      %v388 = vunpack.c.l.b16 %v186
      %v389 = vunpack.c.l.b16 %v187
      %v390 = vunpack.c.l.b16 %v188
      %v391 = vunpack.c.l.b16 %v189
      %v392 = vunpack.c.l.b16 %v190
      %v393 = vunpack.c.l.b16 %v191
      %v394 = vunpack.c.l.b16 %v192
      %v395 = vunpack.c.l.b16 %v193
      %v396 = vunpack.c.l.b16 %v194
      %v397 = vunpack.c.l.b16 %v195
      %v398 = vunpack.c.l.b16 %v196
      %v399 = vunpack.c.l.b16 %v197
      %v400 = vunpack.c.l.b16 %v198
      %v401 = vunpack.c.l.b16 %v199
      %v402 = vunpack.c.l.b16 %v200
      %v403 = vunpack.c.l.b16 %v201
      %v404 = vunpack.c.l.b16 %v202
      %v405 = vunpack.c.l.b16 %v203
      %v406 = vunpack.c.l.b16 %v204
      %v407 = vunpack.c.l.b16 %v205
      %v408 = vunpack.c.l.b16 %v206
      %v409 = vunpack.c.l.b16 %v207
      %v410 = vunpack.c.l.b16 %v208
      %v411 = vunpack.c.l.b16 %v209
      %v412 = vunpack.c.l.b16 %v210
      %v413 = vunpack.c.l.b16 %v211
      %v414 = vunpack.c.l.b16 %v212
      %v415 = vunpack.c.l.b16 %v213
      %v416 = vunpack.c.l.b16 %v214
      %v417 = vunpack.c.l.b16 %v215
      %v418 = vunpack.c.l.b16 %v216
      %v419 = vunpack.c.l.b16 %v217
      %v420 = vunpack.c.l.b16 %v218
      %v421 = vunpack.c.l.b16 %v219
      %v422 = vunpack.c.l.b16 %v220
      %v423 = vunpack.c.l.b16 %v221
      %v424 = vunpack.c.l.b16 %v222
      %v425 = vunpack.c.l.b16 %v223
      %v426 = vunpack.c.l.b16 %v224
      %v427 = vunpack.c.l.b16 %v225
      %v428 = vunpack.c.l.b16 %v226
      %v429 = vunpack.c.l.b16 %v227
      %v430 = vunpack.c.l.b16 %v228
      %v431 = vunpack.c.l.b16 %v229
      %v432 = vunpack.c.l.b16 %v230
      %v433 = vunpack.c.l.b16 %v231
      %v434 = vunpack.c.l.b16 %v232
      %v435 = vunpack.c.l.b16 %v233
      %v436 = vunpack.c.l.b16 %v234
      %v437 = vunpack.c.l.b16 %v235
      %v438 = vunpack.c.l.b16 %v236
      %v439 = vunpack.c.l.b16 %v237
      %v440 = vunpack.c.l.b16 %v238
      %v441 = vunpack.c.l.b16 %v239
      %v442 = vunpack.c.l.b16 %v240
      %v443 = vunpack.c.l.b16 %v241
      %v444 = vunpack.c.l.b16 %v242
      %v445 = vunpack.c.l.b16 %v243
      %v446 = vunpack.c.l.b16 %v244
      %v447 = vunpack.c.l.b16 %v245
      %v448 = vunpack.c.l.b16 %v246
      %v449 = vunpack.c.l.b16 %v247
      %v450 = vunpack.c.l.b16 %v248
      %v451 = vunpack.c.l.b16 %v249
      %v452 = vpack.c.b16 %v353, %v352
      %v453 = vpack.c.b16 %v355, %v354
      %v454 = vpack.c.b16 %v357, %v356
      %v455 = vpack.c.b16 %v359, %v358
      %v456 = vpack.c.b16 %v361, %v360
      %v457 = vpack.c.b16 %v363, %v362
      %v458 = vpack.c.b16 %v365, %v364
      %v459 = vpack.c.b16 %v367, %v366
      %v460 = vpack.c.b16 %v369, %v368
      %v461 = vpack.c.b16 %v371, %v370
      %v462 = vpack.c.b16 %v373, %v372
      %v463 = vpack.c.b16 %v375, %v374
      %v464 = vpack.c.b16 %v377, %v376
      %v465 = vpack.c.b16 %v379, %v378
      %v466 = vpack.c.b16 %v381, %v380
      %v467 = vpack.c.b16 %v383, %v382
      %v468 = vpack.c.b16 %v385, %v384
      %v469 = vpack.c.b16 %v387, %v386
      %v470 = vpack.c.b16 %v389, %v388
      %v471 = vpack.c.b16 %v391, %v390
      %v472 = vpack.c.b16 %v393, %v392
      %v473 = vpack.c.b16 %v395, %v394
      %v474 = vpack.c.b16 %v397, %v396
      %v475 = vpack.c.b16 %v399, %v398
      %v476 = vpack.c.b16 %v401, %v400
      %v477 = vpack.c.b16 %v403, %v402
      %v478 = vpack.c.b16 %v405, %v404
      %v479 = vpack.c.b16 %v407, %v406
      %v480 = vpack.c.b16 %v409, %v408
      %v481 = vpack.c.b16 %v411, %v410
      %v482 = vpack.c.b16 %v413, %v412
      %v483 = vpack.c.b16 %v415, %v414
      %v484 = vpack.c.b16 %v417, %v416
      %v485 = vpack.c.b16 %v419, %v418
      %v486 = vpack.c.b16 %v421, %v420
      %v487 = vpack.c.b16 %v423, %v422
      %v488 = vpack.c.b16 %v425, %v424
      %v489 = vpack.c.b16 %v427, %v426
      %v490 = vpack.c.b16 %v429, %v428
      %v491 = vpack.c.b16 %v431, %v430
      %v492 = vpack.c.b16 %v433, %v432
      %v493 = vpack.c.b16 %v435, %v434
      %v494 = vpack.c.b16 %v437, %v436
      %v495 = vpack.c.b16 %v439, %v438
      %v496 = vpack.c.b16 %v441, %v440
      %v497 = vpack.c.b16 %v443, %v442
      %v498 = vpack.c.b16 %v445, %v444
      %v499 = vpack.c.b16 %v447, %v446
      %v500 = vpack.c.b16 %v449, %v448
      %v501 = vpack.c.b16 %v451, %v450
      %v504 = vunpack.c.l.b16 %v250
      %v505 = vunpack.c.h.b16 %v250
      %v506 = vunpack.c.l.b16 %v251
      %v507 = vunpack.c.h.b16 %v251
      %v508 = vpack.c.b16 %v506, %v504
      %v509 = vpack.c.b16 %v507, %v505
      %vm512 = vcmask 130048
      %v514 = vsel %vm512, %v452, 0
      %v517 = vsel %vm512, %v453, 0
      %v520 = vsel %vm512, %v454, 0
      %v523 = vsel %vm512, %v455, 0
      %v526 = vsel %vm512, %v456, 0
      %v529 = vsel %vm512, %v457, 0
      %v532 = vsel %vm512, %v458, 0
      %v535 = vsel %vm512, %v459, 0
      %v538 = vsel %vm512, %v460, 0
      %v541 = vsel %vm512, %v461, 0
      %v544 = vsel %vm512, %v462, 0
      %v547 = vsel %vm512, %v463, 0
      %v550 = vsel %vm512, %v464, 0
      %v553 = vsel %vm512, %v465, 0
      %v556 = vsel %vm512, %v466, 0
      %v559 = vsel %vm512, %v467, 0
      %v562 = vsel %vm512, %v468, 0
      %v565 = vsel %vm512, %v469, 0
      %v568 = vsel %vm512, %v470, 0
      %v571 = vsel %vm512, %v471, 0
      %v574 = vsel %vm512, %v472, 0
      %v577 = vsel %vm512, %v473, 0
      %v580 = vsel %vm512, %v474, 0
      %v583 = vsel %vm512, %v475, 0
      %v586 = vsel %vm512, %v476, 0
      %v589 = vsel %vm512, %v477, 0
      %v592 = vsel %vm512, %v478, 0
      %v595 = vsel %vm512, %v479, 0
      %v598 = vsel %vm512, %v480, 0
      %v601 = vsel %vm512, %v481, 0
      %v604 = vsel %vm512, %v482, 0
      %v607 = vsel %vm512, %v483, 0
      %v610 = vsel %vm512, %v484, 0
      %v613 = vsel %vm512, %v485, 0
      %v616 = vsel %vm512, %v486, 0
      %v619 = vsel %vm512, %v487, 0
      %v622 = vsel %vm512, %v488, 0
      %v625 = vsel %vm512, %v489, 0
      %v628 = vsel %vm512, %v490, 0
      %v631 = vsel %vm512, %v491, 0
      %v634 = vsel %vm512, %v492, 0
      %v637 = vsel %vm512, %v493, 0
      %v640 = vsel %vm512, %v494, 0
      %v643 = vsel %vm512, %v495, 0
      %v646 = vsel %vm512, %v496, 0
      %v649 = vsel %vm512, %v497, 0
      %v652 = vsel %vm512, %v498, 0
      %v655 = vsel %vm512, %v499, 0
      %v658 = vsel %vm512, %v500, 0
      %v661 = vsel %vm512, %v501, 0
      %663 = vmatpush.bf16.msra.mxu0 0
      %664 = vmatpush.bf16.msra.mxu0 0
      %665 = vmatpush.bf16.msra.mxu0 0
      %666 = vmatpush.bf16.msra.mxu0 0
      %667 = vmatpush.bf16.msra.mxu0 0
      %668 = vmatpush.bf16.msra.mxu0 0
      %669 = vmatpush.bf16.msra.mxu0 0
      %670 = vmatpush.bf16.msra.mxu0 %v508
      %671 = vmatmul.bf16.gmra.mxu0 %v514
      %v672 = vpop.f32.mrf.mxu0
      %v673 = vadd.f32 0.0, %v672
      %v674 = vpop.f32.mrf.mxu0
      %v675 = vadd.f32 0.0, %v674
      %676 = vmatmul.bf16.gmra.mxu0 %v517
      %v677 = vpop.f32.mrf.mxu0
      %v678 = vadd.f32 0.0, %v677
      %v679 = vpop.f32.mrf.mxu0
      %v680 = vadd.f32 0.0, %v679
      %681 = vmatmul.bf16.gmra.mxu0 %v520
      %v682 = vpop.f32.mrf.mxu0
      %v683 = vadd.f32 0.0, %v682
      %v684 = vpop.f32.mrf.mxu0
      %v685 = vadd.f32 0.0, %v684
      %686 = vmatmul.bf16.gmra.mxu0 %v523
      %v687 = vpop.f32.mrf.mxu0
      %v688 = vadd.f32 0.0, %v687
      %v689 = vpop.f32.mrf.mxu0
      %v690 = vadd.f32 0.0, %v689
      %691 = vmatmul.bf16.gmra.mxu0 %v526
      %v692 = vpop.f32.mrf.mxu0
      %v693 = vadd.f32 0.0, %v692
      %v694 = vpop.f32.mrf.mxu0
      %v695 = vadd.f32 0.0, %v694
      %696 = vmatmul.bf16.gmra.mxu0 %v529
      %v697 = vpop.f32.mrf.mxu0
      %v698 = vadd.f32 0.0, %v697
      %v699 = vpop.f32.mrf.mxu0
      %v700 = vadd.f32 0.0, %v699
      %701 = vmatmul.bf16.gmra.mxu0 %v532
      %v702 = vpop.f32.mrf.mxu0
      %v703 = vadd.f32 0.0, %v702
      %v704 = vpop.f32.mrf.mxu0
      %v705 = vadd.f32 0.0, %v704
      %706 = vmatmul.bf16.gmra.mxu0 %v535
      %v707 = vpop.f32.mrf.mxu0
      %v708 = vadd.f32 0.0, %v707
      %v709 = vpop.f32.mrf.mxu0
      %v710 = vadd.f32 0.0, %v709
      %711 = vmatmul.bf16.gmra.mxu0 %v538
      %v712 = vpop.f32.mrf.mxu0
      %v713 = vadd.f32 0.0, %v712
      %v714 = vpop.f32.mrf.mxu0
      %v715 = vadd.f32 0.0, %v714
      %716 = vmatmul.bf16.gmra.mxu0 %v541
      %v717 = vpop.f32.mrf.mxu0
      %v718 = vadd.f32 0.0, %v717
      %v719 = vpop.f32.mrf.mxu0
      %v720 = vadd.f32 0.0, %v719
      %721 = vmatmul.bf16.gmra.mxu0 %v544
      %v722 = vpop.f32.mrf.mxu0
      %v723 = vadd.f32 0.0, %v722
      %v724 = vpop.f32.mrf.mxu0
      %v725 = vadd.f32 0.0, %v724
      %726 = vmatmul.bf16.gmra.mxu0 %v547
      %v727 = vpop.f32.mrf.mxu0
      %v728 = vadd.f32 0.0, %v727
      %v729 = vpop.f32.mrf.mxu0
      %v730 = vadd.f32 0.0, %v729
      %731 = vmatmul.bf16.gmra.mxu0 %v550
      %v732 = vpop.f32.mrf.mxu0
      %v733 = vadd.f32 0.0, %v732
      %v734 = vpop.f32.mrf.mxu0
      %v735 = vadd.f32 0.0, %v734
      %736 = vmatmul.bf16.gmra.mxu0 %v553
      %v737 = vpop.f32.mrf.mxu0
      %v738 = vadd.f32 0.0, %v737
      %v739 = vpop.f32.mrf.mxu0
      %v740 = vadd.f32 0.0, %v739
      %741 = vmatmul.bf16.gmra.mxu0 %v556
      %v742 = vpop.f32.mrf.mxu0
      %v743 = vadd.f32 0.0, %v742
      %v744 = vpop.f32.mrf.mxu0
      %v745 = vadd.f32 0.0, %v744
      %746 = vmatmul.bf16.gmra.mxu0 %v559
      %v747 = vpop.f32.mrf.mxu0
      %v748 = vadd.f32 0.0, %v747
      %v749 = vpop.f32.mrf.mxu0
      %v750 = vadd.f32 0.0, %v749
      %751 = vmatmul.bf16.gmra.mxu0 %v562
      %v752 = vpop.f32.mrf.mxu0
      %v753 = vadd.f32 0.0, %v752
      %v754 = vpop.f32.mrf.mxu0
      %v755 = vadd.f32 0.0, %v754
      %756 = vmatmul.bf16.gmra.mxu0 %v565
      %v757 = vpop.f32.mrf.mxu0
      %v758 = vadd.f32 0.0, %v757
      %v759 = vpop.f32.mrf.mxu0
      %v760 = vadd.f32 0.0, %v759
      %761 = vmatmul.bf16.gmra.mxu0 %v568
      %v762 = vpop.f32.mrf.mxu0
      %v763 = vadd.f32 0.0, %v762
      %v764 = vpop.f32.mrf.mxu0
      %v765 = vadd.f32 0.0, %v764
      %766 = vmatmul.bf16.gmra.mxu0 %v571
      %v767 = vpop.f32.mrf.mxu0
      %v768 = vadd.f32 0.0, %v767
      %v769 = vpop.f32.mrf.mxu0
      %v770 = vadd.f32 0.0, %v769
      %771 = vmatmul.bf16.gmra.mxu0 %v574
      %v772 = vpop.f32.mrf.mxu0
      %v773 = vadd.f32 0.0, %v772
      %v774 = vpop.f32.mrf.mxu0
      %v775 = vadd.f32 0.0, %v774
      %776 = vmatmul.bf16.gmra.mxu0 %v577
      %v777 = vpop.f32.mrf.mxu0
      %v778 = vadd.f32 0.0, %v777
      %v779 = vpop.f32.mrf.mxu0
      %v780 = vadd.f32 0.0, %v779
      %781 = vmatmul.bf16.gmra.mxu0 %v580
      %v782 = vpop.f32.mrf.mxu0
      %v783 = vadd.f32 0.0, %v782
      %v784 = vpop.f32.mrf.mxu0
      %v785 = vadd.f32 0.0, %v784
      %786 = vmatmul.bf16.gmra.mxu0 %v583
      %v787 = vpop.f32.mrf.mxu0
      %v788 = vadd.f32 0.0, %v787
      %v789 = vpop.f32.mrf.mxu0
      %v790 = vadd.f32 0.0, %v789
      %791 = vmatmul.bf16.gmra.mxu0 %v586
      %v792 = vpop.f32.mrf.mxu0
      %v793 = vadd.f32 0.0, %v792
      %v794 = vpop.f32.mrf.mxu0
      %v795 = vadd.f32 0.0, %v794
      %796 = vmatmul.bf16.gmra.mxu0 %v589
      %v797 = vpop.f32.mrf.mxu0
      %v798 = vadd.f32 0.0, %v797
      %v799 = vpop.f32.mrf.mxu0
      %v800 = vadd.f32 0.0, %v799
      %801 = vmatmul.bf16.gmra.mxu0 %v592
      %v802 = vpop.f32.mrf.mxu0
      %v803 = vadd.f32 0.0, %v802
      %v804 = vpop.f32.mrf.mxu0
      %v805 = vadd.f32 0.0, %v804
      %806 = vmatmul.bf16.gmra.mxu0 %v595
      %v807 = vpop.f32.mrf.mxu0
      %v808 = vadd.f32 0.0, %v807
      %v809 = vpop.f32.mrf.mxu0
      %v810 = vadd.f32 0.0, %v809
      %811 = vmatmul.bf16.gmra.mxu0 %v598
      %v812 = vpop.f32.mrf.mxu0
      %v813 = vadd.f32 0.0, %v812
      %v814 = vpop.f32.mrf.mxu0
      %v815 = vadd.f32 0.0, %v814
      %816 = vmatmul.bf16.gmra.mxu0 %v601
      %v817 = vpop.f32.mrf.mxu0
      %v818 = vadd.f32 0.0, %v817
      %v819 = vpop.f32.mrf.mxu0
      %v820 = vadd.f32 0.0, %v819
      %821 = vmatmul.bf16.gmra.mxu0 %v604
      %v822 = vpop.f32.mrf.mxu0
      %v823 = vadd.f32 0.0, %v822
      %v824 = vpop.f32.mrf.mxu0
      %v825 = vadd.f32 0.0, %v824
      %826 = vmatmul.bf16.gmra.mxu0 %v607
      %v827 = vpop.f32.mrf.mxu0
      %v828 = vadd.f32 0.0, %v827
      %v829 = vpop.f32.mrf.mxu0
      %v830 = vadd.f32 0.0, %v829
      %831 = vmatmul.bf16.gmra.mxu0 %v610
      %v832 = vpop.f32.mrf.mxu0
      %v833 = vadd.f32 0.0, %v832
      %v834 = vpop.f32.mrf.mxu0
      %v835 = vadd.f32 0.0, %v834
      %836 = vmatmul.bf16.gmra.mxu0 %v613
      %v837 = vpop.f32.mrf.mxu0
      %v838 = vadd.f32 0.0, %v837
      %v839 = vpop.f32.mrf.mxu0
      %v840 = vadd.f32 0.0, %v839
      %841 = vmatmul.bf16.gmra.mxu0 %v616
      %v842 = vpop.f32.mrf.mxu0
      %v843 = vadd.f32 0.0, %v842
      %v844 = vpop.f32.mrf.mxu0
      %v845 = vadd.f32 0.0, %v844
      %846 = vmatmul.bf16.gmra.mxu0 %v619
      %v847 = vpop.f32.mrf.mxu0
      %v848 = vadd.f32 0.0, %v847
      %v849 = vpop.f32.mrf.mxu0
      %v850 = vadd.f32 0.0, %v849
      %851 = vmatmul.bf16.gmra.mxu0 %v622
      %v852 = vpop.f32.mrf.mxu0
      %v853 = vadd.f32 0.0, %v852
      %v854 = vpop.f32.mrf.mxu0
      %v855 = vadd.f32 0.0, %v854
      %856 = vmatmul.bf16.gmra.mxu0 %v625
      %v857 = vpop.f32.mrf.mxu0
      %v858 = vadd.f32 0.0, %v857
      %v859 = vpop.f32.mrf.mxu0
      %v860 = vadd.f32 0.0, %v859
      %861 = vmatmul.bf16.gmra.mxu0 %v628
      %v862 = vpop.f32.mrf.mxu0
      %v863 = vadd.f32 0.0, %v862
      %v864 = vpop.f32.mrf.mxu0
      %v865 = vadd.f32 0.0, %v864
      %866 = vmatmul.bf16.gmra.mxu0 %v631
      %v867 = vpop.f32.mrf.mxu0
      %v868 = vadd.f32 0.0, %v867
      %v869 = vpop.f32.mrf.mxu0
      %v870 = vadd.f32 0.0, %v869
      %871 = vmatmul.bf16.gmra.mxu0 %v634
      %v872 = vpop.f32.mrf.mxu0
      %v873 = vadd.f32 0.0, %v872
      %v874 = vpop.f32.mrf.mxu0
      %v875 = vadd.f32 0.0, %v874
      %876 = vmatmul.bf16.gmra.mxu0 %v637
      %v877 = vpop.f32.mrf.mxu0
      %v878 = vadd.f32 0.0, %v877
      %v879 = vpop.f32.mrf.mxu0
      %v880 = vadd.f32 0.0, %v879
      %881 = vmatmul.bf16.gmra.mxu0 %v640
      %v882 = vpop.f32.mrf.mxu0
      %v883 = vadd.f32 0.0, %v882
      %v884 = vpop.f32.mrf.mxu0
      %v885 = vadd.f32 0.0, %v884
      %886 = vmatmul.bf16.gmra.mxu0 %v643
      %v887 = vpop.f32.mrf.mxu0
      %v888 = vadd.f32 0.0, %v887
      %v889 = vpop.f32.mrf.mxu0
      %v890 = vadd.f32 0.0, %v889
      %891 = vmatmul.bf16.gmra.mxu0 %v646
      %v892 = vpop.f32.mrf.mxu0
      %v893 = vadd.f32 0.0, %v892
      %v894 = vpop.f32.mrf.mxu0
      %v895 = vadd.f32 0.0, %v894
      %896 = vmatmul.bf16.gmra.mxu0 %v649
      %v897 = vpop.f32.mrf.mxu0
      %v898 = vadd.f32 0.0, %v897
      %v899 = vpop.f32.mrf.mxu0
      %v900 = vadd.f32 0.0, %v899
      %901 = vmatmul.bf16.gmra.mxu0 %v652
      %v902 = vpop.f32.mrf.mxu0
      %v903 = vadd.f32 0.0, %v902
      %v904 = vpop.f32.mrf.mxu0
      %v905 = vadd.f32 0.0, %v904
      %906 = vmatmul.bf16.gmra.mxu0 %v655
      %v907 = vpop.f32.mrf.mxu0
      %v908 = vadd.f32 0.0, %v907
      %v909 = vpop.f32.mrf.mxu0
      %v910 = vadd.f32 0.0, %v909
      %911 = vmatmul.bf16.gmra.mxu0 %v658
      %v912 = vpop.f32.mrf.mxu0
      %v913 = vadd.f32 0.0, %v912
      %v914 = vpop.f32.mrf.mxu0
      %v915 = vadd.f32 0.0, %v914
      %916 = vmatmul.bf16.gmra.mxu0 %v661
      %v917 = vpop.f32.mrf.mxu0
      %v918 = vadd.f32 0.0, %v917
      %v919 = vpop.f32.mrf.mxu0
      %v920 = vadd.f32 0.0, %v919
      %921 = vdwg.mxu0
      %922 = vmatpush.bf16.msra.mxu0 0
      %923 = vmatpush.bf16.msra.mxu0 0
      %924 = vmatpush.bf16.msra.mxu0 0
      %925 = vmatpush.bf16.msra.mxu0 0
      %926 = vmatpush.bf16.msra.mxu0 0
      %927 = vmatpush.bf16.msra.mxu0 0
      %928 = vmatpush.bf16.msra.mxu0 0
      %929 = vmatpush.bf16.msra.mxu0 %v509
      %930 = vmatmul.bf16.gmra.mxu0 %v514
      %v931 = vpop.f32.mrf.mxu0
      %v932 = vadd.f32 0.0, %v931
      %v933 = vpop.f32.mrf.mxu0
      %v934 = vadd.f32 0.0, %v933
      %935 = vmatmul.bf16.gmra.mxu0 %v517
      %v936 = vpop.f32.mrf.mxu0
      %v937 = vadd.f32 0.0, %v936
      %v938 = vpop.f32.mrf.mxu0
      %v939 = vadd.f32 0.0, %v938
      %940 = vmatmul.bf16.gmra.mxu0 %v520
      %v941 = vpop.f32.mrf.mxu0
      %v942 = vadd.f32 0.0, %v941
      %v943 = vpop.f32.mrf.mxu0
      %v944 = vadd.f32 0.0, %v943
      %945 = vmatmul.bf16.gmra.mxu0 %v523
      %v946 = vpop.f32.mrf.mxu0
      %v947 = vadd.f32 0.0, %v946
      %v948 = vpop.f32.mrf.mxu0
      %v949 = vadd.f32 0.0, %v948
      %950 = vmatmul.bf16.gmra.mxu0 %v526
      %v951 = vpop.f32.mrf.mxu0
      %v952 = vadd.f32 0.0, %v951
      %v953 = vpop.f32.mrf.mxu0
      %v954 = vadd.f32 0.0, %v953
      %955 = vmatmul.bf16.gmra.mxu0 %v529
      %v956 = vpop.f32.mrf.mxu0
      %v957 = vadd.f32 0.0, %v956
      %v958 = vpop.f32.mrf.mxu0
      %v959 = vadd.f32 0.0, %v958
      %960 = vmatmul.bf16.gmra.mxu0 %v532
      %v961 = vpop.f32.mrf.mxu0
      %v962 = vadd.f32 0.0, %v961
      %v963 = vpop.f32.mrf.mxu0
      %v964 = vadd.f32 0.0, %v963
      %965 = vmatmul.bf16.gmra.mxu0 %v535
      %v966 = vpop.f32.mrf.mxu0
      %v967 = vadd.f32 0.0, %v966
      %v968 = vpop.f32.mrf.mxu0
      %v969 = vadd.f32 0.0, %v968
      %970 = vmatmul.bf16.gmra.mxu0 %v538
      %v971 = vpop.f32.mrf.mxu0
      %v972 = vadd.f32 0.0, %v971
      %v973 = vpop.f32.mrf.mxu0
      %v974 = vadd.f32 0.0, %v973
      %975 = vmatmul.bf16.gmra.mxu0 %v541
      %v976 = vpop.f32.mrf.mxu0
      %v977 = vadd.f32 0.0, %v976
      %v978 = vpop.f32.mrf.mxu0
      %v979 = vadd.f32 0.0, %v978
      %980 = vmatmul.bf16.gmra.mxu0 %v544
      %v981 = vpop.f32.mrf.mxu0
      %v982 = vadd.f32 0.0, %v981
      %v983 = vpop.f32.mrf.mxu0
      %v984 = vadd.f32 0.0, %v983
      %985 = vmatmul.bf16.gmra.mxu0 %v547
      %v986 = vpop.f32.mrf.mxu0
      %v987 = vadd.f32 0.0, %v986
      %v988 = vpop.f32.mrf.mxu0
      %v989 = vadd.f32 0.0, %v988
      %990 = vmatmul.bf16.gmra.mxu0 %v550
      %v991 = vpop.f32.mrf.mxu0
      %v992 = vadd.f32 0.0, %v991
      %v993 = vpop.f32.mrf.mxu0
      %v994 = vadd.f32 0.0, %v993
      %995 = vmatmul.bf16.gmra.mxu0 %v553
      %v996 = vpop.f32.mrf.mxu0
      %v997 = vadd.f32 0.0, %v996
      %v998 = vpop.f32.mrf.mxu0
      %v999 = vadd.f32 0.0, %v998
      %1000 = vmatmul.bf16.gmra.mxu0 %v556
      %v1001 = vpop.f32.mrf.mxu0
      %v1002 = vadd.f32 0.0, %v1001
      %v1003 = vpop.f32.mrf.mxu0
      %v1004 = vadd.f32 0.0, %v1003
      %1005 = vmatmul.bf16.gmra.mxu0 %v559
      %v1006 = vpop.f32.mrf.mxu0
      %v1007 = vadd.f32 0.0, %v1006
      %v1008 = vpop.f32.mrf.mxu0
      %v1009 = vadd.f32 0.0, %v1008
      %1010 = vmatmul.bf16.gmra.mxu0 %v562
      %v1011 = vpop.f32.mrf.mxu0
      %v1012 = vadd.f32 0.0, %v1011
      %v1013 = vpop.f32.mrf.mxu0
      %v1014 = vadd.f32 0.0, %v1013
      %1015 = vmatmul.bf16.gmra.mxu0 %v565
      %v1016 = vpop.f32.mrf.mxu0
      %v1017 = vadd.f32 0.0, %v1016
      %v1018 = vpop.f32.mrf.mxu0
      %v1019 = vadd.f32 0.0, %v1018
      %1020 = vmatmul.bf16.gmra.mxu0 %v568
      %v1021 = vpop.f32.mrf.mxu0
      %v1022 = vadd.f32 0.0, %v1021
      %v1023 = vpop.f32.mrf.mxu0
      %v1024 = vadd.f32 0.0, %v1023
      %1025 = vmatmul.bf16.gmra.mxu0 %v571
      %v1026 = vpop.f32.mrf.mxu0
      %v1027 = vadd.f32 0.0, %v1026
      %v1028 = vpop.f32.mrf.mxu0
      %v1029 = vadd.f32 0.0, %v1028
      %1030 = vmatmul.bf16.gmra.mxu0 %v574
      %v1031 = vpop.f32.mrf.mxu0
      %v1032 = vadd.f32 0.0, %v1031
      %v1033 = vpop.f32.mrf.mxu0
      %v1034 = vadd.f32 0.0, %v1033
      %1035 = vmatmul.bf16.gmra.mxu0 %v577
      %v1036 = vpop.f32.mrf.mxu0
      %v1037 = vadd.f32 0.0, %v1036
      %v1038 = vpop.f32.mrf.mxu0
      %v1039 = vadd.f32 0.0, %v1038
      %1040 = vmatmul.bf16.gmra.mxu0 %v580
      %v1041 = vpop.f32.mrf.mxu0
      %v1042 = vadd.f32 0.0, %v1041
      %v1043 = vpop.f32.mrf.mxu0
      %v1044 = vadd.f32 0.0, %v1043
      %1045 = vmatmul.bf16.gmra.mxu0 %v583
      %v1046 = vpop.f32.mrf.mxu0
      %v1047 = vadd.f32 0.0, %v1046
      %v1048 = vpop.f32.mrf.mxu0
      %v1049 = vadd.f32 0.0, %v1048
      %1050 = vmatmul.bf16.gmra.mxu0 %v586
      %v1051 = vpop.f32.mrf.mxu0
      %v1052 = vadd.f32 0.0, %v1051
      %v1053 = vpop.f32.mrf.mxu0
      %v1054 = vadd.f32 0.0, %v1053
      %1055 = vmatmul.bf16.gmra.mxu0 %v589
      %v1056 = vpop.f32.mrf.mxu0
      %v1057 = vadd.f32 0.0, %v1056
      %v1058 = vpop.f32.mrf.mxu0
      %v1059 = vadd.f32 0.0, %v1058
      %1060 = vmatmul.bf16.gmra.mxu0 %v592
      %v1061 = vpop.f32.mrf.mxu0
      %v1062 = vadd.f32 0.0, %v1061
      %v1063 = vpop.f32.mrf.mxu0
      %v1064 = vadd.f32 0.0, %v1063
      %1065 = vmatmul.bf16.gmra.mxu0 %v595
      %v1066 = vpop.f32.mrf.mxu0
      %v1067 = vadd.f32 0.0, %v1066
      %v1068 = vpop.f32.mrf.mxu0
      %v1069 = vadd.f32 0.0, %v1068
      %1070 = vmatmul.bf16.gmra.mxu0 %v598
      %v1071 = vpop.f32.mrf.mxu0
      %v1072 = vadd.f32 0.0, %v1071
      %v1073 = vpop.f32.mrf.mxu0
      %v1074 = vadd.f32 0.0, %v1073
      %1075 = vmatmul.bf16.gmra.mxu0 %v601
      %v1076 = vpop.f32.mrf.mxu0
      %v1077 = vadd.f32 0.0, %v1076
      %v1078 = vpop.f32.mrf.mxu0
      %v1079 = vadd.f32 0.0, %v1078
      %1080 = vmatmul.bf16.gmra.mxu0 %v604
      %v1081 = vpop.f32.mrf.mxu0
      %v1082 = vadd.f32 0.0, %v1081
      %v1083 = vpop.f32.mrf.mxu0
      %v1084 = vadd.f32 0.0, %v1083
      %1085 = vmatmul.bf16.gmra.mxu0 %v607
      %v1086 = vpop.f32.mrf.mxu0
      %v1087 = vadd.f32 0.0, %v1086
      %v1088 = vpop.f32.mrf.mxu0
      %v1089 = vadd.f32 0.0, %v1088
      %1090 = vmatmul.bf16.gmra.mxu0 %v610
      %v1091 = vpop.f32.mrf.mxu0
      %v1092 = vadd.f32 0.0, %v1091
      %v1093 = vpop.f32.mrf.mxu0
      %v1094 = vadd.f32 0.0, %v1093
      %1095 = vmatmul.bf16.gmra.mxu0 %v613
      %v1096 = vpop.f32.mrf.mxu0
      %v1097 = vadd.f32 0.0, %v1096
      %v1098 = vpop.f32.mrf.mxu0
      %v1099 = vadd.f32 0.0, %v1098
      %1100 = vmatmul.bf16.gmra.mxu0 %v616
      %v1101 = vpop.f32.mrf.mxu0
      %v1102 = vadd.f32 0.0, %v1101
      %v1103 = vpop.f32.mrf.mxu0
      %v1104 = vadd.f32 0.0, %v1103
      %1105 = vmatmul.bf16.gmra.mxu0 %v619
      %v1106 = vpop.f32.mrf.mxu0
      %v1107 = vadd.f32 0.0, %v1106
      %v1108 = vpop.f32.mrf.mxu0
      %v1109 = vadd.f32 0.0, %v1108
      %1110 = vmatmul.bf16.gmra.mxu0 %v622
      %v1111 = vpop.f32.mrf.mxu0
      %v1112 = vadd.f32 0.0, %v1111
      %v1113 = vpop.f32.mrf.mxu0
      %v1114 = vadd.f32 0.0, %v1113
      %1115 = vmatmul.bf16.gmra.mxu0 %v625
      %v1116 = vpop.f32.mrf.mxu0
      %v1117 = vadd.f32 0.0, %v1116
      %v1118 = vpop.f32.mrf.mxu0
      %v1119 = vadd.f32 0.0, %v1118
      %1120 = vmatmul.bf16.gmra.mxu0 %v628
      %v1121 = vpop.f32.mrf.mxu0
      %v1122 = vadd.f32 0.0, %v1121
      %v1123 = vpop.f32.mrf.mxu0
      %v1124 = vadd.f32 0.0, %v1123
      %1125 = vmatmul.bf16.gmra.mxu0 %v631
      %v1126 = vpop.f32.mrf.mxu0
      %v1127 = vadd.f32 0.0, %v1126
      %v1128 = vpop.f32.mrf.mxu0
      %v1129 = vadd.f32 0.0, %v1128
      %1130 = vmatmul.bf16.gmra.mxu0 %v634
      %v1131 = vpop.f32.mrf.mxu0
      %v1132 = vadd.f32 0.0, %v1131
      %v1133 = vpop.f32.mrf.mxu0
      %v1134 = vadd.f32 0.0, %v1133
      %1135 = vmatmul.bf16.gmra.mxu0 %v637
      %v1136 = vpop.f32.mrf.mxu0
      %v1137 = vadd.f32 0.0, %v1136
      %v1138 = vpop.f32.mrf.mxu0
      %v1139 = vadd.f32 0.0, %v1138
      %1140 = vmatmul.bf16.gmra.mxu0 %v640
      %v1141 = vpop.f32.mrf.mxu0
      %v1142 = vadd.f32 0.0, %v1141
      %v1143 = vpop.f32.mrf.mxu0
      %v1144 = vadd.f32 0.0, %v1143
      %1145 = vmatmul.bf16.gmra.mxu0 %v643
      %v1146 = vpop.f32.mrf.mxu0
      %v1147 = vadd.f32 0.0, %v1146
      %v1148 = vpop.f32.mrf.mxu0
      %v1149 = vadd.f32 0.0, %v1148
      %1150 = vmatmul.bf16.gmra.mxu0 %v646
      %v1151 = vpop.f32.mrf.mxu0
      %v1152 = vadd.f32 0.0, %v1151
      %v1153 = vpop.f32.mrf.mxu0
      %v1154 = vadd.f32 0.0, %v1153
      %1155 = vmatmul.bf16.gmra.mxu0 %v649
      %v1156 = vpop.f32.mrf.mxu0
      %v1157 = vadd.f32 0.0, %v1156
      %v1158 = vpop.f32.mrf.mxu0
      %v1159 = vadd.f32 0.0, %v1158
      %1160 = vmatmul.bf16.gmra.mxu0 %v652
      %v1161 = vpop.f32.mrf.mxu0
      %v1162 = vadd.f32 0.0, %v1161
      %v1163 = vpop.f32.mrf.mxu0
      %v1164 = vadd.f32 0.0, %v1163
      %1165 = vmatmul.bf16.gmra.mxu0 %v655
      %v1166 = vpop.f32.mrf.mxu0
      %v1167 = vadd.f32 0.0, %v1166
      %v1168 = vpop.f32.mrf.mxu0
      %v1169 = vadd.f32 0.0, %v1168
      %1170 = vmatmul.bf16.gmra.mxu0 %v658
      %v1171 = vpop.f32.mrf.mxu0
      %v1172 = vadd.f32 0.0, %v1171
      %v1173 = vpop.f32.mrf.mxu0
      %v1174 = vadd.f32 0.0, %v1173
      %1175 = vmatmul.bf16.gmra.mxu0 %v661
      %v1176 = vpop.f32.mrf.mxu0
      %v1177 = vadd.f32 0.0, %v1176
      %v1178 = vpop.f32.mrf.mxu0
      %v1179 = vadd.f32 0.0, %v1178
      %1180 = vdwg.mxu0
      %1181 = vst [vmem:[%s147] sm:$0xff] %v673
      %vm1182 = vcmask 523264
      %1183 = vst.msk [vmem:[%s147 + $0x8] sm:$0xff] %vm1182, %v932
      %1184 = vst [vmem:[%s147 + $0x10] sm:$0xff] %v675
      %1185 = vst.msk [vmem:[%s147 + $0x18] sm:$0xff] %vm1182, %v934
      %1186 = vst [vmem:[%s147 + $0x20] sm:$0xff] %v678
      %1187 = vst.msk [vmem:[%s147 + $0x28] sm:$0xff] %vm1182, %v937
      %1188 = vst [vmem:[%s147 + $0x30] sm:$0xff] %v680
      %1189 = vst.msk [vmem:[%s147 + $0x38] sm:$0xff] %vm1182, %v939
      %1190 = vst [vmem:[%s147 + $0x40] sm:$0xff] %v683
      %1191 = vst.msk [vmem:[%s147 + $0x48] sm:$0xff] %vm1182, %v942
      %1192 = vst [vmem:[%s147 + $0x50] sm:$0xff] %v685
      %1193 = vst.msk [vmem:[%s147 + $0x58] sm:$0xff] %vm1182, %v944
      %1194 = vst [vmem:[%s147 + $0x60] sm:$0xff] %v688
      %1195 = vst.msk [vmem:[%s147 + $0x68] sm:$0xff] %vm1182, %v947
      %1196 = vst [vmem:[%s147 + $0x70] sm:$0xff] %v690
      %1197 = vst.msk [vmem:[%s147 + $0x78] sm:$0xff] %vm1182, %v949
      %1198 = vst [vmem:[%s147 + $0x80] sm:$0xff] %v693
      %1199 = vst.msk [vmem:[%s147 + $0x88] sm:$0xff] %vm1182, %v952
      %1200 = vst [vmem:[%s147 + $0x90] sm:$0xff] %v695
      %1201 = vst.msk [vmem:[%s147 + $0x98] sm:$0xff] %vm1182, %v954
      %1202 = vst [vmem:[%s147 + $0xa0] sm:$0xff] %v698
      %1203 = vst.msk [vmem:[%s147 + $0xa8] sm:$0xff] %vm1182, %v957
      %1204 = vst [vmem:[%s147 + $0xb0] sm:$0xff] %v700
      %1205 = vst.msk [vmem:[%s147 + $0xb8] sm:$0xff] %vm1182, %v959
      %1206 = vst [vmem:[%s147 + $0xc0] sm:$0xff] %v703
      %1207 = vst.msk [vmem:[%s147 + $0xc8] sm:$0xff] %vm1182, %v962
      %1208 = vst [vmem:[%s147 + $0xd0] sm:$0xff] %v705
      %1209 = vst.msk [vmem:[%s147 + $0xd8] sm:$0xff] %vm1182, %v964
      %1210 = vst [vmem:[%s147 + $0xe0] sm:$0xff] %v708
      %1211 = vst.msk [vmem:[%s147 + $0xe8] sm:$0xff] %vm1182, %v967
      %1212 = vst [vmem:[%s147 + $0xf0] sm:$0xff] %v710
      %1213 = vst.msk [vmem:[%s147 + $0xf8] sm:$0xff] %vm1182, %v969
      %1214 = vst [vmem:[%s147 + $0x100] sm:$0xff] %v713
      %1215 = vst.msk [vmem:[%s147 + $0x108] sm:$0xff] %vm1182, %v972
      %1216 = vst [vmem:[%s147 + $0x110] sm:$0xff] %v715
      %1217 = vst.msk [vmem:[%s147 + $0x118] sm:$0xff] %vm1182, %v974
      %1218 = vst [vmem:[%s147 + $0x120] sm:$0xff] %v718
      %1219 = vst.msk [vmem:[%s147 + $0x128] sm:$0xff] %vm1182, %v977
      %1220 = vst [vmem:[%s147 + $0x130] sm:$0xff] %v720
      %1221 = vst.msk [vmem:[%s147 + $0x138] sm:$0xff] %vm1182, %v979
      %1222 = vst [vmem:[%s147 + $0x140] sm:$0xff] %v723
      %1223 = vst.msk [vmem:[%s147 + $0x148] sm:$0xff] %vm1182, %v982
      %1224 = vst [vmem:[%s147 + $0x150] sm:$0xff] %v725
      %1225 = vst.msk [vmem:[%s147 + $0x158] sm:$0xff] %vm1182, %v984
      %1226 = vst [vmem:[%s147 + $0x160] sm:$0xff] %v728
      %1227 = vst.msk [vmem:[%s147 + $0x168] sm:$0xff] %vm1182, %v987
      %1228 = vst [vmem:[%s147 + $0x170] sm:$0xff] %v730
      %1229 = vst.msk [vmem:[%s147 + $0x178] sm:$0xff] %vm1182, %v989
      %1230 = vst [vmem:[%s147 + $0x180] sm:$0xff] %v733
      %1231 = vst.msk [vmem:[%s147 + $0x188] sm:$0xff] %vm1182, %v992
      %1232 = vst [vmem:[%s147 + $0x190] sm:$0xff] %v735
      %1233 = vst.msk [vmem:[%s147 + $0x198] sm:$0xff] %vm1182, %v994
      %1234 = vst [vmem:[%s147 + $0x1a0] sm:$0xff] %v738
      %1235 = vst.msk [vmem:[%s147 + $0x1a8] sm:$0xff] %vm1182, %v997
      %1236 = vst [vmem:[%s147 + $0x1b0] sm:$0xff] %v740
      %1237 = vst.msk [vmem:[%s147 + $0x1b8] sm:$0xff] %vm1182, %v999
      %1238 = vst [vmem:[%s147 + $0x1c0] sm:$0xff] %v743
      %1239 = vst.msk [vmem:[%s147 + $0x1c8] sm:$0xff] %vm1182, %v1002
      %1240 = vst [vmem:[%s147 + $0x1d0] sm:$0xff] %v745
      %1241 = vst.msk [vmem:[%s147 + $0x1d8] sm:$0xff] %vm1182, %v1004
      %1242 = vst [vmem:[%s147 + $0x1e0] sm:$0xff] %v748
      %1243 = vst.msk [vmem:[%s147 + $0x1e8] sm:$0xff] %vm1182, %v1007
      %1244 = vst [vmem:[%s147 + $0x1f0] sm:$0xff] %v750
      %1245 = vst.msk [vmem:[%s147 + $0x1f8] sm:$0xff] %vm1182, %v1009
      %1246 = vst [vmem:[%s147 + $0x200] sm:$0xff] %v753
      %1247 = vst.msk [vmem:[%s147 + $0x208] sm:$0xff] %vm1182, %v1012
      %1248 = vst [vmem:[%s147 + $0x210] sm:$0xff] %v755
      %1249 = vst.msk [vmem:[%s147 + $0x218] sm:$0xff] %vm1182, %v1014
      %1250 = vst [vmem:[%s147 + $0x220] sm:$0xff] %v758
      %1251 = vst.msk [vmem:[%s147 + $0x228] sm:$0xff] %vm1182, %v1017
      %1252 = vst [vmem:[%s147 + $0x230] sm:$0xff] %v760
      %1253 = vst.msk [vmem:[%s147 + $0x238] sm:$0xff] %vm1182, %v1019
      %1254 = vst [vmem:[%s147 + $0x240] sm:$0xff] %v763
      %1255 = vst.msk [vmem:[%s147 + $0x248] sm:$0xff] %vm1182, %v1022
      %1256 = vst [vmem:[%s147 + $0x250] sm:$0xff] %v765
      %1257 = vst.msk [vmem:[%s147 + $0x258] sm:$0xff] %vm1182, %v1024
      %1258 = vst [vmem:[%s147 + $0x260] sm:$0xff] %v768
      %1259 = vst.msk [vmem:[%s147 + $0x268] sm:$0xff] %vm1182, %v1027
      %1260 = vst [vmem:[%s147 + $0x270] sm:$0xff] %v770
      %1261 = vst.msk [vmem:[%s147 + $0x278] sm:$0xff] %vm1182, %v1029
      %1262 = vst [vmem:[%s147 + $0x280] sm:$0xff] %v773
      %1263 = vst.msk [vmem:[%s147 + $0x288] sm:$0xff] %vm1182, %v1032
      %1264 = vst [vmem:[%s147 + $0x290] sm:$0xff] %v775
      %1265 = vst.msk [vmem:[%s147 + $0x298] sm:$0xff] %vm1182, %v1034
      %1266 = vst [vmem:[%s147 + $0x2a0] sm:$0xff] %v778
      %1267 = vst.msk [vmem:[%s147 + $0x2a8] sm:$0xff] %vm1182, %v1037
      %1268 = vst [vmem:[%s147 + $0x2b0] sm:$0xff] %v780
      %1269 = vst.msk [vmem:[%s147 + $0x2b8] sm:$0xff] %vm1182, %v1039
      %1270 = vst [vmem:[%s147 + $0x2c0] sm:$0xff] %v783
      %1271 = vst.msk [vmem:[%s147 + $0x2c8] sm:$0xff] %vm1182, %v1042
      %1272 = vst [vmem:[%s147 + $0x2d0] sm:$0xff] %v785
      %1273 = vst.msk [vmem:[%s147 + $0x2d8] sm:$0xff] %vm1182, %v1044
      %1274 = vst [vmem:[%s147 + $0x2e0] sm:$0xff] %v788
      %1275 = vst.msk [vmem:[%s147 + $0x2e8] sm:$0xff] %vm1182, %v1047
      %1276 = vst [vmem:[%s147 + $0x2f0] sm:$0xff] %v790
      %1277 = vst.msk [vmem:[%s147 + $0x2f8] sm:$0xff] %vm1182, %v1049
      %1278 = vst [vmem:[%s147 + $0x300] sm:$0xff] %v793
      %1279 = vst.msk [vmem:[%s147 + $0x308] sm:$0xff] %vm1182, %v1052
      %1280 = vst [vmem:[%s147 + $0x310] sm:$0xff] %v795
      %1281 = vst.msk [vmem:[%s147 + $0x318] sm:$0xff] %vm1182, %v1054
      %1282 = vst [vmem:[%s147 + $0x320] sm:$0xff] %v798
      %1283 = vst.msk [vmem:[%s147 + $0x328] sm:$0xff] %vm1182, %v1057
      %1284 = vst [vmem:[%s147 + $0x330] sm:$0xff] %v800
      %1285 = vst.msk [vmem:[%s147 + $0x338] sm:$0xff] %vm1182, %v1059
      %1286 = vst [vmem:[%s147 + $0x340] sm:$0xff] %v803
      %1287 = vst.msk [vmem:[%s147 + $0x348] sm:$0xff] %vm1182, %v1062
      %1288 = vst [vmem:[%s147 + $0x350] sm:$0xff] %v805
      %1289 = vst.msk [vmem:[%s147 + $0x358] sm:$0xff] %vm1182, %v1064
      %1290 = vst [vmem:[%s147 + $0x360] sm:$0xff] %v808
      %1291 = vst.msk [vmem:[%s147 + $0x368] sm:$0xff] %vm1182, %v1067
      %1292 = vst [vmem:[%s147 + $0x370] sm:$0xff] %v810
      %1293 = vst.msk [vmem:[%s147 + $0x378] sm:$0xff] %vm1182, %v1069
      %1294 = vst [vmem:[%s147 + $0x380] sm:$0xff] %v813
      %1295 = vst.msk [vmem:[%s147 + $0x388] sm:$0xff] %vm1182, %v1072
      %1296 = vst [vmem:[%s147 + $0x390] sm:$0xff] %v815
      %1297 = vst.msk [vmem:[%s147 + $0x398] sm:$0xff] %vm1182, %v1074
      %1298 = vst [vmem:[%s147 + $0x3a0] sm:$0xff] %v818
      %1299 = vst.msk [vmem:[%s147 + $0x3a8] sm:$0xff] %vm1182, %v1077
      %1300 = vst [vmem:[%s147 + $0x3b0] sm:$0xff] %v820
      %1301 = vst.msk [vmem:[%s147 + $0x3b8] sm:$0xff] %vm1182, %v1079
      %1302 = vst [vmem:[%s147 + $0x3c0] sm:$0xff] %v823
      %1303 = vst.msk [vmem:[%s147 + $0x3c8] sm:$0xff] %vm1182, %v1082
      %1304 = vst [vmem:[%s147 + $0x3d0] sm:$0xff] %v825
      %1305 = vst.msk [vmem:[%s147 + $0x3d8] sm:$0xff] %vm1182, %v1084
      %1306 = vst [vmem:[%s147 + $0x3e0] sm:$0xff] %v828
      %1307 = vst.msk [vmem:[%s147 + $0x3e8] sm:$0xff] %vm1182, %v1087
      %1308 = vst [vmem:[%s147 + $0x3f0] sm:$0xff] %v830
      %1309 = vst.msk [vmem:[%s147 + $0x3f8] sm:$0xff] %vm1182, %v1089
      %1310 = vst [vmem:[%s147 + $0x400] sm:$0xff] %v833
      %1311 = vst.msk [vmem:[%s147 + $0x408] sm:$0xff] %vm1182, %v1092
      %1312 = vst [vmem:[%s147 + $0x410] sm:$0xff] %v835
      %1313 = vst.msk [vmem:[%s147 + $0x418] sm:$0xff] %vm1182, %v1094
      %1314 = vst [vmem:[%s147 + $0x420] sm:$0xff] %v838
      %1315 = vst.msk [vmem:[%s147 + $0x428] sm:$0xff] %vm1182, %v1097
      %1316 = vst [vmem:[%s147 + $0x430] sm:$0xff] %v840
      %1317 = vst.msk [vmem:[%s147 + $0x438] sm:$0xff] %vm1182, %v1099
      %1318 = vst [vmem:[%s147 + $0x440] sm:$0xff] %v843
      %1319 = vst.msk [vmem:[%s147 + $0x448] sm:$0xff] %vm1182, %v1102
      %1320 = vst [vmem:[%s147 + $0x450] sm:$0xff] %v845
      %1321 = vst.msk [vmem:[%s147 + $0x458] sm:$0xff] %vm1182, %v1104
      %1322 = vst [vmem:[%s147 + $0x460] sm:$0xff] %v848
      %1323 = vst.msk [vmem:[%s147 + $0x468] sm:$0xff] %vm1182, %v1107
      %1324 = vst [vmem:[%s147 + $0x470] sm:$0xff] %v850
      %1325 = vst.msk [vmem:[%s147 + $0x478] sm:$0xff] %vm1182, %v1109
      %1326 = vst [vmem:[%s147 + $0x480] sm:$0xff] %v853
      %1327 = vst.msk [vmem:[%s147 + $0x488] sm:$0xff] %vm1182, %v1112
      %1328 = vst [vmem:[%s147 + $0x490] sm:$0xff] %v855
      %1329 = vst.msk [vmem:[%s147 + $0x498] sm:$0xff] %vm1182, %v1114
      %1330 = vst [vmem:[%s147 + $0x4a0] sm:$0xff] %v858
      %1331 = vst.msk [vmem:[%s147 + $0x4a8] sm:$0xff] %vm1182, %v1117
      %1332 = vst [vmem:[%s147 + $0x4b0] sm:$0xff] %v860
      %1333 = vst.msk [vmem:[%s147 + $0x4b8] sm:$0xff] %vm1182, %v1119
      %1334 = vst [vmem:[%s147 + $0x4c0] sm:$0xff] %v863
      %1335 = vst.msk [vmem:[%s147 + $0x4c8] sm:$0xff] %vm1182, %v1122
      %1336 = vst [vmem:[%s147 + $0x4d0] sm:$0xff] %v865
      %1337 = vst.msk [vmem:[%s147 + $0x4d8] sm:$0xff] %vm1182, %v1124
      %1338 = vst [vmem:[%s147 + $0x4e0] sm:$0xff] %v868
      %1339 = vst.msk [vmem:[%s147 + $0x4e8] sm:$0xff] %vm1182, %v1127
      %1340 = vst [vmem:[%s147 + $0x4f0] sm:$0xff] %v870
      %1341 = vst.msk [vmem:[%s147 + $0x4f8] sm:$0xff] %vm1182, %v1129
      %1342 = vst [vmem:[%s147 + $0x500] sm:$0xff] %v873
      %1343 = vst.msk [vmem:[%s147 + $0x508] sm:$0xff] %vm1182, %v1132
      %1344 = vst [vmem:[%s147 + $0x510] sm:$0xff] %v875
      %1345 = vst.msk [vmem:[%s147 + $0x518] sm:$0xff] %vm1182, %v1134
      %1346 = vst [vmem:[%s147 + $0x520] sm:$0xff] %v878
      %1347 = vst.msk [vmem:[%s147 + $0x528] sm:$0xff] %vm1182, %v1137
      %1348 = vst [vmem:[%s147 + $0x530] sm:$0xff] %v880
      %1349 = vst.msk [vmem:[%s147 + $0x538] sm:$0xff] %vm1182, %v1139
      %1350 = vst [vmem:[%s147 + $0x540] sm:$0xff] %v883
      %1351 = vst.msk [vmem:[%s147 + $0x548] sm:$0xff] %vm1182, %v1142
      %1352 = vst [vmem:[%s147 + $0x550] sm:$0xff] %v885
      %1353 = vst.msk [vmem:[%s147 + $0x558] sm:$0xff] %vm1182, %v1144
      %1354 = vst [vmem:[%s147 + $0x560] sm:$0xff] %v888
      %1355 = vst.msk [vmem:[%s147 + $0x568] sm:$0xff] %vm1182, %v1147
      %1356 = vst [vmem:[%s147 + $0x570] sm:$0xff] %v890
      %1357 = vst.msk [vmem:[%s147 + $0x578] sm:$0xff] %vm1182, %v1149
      %1358 = vst [vmem:[%s147 + $0x580] sm:$0xff] %v893
      %1359 = vst.msk [vmem:[%s147 + $0x588] sm:$0xff] %vm1182, %v1152
      %1360 = vst [vmem:[%s147 + $0x590] sm:$0xff] %v895
      %1361 = vst.msk [vmem:[%s147 + $0x598] sm:$0xff] %vm1182, %v1154
      %1362 = vst [vmem:[%s147 + $0x5a0] sm:$0xff] %v898
      %1363 = vst.msk [vmem:[%s147 + $0x5a8] sm:$0xff] %vm1182, %v1157
      %1364 = vst [vmem:[%s147 + $0x5b0] sm:$0xff] %v900
      %1365 = vst.msk [vmem:[%s147 + $0x5b8] sm:$0xff] %vm1182, %v1159
      %1366 = vst [vmem:[%s147 + $0x5c0] sm:$0xff] %v903
      %1367 = vst.msk [vmem:[%s147 + $0x5c8] sm:$0xff] %vm1182, %v1162
      %1368 = vst [vmem:[%s147 + $0x5d0] sm:$0xff] %v905
      %1369 = vst.msk [vmem:[%s147 + $0x5d8] sm:$0xff] %vm1182, %v1164
      %1370 = vst [vmem:[%s147 + $0x5e0] sm:$0xff] %v908
      %1371 = vst.msk [vmem:[%s147 + $0x5e8] sm:$0xff] %vm1182, %v1167
      %1372 = vst [vmem:[%s147 + $0x5f0] sm:$0xff] %v910
      %1373 = vst.msk [vmem:[%s147 + $0x5f8] sm:$0xff] %vm1182, %v1169
      %1374 = vst [vmem:[%s147 + $0x600] sm:$0xff] %v913
      %1375 = vst.msk [vmem:[%s147 + $0x608] sm:$0xff] %vm1182, %v1172
      %1376 = vst [vmem:[%s147 + $0x610] sm:$0xff] %v915
      %1377 = vst.msk [vmem:[%s147 + $0x618] sm:$0xff] %vm1182, %v1174
      %1378 = vst [vmem:[%s147 + $0x620] sm:$0xff] %v918
      %1379 = vst.msk [vmem:[%s147 + $0x628] sm:$0xff] %vm1182, %v1177
      %1380 = vst [vmem:[%s147 + $0x630] sm:$0xff] %v920
      %1381 = vst.msk [vmem:[%s147 + $0x638] sm:$0xff] %vm1182, %v1179
      %s1382 = smul.u32 100, %s13
      %p1383 = scmp.lt.s32.totalorder %s1382, 199
      %s1384 = scalar_select %p1383, %s1382, 199
      %s1385 = smul.addr %s1384, 2
      %s1386 = smul.addr %s1385, 8
      %s1387 = scalar_lea.vmem %s2, %s1386
      // Predicated region
      $region29: #{icil_forward.17} parent=27 // pred_check
        %p1388 = pneg %p78
      $region30: #{icil_forward.17} parent=27 // pred_check_branch
        %1390 = sbr.rel (%p1388) target = $region32
      $region31: #{icil_forward.17} parent=27 // pred_region
        %s1391 = smul.u32 100, %s13
      $region32: #{icil_forward.17} parent=27 // pred_fallthru
        _
    $region28: #{icil_forward.17} parent=5 // pred_fallthru
      _
    %p1392 = scmp.le.s32.totalorder 2, %s8
    // Predicated region
    $region33: #{icil_forward.17} parent=5 // pred_check
      %p1393 = pneg %p1392
    $region34: #{icil_forward.17} parent=5 // pred_check_branch
      %1395 = sbr.rel (%p1393) target = $region36
    $region35: #{icil_forward.17} parent=5 // pred_region
      %s1396 = ssub.s32 %s8, 2
      // Predicated region
      $region37: #{icil_forward.17} parent=35 // pred_check
        %p1397 = pneg %p84
      $region38: #{icil_forward.17} parent=35 // pred_check_branch
        %1399 = sbr.rel (%p1397) target = $region40
      $region39: #{icil_forward.17} parent=35 // pred_region
        %s1400 = smul.u32 100, %s14
        %p1401 = scmp.lt.s32.totalorder %s1400, 199
        %s1402 = scalar_select %p1401, %s1400, 199
        %s1403 = smul.addr %s1402, 2
        %s1404 = smul.addr %s1403, 8
        %s1405 = scalar_lea.vmem %s2, %s1404
      $region40: #{icil_forward.17} parent=35 // pred_fallthru
        _
    $region36: #{icil_forward.17} parent=5 // pred_fallthru
      _
  $region6: #{icil_forward.17} parent=0 // loop_footer
    %s12 = sadd.s32 1, %s8
  $region7: #{icil_forward.17} parent=0 // loop_footer_branch
    %7 = sbr.rel target = $region3
  $region8: #{icil_forward.17} parent=0 // loop_exit
    _

// kernel: icil_forward.19
$region0: #{icil_forward.19}
  #allocation0 [shape = 'u32[]', space=smem, size = 0x4, offset = 0x4, fixed_abs, tag = 'smem constant byte address 0x4 - core index']
  #allocation1 [shape = 'u32[72,128]{1,0:T(1,128)}', space=vmem, size = 0x9000, scoped, tag = 'internal scratch']
  %s0 = inlined_call_operand.vmem [shape: bf16[16,192], index: 0, kind: input, shape index: {}]
  %s1 = inlined_call_operand.vmem [shape: bf16[2,192,400], index: 1, kind: input, shape index: {}]
  %s2 = inlined_call_operand.vmem [shape: f32[16,1], index: 2, kind: input, shape index: {}]
  %s3 = inlined_call_operand.vmem [shape: f32[2,16,400], index: 3, kind: output, shape index: {}]
  %s4 = sld [smem:[#allocation0]]
  $region45: #{icil_forward.19} parent=0
    _
  %s6 = ssub.s32 1, %s4
  %s7 = scalar_select 0, %s6, %s4
  loop: start=0, step=1, limit=4
  $region2: #{icil_forward.19} parent=0 // loop_pre_header
    _
  $region3: #{icil_forward.19} parent=0 // loop_header
    %s9 = sphi 0, %s13
    %p10 = scmp.ge.s32.totalorder %s9, 4
    %s17 = sphi 0, %s17
    %s19 = sphi 0, %s17
    %s20 = sphi 0, %s19
    %s34 = sphi 0, %s20
    %s40 = sphi 0, %s42
    %s43 = sphi 0, %s40
    %s44 = sphi 0, %s43
    %s60 = sphi 0, %s44
    %s64 = sphi 0, %s64
    %s66 = sphi 0, %s64
    %s67 = sphi 0, %s66
    %s81 = sphi 0, %s67
    %s87 = sphi 0, %s89
    %s90 = sphi 0, %s87
    %s91 = sphi 0, %s90
    %s107 = sphi 0, %s91
  $region4: #{icil_forward.19} parent=0 // loop_header_branch
    %12 = sbr.rel (%p10) target = $region8
  $region5: #{icil_forward.19} parent=0 // loop_body
    %s14 = ssub.s32 %s9, 1
    %s15 = ssub.s32 %s9, 2
    %s16 = sadd.s32 %s9, 1
    %s18 = sadd.s32 %s17, 1
    %p21 = scmp.eq.s32.totalorder %s9, 1
    %p22 = scmp.ne.s32.totalorder %s17, %s19
    %p23 = scmp.eq.s32.totalorder %s9, 0
    %p24 = por %p22, %p23
    %p25 = scmp.ne.s32.totalorder %s17, %s19
    %p26 = scmp.eq.s32.totalorder %s14, 1
    %p27 = por %p25, %p26
    %p28 = scmp.ne.s32.totalorder %s19, %s20
    %p29 = scmp.eq.s32.totalorder %s14, 0
    %p30 = por %p28, %p29
    %p31 = scmp.ne.s32.totalorder %s19, %s20
    %p32 = scmp.eq.s32.totalorder %s15, 1
    %p33 = por %p31, %p32
    %p35 = scmp.ne.s32.totalorder %s20, %s34
    %p36 = scmp.eq.s32.totalorder %s15, 0
    %p37 = por %p35, %p36
    %s38 = ssub.s32 %s9, %s16
    %p39 = scmp.eq.s32.totalorder %s38, 0
    %s41 = sadd.s32 %s40, 1
    %s42 = scalar_select %p39, %s40, %s41
    %p45 = pneg %p39
    %p46 = scmp.eq.s32.totalorder %s9, 1
    %p47 = por %p45, %p46
    %p48 = scmp.ne.s32.totalorder %s40, %s43
    %p49 = scmp.eq.s32.totalorder %s9, 0
    %p50 = por %p48, %p49
    %p51 = scmp.ne.s32.totalorder %s40, %s43
    %p52 = scmp.eq.s32.totalorder %s14, 1
    %p53 = por %p51, %p52
    %p54 = scmp.ne.s32.totalorder %s43, %s44
    %p55 = scmp.eq.s32.totalorder %s14, 0
    %p56 = por %p54, %p55
    %p57 = scmp.ne.s32.totalorder %s43, %s44
    %p58 = scmp.eq.s32.totalorder %s15, 1
    %p59 = por %p57, %p58
    %p61 = scmp.ne.s32.totalorder %s44, %s60
    %p62 = scmp.eq.s32.totalorder %s15, 0
    %p63 = por %p61, %p62
    %s65 = sadd.s32 %s64, 1
    %p68 = scmp.eq.s32.totalorder %s9, 1
    %p69 = scmp.ne.s32.totalorder %s64, %s66
    %p70 = scmp.eq.s32.totalorder %s9, 0
    %p71 = por %p69, %p70
    %p72 = scmp.ne.s32.totalorder %s64, %s66
    %p73 = scmp.eq.s32.totalorder %s14, 1
    %p74 = por %p72, %p73
    %p75 = scmp.ne.s32.totalorder %s66, %s67
    %p76 = scmp.eq.s32.totalorder %s14, 0
    %p77 = por %p75, %p76
    %p78 = scmp.ne.s32.totalorder %s66, %s67
    %p79 = scmp.eq.s32.totalorder %s15, 1
    %p80 = por %p78, %p79
    %p82 = scmp.ne.s32.totalorder %s67, %s81
    %p83 = scmp.eq.s32.totalorder %s15, 0
    %p84 = por %p82, %p83
    %s85 = ssub.s32 %s9, %s16
    %p86 = scmp.eq.s32.totalorder %s85, 0
    %s88 = sadd.s32 %s87, 1
    %s89 = scalar_select %p86, %s87, %s88
    %p92 = pneg %p86
    %p93 = scmp.eq.s32.totalorder %s9, 1
    %p94 = por %p92, %p93
    %p95 = scmp.ne.s32.totalorder %s87, %s90
    %p96 = scmp.eq.s32.totalorder %s9, 0
    %p97 = por %p95, %p96
    %p98 = scmp.ne.s32.totalorder %s87, %s90
    %p99 = scmp.eq.s32.totalorder %s14, 1
    %p100 = por %p98, %p99
    %p101 = scmp.ne.s32.totalorder %s90, %s91
    %p102 = scmp.eq.s32.totalorder %s14, 0
    %p103 = por %p101, %p102
    %p104 = scmp.ne.s32.totalorder %s90, %s91
    %p105 = scmp.eq.s32.totalorder %s15, 1
    %p106 = por %p104, %p105
    %p108 = scmp.ne.s32.totalorder %s91, %s107
    %p109 = scmp.eq.s32.totalorder %s15, 0
    %p110 = por %p108, %p109
    %p111 = scmp.le.s32.totalorder 1, %s9
    %p112 = scmp.lt.s32.totalorder %s9, 3
    %p113 = pnand %p111, %p112
    %p114 = pneg %p113
    // Predicated region
    $region9: #{icil_forward.19} parent=5 // pred_check
      _
    $region10: #{icil_forward.19} parent=5 // pred_check_branch
      %116 = sbr.rel (%p113) target = $region12
    $region11: #{icil_forward.19} parent=5 // pred_region
      %s117 = ssub.s32 %s9, 1
      // Predicated region
      $region13: #{icil_forward.19} parent=11 // pred_check
        %p118 = pneg %p30
      $region14: #{icil_forward.19} parent=11 // pred_check_branch
        %120 = sbr.rel (%p118) target = $region16
      $region15: #{icil_forward.19} parent=11 // pred_region
        _
      $region16: #{icil_forward.19} parent=11 // pred_fallthru
        _
      // Predicated region
      $region17: #{icil_forward.19} parent=11 // pred_check
        %p121 = pneg %p77
      $region18: #{icil_forward.19} parent=11 // pred_check_branch
        %123 = sbr.rel (%p121) target = $region20
      $region19: #{icil_forward.19} parent=11 // pred_region
        _
      $region20: #{icil_forward.19} parent=11 // pred_fallthru
        _
    $region12: #{icil_forward.19} parent=5 // pred_fallthru
      _
    %p124 = scmp.lt.s32.totalorder %s9, 2
    // Predicated region
    $region21: #{icil_forward.19} parent=5 // pred_check
      %p125 = pneg %p124
    $region22: #{icil_forward.19} parent=5 // pred_check_branch
      %127 = sbr.rel (%p125) target = $region24
    $region23: #{icil_forward.19} parent=5 // pred_region
      // Predicated region
      $region25: #{icil_forward.19} parent=23 // pred_check
        %p128 = pneg %p50
      $region26: #{icil_forward.19} parent=23 // pred_check_branch
        %130 = sbr.rel (%p128) target = $region28
      $region27: #{icil_forward.19} parent=23 // pred_region
        %p131 = scmp.lt.s32.totalorder %s9, 1
        %s132 = scalar_select %p131, %s9, 1
        %s133 = smul.addr %s132, 96
        %s134 = smul.addr %s133, 4
        %s135 = scalar_lea.vmem %s1, %s134
      $region28: #{icil_forward.19} parent=23 // pred_fallthru
        _
    $region24: #{icil_forward.19} parent=5 // pred_fallthru
      _
    %p136 = scmp.le.s32.totalorder 1, %s9
    %p137 = scmp.lt.s32.totalorder %s9, 3
    %p138 = pnand %p136, %p137
    %p139 = pneg %p138
    // Predicated region
    $region29: #{icil_forward.19} parent=5 // pred_check
      _
    $region30: #{icil_forward.19} parent=5 // pred_check_branch
      %141 = sbr.rel (%p138) target = $region32
    $region31: #{icil_forward.19} parent=5 // pred_region
      %s142 = ssub.s32 %s9, 1
      %p143 = pneg %p30
      %p144 = pneg %p27
      %p145 = scmp.lt.s32.totalorder %s14, 1
      %s146 = scalar_select %p145, %s14, 1
      %s147 = smul.addr %s146, 96
      %s148 = smul.addr %s147, 4
      %s149 = scalar_lea.vmem %s1, %s148
      %p150 = pneg %p56
      %p151 = pneg %p53
      %p152 = pneg %p77
      %p153 = pneg %p74
      %p154 = pneg %p103
      %p155 = pneg %p100
      %p156 = scmp.lt.s32.totalorder %s14, 1
      %s157 = scalar_select %p156, %s14, 1
      %s158 = smul.addr %s157, 8
      %s159 = smul.addr %s158, 8
      %s160 = scalar_lea.vmem %s3, %s159
      %p161 = scmp.lt.s32.totalorder %s14, 1
      %s162 = scalar_select %p161, %s14, 1
      %s163 = smul.addr %s162, 96
      %s164 = smul.addr %s163, 4
      %s165 = scalar_lea.vmem %s1, %s164
      %p166 = scmp.lt.s32.totalorder %s14, 1
      %s167 = scalar_select %p166, %s14, 1
      %s168 = smul.addr %s167, 8
      %s169 = smul.addr %s168, 8
      %s170 = scalar_lea.vmem %s3, %s169
      %v172 = vld [vmem:[%s0] sm:$0xff]
      %v173 = vld [vmem:[%s0 + $0x8] sm:$0xff]
      %v174 = vld [vmem:[%s165] sm:$0xff]
      %v175 = vld [vmem:[%s165 + $0x8] sm:$0xff]
      %v176 = vld [vmem:[%s165 + $0x10] sm:$0xff]
      %v177 = vld [vmem:[%s165 + $0x18] sm:$0xff]
      %v178 = vld [vmem:[%s165 + $0x20] sm:$0xff]
      %v179 = vld [vmem:[%s165 + $0x28] sm:$0xff]
      %v180 = vld [vmem:[%s165 + $0x30] sm:$0xff]
      %v181 = vld [vmem:[%s165 + $0x38] sm:$0xff]
      %v182 = vld [vmem:[%s165 + $0x40] sm:$0xff]
      %v183 = vld [vmem:[%s165 + $0x48] sm:$0xff]
      %v184 = vld [vmem:[%s165 + $0x50] sm:$0xff]
      %v185 = vld [vmem:[%s165 + $0x58] sm:$0xff]
      %v186 = vld [vmem:[%s165 + $0x60] sm:$0xff]
      %v187 = vld [vmem:[%s165 + $0x68] sm:$0xff]
      %v188 = vld [vmem:[%s165 + $0x70] sm:$0xff]
      %v189 = vld [vmem:[%s165 + $0x78] sm:$0xff]
      %v190 = vld [vmem:[%s165 + $0x80] sm:$0xff]
      %v191 = vld [vmem:[%s165 + $0x88] sm:$0xff]
      %v192 = vld [vmem:[%s165 + $0x90] sm:$0xff]
      %v193 = vld [vmem:[%s165 + $0x98] sm:$0xff]
      %v194 = vld [vmem:[%s165 + $0xa0] sm:$0xff]
      %v195 = vld [vmem:[%s165 + $0xa8] sm:$0xff]
      %v196 = vld [vmem:[%s165 + $0xb0] sm:$0xff]
      %v197 = vld [vmem:[%s165 + $0xb8] sm:$0xff]
      %v198 = vld [vmem:[%s165 + $0xc0] sm:$0xff]
      %v199 = vld [vmem:[%s165 + $0xc8] sm:$0xff]
      %v200 = vld [vmem:[%s165 + $0xd0] sm:$0xff]
      %v201 = vld [vmem:[%s165 + $0xd8] sm:$0xff]
      %v202 = vld [vmem:[%s165 + $0xe0] sm:$0xff]
      %v203 = vld [vmem:[%s165 + $0xe8] sm:$0xff]
      %v204 = vld [vmem:[%s165 + $0xf0] sm:$0xff]
      %v205 = vld [vmem:[%s165 + $0xf8] sm:$0xff]
      %v206 = vld [vmem:[%s165 + $0x100] sm:$0xff]
      %v207 = vld [vmem:[%s165 + $0x108] sm:$0xff]
      %v208 = vld [vmem:[%s165 + $0x110] sm:$0xff]
      %v209 = vld [vmem:[%s165 + $0x118] sm:$0xff]
      %v210 = vld [vmem:[%s165 + $0x120] sm:$0xff]
      %v211 = vld [vmem:[%s165 + $0x128] sm:$0xff]
      %v212 = vld [vmem:[%s165 + $0x130] sm:$0xff]
      %v213 = vld [vmem:[%s165 + $0x138] sm:$0xff]
      %v214 = vld [vmem:[%s165 + $0x140] sm:$0xff]
      %v215 = vld [vmem:[%s165 + $0x148] sm:$0xff]
      %v216 = vld [vmem:[%s165 + $0x150] sm:$0xff]
      %v217 = vld [vmem:[%s165 + $0x158] sm:$0xff]
      %v218 = vld [vmem:[%s165 + $0x160] sm:$0xff]
      %v219 = vld [vmem:[%s165 + $0x168] sm:$0xff]
      %v220 = vld [vmem:[%s165 + $0x170] sm:$0xff]
      %v221 = vld [vmem:[%s165 + $0x178] sm:$0xff]
      %v222 = vld [vmem:[%s2] sm:$0xff]
      %v223 = vld [vmem:[%s2 + $0x8] sm:$0xff]
      %225 = vset.pattern.permute.xlu0 0
      %226 = vperm.xlu0 %225, %v222
      %v227 = vpop.permute.xlu0 %226
      %230 = vset.pattern.permute.xlu0 0
      %231 = vperm.xlu0 %230, %v223
      %v232 = vpop.permute.xlu0 %231
      %v236 = vunpack.c.l.b16 %v172
      %v237 = vunpack.c.h.b16 %v172
      %v238 = vunpack.c.l.b16 %v173
      %v239 = vunpack.c.h.b16 %v173
      %v240 = vpack.c.b16 %v238, %v236
      %v241 = vpack.c.b16 %v239, %v237
      %v291 = vunpack.c.l.b16 %v174
      %v292 = vunpack.c.h.b16 %v174
      %v293 = vunpack.c.l.b16 %v175
      %v294 = vunpack.c.h.b16 %v175
      %v295 = vunpack.c.l.b16 %v176
      %v296 = vunpack.c.h.b16 %v176
      %v297 = vunpack.c.l.b16 %v177
      %v298 = vunpack.c.h.b16 %v177
      %v299 = vunpack.c.l.b16 %v178
      %v300 = vunpack.c.h.b16 %v178
      %v301 = vunpack.c.l.b16 %v179
      %v302 = vunpack.c.h.b16 %v179
      %v303 = vunpack.c.l.b16 %v180
      %v304 = vunpack.c.h.b16 %v180
      %v305 = vunpack.c.l.b16 %v181
      %v306 = vunpack.c.h.b16 %v181
      %v307 = vunpack.c.l.b16 %v182
      %v308 = vunpack.c.h.b16 %v182
      %v309 = vunpack.c.l.b16 %v183
      %v310 = vunpack.c.h.b16 %v183
      %v311 = vunpack.c.l.b16 %v184
      %v312 = vunpack.c.h.b16 %v184
      %v313 = vunpack.c.l.b16 %v185
      %v314 = vunpack.c.h.b16 %v185
      %v315 = vunpack.c.l.b16 %v186
      %v316 = vunpack.c.h.b16 %v186
      %v317 = vunpack.c.l.b16 %v187
      %v318 = vunpack.c.h.b16 %v187
      %v319 = vunpack.c.l.b16 %v188
      %v320 = vunpack.c.h.b16 %v188
      %v321 = vunpack.c.l.b16 %v189
      %v322 = vunpack.c.h.b16 %v189
      %v323 = vunpack.c.l.b16 %v190
      %v324 = vunpack.c.h.b16 %v190
      %v325 = vunpack.c.l.b16 %v191
      %v326 = vunpack.c.h.b16 %v191
      %v327 = vunpack.c.l.b16 %v192
      %v328 = vunpack.c.h.b16 %v192
      %v329 = vunpack.c.l.b16 %v193
      %v330 = vunpack.c.h.b16 %v193
      %v331 = vunpack.c.l.b16 %v194
      %v332 = vunpack.c.h.b16 %v194
      %v333 = vunpack.c.l.b16 %v195
      %v334 = vunpack.c.h.b16 %v195
      %v335 = vunpack.c.l.b16 %v196
      %v336 = vunpack.c.h.b16 %v196
      %v337 = vunpack.c.l.b16 %v197
      %v338 = vunpack.c.h.b16 %v197
      %v339 = vunpack.c.l.b16 %v198
      %v340 = vunpack.c.h.b16 %v198
      %v341 = vunpack.c.l.b16 %v199
      %v342 = vunpack.c.h.b16 %v199
      %v343 = vunpack.c.l.b16 %v200
      %v344 = vunpack.c.h.b16 %v200
      %v345 = vunpack.c.l.b16 %v201
      %v346 = vunpack.c.h.b16 %v201
      %v347 = vunpack.c.l.b16 %v202
      %v348 = vunpack.c.h.b16 %v202
      %v349 = vunpack.c.l.b16 %v203
      %v350 = vunpack.c.h.b16 %v203
      %v351 = vunpack.c.l.b16 %v204
      %v352 = vunpack.c.h.b16 %v204
      %v353 = vunpack.c.l.b16 %v205
      %v354 = vunpack.c.h.b16 %v205
      %v355 = vunpack.c.l.b16 %v206
      %v356 = vunpack.c.h.b16 %v206
      %v357 = vunpack.c.l.b16 %v207
      %v358 = vunpack.c.h.b16 %v207
      %v359 = vunpack.c.l.b16 %v208
      %v360 = vunpack.c.h.b16 %v208
      %v361 = vunpack.c.l.b16 %v209
      %v362 = vunpack.c.h.b16 %v209
      %v363 = vunpack.c.l.b16 %v210
      %v364 = vunpack.c.h.b16 %v210
      %v365 = vunpack.c.l.b16 %v211
      %v366 = vunpack.c.h.b16 %v211
      %v367 = vunpack.c.l.b16 %v212
      %v368 = vunpack.c.h.b16 %v212
      %v369 = vunpack.c.l.b16 %v213
      %v370 = vunpack.c.h.b16 %v213
      %v371 = vunpack.c.l.b16 %v214
      %v372 = vunpack.c.h.b16 %v214
      %v373 = vunpack.c.l.b16 %v215
      %v374 = vunpack.c.h.b16 %v215
      %v375 = vunpack.c.l.b16 %v216
      %v376 = vunpack.c.h.b16 %v216
      %v377 = vunpack.c.l.b16 %v217
      %v378 = vunpack.c.h.b16 %v217
      %v379 = vunpack.c.l.b16 %v218
      %v380 = vunpack.c.h.b16 %v218
      %v381 = vunpack.c.l.b16 %v219
      %v382 = vunpack.c.h.b16 %v219
      %v383 = vunpack.c.l.b16 %v220
      %v384 = vunpack.c.h.b16 %v220
      %v385 = vunpack.c.l.b16 %v221
      %v386 = vunpack.c.h.b16 %v221
      %v387 = vpack.c.b16 %v295, %v291
      %v388 = vpack.c.b16 %v296, %v292
      %v389 = vpack.c.b16 %v297, %v293
      %v390 = vpack.c.b16 %v298, %v294
      %v391 = vpack.c.b16 %v303, %v299
      %v392 = vpack.c.b16 %v304, %v300
      %v393 = vpack.c.b16 %v305, %v301
      %v394 = vpack.c.b16 %v306, %v302
      %v395 = vpack.c.b16 %v311, %v307
      %v396 = vpack.c.b16 %v312, %v308
      %v397 = vpack.c.b16 %v313, %v309
      %v398 = vpack.c.b16 %v314, %v310
      %v399 = vpack.c.b16 %v319, %v315
      %v400 = vpack.c.b16 %v320, %v316
      %v401 = vpack.c.b16 %v321, %v317
      %v402 = vpack.c.b16 %v322, %v318
      %v403 = vpack.c.b16 %v327, %v323
      %v404 = vpack.c.b16 %v328, %v324
      %v405 = vpack.c.b16 %v329, %v325
      %v406 = vpack.c.b16 %v330, %v326
      %v407 = vpack.c.b16 %v335, %v331
      %v408 = vpack.c.b16 %v336, %v332
      %v409 = vpack.c.b16 %v337, %v333
      %v410 = vpack.c.b16 %v338, %v334
      %v411 = vpack.c.b16 %v343, %v339
      %v412 = vpack.c.b16 %v344, %v340
      %v413 = vpack.c.b16 %v345, %v341
      %v414 = vpack.c.b16 %v346, %v342
      %v415 = vpack.c.b16 %v351, %v347
      %v416 = vpack.c.b16 %v352, %v348
      %v417 = vpack.c.b16 %v353, %v349
      %v418 = vpack.c.b16 %v354, %v350
      %v419 = vpack.c.b16 %v359, %v355
      %v420 = vpack.c.b16 %v360, %v356
      %v421 = vpack.c.b16 %v361, %v357
      %v422 = vpack.c.b16 %v362, %v358
      %v423 = vpack.c.b16 %v367, %v363
      %v424 = vpack.c.b16 %v368, %v364
      %v425 = vpack.c.b16 %v369, %v365
      %v426 = vpack.c.b16 %v370, %v366
      %v427 = vpack.c.b16 %v375, %v371
      %v428 = vpack.c.b16 %v376, %v372
      %v429 = vpack.c.b16 %v377, %v373
      %v430 = vpack.c.b16 %v378, %v374
      %v431 = vpack.c.b16 %v383, %v379
      %v432 = vpack.c.b16 %v384, %v380
      %v433 = vpack.c.b16 %v385, %v381
      %v434 = vpack.c.b16 %v386, %v382
      %vm483 = vcmask 523264
      %v485 = vsel %vm483, %v241, 0
      %487 = vmatpush.bf16.msra.mxu0 %v415
      %488 = vmatpush.bf16.msra.mxu0 %v411
      %489 = vmatpush.bf16.msra.mxu0 %v407
      %490 = vmatpush.bf16.msra.mxu0 %v403
      %491 = vmatpush.bf16.msra.mxu0 %v399
      %492 = vmatpush.bf16.msra.mxu0 %v395
      %493 = vmatpush.bf16.msra.mxu0 %v391
      %494 = vmatpush.bf16.msra.mxu0 %v387
      %495 = vmatmul.bf16.gmra.mxu0 %v240
      %v496 = vpop.f32.mrf.mxu0
      %v497 = vadd.f32 %v227, %v496
      %v498 = vpop.f32.mrf.mxu0
      %v499 = vadd.f32 %v232, %v498
      %500 = vdwg.mxu0
      %501 = vmatpush.bf16.msra.mxu0 0
      %502 = vmatpush.bf16.msra.mxu0 0
      %503 = vmatpush.bf16.msra.mxu0 0
      %504 = vmatpush.bf16.msra.mxu0 0
      %505 = vmatpush.bf16.msra.mxu0 %v431
      %506 = vmatpush.bf16.msra.mxu0 %v427
      %507 = vmatpush.bf16.msra.mxu0 %v423
      %508 = vmatpush.bf16.msra.mxu0 %v419
      %509 = vmatmul.bf16.gmra.mxu0 %v485
      %v510 = vpop.f32.mrf.mxu0
      %v511 = vadd.f32 %v497, %v510
      %v512 = vpop.f32.mrf.mxu0
      %v513 = vadd.f32 %v499, %v512
      %514 = vdwg.mxu0
      %515 = vmatpush.bf16.msra.mxu0 %v416
      %516 = vmatpush.bf16.msra.mxu0 %v412
      %517 = vmatpush.bf16.msra.mxu0 %v408
      %518 = vmatpush.bf16.msra.mxu0 %v404
      %519 = vmatpush.bf16.msra.mxu0 %v400
      %520 = vmatpush.bf16.msra.mxu0 %v396
      %521 = vmatpush.bf16.msra.mxu0 %v392
      %522 = vmatpush.bf16.msra.mxu0 %v388
      %523 = vmatmul.bf16.gmra.mxu0 %v240
      %v524 = vpop.f32.mrf.mxu0
      %v525 = vadd.f32 %v227, %v524
      %v526 = vpop.f32.mrf.mxu0
      %v527 = vadd.f32 %v232, %v526
      %528 = vdwg.mxu0
      %529 = vmatpush.bf16.msra.mxu0 0
      %530 = vmatpush.bf16.msra.mxu0 0
      %531 = vmatpush.bf16.msra.mxu0 0
      %532 = vmatpush.bf16.msra.mxu0 0
      %533 = vmatpush.bf16.msra.mxu0 %v432
      %534 = vmatpush.bf16.msra.mxu0 %v428
      %535 = vmatpush.bf16.msra.mxu0 %v424
      %536 = vmatpush.bf16.msra.mxu0 %v420
      %537 = vmatmul.bf16.gmra.mxu0 %v485
      %v538 = vpop.f32.mrf.mxu0
      %v539 = vadd.f32 %v525, %v538
      %v540 = vpop.f32.mrf.mxu0
      %v541 = vadd.f32 %v527, %v540
      %542 = vdwg.mxu0
      %543 = vmatpush.bf16.msra.mxu0 %v417
      %544 = vmatpush.bf16.msra.mxu0 %v413
      %545 = vmatpush.bf16.msra.mxu0 %v409
      %546 = vmatpush.bf16.msra.mxu0 %v405
      %547 = vmatpush.bf16.msra.mxu0 %v401
      %548 = vmatpush.bf16.msra.mxu0 %v397
      %549 = vmatpush.bf16.msra.mxu0 %v393
      %550 = vmatpush.bf16.msra.mxu0 %v389
      %551 = vmatmul.bf16.gmra.mxu0 %v240
      %v552 = vpop.f32.mrf.mxu0
      %v553 = vadd.f32 %v227, %v552
      %v554 = vpop.f32.mrf.mxu0
      %v555 = vadd.f32 %v232, %v554
      %556 = vdwg.mxu0
      %557 = vmatpush.bf16.msra.mxu0 0
      %558 = vmatpush.bf16.msra.mxu0 0
      %559 = vmatpush.bf16.msra.mxu0 0
      %560 = vmatpush.bf16.msra.mxu0 0
      %561 = vmatpush.bf16.msra.mxu0 %v433
      %562 = vmatpush.bf16.msra.mxu0 %v429
      %563 = vmatpush.bf16.msra.mxu0 %v425
      %564 = vmatpush.bf16.msra.mxu0 %v421
      %565 = vmatmul.bf16.gmra.mxu0 %v485
      %v566 = vpop.f32.mrf.mxu0
      %v567 = vadd.f32 %v553, %v566
      %v568 = vpop.f32.mrf.mxu0
      %v569 = vadd.f32 %v555, %v568
      %570 = vdwg.mxu0
      %571 = vmatpush.bf16.msra.mxu0 %v418
      %572 = vmatpush.bf16.msra.mxu0 %v414
      %573 = vmatpush.bf16.msra.mxu0 %v410
      %574 = vmatpush.bf16.msra.mxu0 %v406
      %575 = vmatpush.bf16.msra.mxu0 %v402
      %576 = vmatpush.bf16.msra.mxu0 %v398
      %577 = vmatpush.bf16.msra.mxu0 %v394
      %578 = vmatpush.bf16.msra.mxu0 %v390
      %579 = vmatmul.bf16.gmra.mxu0 %v240
      %v580 = vpop.f32.mrf.mxu0
      %v581 = vadd.f32 %v227, %v580
      %v582 = vpop.f32.mrf.mxu0
      %v583 = vadd.f32 %v232, %v582
      %584 = vdwg.mxu0
      %585 = vmatpush.bf16.msra.mxu0 0
      %586 = vmatpush.bf16.msra.mxu0 0
      %587 = vmatpush.bf16.msra.mxu0 0
      %588 = vmatpush.bf16.msra.mxu0 0
      %589 = vmatpush.bf16.msra.mxu0 %v434
      %590 = vmatpush.bf16.msra.mxu0 %v430
      %591 = vmatpush.bf16.msra.mxu0 %v426
      %592 = vmatpush.bf16.msra.mxu0 %v422
      %593 = vmatmul.bf16.gmra.mxu0 %v485
      %v594 = vpop.f32.mrf.mxu0
      %v595 = vadd.f32 %v581, %v594
      %v596 = vpop.f32.mrf.mxu0
      %v597 = vadd.f32 %v583, %v596
      %598 = vdwg.mxu0
      %v599 = vmax.f32 %v511, 0.0
      %v600 = vmax.f32 %v539, 0.0
      %v601 = vmax.f32 %v567, 0.0
      %v602 = vmax.f32 %v595, 0.0
      %v603 = vmax.f32 %v513, 0.0
      %v604 = vmax.f32 %v541, 0.0
      %v605 = vmax.f32 %v569, 0.0
      %v606 = vmax.f32 %v597, 0.0
      %607 = vst [vmem:[%s170] sm:$0xff] %v599
      %608 = vst [vmem:[%s170 + $0x8] sm:$0xff] %v600
      %609 = vst [vmem:[%s170 + $0x10] sm:$0xff] %v601
      %vm610 = vcmask 130048
      %611 = vst.msk [vmem:[%s170 + $0x18] sm:$0xff] %vm610, %v602
      %612 = vst [vmem:[%s170 + $0x20] sm:$0xff] %v603
      %613 = vst [vmem:[%s170 + $0x28] sm:$0xff] %v604
      %614 = vst [vmem:[%s170 + $0x30] sm:$0xff] %v605
      %615 = vst.msk [vmem:[%s170 + $0x38] sm:$0xff] %vm610, %v606
      %p616 = scmp.lt.s32.totalorder %s14, 1
      %s617 = scalar_select %p616, %s14, 1
      %s618 = smul.addr %s617, 8
      %s619 = smul.addr %s618, 8
      %s620 = scalar_lea.vmem %s3, %s619
      // Predicated region
      $region33: #{icil_forward.19} parent=31 // pred_check
        %p621 = pneg %p100
      $region34: #{icil_forward.19} parent=31 // pred_check_branch
        %623 = sbr.rel (%p621) target = $region36
      $region35: #{icil_forward.19} parent=31 // pred_region
        _
      $region36: #{icil_forward.19} parent=31 // pred_fallthru
        _
    $region32: #{icil_forward.19} parent=5 // pred_fallthru
      _
    %p624 = scmp.le.s32.totalorder 2, %s9
    // Predicated region
    $region37: #{icil_forward.19} parent=5 // pred_check
      %p625 = pneg %p624
    $region38: #{icil_forward.19} parent=5 // pred_check_branch
      %627 = sbr.rel (%p625) target = $region40
    $region39: #{icil_forward.19} parent=5 // pred_region
      %s628 = ssub.s32 %s9, 2
      // Predicated region
      $region41: #{icil_forward.19} parent=39 // pred_check
        %p629 = pneg %p106
      $region42: #{icil_forward.19} parent=39 // pred_check_branch
        %631 = sbr.rel (%p629) target = $region44
      $region43: #{icil_forward.19} parent=39 // pred_region
        %p632 = scmp.lt.s32.totalorder %s15, 1
        %s633 = scalar_select %p632, %s15, 1
        %s634 = smul.addr %s633, 8
        %s635 = smul.addr %s634, 8
        %s636 = scalar_lea.vmem %s3, %s635
      $region44: #{icil_forward.19} parent=39 // pred_fallthru
        _
    $region40: #{icil_forward.19} parent=5 // pred_fallthru
      _
  $region6: #{icil_forward.19} parent=0 // loop_footer
    %s13 = sadd.s32 1, %s9
  $region7: #{icil_forward.19} parent=0 // loop_footer_branch
    %8 = sbr.rel target = $region3
  $region8: #{icil_forward.19} parent=0 // loop_exit
    _

// kernel: icil_forward.18
$region0: #{icil_forward.18}
  #allocation0 [shape = 'u32[]', space=smem, size = 0x4, offset = 0x4, fixed_abs, tag = 'smem constant byte address 0x4 - core index']
  #allocation1 [shape = 'u32[72,128]{1,0:T(1,128)}', space=vmem, size = 0x9000, scoped, tag = 'internal scratch']
  %s0 = inlined_call_operand.vmem [shape: f32[336,128], index: 0, kind: input, shape index: {}]
  %s1 = inlined_call_operand.vmem [shape: f32[336,128], index: 1, kind: input, shape index: {}]
  %s2 = inlined_call_operand.vmem [shape: f32[1,128], index: 2, kind: output, shape index: {}]
  %s3 = sld [smem:[#allocation0]]
  $region22: #{icil_forward.18} parent=0
    _
  %s5 = ssub.s32 1, %s3
  %s6 = scalar_select 0, %s5, %s3
  // Predicated region
  $region2: #{icil_forward.18} parent=0 // pred_check
    _
  $region3: #{icil_forward.18} parent=0 // pred_check_branch
    %8 = sbr.rel (0) target = $region5
  $region4: #{icil_forward.18} parent=0 // pred_region
    _
  $region5: #{icil_forward.18} parent=0 // pred_fallthru
    _
  // Predicated region
  $region6: #{icil_forward.18} parent=0 // pred_check
    _
  $region7: #{icil_forward.18} parent=0 // pred_check_branch
    %10 = sbr.rel (0) target = $region9
  $region8: #{icil_forward.18} parent=0 // pred_region
    _
  $region9: #{icil_forward.18} parent=0 // pred_fallthru
    _
  %p11 = scmp.eq.s32.totalorder 0, 0
  // Predicated region
  $region10: #{icil_forward.18} parent=0 // pred_check
    %p12 = pneg %p11
  $region11: #{icil_forward.18} parent=0 // pred_check_branch
    %14 = sbr.rel (%p12) target = $region13
  $region12: #{icil_forward.18} parent=0 // pred_region
    %15 = vst [vmem:[%s2] sm:$0x1] 0.0
  $region13: #{icil_forward.18} parent=0 // pred_fallthru
    _
  %v16 = vld [vmem:[%s0] sm:$0xff]
  %v17 = vld [vmem:[%s0 + $0x8] sm:$0xff]
  %v18 = vld [vmem:[%s0 + $0x10] sm:$0xff]
  %v19 = vld [vmem:[%s0 + $0x18] sm:$0xff]
  %v20 = vld [vmem:[%s0 + $0x20] sm:$0xff]
  %v21 = vld [vmem:[%s0 + $0x28] sm:$0xff]
  %v22 = vld [vmem:[%s0 + $0x30] sm:$0xff]
  %v23 = vld [vmem:[%s0 + $0x38] sm:$0xff]
  %v24 = vld [vmem:[%s0 + $0x40] sm:$0xff]
  %v25 = vld [vmem:[%s0 + $0x48] sm:$0xff]
  %v26 = vld [vmem:[%s0 + $0x50] sm:$0xff]
  %v27 = vld [vmem:[%s0 + $0x58] sm:$0xff]
  %v28 = vld [vmem:[%s0 + $0x60] sm:$0xff]
  %v29 = vld [vmem:[%s0 + $0x68] sm:$0xff]
  %v30 = vld [vmem:[%s0 + $0x70] sm:$0xff]
  %v31 = vld [vmem:[%s0 + $0x78] sm:$0xff]
  %v32 = vld [vmem:[%s0 + $0x80] sm:$0xff]
  %v33 = vld [vmem:[%s0 + $0x88] sm:$0xff]
  %v34 = vld [vmem:[%s0 + $0x90] sm:$0xff]
  %v35 = vld [vmem:[%s0 + $0x98] sm:$0xff]
  %v36 = vld [vmem:[%s0 + $0xa0] sm:$0xff]
  %v37 = vld [vmem:[%s0 + $0xa8] sm:$0xff]
  %v38 = vld [vmem:[%s0 + $0xb0] sm:$0xff]
  %v39 = vld [vmem:[%s0 + $0xb8] sm:$0xff]
  %v40 = vld [vmem:[%s0 + $0xc0] sm:$0xff]
  %v41 = vld [vmem:[%s0 + $0xc8] sm:$0xff]
  %v42 = vld [vmem:[%s0 + $0xd0] sm:$0xff]
  %v43 = vld [vmem:[%s0 + $0xd8] sm:$0xff]
  %v44 = vld [vmem:[%s0 + $0xe0] sm:$0xff]
  %v45 = vld [vmem:[%s0 + $0xe8] sm:$0xff]
  %v46 = vld [vmem:[%s0 + $0xf0] sm:$0xff]
  %v47 = vld [vmem:[%s0 + $0xf8] sm:$0xff]
  %v48 = vld [vmem:[%s0 + $0x100] sm:$0xff]
  %v49 = vld [vmem:[%s0 + $0x108] sm:$0xff]
  %v50 = vld [vmem:[%s0 + $0x110] sm:$0xff]
  %v51 = vld [vmem:[%s0 + $0x118] sm:$0xff]
  %v52 = vld [vmem:[%s0 + $0x120] sm:$0xff]
  %v53 = vld [vmem:[%s0 + $0x128] sm:$0xff]
  %v54 = vld [vmem:[%s0 + $0x130] sm:$0xff]
  %v55 = vld [vmem:[%s0 + $0x138] sm:$0xff]
  %v56 = vld [vmem:[%s0 + $0x140] sm:$0xff]
  %v57 = vld [vmem:[%s0 + $0x148] sm:$0xff]
  %v58 = vld [vmem:[%s1] sm:$0xff]
  %v59 = vld [vmem:[%s1 + $0x8] sm:$0xff]
  %v60 = vld [vmem:[%s1 + $0x10] sm:$0xff]
  %v61 = vld [vmem:[%s1 + $0x18] sm:$0xff]
  %v62 = vld [vmem:[%s1 + $0x20] sm:$0xff]
  %v63 = vld [vmem:[%s1 + $0x28] sm:$0xff]
  %v64 = vld [vmem:[%s1 + $0x30] sm:$0xff]
  %v65 = vld [vmem:[%s1 + $0x38] sm:$0xff]
  %v66 = vld [vmem:[%s1 + $0x40] sm:$0xff]
  %v67 = vld [vmem:[%s1 + $0x48] sm:$0xff]
  %v68 = vld [vmem:[%s1 + $0x50] sm:$0xff]
  %v69 = vld [vmem:[%s1 + $0x58] sm:$0xff]
  %v70 = vld [vmem:[%s1 + $0x60] sm:$0xff]
  %v71 = vld [vmem:[%s1 + $0x68] sm:$0xff]
  %v72 = vld [vmem:[%s1 + $0x70] sm:$0xff]
  %v73 = vld [vmem:[%s1 + $0x78] sm:$0xff]
  %v74 = vld [vmem:[%s1 + $0x80] sm:$0xff]
  %v75 = vld [vmem:[%s1 + $0x88] sm:$0xff]
  %v76 = vld [vmem:[%s1 + $0x90] sm:$0xff]
  %v77 = vld [vmem:[%s1 + $0x98] sm:$0xff]
  %v78 = vld [vmem:[%s1 + $0xa0] sm:$0xff]
  %v79 = vld [vmem:[%s1 + $0xa8] sm:$0xff]
  %v80 = vld [vmem:[%s1 + $0xb0] sm:$0xff]
  %v81 = vld [vmem:[%s1 + $0xb8] sm:$0xff]
  %v82 = vld [vmem:[%s1 + $0xc0] sm:$0xff]
  %v83 = vld [vmem:[%s1 + $0xc8] sm:$0xff]
  %v84 = vld [vmem:[%s1 + $0xd0] sm:$0xff]
  %v85 = vld [vmem:[%s1 + $0xd8] sm:$0xff]
  %v86 = vld [vmem:[%s1 + $0xe0] sm:$0xff]
  %v87 = vld [vmem:[%s1 + $0xe8] sm:$0xff]
  %v88 = vld [vmem:[%s1 + $0xf0] sm:$0xff]
  %v89 = vld [vmem:[%s1 + $0xf8] sm:$0xff]
  %v90 = vld [vmem:[%s1 + $0x100] sm:$0xff]
  %v91 = vld [vmem:[%s1 + $0x108] sm:$0xff]
  %v92 = vld [vmem:[%s1 + $0x110] sm:$0xff]
  %v93 = vld [vmem:[%s1 + $0x118] sm:$0xff]
  %v94 = vld [vmem:[%s1 + $0x120] sm:$0xff]
  %v95 = vld [vmem:[%s1 + $0x128] sm:$0xff]
  %v96 = vld [vmem:[%s1 + $0x130] sm:$0xff]
  %v97 = vld [vmem:[%s1 + $0x138] sm:$0xff]
  %v98 = vld [vmem:[%s1 + $0x140] sm:$0xff]
  %v99 = vld [vmem:[%s1 + $0x148] sm:$0xff]
  %v100 = vsub.f32 %v16, %v58
  %v101 = vsub.f32 %v17, %v59
  %v102 = vsub.f32 %v18, %v60
  %v103 = vsub.f32 %v19, %v61
  %v104 = vsub.f32 %v20, %v62
  %v105 = vsub.f32 %v21, %v63
  %v106 = vsub.f32 %v22, %v64
  %v107 = vsub.f32 %v23, %v65
  %v108 = vsub.f32 %v24, %v66
  %v109 = vsub.f32 %v25, %v67
  %v110 = vsub.f32 %v26, %v68
  %v111 = vsub.f32 %v27, %v69
  %v112 = vsub.f32 %v28, %v70
  %v113 = vsub.f32 %v29, %v71
  %v114 = vsub.f32 %v30, %v72
  %v115 = vsub.f32 %v31, %v73
  %v116 = vsub.f32 %v32, %v74
  %v117 = vsub.f32 %v33, %v75
  %v118 = vsub.f32 %v34, %v76
  %v119 = vsub.f32 %v35, %v77
  %v120 = vsub.f32 %v36, %v78
  %v121 = vsub.f32 %v37, %v79
  %v122 = vsub.f32 %v38, %v80
  %v123 = vsub.f32 %v39, %v81
  %v124 = vsub.f32 %v40, %v82
  %v125 = vsub.f32 %v41, %v83
  %v126 = vsub.f32 %v42, %v84
  %v127 = vsub.f32 %v43, %v85
  %v128 = vsub.f32 %v44, %v86
  %v129 = vsub.f32 %v45, %v87
  %v130 = vsub.f32 %v46, %v88
  %v131 = vsub.f32 %v47, %v89
  %v132 = vsub.f32 %v48, %v90
  %v133 = vsub.f32 %v49, %v91
  %v134 = vsub.f32 %v50, %v92
  %v135 = vsub.f32 %v51, %v93
  %v136 = vsub.f32 %v52, %v94
  %v137 = vsub.f32 %v53, %v95
  %v138 = vsub.f32 %v54, %v96
  %v139 = vsub.f32 %v55, %v97
  %v140 = vsub.f32 %v56, %v98
  %v141 = vsub.f32 %v57, %v99
  %v142 = vld [vmem:[%s2] sm:$0x1]
  %v143 = vmul.f32 %v100, %v100
  %v144 = vmul.f32 %v101, %v101
  %v145 = vmul.f32 %v102, %v102
  %v146 = vmul.f32 %v103, %v103
  %v147 = vmul.f32 %v104, %v104
  %v148 = vmul.f32 %v105, %v105
  %v149 = vmul.f32 %v106, %v106
  %v150 = vmul.f32 %v107, %v107
  %v151 = vmul.f32 %v108, %v108
  %v152 = vmul.f32 %v109, %v109
  %v153 = vmul.f32 %v110, %v110
  %v154 = vmul.f32 %v111, %v111
  %v155 = vmul.f32 %v112, %v112
  %v156 = vmul.f32 %v113, %v113
  %v157 = vmul.f32 %v114, %v114
  %v158 = vmul.f32 %v115, %v115
  %v159 = vmul.f32 %v116, %v116
  %v160 = vmul.f32 %v117, %v117
  %v161 = vmul.f32 %v118, %v118
  %v162 = vmul.f32 %v119, %v119
  %v163 = vmul.f32 %v120, %v120
  %v164 = vmul.f32 %v121, %v121
  %v165 = vmul.f32 %v122, %v122
  %v166 = vmul.f32 %v123, %v123
  %v167 = vmul.f32 %v124, %v124
  %v168 = vmul.f32 %v125, %v125
  %v169 = vmul.f32 %v126, %v126
  %v170 = vmul.f32 %v127, %v127
  %v171 = vmul.f32 %v128, %v128
  %v172 = vmul.f32 %v129, %v129
  %v173 = vmul.f32 %v130, %v130
  %v174 = vmul.f32 %v131, %v131
  %v175 = vmul.f32 %v132, %v132
  %v176 = vmul.f32 %v133, %v133
  %v177 = vmul.f32 %v134, %v134
  %v178 = vmul.f32 %v135, %v135
  %v179 = vmul.f32 %v136, %v136
  %v180 = vmul.f32 %v137, %v137
  %v181 = vmul.f32 %v138, %v138
  %v182 = vmul.f32 %v139, %v139
  %v183 = vmul.f32 %v140, %v140
  %v184 = vmul.f32 %v141, %v141
  %v185 = vadd.f32 %v143, %v144
  %v186 = vadd.f32 %v185, %v145
  %v187 = vadd.f32 %v186, %v146
  %v188 = vadd.f32 %v187, %v147
  %v189 = vadd.f32 %v188, %v148
  %v190 = vadd.f32 %v189, %v149
  %v191 = vadd.f32 %v190, %v150
  %v192 = vadd.f32 %v191, %v151
  %v193 = vadd.f32 %v192, %v152
  %v194 = vadd.f32 %v193, %v153
  %v195 = vadd.f32 %v194, %v154
  %v196 = vadd.f32 %v195, %v155
  %v197 = vadd.f32 %v196, %v156
  %v198 = vadd.f32 %v197, %v157
  %v199 = vadd.f32 %v198, %v158
  %v200 = vadd.f32 %v199, %v159
  %v201 = vadd.f32 %v200, %v160
  %v202 = vadd.f32 %v201, %v161
  %v203 = vadd.f32 %v202, %v162
  %v204 = vadd.f32 %v203, %v163
  %v205 = vadd.f32 %v204, %v164
  %v206 = vadd.f32 %v205, %v165
  %v207 = vadd.f32 %v206, %v166
  %v208 = vadd.f32 %v207, %v167
  %v209 = vadd.f32 %v208, %v168
  %v210 = vadd.f32 %v209, %v169
  %v211 = vadd.f32 %v210, %v170
  %v212 = vadd.f32 %v211, %v171
  %v213 = vadd.f32 %v212, %v172
  %v214 = vadd.f32 %v213, %v173
  %v215 = vadd.f32 %v214, %v174
  %v216 = vadd.f32 %v215, %v175
  %v217 = vadd.f32 %v216, %v176
  %v218 = vadd.f32 %v217, %v177
  %v219 = vadd.f32 %v218, %v178
  %v220 = vadd.f32 %v219, %v179
  %v221 = vadd.f32 %v220, %v180
  %v222 = vadd.f32 %v221, %v181
  %v223 = vadd.f32 %v222, %v182
  %v224 = vadd.f32 %v223, %v183
  %v225 = vadd.f32 %v224, %v184
  %v226 = vrot.slane %v225, 4
  %v227 = vadd.f32 %v225, %v226
  %v228 = vrot.slane %v227, 2
  %v229 = vadd.f32 %v227, %v228
  %v230 = vrot.slane %v229, 1
  %v231 = vadd.f32 %v229, %v230
  %v232 = vadd.f32 %v142, %v231
  %233 = vst [vmem:[%s2] sm:$0x1] %v232
  // Predicated region
  $region14: #{icil_forward.18} parent=0 // pred_check
    _
  $region15: #{icil_forward.18} parent=0 // pred_check_branch
    %235 = sbr.rel (0) target = $region17
  $region16: #{icil_forward.18} parent=0 // pred_region
    _
  $region17: #{icil_forward.18} parent=0 // pred_fallthru
    _
  // Predicated region
  $region18: #{icil_forward.18} parent=0 // pred_check
    _
  $region19: #{icil_forward.18} parent=0 // pred_check_branch
    %237 = sbr.rel (0) target = $region21
  $region20: #{icil_forward.18} parent=0 // pred_region
    _
  $region21: #{icil_forward.18} parent=0 // pred_fallthru
    _

</llo_original>
